<compile_context>
chip_gen: v7x
topology: tpu7x:2x2x1
jax: 0.10.0
libtpu: 0.0.40
codegen_flags: <defaults>
</compile_context>

<pallas_src>
import functools

import jax
import jax.numpy as jnp
from jax.experimental import pallas as pl
from jax.experimental.pallas import tpu as pltpu


def _round_up(x, m):
    return ((x + m - 1) // m) * m


# ---------------------------------------------------------------------------
# Pallas kernel: fused 3x3 gated conv on one (batch, row-tile) block
# ---------------------------------------------------------------------------
def _gated_conv_kernel(x_ref, w_ref, o_ref, *, stride, wout, wph, cout, coutp):
    # x_ref : (TRin, s*Wph, Cin)  bf16  haloed, W-phase-decomposed input rows
    # w_ref : (9, Cin, 2*Coutp)   bf16  per-tap weights, columns = [phi | gate]
    # o_ref : (TR, Wout, Cout)    bf16  gated output rows
    s = stride
    tr = o_ref.shape[0]

    def row_body(r, carry):
        acc = jnp.zeros((wout, 2 * coutp), jnp.float32)
        for kh in range(3):
            x_row = x_ref[r * s + kh]                    # (s*Wph, Cin) bf16
            for kw in range(3):
                col0 = (kw % s) * wph + (kw // s)        # static per tap
                tap = x_row[col0:col0 + wout, :]         # (Wout, Cin) contiguous
                acc = acc + jnp.dot(tap, w_ref[kh * 3 + kw],
                                    preferred_element_type=jnp.float32)
        phi = acc[:, :coutp]                             # 128-lane boundary split
        gate = acc[:, coutp:]
        gated = jax.nn.sigmoid(gate) * jnp.maximum(phi, 0.0)   # f32 VPU/EUP
        o_ref[r] = gated[:, :cout].astype(o_ref.dtype)
        return carry

    jax.lax.fori_loop(0, tr, row_body, 0)


def _choose_tile_rows(hout, s, wcols, cin):
    """Output rows per grid step, sized to ~2 MiB of (lane-padded) VMEM slab."""
    lane_cin = _round_up(max(cin, 1), 128)        # VMEM lane padding of last dim
    bytes_per_out_row = s * wcols * lane_cin * 2  # bf16 input rows per output row
    budget = 2 << 20
    return max(1, min(hout, budget // max(bytes_per_out_row, 1)))


def gated_conv2d(x_nhwc, w_oihw, stride):
    """GatedConvolution forward (train mode): sigmoid(gate) * relu(phi).

    x_nhwc : (N, H, W, Cin)   float32 or bfloat16
    w_oihw : (2*Cout, Cin, 3, 3) float32 (PyTorch Conv2d layout)
    stride : int (same for H/W); padding fixed at 1, kernel fixed at 3x3
    returns: (N, Hout, Wout, Cout) bfloat16
    """
    n, h, w, cin = x_nhwc.shape
    cout = w_oihw.shape[0] // 2
    s = int(stride)
    hout = (h - 1) // s + 1
    wout = (w - 1) // s + 1
    coutp = _round_up(cout, 128)

    wph = wout + (2 // s)              # per-phase width incl. column halo
    wcols = s * wph                    # padded input width (phase-major layout)

    tr = _choose_tile_rows(hout, s, wcols, cin)
    n_tiles = pl.cdiv(hout, tr)
    trin = (tr - 1) * s + 3            # haloed input rows per tile
    rows_needed = (n_tiles * tr - 1) * s + 3

    # ---- glue (~1x input bytes): pad, W-phase split, haloed row tiles -------
    xb = x_nhwc.astype(jnp.bfloat16)
    xp = jnp.pad(xb, ((0, 0), (1, rows_needed - (h + 1)),
                      (1, wcols - (w + 1)), (0, 0)))
    if s > 1:
        # padded col j = s*jj + pw  ->  layout index pw*Wph + jj, so every tap
        # becomes a contiguous column slice inside the kernel.
        xp = xp.reshape(n, rows_needed, wph, s, cin)
        xp = jnp.swapaxes(xp, 2, 3).reshape(n, rows_needed, wcols, cin)
    if n_tiles == 1:
        slab = xp[:, None]                                  # (N,1,TRin,wcols,Cin)
    else:
        ridx = (jnp.arange(n_tiles) * (tr * s))[:, None] + jnp.arange(trin)[None, :]
        slab = jnp.take(xp, ridx, axis=1)                   # (N,T,TRin,wcols,Cin)

    # ---- weights: (2*Cout,Cin,3,3) -> (9, Cin, 2*Coutp), [phi | gate] merged
    wk = jnp.transpose(w_oihw, (2, 3, 1, 0)).astype(jnp.bfloat16)   # (3,3,Cin,2Cout)
    pad_c = ((0, 0), (0, 0), (0, 0), (0, coutp - cout))
    w_m = jnp.concatenate([jnp.pad(wk[..., :cout], pad_c),
                           jnp.pad(wk[..., cout:], pad_c)], axis=-1)
    w_m = w_m.reshape(9, cin, 2 * coutp)

    flops = 2 * n * n_tiles * tr * wout * 9 * cin * (2 * coutp)
    bytes_accessed = (slab.size * 2 + w_m.size * 2
                      + n * n_tiles * tr * wout * cout * 2)

    kernel = functools.partial(_gated_conv_kernel, stride=s, wout=wout,
                               wph=wph, cout=cout, coutp=coutp)
    out = pl.pallas_call(
        kernel,
        out_shape=jax.ShapeDtypeStruct((n, n_tiles * tr, wout, cout), jnp.bfloat16),
        grid_spec=pltpu.PrefetchScalarGridSpec(
            num_scalar_prefetch=0,
            grid=(n, n_tiles),
            in_specs=[
                pl.BlockSpec((None, None, trin, wcols, cin),
                             lambda b, t: (b, t, 0, 0, 0)),
                pl.BlockSpec((9, cin, 2 * coutp), lambda b, t: (0, 0, 0)),
            ],
            out_specs=pl.BlockSpec((None, tr, wout, cout),
                                   lambda b, t: (b, t, 0, 0)),
        ),
        compiler_params=pltpu.CompilerParams(
            dimension_semantics=("parallel", "parallel"),
        ),
        cost_estimate=pl.CostEstimate(
            flops=flops,
            transcendentals=n * n_tiles * tr * wout * coutp,
            bytes_accessed=bytes_accessed,
        ),
    )(slab, w_m)

    return out[:, :hout]                       # (N, Hout, Wout, Cout) bf16


# ---------------------------------------------------------------------------
# Parameter construction (deterministic, kaiming_normal_ mode='fan_out')
# ---------------------------------------------------------------------------
def _kaiming_conv_weight(key, out_ch, in_ch, ksize=3):
    fan_out = out_ch * ksize * ksize
    std = (2.0 / fan_out) ** 0.5
    return std * jax.random.normal(key, (out_ch, in_ch, ksize, ksize), jnp.float32)


def init_encoder_params(key, double_size=False):
    st = 2 if double_size else 1
    layer_defs = [
        ("ec0", 5, 32, st),
        ("ec1", 32, 64, 2),
        ("ec2", 64, 64, 1),
        ("ec3_1", 64, 96, 2),
        ("ec3_2", 96, 96, 1),
        ("ec4_1", 96, 128, 2),
        ("ec4", 128, 128, 1),
        ("ec5", 128, 128, 1),
    ]
    keys = jax.random.split(key, len(layer_defs))
    params = {}
    strides = {}
    for k, (name, cin, cout, s) in zip(keys, layer_defs):
        params[name] = _kaiming_conv_weight(k, 2 * cout, cin)
        strides[name] = s
    return params, strides


# ---------------------------------------------------------------------------
# Full encoder forward (mirrors VI_2D_Encoder_3.forward)
# ---------------------------------------------------------------------------
@functools.partial(jax.jit, static_argnames=("strides_items",))
def _encoder_forward_nhwc(x_nhwc, params, strides_items):
    strides = dict(strides_items)
    gc = lambda name, t: gated_conv2d(t, params[name], strides[name])
    out_1 = gc("ec0", x_nhwc)
    out_2 = gc("ec2", gc("ec1", out_1))
    out_4 = gc("ec3_2", gc("ec3_1", out_2))
    out = gc("ec5", gc("ec4", gc("ec4_1", out_4)))
    f32 = lambda t: t.astype(jnp.float32)
    return f32(out), f32(out_4), f32(out_2), f32(out_1)


def vi_2d_encoder_3(x_nchw, params, strides):
    """x_nchw: (N, 5, H, W) float32 -> tuple of NCHW feature maps (f32)."""
    x_nhwc = jnp.transpose(x_nchw, (0, 2, 3, 1))
    outs = _encoder_forward_nhwc(x_nhwc, params, tuple(sorted(strides.items())))
    return tuple(jnp.transpose(o, (0, 3, 1, 2)) for o in outs)


# ---------------------------------------------------------------------------
# Pure-JAX f32 reference (loose numerical sanity check)
# ---------------------------------------------------------------------------
def _gated_conv2d_ref(x_nhwc, w_oihw, stride):
    w_hwio = jnp.transpose(w_oihw, (2, 3, 1, 0))
    y = jax.lax.conv_general_dilated(
        x_nhwc, w_hwio, window_strides=(stride, stride),
        padding=((1, 1), (1, 1)),
        dimension_numbers=("NHWC", "HWIO", "NHWC"),
        precision=jax.lax.Precision.HIGHEST)
    cout = w_oihw.shape[0] // 2
    phi, gate = y[..., :cout], y[..., cout:]
    return jax.nn.sigmoid(gate) * jnp.maximum(phi, 0.0)


def _encoder_forward_ref(x_nhwc, params, strides):
    gc = lambda name, t: _gated_conv2d_ref(t, params[name], strides[name])
    out_1 = gc("ec0", x_nhwc)
    out_2 = gc("ec2", gc("ec1", out_1))
    out_4 = gc("ec3_2", gc("ec3_1", out_2))
    out = gc("ec5", gc("ec4", gc("ec4_1", out_4)))
    return out, out_4, out_2, out_1


if __name__ == "__main__":
    key = jax.random.PRNGKey(0)
    k_param, k_x = jax.random.split(key)

    params, strides = init_encoder_params(k_param, double_size=False)

    # input: (N=2, C=5, H=16, W=16), NCHW like the PyTorch module
    x = jax.random.normal(k_x, (2, 5, 16, 16), jnp.float32)

    out, out_4, out_2, out_1 = vi_2d_encoder_3(x, params, strides)
    jax.block_until_ready((out, out_4, out_2, out_1))

    assert out_1.shape == (2, 32, 16, 16), out_1.shape
    assert out_2.shape == (2, 64, 8, 8), out_2.shape
    assert out_4.shape == (2, 96, 4, 4), out_4.shape
    assert out.shape == (2, 128, 2, 2), out.shape

    # loose numerical check vs f32 reference (bf16 MXU inputs + bf16 storage)
    x_nhwc = jnp.transpose(x, (0, 2, 3, 1))
    refs = _encoder_forward_ref(x_nhwc, params, strides)
    refs_nchw = tuple(jnp.transpose(r, (0, 3, 1, 2)) for r in refs)
    for got, ref in zip((out, out_4, out_2, out_1), refs_nchw):
        err = float(jnp.max(jnp.abs(got - ref)))
        assert err < 1e-1, f"max abs err {err}"

    print("KERNEL_OK")
</pallas_src>

<mosaic_0001>
module attributes {stable_mosaic.version = 11 : i64} {
  func.func @_gated_conv_kernel(%arg0: i32, %arg1: i32, %arg2: memref<1x1x18x18x5xbf16, #tpu.memory_space<vmem>>, %arg3: memref<9x5x256xbf16, #tpu.memory_space<vmem>>, %arg4: memref<1x16x16x32xbf16, #tpu.memory_space<vmem>>) attributes {dimension_semantics = [#tpu.dimension_semantics<parallel>, #tpu.dimension_semantics<parallel>], iteration_bounds = array<i64: 2, 1>, scalar_prefetch = 0 : i64, scratch_operands = 0 : i64, tpu.core_type = #tpu.core_type<tc>, window_params = [{transform_indices = @transform_0, window_bounds = array<i64: 1, 1, 18, 18, 5>}, {pipeline_mode = #tpu.pipeline_mode<synchronous>, transform_indices = @transform_1, window_bounds = array<i64: 9, 5, 256>}, {transform_indices = @transform_2, window_bounds = array<i64: 1, 16, 16, 32>}]} {
    %c0_i32 = arith.constant 0 : i32
    %c16_i32 = arith.constant 16 : i32
    %0 = arith.addi %c0_i32, %c16_i32 : i32
    %c1_i32 = arith.constant 1 : i32
    scf.for %arg5 = %c0_i32 to %0 step %c1_i32  : i32 {
      %cst = arith.constant 0.000000e+00 : f32
      %1 = vector.broadcast %cst : f32 to vector<16x256xf32>
      %c1_i32_1 = arith.constant 1 : i32
      %2 = arith.muli %arg5, %c1_i32_1 : i32
      %c0_i32_2 = arith.constant 0 : i32
      %3 = arith.addi %2, %c0_i32_2 : i32
      %c0 = arith.constant 0 : index
      %c0_3 = arith.constant 0 : index
      %4 = arith.index_cast %3 : i32 to index
      %c0_4 = arith.constant 0 : index
      %c0_5 = arith.constant 0 : index
      %5 = vector.load %arg2[%c0, %c0_3, %4, %c0_4, %c0_5] : memref<1x1x18x18x5xbf16, #tpu.memory_space<vmem>>, vector<1x1x1x18x5xbf16>
      %6 = vector.shape_cast %5 : vector<1x1x1x18x5xbf16> to vector<18x5xbf16>
      %7 = vector.extract_strided_slice %6 {offsets = [0, 0], sizes = [16, 5], strides = [1, 1]} : vector<18x5xbf16> to vector<16x5xbf16>
      %c0_6 = arith.constant 0 : index
      %c0_7 = arith.constant 0 : index
      %c0_8 = arith.constant 0 : index
      %8 = vector.load %arg3[%c0_6, %c0_7, %c0_8] : memref<9x5x256xbf16, #tpu.memory_space<vmem>>, vector<1x5x256xbf16>
      %9 = vector.shape_cast %8 : vector<1x5x256xbf16> to vector<5x256xbf16>
      %cst_9 = arith.constant dense<0.000000e+00> : vector<16x256xf32>
      %10 = tpu.matmul %7, %9, %cst_9 {dimension_numbers = #tpu.dot_dimension_numbers<[1], [0], [0], [1], [0, 0, 1, 1], [], []>} : vector<16x5xbf16>, vector<5x256xbf16>, vector<16x256xf32> -> vector<16x256xf32>
      %11 = arith.addf %1, %10 : vector<16x256xf32>
      %12 = vector.extract_strided_slice %6 {offsets = [1, 0], sizes = [16, 5], strides = [1, 1]} : vector<18x5xbf16> to vector<16x5xbf16>
      %c1 = arith.constant 1 : index
      %c0_10 = arith.constant 0 : index
      %c0_11 = arith.constant 0 : index
      %13 = vector.load %arg3[%c1, %c0_10, %c0_11] : memref<9x5x256xbf16, #tpu.memory_space<vmem>>, vector<1x5x256xbf16>
      %14 = vector.shape_cast %13 : vector<1x5x256xbf16> to vector<5x256xbf16>
      %cst_12 = arith.constant dense<0.000000e+00> : vector<16x256xf32>
      %15 = tpu.matmul %12, %14, %cst_12 {dimension_numbers = #tpu.dot_dimension_numbers<[1], [0], [0], [1], [0, 0, 1, 1], [], []>} : vector<16x5xbf16>, vector<5x256xbf16>, vector<16x256xf32> -> vector<16x256xf32>
      %16 = arith.addf %11, %15 : vector<16x256xf32>
      %17 = vector.extract_strided_slice %6 {offsets = [2, 0], sizes = [16, 5], strides = [1, 1]} : vector<18x5xbf16> to vector<16x5xbf16>
      %c2 = arith.constant 2 : index
      %c0_13 = arith.constant 0 : index
      %c0_14 = arith.constant 0 : index
      %18 = vector.load %arg3[%c2, %c0_13, %c0_14] : memref<9x5x256xbf16, #tpu.memory_space<vmem>>, vector<1x5x256xbf16>
      %19 = vector.shape_cast %18 : vector<1x5x256xbf16> to vector<5x256xbf16>
      %cst_15 = arith.constant dense<0.000000e+00> : vector<16x256xf32>
      %20 = tpu.matmul %17, %19, %cst_15 {dimension_numbers = #tpu.dot_dimension_numbers<[1], [0], [0], [1], [0, 0, 1, 1], [], []>} : vector<16x5xbf16>, vector<5x256xbf16>, vector<16x256xf32> -> vector<16x256xf32>
      %21 = arith.addf %16, %20 : vector<16x256xf32>
      %c1_i32_16 = arith.constant 1 : i32
      %22 = arith.muli %arg5, %c1_i32_16 : i32
      %c1_i32_17 = arith.constant 1 : i32
      %23 = arith.addi %22, %c1_i32_17 : i32
      %c0_18 = arith.constant 0 : index
      %c0_19 = arith.constant 0 : index
      %24 = arith.index_cast %23 : i32 to index
      %c0_20 = arith.constant 0 : index
      %c0_21 = arith.constant 0 : index
      %25 = vector.load %arg2[%c0_18, %c0_19, %24, %c0_20, %c0_21] : memref<1x1x18x18x5xbf16, #tpu.memory_space<vmem>>, vector<1x1x1x18x5xbf16>
      %26 = vector.shape_cast %25 : vector<1x1x1x18x5xbf16> to vector<18x5xbf16>
      %27 = vector.extract_strided_slice %26 {offsets = [0, 0], sizes = [16, 5], strides = [1, 1]} : vector<18x5xbf16> to vector<16x5xbf16>
      %c3 = arith.constant 3 : index
      %c0_22 = arith.constant 0 : index
      %c0_23 = arith.constant 0 : index
      %28 = vector.load %arg3[%c3, %c0_22, %c0_23] : memref<9x5x256xbf16, #tpu.memory_space<vmem>>, vector<1x5x256xbf16>
      %29 = vector.shape_cast %28 : vector<1x5x256xbf16> to vector<5x256xbf16>
      %cst_24 = arith.constant dense<0.000000e+00> : vector<16x256xf32>
      %30 = tpu.matmul %27, %29, %cst_24 {dimension_numbers = #tpu.dot_dimension_numbers<[1], [0], [0], [1], [0, 0, 1, 1], [], []>} : vector<16x5xbf16>, vector<5x256xbf16>, vector<16x256xf32> -> vector<16x256xf32>
      %31 = arith.addf %21, %30 : vector<16x256xf32>
      %32 = vector.extract_strided_slice %26 {offsets = [1, 0], sizes = [16, 5], strides = [1, 1]} : vector<18x5xbf16> to vector<16x5xbf16>
      %c4 = arith.constant 4 : index
      %c0_25 = arith.constant 0 : index
      %c0_26 = arith.constant 0 : index
      %33 = vector.load %arg3[%c4, %c0_25, %c0_26] : memref<9x5x256xbf16, #tpu.memory_space<vmem>>, vector<1x5x256xbf16>
      %34 = vector.shape_cast %33 : vector<1x5x256xbf16> to vector<5x256xbf16>
      %cst_27 = arith.constant dense<0.000000e+00> : vector<16x256xf32>
      %35 = tpu.matmul %32, %34, %cst_27 {dimension_numbers = #tpu.dot_dimension_numbers<[1], [0], [0], [1], [0, 0, 1, 1], [], []>} : vector<16x5xbf16>, vector<5x256xbf16>, vector<16x256xf32> -> vector<16x256xf32>
      %36 = arith.addf %31, %35 : vector<16x256xf32>
      %37 = vector.extract_strided_slice %26 {offsets = [2, 0], sizes = [16, 5], strides = [1, 1]} : vector<18x5xbf16> to vector<16x5xbf16>
      %c5 = arith.constant 5 : index
      %c0_28 = arith.constant 0 : index
      %c0_29 = arith.constant 0 : index
      %38 = vector.load %arg3[%c5, %c0_28, %c0_29] : memref<9x5x256xbf16, #tpu.memory_space<vmem>>, vector<1x5x256xbf16>
      %39 = vector.shape_cast %38 : vector<1x5x256xbf16> to vector<5x256xbf16>
      %cst_30 = arith.constant dense<0.000000e+00> : vector<16x256xf32>
      %40 = tpu.matmul %37, %39, %cst_30 {dimension_numbers = #tpu.dot_dimension_numbers<[1], [0], [0], [1], [0, 0, 1, 1], [], []>} : vector<16x5xbf16>, vector<5x256xbf16>, vector<16x256xf32> -> vector<16x256xf32>
      %41 = arith.addf %36, %40 : vector<16x256xf32>
      %c1_i32_31 = arith.constant 1 : i32
      %42 = arith.muli %arg5, %c1_i32_31 : i32
      %c2_i32 = arith.constant 2 : i32
      %43 = arith.addi %42, %c2_i32 : i32
      %c0_32 = arith.constant 0 : index
      %c0_33 = arith.constant 0 : index
      %44 = arith.index_cast %43 : i32 to index
      %c0_34 = arith.constant 0 : index
      %c0_35 = arith.constant 0 : index
      %45 = vector.load %arg2[%c0_32, %c0_33, %44, %c0_34, %c0_35] : memref<1x1x18x18x5xbf16, #tpu.memory_space<vmem>>, vector<1x1x1x18x5xbf16>
      %46 = vector.shape_cast %45 : vector<1x1x1x18x5xbf16> to vector<18x5xbf16>
      %47 = vector.extract_strided_slice %46 {offsets = [0, 0], sizes = [16, 5], strides = [1, 1]} : vector<18x5xbf16> to vector<16x5xbf16>
      %c6 = arith.constant 6 : index
      %c0_36 = arith.constant 0 : index
      %c0_37 = arith.constant 0 : index
      %48 = vector.load %arg3[%c6, %c0_36, %c0_37] : memref<9x5x256xbf16, #tpu.memory_space<vmem>>, vector<1x5x256xbf16>
      %49 = vector.shape_cast %48 : vector<1x5x256xbf16> to vector<5x256xbf16>
      %cst_38 = arith.constant dense<0.000000e+00> : vector<16x256xf32>
      %50 = tpu.matmul %47, %49, %cst_38 {dimension_numbers = #tpu.dot_dimension_numbers<[1], [0], [0], [1], [0, 0, 1, 1], [], []>} : vector<16x5xbf16>, vector<5x256xbf16>, vector<16x256xf32> -> vector<16x256xf32>
      %51 = arith.addf %41, %50 : vector<16x256xf32>
      %52 = vector.extract_strided_slice %46 {offsets = [1, 0], sizes = [16, 5], strides = [1, 1]} : vector<18x5xbf16> to vector<16x5xbf16>
      %c7 = arith.constant 7 : index
      %c0_39 = arith.constant 0 : index
      %c0_40 = arith.constant 0 : index
      %53 = vector.load %arg3[%c7, %c0_39, %c0_40] : memref<9x5x256xbf16, #tpu.memory_space<vmem>>, vector<1x5x256xbf16>
      %54 = vector.shape_cast %53 : vector<1x5x256xbf16> to vector<5x256xbf16>
      %cst_41 = arith.constant dense<0.000000e+00> : vector<16x256xf32>
      %55 = tpu.matmul %52, %54, %cst_41 {dimension_numbers = #tpu.dot_dimension_numbers<[1], [0], [0], [1], [0, 0, 1, 1], [], []>} : vector<16x5xbf16>, vector<5x256xbf16>, vector<16x256xf32> -> vector<16x256xf32>
      %56 = arith.addf %51, %55 : vector<16x256xf32>
      %57 = vector.extract_strided_slice %46 {offsets = [2, 0], sizes = [16, 5], strides = [1, 1]} : vector<18x5xbf16> to vector<16x5xbf16>
      %c8 = arith.constant 8 : index
      %c0_42 = arith.constant 0 : index
      %c0_43 = arith.constant 0 : index
      %58 = vector.load %arg3[%c8, %c0_42, %c0_43] : memref<9x5x256xbf16, #tpu.memory_space<vmem>>, vector<1x5x256xbf16>
      %59 = vector.shape_cast %58 : vector<1x5x256xbf16> to vector<5x256xbf16>
      %cst_44 = arith.constant dense<0.000000e+00> : vector<16x256xf32>
      %60 = tpu.matmul %57, %59, %cst_44 {dimension_numbers = #tpu.dot_dimension_numbers<[1], [0], [0], [1], [0, 0, 1, 1], [], []>} : vector<16x5xbf16>, vector<5x256xbf16>, vector<16x256xf32> -> vector<16x256xf32>
      %61 = arith.addf %56, %60 : vector<16x256xf32>
      %62 = vector.extract_strided_slice %61 {offsets = [0, 0], sizes = [16, 128], strides = [1, 1]} : vector<16x256xf32> to vector<16x128xf32>
      %63 = vector.extract_strided_slice %61 {offsets = [0, 128], sizes = [16, 128], strides = [1, 1]} : vector<16x256xf32> to vector<16x128xf32>
      %64 = arith.negf %63 : vector<16x128xf32>
      %65 = math.exp %64 : vector<16x128xf32>
      %cst_45 = arith.constant 1.000000e+00 : f32
      %66 = vector.broadcast %cst_45 : f32 to vector<16x128xf32>
      %67 = arith.addf %66, %65 : vector<16x128xf32>
      %68 = arith.divf %66, %67 : vector<16x128xf32>
      %cst_46 = arith.constant 0.000000e+00 : f32
      %69 = vector.broadcast %cst_46 : f32 to vector<16x128xf32>
      %70 = arith.maximumf %62, %69 : vector<16x128xf32>
      %71 = arith.mulf %68, %70 : vector<16x128xf32>
      %72 = vector.extract_strided_slice %71 {offsets = [0, 0], sizes = [16, 32], strides = [1, 1]} : vector<16x128xf32> to vector<16x32xf32>
      %73 = arith.truncf %72 : vector<16x32xf32> to vector<16x32xbf16>
      %c0_47 = arith.constant 0 : index
      %74 = arith.index_cast %arg5 : i32 to index
      %c0_48 = arith.constant 0 : index
      %c0_49 = arith.constant 0 : index
      %75 = vector.load %arg4[%c0_47, %74, %c0_48, %c0_49] : memref<1x16x16x32xbf16, #tpu.memory_space<vmem>>, vector<1x1x16x32xbf16>
      %76 = vector.shape_cast %75 : vector<1x1x16x32xbf16> to vector<16x32xbf16>
      %77 = vector.shape_cast %73 : vector<16x32xbf16> to vector<1x1x16x32xbf16>
      tpu.vector_store %arg4[%c0_47, %74, %c0_48, %c0_49], %77 {strides = array<i32>} : memref<1x16x16x32xbf16, #tpu.memory_space<vmem>>, vector<1x1x16x32xbf16>,
    }
    %c16_i32_0 = arith.constant 16 : i32
    return
  }
  func.func @transform_0(%arg0: i32, %arg1: i32) -> (i32, i32, i32, i32, i32) {
    %c0_i32 = arith.constant 0 : i32
    %c0_i32_0 = arith.constant 0 : i32
    %c0_i32_1 = arith.constant 0 : i32
    %c0_i32_2 = arith.constant 0 : i32
    return %arg0, %arg1, %c0_i32, %c0_i32_0, %c0_i32_1 : i32, i32, i32, i32, i32
  }
  func.func @transform_1(%arg0: i32, %arg1: i32) -> (i32, i32, i32) {
    %c0_i32 = arith.constant 0 : i32
    %c0_i32_0 = arith.constant 0 : i32
    %c0_i32_1 = arith.constant 0 : i32
    %c0_i32_2 = arith.constant 0 : i32
    return %c0_i32, %c0_i32_0, %c0_i32_1 : i32, i32, i32
  }
  func.func @transform_2(%arg0: i32, %arg1: i32) -> (i32, i32, i32, i32) {
    %c0_i32 = arith.constant 0 : i32
    %c0_i32_0 = arith.constant 0 : i32
    %c0_i32_1 = arith.constant 0 : i32
    return %arg0, %arg1, %c0_i32, %c0_i32_0 : i32, i32, i32, i32
  }
}

module attributes {stable_mosaic.version = 11 : i64} {
  func.func @_gated_conv_kernel(%arg0: i32, %arg1: i32, %arg2: memref<1x1x17x18x32xbf16, #tpu.memory_space<vmem>>, %arg3: memref<9x32x256xbf16, #tpu.memory_space<vmem>>, %arg4: memref<1x8x8x64xbf16, #tpu.memory_space<vmem>>) attributes {dimension_semantics = [#tpu.dimension_semantics<parallel>, #tpu.dimension_semantics<parallel>], iteration_bounds = array<i64: 2, 1>, scalar_prefetch = 0 : i64, scratch_operands = 0 : i64, tpu.core_type = #tpu.core_type<tc>, window_params = [{transform_indices = @transform_0, window_bounds = array<i64: 1, 1, 17, 18, 32>}, {pipeline_mode = #tpu.pipeline_mode<synchronous>, transform_indices = @transform_1, window_bounds = array<i64: 9, 32, 256>}, {transform_indices = @transform_2, window_bounds = array<i64: 1, 8, 8, 64>}]} {
    %c0_i32 = arith.constant 0 : i32
    %c8_i32 = arith.constant 8 : i32
    %0 = arith.addi %c0_i32, %c8_i32 : i32
    %c1_i32 = arith.constant 1 : i32
    scf.for %arg5 = %c0_i32 to %0 step %c1_i32  : i32 {
      %cst = arith.constant 0.000000e+00 : f32
      %1 = vector.broadcast %cst : f32 to vector<8x256xf32>
      %c2_i32 = arith.constant 2 : i32
      %2 = arith.muli %arg5, %c2_i32 : i32
      %c0_i32_1 = arith.constant 0 : i32
      %3 = arith.addi %2, %c0_i32_1 : i32
      %c0 = arith.constant 0 : index
      %c0_2 = arith.constant 0 : index
      %4 = arith.index_cast %3 : i32 to index
      %c0_3 = arith.constant 0 : index
      %c0_4 = arith.constant 0 : index
      %5 = vector.load %arg2[%c0, %c0_2, %4, %c0_3, %c0_4] : memref<1x1x17x18x32xbf16, #tpu.memory_space<vmem>>, vector<1x1x1x18x32xbf16>
      %6 = vector.shape_cast %5 : vector<1x1x1x18x32xbf16> to vector<18x32xbf16>
      %7 = vector.extract_strided_slice %6 {offsets = [0, 0], sizes = [8, 32], strides = [1, 1]} : vector<18x32xbf16> to vector<8x32xbf16>
      %c0_5 = arith.constant 0 : index
      %c0_6 = arith.constant 0 : index
      %c0_7 = arith.constant 0 : index
      %8 = vector.load %arg3[%c0_5, %c0_6, %c0_7] : memref<9x32x256xbf16, #tpu.memory_space<vmem>>, vector<1x32x256xbf16>
      %9 = vector.shape_cast %8 : vector<1x32x256xbf16> to vector<32x256xbf16>
      %cst_8 = arith.constant dense<0.000000e+00> : vector<8x256xf32>
      %10 = tpu.matmul %7, %9, %cst_8 {dimension_numbers = #tpu.dot_dimension_numbers<[1], [0], [0], [1], [0, 0, 1, 1], [], []>} : vector<8x32xbf16>, vector<32x256xbf16>, vector<8x256xf32> -> vector<8x256xf32>
      %11 = arith.addf %1, %10 : vector<8x256xf32>
      %12 = vector.extract_strided_slice %6 {offsets = [9, 0], sizes = [8, 32], strides = [1, 1]} : vector<18x32xbf16> to vector<8x32xbf16>
      %c1 = arith.constant 1 : index
      %c0_9 = arith.constant 0 : index
      %c0_10 = arith.constant 0 : index
      %13 = vector.load %arg3[%c1, %c0_9, %c0_10] : memref<9x32x256xbf16, #tpu.memory_space<vmem>>, vector<1x32x256xbf16>
      %14 = vector.shape_cast %13 : vector<1x32x256xbf16> to vector<32x256xbf16>
      %cst_11 = arith.constant dense<0.000000e+00> : vector<8x256xf32>
      %15 = tpu.matmul %12, %14, %cst_11 {dimension_numbers = #tpu.dot_dimension_numbers<[1], [0], [0], [1], [0, 0, 1, 1], [], []>} : vector<8x32xbf16>, vector<32x256xbf16>, vector<8x256xf32> -> vector<8x256xf32>
      %16 = arith.addf %11, %15 : vector<8x256xf32>
      %17 = vector.extract_strided_slice %6 {offsets = [1, 0], sizes = [8, 32], strides = [1, 1]} : vector<18x32xbf16> to vector<8x32xbf16>
      %c2 = arith.constant 2 : index
      %c0_12 = arith.constant 0 : index
      %c0_13 = arith.constant 0 : index
      %18 = vector.load %arg3[%c2, %c0_12, %c0_13] : memref<9x32x256xbf16, #tpu.memory_space<vmem>>, vector<1x32x256xbf16>
      %19 = vector.shape_cast %18 : vector<1x32x256xbf16> to vector<32x256xbf16>
      %cst_14 = arith.constant dense<0.000000e+00> : vector<8x256xf32>
      %20 = tpu.matmul %17, %19, %cst_14 {dimension_numbers = #tpu.dot_dimension_numbers<[1], [0], [0], [1], [0, 0, 1, 1], [], []>} : vector<8x32xbf16>, vector<32x256xbf16>, vector<8x256xf32> -> vector<8x256xf32>
      %21 = arith.addf %16, %20 : vector<8x256xf32>
      %c2_i32_15 = arith.constant 2 : i32
      %22 = arith.muli %arg5, %c2_i32_15 : i32
      %c1_i32_16 = arith.constant 1 : i32
      %23 = arith.addi %22, %c1_i32_16 : i32
      %c0_17 = arith.constant 0 : index
      %c0_18 = arith.constant 0 : index
      %24 = arith.index_cast %23 : i32 to index
      %c0_19 = arith.constant 0 : index
      %c0_20 = arith.constant 0 : index
      %25 = vector.load %arg2[%c0_17, %c0_18, %24, %c0_19, %c0_20] : memref<1x1x17x18x32xbf16, #tpu.memory_space<vmem>>, vector<1x1x1x18x32xbf16>
      %26 = vector.shape_cast %25 : vector<1x1x1x18x32xbf16> to vector<18x32xbf16>
      %27 = vector.extract_strided_slice %26 {offsets = [0, 0], sizes = [8, 32], strides = [1, 1]} : vector<18x32xbf16> to vector<8x32xbf16>
      %c3 = arith.constant 3 : index
      %c0_21 = arith.constant 0 : index
      %c0_22 = arith.constant 0 : index
      %28 = vector.load %arg3[%c3, %c0_21, %c0_22] : memref<9x32x256xbf16, #tpu.memory_space<vmem>>, vector<1x32x256xbf16>
      %29 = vector.shape_cast %28 : vector<1x32x256xbf16> to vector<32x256xbf16>
      %cst_23 = arith.constant dense<0.000000e+00> : vector<8x256xf32>
      %30 = tpu.matmul %27, %29, %cst_23 {dimension_numbers = #tpu.dot_dimension_numbers<[1], [0], [0], [1], [0, 0, 1, 1], [], []>} : vector<8x32xbf16>, vector<32x256xbf16>, vector<8x256xf32> -> vector<8x256xf32>
      %31 = arith.addf %21, %30 : vector<8x256xf32>
      %32 = vector.extract_strided_slice %26 {offsets = [9, 0], sizes = [8, 32], strides = [1, 1]} : vector<18x32xbf16> to vector<8x32xbf16>
      %c4 = arith.constant 4 : index
      %c0_24 = arith.constant 0 : index
      %c0_25 = arith.constant 0 : index
      %33 = vector.load %arg3[%c4, %c0_24, %c0_25] : memref<9x32x256xbf16, #tpu.memory_space<vmem>>, vector<1x32x256xbf16>
      %34 = vector.shape_cast %33 : vector<1x32x256xbf16> to vector<32x256xbf16>
      %cst_26 = arith.constant dense<0.000000e+00> : vector<8x256xf32>
      %35 = tpu.matmul %32, %34, %cst_26 {dimension_numbers = #tpu.dot_dimension_numbers<[1], [0], [0], [1], [0, 0, 1, 1], [], []>} : vector<8x32xbf16>, vector<32x256xbf16>, vector<8x256xf32> -> vector<8x256xf32>
      %36 = arith.addf %31, %35 : vector<8x256xf32>
      %37 = vector.extract_strided_slice %26 {offsets = [1, 0], sizes = [8, 32], strides = [1, 1]} : vector<18x32xbf16> to vector<8x32xbf16>
      %c5 = arith.constant 5 : index
      %c0_27 = arith.constant 0 : index
      %c0_28 = arith.constant 0 : index
      %38 = vector.load %arg3[%c5, %c0_27, %c0_28] : memref<9x32x256xbf16, #tpu.memory_space<vmem>>, vector<1x32x256xbf16>
      %39 = vector.shape_cast %38 : vector<1x32x256xbf16> to vector<32x256xbf16>
      %cst_29 = arith.constant dense<0.000000e+00> : vector<8x256xf32>
      %40 = tpu.matmul %37, %39, %cst_29 {dimension_numbers = #tpu.dot_dimension_numbers<[1], [0], [0], [1], [0, 0, 1, 1], [], []>} : vector<8x32xbf16>, vector<32x256xbf16>, vector<8x256xf32> -> vector<8x256xf32>
      %41 = arith.addf %36, %40 : vector<8x256xf32>
      %c2_i32_30 = arith.constant 2 : i32
      %42 = arith.muli %arg5, %c2_i32_30 : i32
      %c2_i32_31 = arith.constant 2 : i32
      %43 = arith.addi %42, %c2_i32_31 : i32
      %c0_32 = arith.constant 0 : index
      %c0_33 = arith.constant 0 : index
      %44 = arith.index_cast %43 : i32 to index
      %c0_34 = arith.constant 0 : index
      %c0_35 = arith.constant 0 : index
      %45 = vector.load %arg2[%c0_32, %c0_33, %44, %c0_34, %c0_35] : memref<1x1x17x18x32xbf16, #tpu.memory_space<vmem>>, vector<1x1x1x18x32xbf16>
      %46 = vector.shape_cast %45 : vector<1x1x1x18x32xbf16> to vector<18x32xbf16>
      %47 = vector.extract_strided_slice %46 {offsets = [0, 0], sizes = [8, 32], strides = [1, 1]} : vector<18x32xbf16> to vector<8x32xbf16>
      %c6 = arith.constant 6 : index
      %c0_36 = arith.constant 0 : index
      %c0_37 = arith.constant 0 : index
      %48 = vector.load %arg3[%c6, %c0_36, %c0_37] : memref<9x32x256xbf16, #tpu.memory_space<vmem>>, vector<1x32x256xbf16>
      %49 = vector.shape_cast %48 : vector<1x32x256xbf16> to vector<32x256xbf16>
      %cst_38 = arith.constant dense<0.000000e+00> : vector<8x256xf32>
      %50 = tpu.matmul %47, %49, %cst_38 {dimension_numbers = #tpu.dot_dimension_numbers<[1], [0], [0], [1], [0, 0, 1, 1], [], []>} : vector<8x32xbf16>, vector<32x256xbf16>, vector<8x256xf32> -> vector<8x256xf32>
      %51 = arith.addf %41, %50 : vector<8x256xf32>
      %52 = vector.extract_strided_slice %46 {offsets = [9, 0], sizes = [8, 32], strides = [1, 1]} : vector<18x32xbf16> to vector<8x32xbf16>
      %c7 = arith.constant 7 : index
      %c0_39 = arith.constant 0 : index
      %c0_40 = arith.constant 0 : index
      %53 = vector.load %arg3[%c7, %c0_39, %c0_40] : memref<9x32x256xbf16, #tpu.memory_space<vmem>>, vector<1x32x256xbf16>
      %54 = vector.shape_cast %53 : vector<1x32x256xbf16> to vector<32x256xbf16>
      %cst_41 = arith.constant dense<0.000000e+00> : vector<8x256xf32>
      %55 = tpu.matmul %52, %54, %cst_41 {dimension_numbers = #tpu.dot_dimension_numbers<[1], [0], [0], [1], [0, 0, 1, 1], [], []>} : vector<8x32xbf16>, vector<32x256xbf16>, vector<8x256xf32> -> vector<8x256xf32>
      %56 = arith.addf %51, %55 : vector<8x256xf32>
      %57 = vector.extract_strided_slice %46 {offsets = [1, 0], sizes = [8, 32], strides = [1, 1]} : vector<18x32xbf16> to vector<8x32xbf16>
      %c8 = arith.constant 8 : index
      %c0_42 = arith.constant 0 : index
      %c0_43 = arith.constant 0 : index
      %58 = vector.load %arg3[%c8, %c0_42, %c0_43] : memref<9x32x256xbf16, #tpu.memory_space<vmem>>, vector<1x32x256xbf16>
      %59 = vector.shape_cast %58 : vector<1x32x256xbf16> to vector<32x256xbf16>
      %cst_44 = arith.constant dense<0.000000e+00> : vector<8x256xf32>
      %60 = tpu.matmul %57, %59, %cst_44 {dimension_numbers = #tpu.dot_dimension_numbers<[1], [0], [0], [1], [0, 0, 1, 1], [], []>} : vector<8x32xbf16>, vector<32x256xbf16>, vector<8x256xf32> -> vector<8x256xf32>
      %61 = arith.addf %56, %60 : vector<8x256xf32>
      %62 = vector.extract_strided_slice %61 {offsets = [0, 0], sizes = [8, 128], strides = [1, 1]} : vector<8x256xf32> to vector<8x128xf32>
      %63 = vector.extract_strided_slice %61 {offsets = [0, 128], sizes = [8, 128], strides = [1, 1]} : vector<8x256xf32> to vector<8x128xf32>
      %64 = arith.negf %63 : vector<8x128xf32>
      %65 = math.exp %64 : vector<8x128xf32>
      %cst_45 = arith.constant 1.000000e+00 : f32
      %66 = vector.broadcast %cst_45 : f32 to vector<8x128xf32>
      %67 = arith.addf %66, %65 : vector<8x128xf32>
      %68 = arith.divf %66, %67 : vector<8x128xf32>
      %cst_46 = arith.constant 0.000000e+00 : f32
      %69 = vector.broadcast %cst_46 : f32 to vector<8x128xf32>
      %70 = arith.maximumf %62, %69 : vector<8x128xf32>
      %71 = arith.mulf %68, %70 : vector<8x128xf32>
      %72 = vector.extract_strided_slice %71 {offsets = [0, 0], sizes = [8, 64], strides = [1, 1]} : vector<8x128xf32> to vector<8x64xf32>
      %73 = arith.truncf %72 : vector<8x64xf32> to vector<8x64xbf16>
      %c0_47 = arith.constant 0 : index
      %74 = arith.index_cast %arg5 : i32 to index
      %c0_48 = arith.constant 0 : index
      %c0_49 = arith.constant 0 : index
      %75 = vector.load %arg4[%c0_47, %74, %c0_48, %c0_49] : memref<1x8x8x64xbf16, #tpu.memory_space<vmem>>, vector<1x1x8x64xbf16>
      %76 = vector.shape_cast %75 : vector<1x1x8x64xbf16> to vector<8x64xbf16>
      %77 = vector.shape_cast %73 : vector<8x64xbf16> to vector<1x1x8x64xbf16>
      tpu.vector_store %arg4[%c0_47, %74, %c0_48, %c0_49], %77 {strides = array<i32>} : memref<1x8x8x64xbf16, #tpu.memory_space<vmem>>, vector<1x1x8x64xbf16>,
    }
    %c8_i32_0 = arith.constant 8 : i32
    return
  }
  func.func @transform_0(%arg0: i32, %arg1: i32) -> (i32, i32, i32, i32, i32) {
    %c0_i32 = arith.constant 0 : i32
    %c0_i32_0 = arith.constant 0 : i32
    %c0_i32_1 = arith.constant 0 : i32
    %c0_i32_2 = arith.constant 0 : i32
    return %arg0, %arg1, %c0_i32, %c0_i32_0, %c0_i32_1 : i32, i32, i32, i32, i32
  }
  func.func @transform_1(%arg0: i32, %arg1: i32) -> (i32, i32, i32) {
    %c0_i32 = arith.constant 0 : i32
    %c0_i32_0 = arith.constant 0 : i32
    %c0_i32_1 = arith.constant 0 : i32
    %c0_i32_2 = arith.constant 0 : i32
    return %c0_i32, %c0_i32_0, %c0_i32_1 : i32, i32, i32
  }
  func.func @transform_2(%arg0: i32, %arg1: i32) -> (i32, i32, i32, i32) {
    %c0_i32 = arith.constant 0 : i32
    %c0_i32_0 = arith.constant 0 : i32
    %c0_i32_1 = arith.constant 0 : i32
    return %arg0, %arg1, %c0_i32, %c0_i32_0 : i32, i32, i32, i32
  }
}

module attributes {stable_mosaic.version = 11 : i64} {
  func.func @_gated_conv_kernel(%arg0: i32, %arg1: i32, %arg2: memref<1x1x10x10x64xbf16, #tpu.memory_space<vmem>>, %arg3: memref<9x64x256xbf16, #tpu.memory_space<vmem>>, %arg4: memref<1x8x8x64xbf16, #tpu.memory_space<vmem>>) attributes {dimension_semantics = [#tpu.dimension_semantics<parallel>, #tpu.dimension_semantics<parallel>], iteration_bounds = array<i64: 2, 1>, scalar_prefetch = 0 : i64, scratch_operands = 0 : i64, tpu.core_type = #tpu.core_type<tc>, window_params = [{transform_indices = @transform_0, window_bounds = array<i64: 1, 1, 10, 10, 64>}, {pipeline_mode = #tpu.pipeline_mode<synchronous>, transform_indices = @transform_1, window_bounds = array<i64: 9, 64, 256>}, {transform_indices = @transform_2, window_bounds = array<i64: 1, 8, 8, 64>}]} {
    %c0_i32 = arith.constant 0 : i32
    %c8_i32 = arith.constant 8 : i32
    %0 = arith.addi %c0_i32, %c8_i32 : i32
    %c1_i32 = arith.constant 1 : i32
    scf.for %arg5 = %c0_i32 to %0 step %c1_i32  : i32 {
      %cst = arith.constant 0.000000e+00 : f32
      %1 = vector.broadcast %cst : f32 to vector<8x256xf32>
      %c1_i32_1 = arith.constant 1 : i32
      %2 = arith.muli %arg5, %c1_i32_1 : i32
      %c0_i32_2 = arith.constant 0 : i32
      %3 = arith.addi %2, %c0_i32_2 : i32
      %c0 = arith.constant 0 : index
      %c0_3 = arith.constant 0 : index
      %4 = arith.index_cast %3 : i32 to index
      %c0_4 = arith.constant 0 : index
      %c0_5 = arith.constant 0 : index
      %5 = vector.load %arg2[%c0, %c0_3, %4, %c0_4, %c0_5] : memref<1x1x10x10x64xbf16, #tpu.memory_space<vmem>>, vector<1x1x1x10x64xbf16>
      %6 = vector.shape_cast %5 : vector<1x1x1x10x64xbf16> to vector<10x64xbf16>
      %7 = vector.extract_strided_slice %6 {offsets = [0, 0], sizes = [8, 64], strides = [1, 1]} : vector<10x64xbf16> to vector<8x64xbf16>
      %c0_6 = arith.constant 0 : index
      %c0_7 = arith.constant 0 : index
      %c0_8 = arith.constant 0 : index
      %8 = vector.load %arg3[%c0_6, %c0_7, %c0_8] : memref<9x64x256xbf16, #tpu.memory_space<vmem>>, vector<1x64x256xbf16>
      %9 = vector.shape_cast %8 : vector<1x64x256xbf16> to vector<64x256xbf16>
      %cst_9 = arith.constant dense<0.000000e+00> : vector<8x256xf32>
      %10 = tpu.matmul %7, %9, %cst_9 {dimension_numbers = #tpu.dot_dimension_numbers<[1], [0], [0], [1], [0, 0, 1, 1], [], []>} : vector<8x64xbf16>, vector<64x256xbf16>, vector<8x256xf32> -> vector<8x256xf32>
      %11 = arith.addf %1, %10 : vector<8x256xf32>
      %12 = vector.extract_strided_slice %6 {offsets = [1, 0], sizes = [8, 64], strides = [1, 1]} : vector<10x64xbf16> to vector<8x64xbf16>
      %c1 = arith.constant 1 : index
      %c0_10 = arith.constant 0 : index
      %c0_11 = arith.constant 0 : index
      %13 = vector.load %arg3[%c1, %c0_10, %c0_11] : memref<9x64x256xbf16, #tpu.memory_space<vmem>>, vector<1x64x256xbf16>
      %14 = vector.shape_cast %13 : vector<1x64x256xbf16> to vector<64x256xbf16>
      %cst_12 = arith.constant dense<0.000000e+00> : vector<8x256xf32>
      %15 = tpu.matmul %12, %14, %cst_12 {dimension_numbers = #tpu.dot_dimension_numbers<[1], [0], [0], [1], [0, 0, 1, 1], [], []>} : vector<8x64xbf16>, vector<64x256xbf16>, vector<8x256xf32> -> vector<8x256xf32>
      %16 = arith.addf %11, %15 : vector<8x256xf32>
      %17 = vector.extract_strided_slice %6 {offsets = [2, 0], sizes = [8, 64], strides = [1, 1]} : vector<10x64xbf16> to vector<8x64xbf16>
      %c2 = arith.constant 2 : index
      %c0_13 = arith.constant 0 : index
      %c0_14 = arith.constant 0 : index
      %18 = vector.load %arg3[%c2, %c0_13, %c0_14] : memref<9x64x256xbf16, #tpu.memory_space<vmem>>, vector<1x64x256xbf16>
      %19 = vector.shape_cast %18 : vector<1x64x256xbf16> to vector<64x256xbf16>
      %cst_15 = arith.constant dense<0.000000e+00> : vector<8x256xf32>
      %20 = tpu.matmul %17, %19, %cst_15 {dimension_numbers = #tpu.dot_dimension_numbers<[1], [0], [0], [1], [0, 0, 1, 1], [], []>} : vector<8x64xbf16>, vector<64x256xbf16>, vector<8x256xf32> -> vector<8x256xf32>
      %21 = arith.addf %16, %20 : vector<8x256xf32>
      %c1_i32_16 = arith.constant 1 : i32
      %22 = arith.muli %arg5, %c1_i32_16 : i32
      %c1_i32_17 = arith.constant 1 : i32
      %23 = arith.addi %22, %c1_i32_17 : i32
      %c0_18 = arith.constant 0 : index
      %c0_19 = arith.constant 0 : index
      %24 = arith.index_cast %23 : i32 to index
      %c0_20 = arith.constant 0 : index
      %c0_21 = arith.constant 0 : index
      %25 = vector.load %arg2[%c0_18, %c0_19, %24, %c0_20, %c0_21] : memref<1x1x10x10x64xbf16, #tpu.memory_space<vmem>>, vector<1x1x1x10x64xbf16>
      %26 = vector.shape_cast %25 : vector<1x1x1x10x64xbf16> to vector<10x64xbf16>
      %27 = vector.extract_strided_slice %26 {offsets = [0, 0], sizes = [8, 64], strides = [1, 1]} : vector<10x64xbf16> to vector<8x64xbf16>
      %c3 = arith.constant 3 : index
      %c0_22 = arith.constant 0 : index
      %c0_23 = arith.constant 0 : index
      %28 = vector.load %arg3[%c3, %c0_22, %c0_23] : memref<9x64x256xbf16, #tpu.memory_space<vmem>>, vector<1x64x256xbf16>
      %29 = vector.shape_cast %28 : vector<1x64x256xbf16> to vector<64x256xbf16>
      %cst_24 = arith.constant dense<0.000000e+00> : vector<8x256xf32>
      %30 = tpu.matmul %27, %29, %cst_24 {dimension_numbers = #tpu.dot_dimension_numbers<[1], [0], [0], [1], [0, 0, 1, 1], [], []>} : vector<8x64xbf16>, vector<64x256xbf16>, vector<8x256xf32> -> vector<8x256xf32>
      %31 = arith.addf %21, %30 : vector<8x256xf32>
      %32 = vector.extract_strided_slice %26 {offsets = [1, 0], sizes = [8, 64], strides = [1, 1]} : vector<10x64xbf16> to vector<8x64xbf16>
      %c4 = arith.constant 4 : index
      %c0_25 = arith.constant 0 : index
      %c0_26 = arith.constant 0 : index
      %33 = vector.load %arg3[%c4, %c0_25, %c0_26] : memref<9x64x256xbf16, #tpu.memory_space<vmem>>, vector<1x64x256xbf16>
      %34 = vector.shape_cast %33 : vector<1x64x256xbf16> to vector<64x256xbf16>
      %cst_27 = arith.constant dense<0.000000e+00> : vector<8x256xf32>
      %35 = tpu.matmul %32, %34, %cst_27 {dimension_numbers = #tpu.dot_dimension_numbers<[1], [0], [0], [1], [0, 0, 1, 1], [], []>} : vector<8x64xbf16>, vector<64x256xbf16>, vector<8x256xf32> -> vector<8x256xf32>
      %36 = arith.addf %31, %35 : vector<8x256xf32>
      %37 = vector.extract_strided_slice %26 {offsets = [2, 0], sizes = [8, 64], strides = [1, 1]} : vector<10x64xbf16> to vector<8x64xbf16>
      %c5 = arith.constant 5 : index
      %c0_28 = arith.constant 0 : index
      %c0_29 = arith.constant 0 : index
      %38 = vector.load %arg3[%c5, %c0_28, %c0_29] : memref<9x64x256xbf16, #tpu.memory_space<vmem>>, vector<1x64x256xbf16>
      %39 = vector.shape_cast %38 : vector<1x64x256xbf16> to vector<64x256xbf16>
      %cst_30 = arith.constant dense<0.000000e+00> : vector<8x256xf32>
      %40 = tpu.matmul %37, %39, %cst_30 {dimension_numbers = #tpu.dot_dimension_numbers<[1], [0], [0], [1], [0, 0, 1, 1], [], []>} : vector<8x64xbf16>, vector<64x256xbf16>, vector<8x256xf32> -> vector<8x256xf32>
      %41 = arith.addf %36, %40 : vector<8x256xf32>
      %c1_i32_31 = arith.constant 1 : i32
      %42 = arith.muli %arg5, %c1_i32_31 : i32
      %c2_i32 = arith.constant 2 : i32
      %43 = arith.addi %42, %c2_i32 : i32
      %c0_32 = arith.constant 0 : index
      %c0_33 = arith.constant 0 : index
      %44 = arith.index_cast %43 : i32 to index
      %c0_34 = arith.constant 0 : index
      %c0_35 = arith.constant 0 : index
      %45 = vector.load %arg2[%c0_32, %c0_33, %44, %c0_34, %c0_35] : memref<1x1x10x10x64xbf16, #tpu.memory_space<vmem>>, vector<1x1x1x10x64xbf16>
      %46 = vector.shape_cast %45 : vector<1x1x1x10x64xbf16> to vector<10x64xbf16>
      %47 = vector.extract_strided_slice %46 {offsets = [0, 0], sizes = [8, 64], strides = [1, 1]} : vector<10x64xbf16> to vector<8x64xbf16>
      %c6 = arith.constant 6 : index
      %c0_36 = arith.constant 0 : index
      %c0_37 = arith.constant 0 : index
      %48 = vector.load %arg3[%c6, %c0_36, %c0_37] : memref<9x64x256xbf16, #tpu.memory_space<vmem>>, vector<1x64x256xbf16>
      %49 = vector.shape_cast %48 : vector<1x64x256xbf16> to vector<64x256xbf16>
      %cst_38 = arith.constant dense<0.000000e+00> : vector<8x256xf32>
      %50 = tpu.matmul %47, %49, %cst_38 {dimension_numbers = #tpu.dot_dimension_numbers<[1], [0], [0], [1], [0, 0, 1, 1], [], []>} : vector<8x64xbf16>, vector<64x256xbf16>, vector<8x256xf32> -> vector<8x256xf32>
      %51 = arith.addf %41, %50 : vector<8x256xf32>
      %52 = vector.extract_strided_slice %46 {offsets = [1, 0], sizes = [8, 64], strides = [1, 1]} : vector<10x64xbf16> to vector<8x64xbf16>
      %c7 = arith.constant 7 : index
      %c0_39 = arith.constant 0 : index
      %c0_40 = arith.constant 0 : index
      %53 = vector.load %arg3[%c7, %c0_39, %c0_40] : memref<9x64x256xbf16, #tpu.memory_space<vmem>>, vector<1x64x256xbf16>
      %54 = vector.shape_cast %53 : vector<1x64x256xbf16> to vector<64x256xbf16>
      %cst_41 = arith.constant dense<0.000000e+00> : vector<8x256xf32>
      %55 = tpu.matmul %52, %54, %cst_41 {dimension_numbers = #tpu.dot_dimension_numbers<[1], [0], [0], [1], [0, 0, 1, 1], [], []>} : vector<8x64xbf16>, vector<64x256xbf16>, vector<8x256xf32> -> vector<8x256xf32>
      %56 = arith.addf %51, %55 : vector<8x256xf32>
      %57 = vector.extract_strided_slice %46 {offsets = [2, 0], sizes = [8, 64], strides = [1, 1]} : vector<10x64xbf16> to vector<8x64xbf16>
      %c8 = arith.constant 8 : index
      %c0_42 = arith.constant 0 : index
      %c0_43 = arith.constant 0 : index
      %58 = vector.load %arg3[%c8, %c0_42, %c0_43] : memref<9x64x256xbf16, #tpu.memory_space<vmem>>, vector<1x64x256xbf16>
      %59 = vector.shape_cast %58 : vector<1x64x256xbf16> to vector<64x256xbf16>
      %cst_44 = arith.constant dense<0.000000e+00> : vector<8x256xf32>
      %60 = tpu.matmul %57, %59, %cst_44 {dimension_numbers = #tpu.dot_dimension_numbers<[1], [0], [0], [1], [0, 0, 1, 1], [], []>} : vector<8x64xbf16>, vector<64x256xbf16>, vector<8x256xf32> -> vector<8x256xf32>
      %61 = arith.addf %56, %60 : vector<8x256xf32>
      %62 = vector.extract_strided_slice %61 {offsets = [0, 0], sizes = [8, 128], strides = [1, 1]} : vector<8x256xf32> to vector<8x128xf32>
      %63 = vector.extract_strided_slice %61 {offsets = [0, 128], sizes = [8, 128], strides = [1, 1]} : vector<8x256xf32> to vector<8x128xf32>
      %64 = arith.negf %63 : vector<8x128xf32>
      %65 = math.exp %64 : vector<8x128xf32>
      %cst_45 = arith.constant 1.000000e+00 : f32
      %66 = vector.broadcast %cst_45 : f32 to vector<8x128xf32>
      %67 = arith.addf %66, %65 : vector<8x128xf32>
      %68 = arith.divf %66, %67 : vector<8x128xf32>
      %cst_46 = arith.constant 0.000000e+00 : f32
      %69 = vector.broadcast %cst_46 : f32 to vector<8x128xf32>
      %70 = arith.maximumf %62, %69 : vector<8x128xf32>
      %71 = arith.mulf %68, %70 : vector<8x128xf32>
      %72 = vector.extract_strided_slice %71 {offsets = [0, 0], sizes = [8, 64], strides = [1, 1]} : vector<8x128xf32> to vector<8x64xf32>
      %73 = arith.truncf %72 : vector<8x64xf32> to vector<8x64xbf16>
      %c0_47 = arith.constant 0 : index
      %74 = arith.index_cast %arg5 : i32 to index
      %c0_48 = arith.constant 0 : index
      %c0_49 = arith.constant 0 : index
      %75 = vector.load %arg4[%c0_47, %74, %c0_48, %c0_49] : memref<1x8x8x64xbf16, #tpu.memory_space<vmem>>, vector<1x1x8x64xbf16>
      %76 = vector.shape_cast %75 : vector<1x1x8x64xbf16> to vector<8x64xbf16>
      %77 = vector.shape_cast %73 : vector<8x64xbf16> to vector<1x1x8x64xbf16>
      tpu.vector_store %arg4[%c0_47, %74, %c0_48, %c0_49], %77 {strides = array<i32>} : memref<1x8x8x64xbf16, #tpu.memory_space<vmem>>, vector<1x1x8x64xbf16>,
    }
    %c8_i32_0 = arith.constant 8 : i32
    return
  }
  func.func @transform_0(%arg0: i32, %arg1: i32) -> (i32, i32, i32, i32, i32) {
    %c0_i32 = arith.constant 0 : i32
    %c0_i32_0 = arith.constant 0 : i32
    %c0_i32_1 = arith.constant 0 : i32
    %c0_i32_2 = arith.constant 0 : i32
    return %arg0, %arg1, %c0_i32, %c0_i32_0, %c0_i32_1 : i32, i32, i32, i32, i32
  }
  func.func @transform_1(%arg0: i32, %arg1: i32) -> (i32, i32, i32) {
    %c0_i32 = arith.constant 0 : i32
    %c0_i32_0 = arith.constant 0 : i32
    %c0_i32_1 = arith.constant 0 : i32
    %c0_i32_2 = arith.constant 0 : i32
    return %c0_i32, %c0_i32_0, %c0_i32_1 : i32, i32, i32
  }
  func.func @transform_2(%arg0: i32, %arg1: i32) -> (i32, i32, i32, i32) {
    %c0_i32 = arith.constant 0 : i32
    %c0_i32_0 = arith.constant 0 : i32
    %c0_i32_1 = arith.constant 0 : i32
    return %arg0, %arg1, %c0_i32, %c0_i32_0 : i32, i32, i32, i32
  }
}

module attributes {stable_mosaic.version = 11 : i64} {
  func.func @_gated_conv_kernel(%arg0: i32, %arg1: i32, %arg2: memref<1x1x9x10x64xbf16, #tpu.memory_space<vmem>>, %arg3: memref<9x64x256xbf16, #tpu.memory_space<vmem>>, %arg4: memref<1x4x4x96xbf16, #tpu.memory_space<vmem>>) attributes {dimension_semantics = [#tpu.dimension_semantics<parallel>, #tpu.dimension_semantics<parallel>], iteration_bounds = array<i64: 2, 1>, scalar_prefetch = 0 : i64, scratch_operands = 0 : i64, tpu.core_type = #tpu.core_type<tc>, window_params = [{transform_indices = @transform_0, window_bounds = array<i64: 1, 1, 9, 10, 64>}, {pipeline_mode = #tpu.pipeline_mode<synchronous>, transform_indices = @transform_1, window_bounds = array<i64: 9, 64, 256>}, {transform_indices = @transform_2, window_bounds = array<i64: 1, 4, 4, 96>}]} {
    %c0_i32 = arith.constant 0 : i32
    %c4_i32 = arith.constant 4 : i32
    %0 = arith.addi %c0_i32, %c4_i32 : i32
    %c1_i32 = arith.constant 1 : i32
    scf.for %arg5 = %c0_i32 to %0 step %c1_i32  : i32 {
      %cst = arith.constant 0.000000e+00 : f32
      %1 = vector.broadcast %cst : f32 to vector<4x256xf32>
      %c2_i32 = arith.constant 2 : i32
      %2 = arith.muli %arg5, %c2_i32 : i32
      %c0_i32_1 = arith.constant 0 : i32
      %3 = arith.addi %2, %c0_i32_1 : i32
      %c0 = arith.constant 0 : index
      %c0_2 = arith.constant 0 : index
      %4 = arith.index_cast %3 : i32 to index
      %c0_3 = arith.constant 0 : index
      %c0_4 = arith.constant 0 : index
      %5 = vector.load %arg2[%c0, %c0_2, %4, %c0_3, %c0_4] : memref<1x1x9x10x64xbf16, #tpu.memory_space<vmem>>, vector<1x1x1x10x64xbf16>
      %6 = vector.shape_cast %5 : vector<1x1x1x10x64xbf16> to vector<10x64xbf16>
      %7 = vector.extract_strided_slice %6 {offsets = [0, 0], sizes = [4, 64], strides = [1, 1]} : vector<10x64xbf16> to vector<4x64xbf16>
      %c0_5 = arith.constant 0 : index
      %c0_6 = arith.constant 0 : index
      %c0_7 = arith.constant 0 : index
      %8 = vector.load %arg3[%c0_5, %c0_6, %c0_7] : memref<9x64x256xbf16, #tpu.memory_space<vmem>>, vector<1x64x256xbf16>
      %9 = vector.shape_cast %8 : vector<1x64x256xbf16> to vector<64x256xbf16>
      %cst_8 = arith.constant dense<0.000000e+00> : vector<4x256xf32>
      %10 = tpu.matmul %7, %9, %cst_8 {dimension_numbers = #tpu.dot_dimension_numbers<[1], [0], [0], [1], [0, 0, 1, 1], [], []>} : vector<4x64xbf16>, vector<64x256xbf16>, vector<4x256xf32> -> vector<4x256xf32>
      %11 = arith.addf %1, %10 : vector<4x256xf32>
      %12 = vector.extract_strided_slice %6 {offsets = [5, 0], sizes = [4, 64], strides = [1, 1]} : vector<10x64xbf16> to vector<4x64xbf16>
      %c1 = arith.constant 1 : index
      %c0_9 = arith.constant 0 : index
      %c0_10 = arith.constant 0 : index
      %13 = vector.load %arg3[%c1, %c0_9, %c0_10] : memref<9x64x256xbf16, #tpu.memory_space<vmem>>, vector<1x64x256xbf16>
      %14 = vector.shape_cast %13 : vector<1x64x256xbf16> to vector<64x256xbf16>
      %cst_11 = arith.constant dense<0.000000e+00> : vector<4x256xf32>
      %15 = tpu.matmul %12, %14, %cst_11 {dimension_numbers = #tpu.dot_dimension_numbers<[1], [0], [0], [1], [0, 0, 1, 1], [], []>} : vector<4x64xbf16>, vector<64x256xbf16>, vector<4x256xf32> -> vector<4x256xf32>
      %16 = arith.addf %11, %15 : vector<4x256xf32>
      %17 = vector.extract_strided_slice %6 {offsets = [1, 0], sizes = [4, 64], strides = [1, 1]} : vector<10x64xbf16> to vector<4x64xbf16>
      %c2 = arith.constant 2 : index
      %c0_12 = arith.constant 0 : index
      %c0_13 = arith.constant 0 : index
      %18 = vector.load %arg3[%c2, %c0_12, %c0_13] : memref<9x64x256xbf16, #tpu.memory_space<vmem>>, vector<1x64x256xbf16>
      %19 = vector.shape_cast %18 : vector<1x64x256xbf16> to vector<64x256xbf16>
      %cst_14 = arith.constant dense<0.000000e+00> : vector<4x256xf32>
      %20 = tpu.matmul %17, %19, %cst_14 {dimension_numbers = #tpu.dot_dimension_numbers<[1], [0], [0], [1], [0, 0, 1, 1], [], []>} : vector<4x64xbf16>, vector<64x256xbf16>, vector<4x256xf32> -> vector<4x256xf32>
      %21 = arith.addf %16, %20 : vector<4x256xf32>
      %c2_i32_15 = arith.constant 2 : i32
      %22 = arith.muli %arg5, %c2_i32_15 : i32
      %c1_i32_16 = arith.constant 1 : i32
      %23 = arith.addi %22, %c1_i32_16 : i32
      %c0_17 = arith.constant 0 : index
      %c0_18 = arith.constant 0 : index
      %24 = arith.index_cast %23 : i32 to index
      %c0_19 = arith.constant 0 : index
      %c0_20 = arith.constant 0 : index
      %25 = vector.load %arg2[%c0_17, %c0_18, %24, %c0_19, %c0_20] : memref<1x1x9x10x64xbf16, #tpu.memory_space<vmem>>, vector<1x1x1x10x64xbf16>
      %26 = vector.shape_cast %25 : vector<1x1x1x10x64xbf16> to vector<10x64xbf16>
      %27 = vector.extract_strided_slice %26 {offsets = [0, 0], sizes = [4, 64], strides = [1, 1]} : vector<10x64xbf16> to vector<4x64xbf16>
      %c3 = arith.constant 3 : index
      %c0_21 = arith.constant 0 : index
      %c0_22 = arith.constant 0 : index
      %28 = vector.load %arg3[%c3, %c0_21, %c0_22] : memref<9x64x256xbf16, #tpu.memory_space<vmem>>, vector<1x64x256xbf16>
      %29 = vector.shape_cast %28 : vector<1x64x256xbf16> to vector<64x256xbf16>
      %cst_23 = arith.constant dense<0.000000e+00> : vector<4x256xf32>
      %30 = tpu.matmul %27, %29, %cst_23 {dimension_numbers = #tpu.dot_dimension_numbers<[1], [0], [0], [1], [0, 0, 1, 1], [], []>} : vector<4x64xbf16>, vector<64x256xbf16>, vector<4x256xf32> -> vector<4x256xf32>
      %31 = arith.addf %21, %30 : vector<4x256xf32>
      %32 = vector.extract_strided_slice %26 {offsets = [5, 0], sizes = [4, 64], strides = [1, 1]} : vector<10x64xbf16> to vector<4x64xbf16>
      %c4 = arith.constant 4 : index
      %c0_24 = arith.constant 0 : index
      %c0_25 = arith.constant 0 : index
      %33 = vector.load %arg3[%c4, %c0_24, %c0_25] : memref<9x64x256xbf16, #tpu.memory_space<vmem>>, vector<1x64x256xbf16>
      %34 = vector.shape_cast %33 : vector<1x64x256xbf16> to vector<64x256xbf16>
      %cst_26 = arith.constant dense<0.000000e+00> : vector<4x256xf32>
      %35 = tpu.matmul %32, %34, %cst_26 {dimension_numbers = #tpu.dot_dimension_numbers<[1], [0], [0], [1], [0, 0, 1, 1], [], []>} : vector<4x64xbf16>, vector<64x256xbf16>, vector<4x256xf32> -> vector<4x256xf32>
      %36 = arith.addf %31, %35 : vector<4x256xf32>
      %37 = vector.extract_strided_slice %26 {offsets = [1, 0], sizes = [4, 64], strides = [1, 1]} : vector<10x64xbf16> to vector<4x64xbf16>
      %c5 = arith.constant 5 : index
      %c0_27 = arith.constant 0 : index
      %c0_28 = arith.constant 0 : index
      %38 = vector.load %arg3[%c5, %c0_27, %c0_28] : memref<9x64x256xbf16, #tpu.memory_space<vmem>>, vector<1x64x256xbf16>
      %39 = vector.shape_cast %38 : vector<1x64x256xbf16> to vector<64x256xbf16>
      %cst_29 = arith.constant dense<0.000000e+00> : vector<4x256xf32>
      %40 = tpu.matmul %37, %39, %cst_29 {dimension_numbers = #tpu.dot_dimension_numbers<[1], [0], [0], [1], [0, 0, 1, 1], [], []>} : vector<4x64xbf16>, vector<64x256xbf16>, vector<4x256xf32> -> vector<4x256xf32>
      %41 = arith.addf %36, %40 : vector<4x256xf32>
      %c2_i32_30 = arith.constant 2 : i32
      %42 = arith.muli %arg5, %c2_i32_30 : i32
      %c2_i32_31 = arith.constant 2 : i32
      %43 = arith.addi %42, %c2_i32_31 : i32
      %c0_32 = arith.constant 0 : index
      %c0_33 = arith.constant 0 : index
      %44 = arith.index_cast %43 : i32 to index
      %c0_34 = arith.constant 0 : index
      %c0_35 = arith.constant 0 : index
      %45 = vector.load %arg2[%c0_32, %c0_33, %44, %c0_34, %c0_35] : memref<1x1x9x10x64xbf16, #tpu.memory_space<vmem>>, vector<1x1x1x10x64xbf16>
      %46 = vector.shape_cast %45 : vector<1x1x1x10x64xbf16> to vector<10x64xbf16>
      %47 = vector.extract_strided_slice %46 {offsets = [0, 0], sizes = [4, 64], strides = [1, 1]} : vector<10x64xbf16> to vector<4x64xbf16>
      %c6 = arith.constant 6 : index
      %c0_36 = arith.constant 0 : index
      %c0_37 = arith.constant 0 : index
      %48 = vector.load %arg3[%c6, %c0_36, %c0_37] : memref<9x64x256xbf16, #tpu.memory_space<vmem>>, vector<1x64x256xbf16>
      %49 = vector.shape_cast %48 : vector<1x64x256xbf16> to vector<64x256xbf16>
      %cst_38 = arith.constant dense<0.000000e+00> : vector<4x256xf32>
      %50 = tpu.matmul %47, %49, %cst_38 {dimension_numbers = #tpu.dot_dimension_numbers<[1], [0], [0], [1], [0, 0, 1, 1], [], []>} : vector<4x64xbf16>, vector<64x256xbf16>, vector<4x256xf32> -> vector<4x256xf32>
      %51 = arith.addf %41, %50 : vector<4x256xf32>
      %52 = vector.extract_strided_slice %46 {offsets = [5, 0], sizes = [4, 64], strides = [1, 1]} : vector<10x64xbf16> to vector<4x64xbf16>
      %c7 = arith.constant 7 : index
      %c0_39 = arith.constant 0 : index
      %c0_40 = arith.constant 0 : index
      %53 = vector.load %arg3[%c7, %c0_39, %c0_40] : memref<9x64x256xbf16, #tpu.memory_space<vmem>>, vector<1x64x256xbf16>
      %54 = vector.shape_cast %53 : vector<1x64x256xbf16> to vector<64x256xbf16>
      %cst_41 = arith.constant dense<0.000000e+00> : vector<4x256xf32>
      %55 = tpu.matmul %52, %54, %cst_41 {dimension_numbers = #tpu.dot_dimension_numbers<[1], [0], [0], [1], [0, 0, 1, 1], [], []>} : vector<4x64xbf16>, vector<64x256xbf16>, vector<4x256xf32> -> vector<4x256xf32>
      %56 = arith.addf %51, %55 : vector<4x256xf32>
      %57 = vector.extract_strided_slice %46 {offsets = [1, 0], sizes = [4, 64], strides = [1, 1]} : vector<10x64xbf16> to vector<4x64xbf16>
      %c8 = arith.constant 8 : index
      %c0_42 = arith.constant 0 : index
      %c0_43 = arith.constant 0 : index
      %58 = vector.load %arg3[%c8, %c0_42, %c0_43] : memref<9x64x256xbf16, #tpu.memory_space<vmem>>, vector<1x64x256xbf16>
      %59 = vector.shape_cast %58 : vector<1x64x256xbf16> to vector<64x256xbf16>
      %cst_44 = arith.constant dense<0.000000e+00> : vector<4x256xf32>
      %60 = tpu.matmul %57, %59, %cst_44 {dimension_numbers = #tpu.dot_dimension_numbers<[1], [0], [0], [1], [0, 0, 1, 1], [], []>} : vector<4x64xbf16>, vector<64x256xbf16>, vector<4x256xf32> -> vector<4x256xf32>
      %61 = arith.addf %56, %60 : vector<4x256xf32>
      %62 = vector.extract_strided_slice %61 {offsets = [0, 0], sizes = [4, 128], strides = [1, 1]} : vector<4x256xf32> to vector<4x128xf32>
      %63 = vector.extract_strided_slice %61 {offsets = [0, 128], sizes = [4, 128], strides = [1, 1]} : vector<4x256xf32> to vector<4x128xf32>
      %64 = arith.negf %63 : vector<4x128xf32>
      %65 = math.exp %64 : vector<4x128xf32>
      %cst_45 = arith.constant 1.000000e+00 : f32
      %66 = vector.broadcast %cst_45 : f32 to vector<4x128xf32>
      %67 = arith.addf %66, %65 : vector<4x128xf32>
      %68 = arith.divf %66, %67 : vector<4x128xf32>
      %cst_46 = arith.constant 0.000000e+00 : f32
      %69 = vector.broadcast %cst_46 : f32 to vector<4x128xf32>
      %70 = arith.maximumf %62, %69 : vector<4x128xf32>
      %71 = arith.mulf %68, %70 : vector<4x128xf32>
      %72 = vector.extract_strided_slice %71 {offsets = [0, 0], sizes = [4, 96], strides = [1, 1]} : vector<4x128xf32> to vector<4x96xf32>
      %73 = arith.truncf %72 : vector<4x96xf32> to vector<4x96xbf16>
      %c0_47 = arith.constant 0 : index
      %74 = arith.index_cast %arg5 : i32 to index
      %c0_48 = arith.constant 0 : index
      %c0_49 = arith.constant 0 : index
      %75 = vector.load %arg4[%c0_47, %74, %c0_48, %c0_49] : memref<1x4x4x96xbf16, #tpu.memory_space<vmem>>, vector<1x1x4x96xbf16>
      %76 = vector.shape_cast %75 : vector<1x1x4x96xbf16> to vector<4x96xbf16>
      %77 = vector.shape_cast %73 : vector<4x96xbf16> to vector<1x1x4x96xbf16>
      tpu.vector_store %arg4[%c0_47, %74, %c0_48, %c0_49], %77 {strides = array<i32>} : memref<1x4x4x96xbf16, #tpu.memory_space<vmem>>, vector<1x1x4x96xbf16>,
    }
    %c4_i32_0 = arith.constant 4 : i32
    return
  }
  func.func @transform_0(%arg0: i32, %arg1: i32) -> (i32, i32, i32, i32, i32) {
    %c0_i32 = arith.constant 0 : i32
    %c0_i32_0 = arith.constant 0 : i32
    %c0_i32_1 = arith.constant 0 : i32
    %c0_i32_2 = arith.constant 0 : i32
    return %arg0, %arg1, %c0_i32, %c0_i32_0, %c0_i32_1 : i32, i32, i32, i32, i32
  }
  func.func @transform_1(%arg0: i32, %arg1: i32) -> (i32, i32, i32) {
    %c0_i32 = arith.constant 0 : i32
    %c0_i32_0 = arith.constant 0 : i32
    %c0_i32_1 = arith.constant 0 : i32
    %c0_i32_2 = arith.constant 0 : i32
    return %c0_i32, %c0_i32_0, %c0_i32_1 : i32, i32, i32
  }
  func.func @transform_2(%arg0: i32, %arg1: i32) -> (i32, i32, i32, i32) {
    %c0_i32 = arith.constant 0 : i32
    %c0_i32_0 = arith.constant 0 : i32
    %c0_i32_1 = arith.constant 0 : i32
    return %arg0, %arg1, %c0_i32, %c0_i32_0 : i32, i32, i32, i32
  }
}

module attributes {stable_mosaic.version = 11 : i64} {
  func.func @_gated_conv_kernel(%arg0: i32, %arg1: i32, %arg2: memref<1x1x6x6x96xbf16, #tpu.memory_space<vmem>>, %arg3: memref<9x96x256xbf16, #tpu.memory_space<vmem>>, %arg4: memref<1x4x4x96xbf16, #tpu.memory_space<vmem>>) attributes {dimension_semantics = [#tpu.dimension_semantics<parallel>, #tpu.dimension_semantics<parallel>], iteration_bounds = array<i64: 2, 1>, scalar_prefetch = 0 : i64, scratch_operands = 0 : i64, tpu.core_type = #tpu.core_type<tc>, window_params = [{transform_indices = @transform_0, window_bounds = array<i64: 1, 1, 6, 6, 96>}, {pipeline_mode = #tpu.pipeline_mode<synchronous>, transform_indices = @transform_1, window_bounds = array<i64: 9, 96, 256>}, {transform_indices = @transform_2, window_bounds = array<i64: 1, 4, 4, 96>}]} {
    %c0_i32 = arith.constant 0 : i32
    %c4_i32 = arith.constant 4 : i32
    %0 = arith.addi %c0_i32, %c4_i32 : i32
    %c1_i32 = arith.constant 1 : i32
    scf.for %arg5 = %c0_i32 to %0 step %c1_i32  : i32 {
      %cst = arith.constant 0.000000e+00 : f32
      %1 = vector.broadcast %cst : f32 to vector<4x256xf32>
      %c1_i32_1 = arith.constant 1 : i32
      %2 = arith.muli %arg5, %c1_i32_1 : i32
      %c0_i32_2 = arith.constant 0 : i32
      %3 = arith.addi %2, %c0_i32_2 : i32
      %c0 = arith.constant 0 : index
      %c0_3 = arith.constant 0 : index
      %4 = arith.index_cast %3 : i32 to index
      %c0_4 = arith.constant 0 : index
      %c0_5 = arith.constant 0 : index
      %5 = vector.load %arg2[%c0, %c0_3, %4, %c0_4, %c0_5] : memref<1x1x6x6x96xbf16, #tpu.memory_space<vmem>>, vector<1x1x1x6x96xbf16>
      %6 = vector.shape_cast %5 : vector<1x1x1x6x96xbf16> to vector<6x96xbf16>
      %7 = vector.extract_strided_slice %6 {offsets = [0, 0], sizes = [4, 96], strides = [1, 1]} : vector<6x96xbf16> to vector<4x96xbf16>
      %c0_6 = arith.constant 0 : index
      %c0_7 = arith.constant 0 : index
      %c0_8 = arith.constant 0 : index
      %8 = vector.load %arg3[%c0_6, %c0_7, %c0_8] : memref<9x96x256xbf16, #tpu.memory_space<vmem>>, vector<1x96x256xbf16>
      %9 = vector.shape_cast %8 : vector<1x96x256xbf16> to vector<96x256xbf16>
      %cst_9 = arith.constant dense<0.000000e+00> : vector<4x256xf32>
      %10 = tpu.matmul %7, %9, %cst_9 {dimension_numbers = #tpu.dot_dimension_numbers<[1], [0], [0], [1], [0, 0, 1, 1], [], []>} : vector<4x96xbf16>, vector<96x256xbf16>, vector<4x256xf32> -> vector<4x256xf32>
      %11 = arith.addf %1, %10 : vector<4x256xf32>
      %12 = vector.extract_strided_slice %6 {offsets = [1, 0], sizes = [4, 96], strides = [1, 1]} : vector<6x96xbf16> to vector<4x96xbf16>
      %c1 = arith.constant 1 : index
      %c0_10 = arith.constant 0 : index
      %c0_11 = arith.constant 0 : index
      %13 = vector.load %arg3[%c1, %c0_10, %c0_11] : memref<9x96x256xbf16, #tpu.memory_space<vmem>>, vector<1x96x256xbf16>
      %14 = vector.shape_cast %13 : vector<1x96x256xbf16> to vector<96x256xbf16>
      %cst_12 = arith.constant dense<0.000000e+00> : vector<4x256xf32>
      %15 = tpu.matmul %12, %14, %cst_12 {dimension_numbers = #tpu.dot_dimension_numbers<[1], [0], [0], [1], [0, 0, 1, 1], [], []>} : vector<4x96xbf16>, vector<96x256xbf16>, vector<4x256xf32> -> vector<4x256xf32>
      %16 = arith.addf %11, %15 : vector<4x256xf32>
      %17 = vector.extract_strided_slice %6 {offsets = [2, 0], sizes = [4, 96], strides = [1, 1]} : vector<6x96xbf16> to vector<4x96xbf16>
      %c2 = arith.constant 2 : index
      %c0_13 = arith.constant 0 : index
      %c0_14 = arith.constant 0 : index
      %18 = vector.load %arg3[%c2, %c0_13, %c0_14] : memref<9x96x256xbf16, #tpu.memory_space<vmem>>, vector<1x96x256xbf16>
      %19 = vector.shape_cast %18 : vector<1x96x256xbf16> to vector<96x256xbf16>
      %cst_15 = arith.constant dense<0.000000e+00> : vector<4x256xf32>
      %20 = tpu.matmul %17, %19, %cst_15 {dimension_numbers = #tpu.dot_dimension_numbers<[1], [0], [0], [1], [0, 0, 1, 1], [], []>} : vector<4x96xbf16>, vector<96x256xbf16>, vector<4x256xf32> -> vector<4x256xf32>
      %21 = arith.addf %16, %20 : vector<4x256xf32>
      %c1_i32_16 = arith.constant 1 : i32
      %22 = arith.muli %arg5, %c1_i32_16 : i32
      %c1_i32_17 = arith.constant 1 : i32
      %23 = arith.addi %22, %c1_i32_17 : i32
      %c0_18 = arith.constant 0 : index
      %c0_19 = arith.constant 0 : index
      %24 = arith.index_cast %23 : i32 to index
      %c0_20 = arith.constant 0 : index
      %c0_21 = arith.constant 0 : index
      %25 = vector.load %arg2[%c0_18, %c0_19, %24, %c0_20, %c0_21] : memref<1x1x6x6x96xbf16, #tpu.memory_space<vmem>>, vector<1x1x1x6x96xbf16>
      %26 = vector.shape_cast %25 : vector<1x1x1x6x96xbf16> to vector<6x96xbf16>
      %27 = vector.extract_strided_slice %26 {offsets = [0, 0], sizes = [4, 96], strides = [1, 1]} : vector<6x96xbf16> to vector<4x96xbf16>
      %c3 = arith.constant 3 : index
      %c0_22 = arith.constant 0 : index
      %c0_23 = arith.constant 0 : index
      %28 = vector.load %arg3[%c3, %c0_22, %c0_23] : memref<9x96x256xbf16, #tpu.memory_space<vmem>>, vector<1x96x256xbf16>
      %29 = vector.shape_cast %28 : vector<1x96x256xbf16> to vector<96x256xbf16>
      %cst_24 = arith.constant dense<0.000000e+00> : vector<4x256xf32>
      %30 = tpu.matmul %27, %29, %cst_24 {dimension_numbers = #tpu.dot_dimension_numbers<[1], [0], [0], [1], [0, 0, 1, 1], [], []>} : vector<4x96xbf16>, vector<96x256xbf16>, vector<4x256xf32> -> vector<4x256xf32>
      %31 = arith.addf %21, %30 : vector<4x256xf32>
      %32 = vector.extract_strided_slice %26 {offsets = [1, 0], sizes = [4, 96], strides = [1, 1]} : vector<6x96xbf16> to vector<4x96xbf16>
      %c4 = arith.constant 4 : index
      %c0_25 = arith.constant 0 : index
      %c0_26 = arith.constant 0 : index
      %33 = vector.load %arg3[%c4, %c0_25, %c0_26] : memref<9x96x256xbf16, #tpu.memory_space<vmem>>, vector<1x96x256xbf16>
      %34 = vector.shape_cast %33 : vector<1x96x256xbf16> to vector<96x256xbf16>
      %cst_27 = arith.constant dense<0.000000e+00> : vector<4x256xf32>
      %35 = tpu.matmul %32, %34, %cst_27 {dimension_numbers = #tpu.dot_dimension_numbers<[1], [0], [0], [1], [0, 0, 1, 1], [], []>} : vector<4x96xbf16>, vector<96x256xbf16>, vector<4x256xf32> -> vector<4x256xf32>
      %36 = arith.addf %31, %35 : vector<4x256xf32>
      %37 = vector.extract_strided_slice %26 {offsets = [2, 0], sizes = [4, 96], strides = [1, 1]} : vector<6x96xbf16> to vector<4x96xbf16>
      %c5 = arith.constant 5 : index
      %c0_28 = arith.constant 0 : index
      %c0_29 = arith.constant 0 : index
      %38 = vector.load %arg3[%c5, %c0_28, %c0_29] : memref<9x96x256xbf16, #tpu.memory_space<vmem>>, vector<1x96x256xbf16>
      %39 = vector.shape_cast %38 : vector<1x96x256xbf16> to vector<96x256xbf16>
      %cst_30 = arith.constant dense<0.000000e+00> : vector<4x256xf32>
      %40 = tpu.matmul %37, %39, %cst_30 {dimension_numbers = #tpu.dot_dimension_numbers<[1], [0], [0], [1], [0, 0, 1, 1], [], []>} : vector<4x96xbf16>, vector<96x256xbf16>, vector<4x256xf32> -> vector<4x256xf32>
      %41 = arith.addf %36, %40 : vector<4x256xf32>
      %c1_i32_31 = arith.constant 1 : i32
      %42 = arith.muli %arg5, %c1_i32_31 : i32
      %c2_i32 = arith.constant 2 : i32
      %43 = arith.addi %42, %c2_i32 : i32
      %c0_32 = arith.constant 0 : index
      %c0_33 = arith.constant 0 : index
      %44 = arith.index_cast %43 : i32 to index
      %c0_34 = arith.constant 0 : index
      %c0_35 = arith.constant 0 : index
      %45 = vector.load %arg2[%c0_32, %c0_33, %44, %c0_34, %c0_35] : memref<1x1x6x6x96xbf16, #tpu.memory_space<vmem>>, vector<1x1x1x6x96xbf16>
      %46 = vector.shape_cast %45 : vector<1x1x1x6x96xbf16> to vector<6x96xbf16>
      %47 = vector.extract_strided_slice %46 {offsets = [0, 0], sizes = [4, 96], strides = [1, 1]} : vector<6x96xbf16> to vector<4x96xbf16>
      %c6 = arith.constant 6 : index
      %c0_36 = arith.constant 0 : index
      %c0_37 = arith.constant 0 : index
      %48 = vector.load %arg3[%c6, %c0_36, %c0_37] : memref<9x96x256xbf16, #tpu.memory_space<vmem>>, vector<1x96x256xbf16>
      %49 = vector.shape_cast %48 : vector<1x96x256xbf16> to vector<96x256xbf16>
      %cst_38 = arith.constant dense<0.000000e+00> : vector<4x256xf32>
      %50 = tpu.matmul %47, %49, %cst_38 {dimension_numbers = #tpu.dot_dimension_numbers<[1], [0], [0], [1], [0, 0, 1, 1], [], []>} : vector<4x96xbf16>, vector<96x256xbf16>, vector<4x256xf32> -> vector<4x256xf32>
      %51 = arith.addf %41, %50 : vector<4x256xf32>
      %52 = vector.extract_strided_slice %46 {offsets = [1, 0], sizes = [4, 96], strides = [1, 1]} : vector<6x96xbf16> to vector<4x96xbf16>
      %c7 = arith.constant 7 : index
      %c0_39 = arith.constant 0 : index
      %c0_40 = arith.constant 0 : index
      %53 = vector.load %arg3[%c7, %c0_39, %c0_40] : memref<9x96x256xbf16, #tpu.memory_space<vmem>>, vector<1x96x256xbf16>
      %54 = vector.shape_cast %53 : vector<1x96x256xbf16> to vector<96x256xbf16>
      %cst_41 = arith.constant dense<0.000000e+00> : vector<4x256xf32>
      %55 = tpu.matmul %52, %54, %cst_41 {dimension_numbers = #tpu.dot_dimension_numbers<[1], [0], [0], [1], [0, 0, 1, 1], [], []>} : vector<4x96xbf16>, vector<96x256xbf16>, vector<4x256xf32> -> vector<4x256xf32>
      %56 = arith.addf %51, %55 : vector<4x256xf32>
      %57 = vector.extract_strided_slice %46 {offsets = [2, 0], sizes = [4, 96], strides = [1, 1]} : vector<6x96xbf16> to vector<4x96xbf16>
      %c8 = arith.constant 8 : index
      %c0_42 = arith.constant 0 : index
      %c0_43 = arith.constant 0 : index
      %58 = vector.load %arg3[%c8, %c0_42, %c0_43] : memref<9x96x256xbf16, #tpu.memory_space<vmem>>, vector<1x96x256xbf16>
      %59 = vector.shape_cast %58 : vector<1x96x256xbf16> to vector<96x256xbf16>
      %cst_44 = arith.constant dense<0.000000e+00> : vector<4x256xf32>
      %60 = tpu.matmul %57, %59, %cst_44 {dimension_numbers = #tpu.dot_dimension_numbers<[1], [0], [0], [1], [0, 0, 1, 1], [], []>} : vector<4x96xbf16>, vector<96x256xbf16>, vector<4x256xf32> -> vector<4x256xf32>
      %61 = arith.addf %56, %60 : vector<4x256xf32>
      %62 = vector.extract_strided_slice %61 {offsets = [0, 0], sizes = [4, 128], strides = [1, 1]} : vector<4x256xf32> to vector<4x128xf32>
      %63 = vector.extract_strided_slice %61 {offsets = [0, 128], sizes = [4, 128], strides = [1, 1]} : vector<4x256xf32> to vector<4x128xf32>
      %64 = arith.negf %63 : vector<4x128xf32>
      %65 = math.exp %64 : vector<4x128xf32>
      %cst_45 = arith.constant 1.000000e+00 : f32
      %66 = vector.broadcast %cst_45 : f32 to vector<4x128xf32>
      %67 = arith.addf %66, %65 : vector<4x128xf32>
      %68 = arith.divf %66, %67 : vector<4x128xf32>
      %cst_46 = arith.constant 0.000000e+00 : f32
      %69 = vector.broadcast %cst_46 : f32 to vector<4x128xf32>
      %70 = arith.maximumf %62, %69 : vector<4x128xf32>
      %71 = arith.mulf %68, %70 : vector<4x128xf32>
      %72 = vector.extract_strided_slice %71 {offsets = [0, 0], sizes = [4, 96], strides = [1, 1]} : vector<4x128xf32> to vector<4x96xf32>
      %73 = arith.truncf %72 : vector<4x96xf32> to vector<4x96xbf16>
      %c0_47 = arith.constant 0 : index
      %74 = arith.index_cast %arg5 : i32 to index
      %c0_48 = arith.constant 0 : index
      %c0_49 = arith.constant 0 : index
      %75 = vector.load %arg4[%c0_47, %74, %c0_48, %c0_49] : memref<1x4x4x96xbf16, #tpu.memory_space<vmem>>, vector<1x1x4x96xbf16>
      %76 = vector.shape_cast %75 : vector<1x1x4x96xbf16> to vector<4x96xbf16>
      %77 = vector.shape_cast %73 : vector<4x96xbf16> to vector<1x1x4x96xbf16>
      tpu.vector_store %arg4[%c0_47, %74, %c0_48, %c0_49], %77 {strides = array<i32>} : memref<1x4x4x96xbf16, #tpu.memory_space<vmem>>, vector<1x1x4x96xbf16>,
    }
    %c4_i32_0 = arith.constant 4 : i32
    return
  }
  func.func @transform_0(%arg0: i32, %arg1: i32) -> (i32, i32, i32, i32, i32) {
    %c0_i32 = arith.constant 0 : i32
    %c0_i32_0 = arith.constant 0 : i32
    %c0_i32_1 = arith.constant 0 : i32
    %c0_i32_2 = arith.constant 0 : i32
    return %arg0, %arg1, %c0_i32, %c0_i32_0, %c0_i32_1 : i32, i32, i32, i32, i32
  }
  func.func @transform_1(%arg0: i32, %arg1: i32) -> (i32, i32, i32) {
    %c0_i32 = arith.constant 0 : i32
    %c0_i32_0 = arith.constant 0 : i32
    %c0_i32_1 = arith.constant 0 : i32
    %c0_i32_2 = arith.constant 0 : i32
    return %c0_i32, %c0_i32_0, %c0_i32_1 : i32, i32, i32
  }
  func.func @transform_2(%arg0: i32, %arg1: i32) -> (i32, i32, i32, i32) {
    %c0_i32 = arith.constant 0 : i32
    %c0_i32_0 = arith.constant 0 : i32
    %c0_i32_1 = arith.constant 0 : i32
    return %arg0, %arg1, %c0_i32, %c0_i32_0 : i32, i32, i32, i32
  }
}

module attributes {stable_mosaic.version = 11 : i64} {
  func.func @_gated_conv_kernel(%arg0: i32, %arg1: i32, %arg2: memref<1x1x5x6x96xbf16, #tpu.memory_space<vmem>>, %arg3: memref<9x96x256xbf16, #tpu.memory_space<vmem>>, %arg4: memref<1x2x2x128xbf16, #tpu.memory_space<vmem>>) attributes {dimension_semantics = [#tpu.dimension_semantics<parallel>, #tpu.dimension_semantics<parallel>], iteration_bounds = array<i64: 2, 1>, scalar_prefetch = 0 : i64, scratch_operands = 0 : i64, tpu.core_type = #tpu.core_type<tc>, window_params = [{transform_indices = @transform_0, window_bounds = array<i64: 1, 1, 5, 6, 96>}, {pipeline_mode = #tpu.pipeline_mode<synchronous>, transform_indices = @transform_1, window_bounds = array<i64: 9, 96, 256>}, {transform_indices = @transform_2, window_bounds = array<i64: 1, 2, 2, 128>}]} {
    %c0_i32 = arith.constant 0 : i32
    %c2_i32 = arith.constant 2 : i32
    %0 = arith.addi %c0_i32, %c2_i32 : i32
    %c1_i32 = arith.constant 1 : i32
    scf.for %arg5 = %c0_i32 to %0 step %c1_i32  : i32 {
      %cst = arith.constant 0.000000e+00 : f32
      %1 = vector.broadcast %cst : f32 to vector<2x256xf32>
      %c2_i32_1 = arith.constant 2 : i32
      %2 = arith.muli %arg5, %c2_i32_1 : i32
      %c0_i32_2 = arith.constant 0 : i32
      %3 = arith.addi %2, %c0_i32_2 : i32
      %c0 = arith.constant 0 : index
      %c0_3 = arith.constant 0 : index
      %4 = arith.index_cast %3 : i32 to index
      %c0_4 = arith.constant 0 : index
      %c0_5 = arith.constant 0 : index
      %5 = vector.load %arg2[%c0, %c0_3, %4, %c0_4, %c0_5] : memref<1x1x5x6x96xbf16, #tpu.memory_space<vmem>>, vector<1x1x1x6x96xbf16>
      %6 = vector.shape_cast %5 : vector<1x1x1x6x96xbf16> to vector<6x96xbf16>
      %7 = vector.extract_strided_slice %6 {offsets = [0, 0], sizes = [2, 96], strides = [1, 1]} : vector<6x96xbf16> to vector<2x96xbf16>
      %c0_6 = arith.constant 0 : index
      %c0_7 = arith.constant 0 : index
      %c0_8 = arith.constant 0 : index
      %8 = vector.load %arg3[%c0_6, %c0_7, %c0_8] : memref<9x96x256xbf16, #tpu.memory_space<vmem>>, vector<1x96x256xbf16>
      %9 = vector.shape_cast %8 : vector<1x96x256xbf16> to vector<96x256xbf16>
      %cst_9 = arith.constant dense<0.000000e+00> : vector<2x256xf32>
      %10 = tpu.matmul %7, %9, %cst_9 {dimension_numbers = #tpu.dot_dimension_numbers<[1], [0], [0], [1], [0, 0, 1, 1], [], []>} : vector<2x96xbf16>, vector<96x256xbf16>, vector<2x256xf32> -> vector<2x256xf32>
      %11 = arith.addf %1, %10 : vector<2x256xf32>
      %12 = vector.extract_strided_slice %6 {offsets = [3, 0], sizes = [2, 96], strides = [1, 1]} : vector<6x96xbf16> to vector<2x96xbf16>
      %c1 = arith.constant 1 : index
      %c0_10 = arith.constant 0 : index
      %c0_11 = arith.constant 0 : index
      %13 = vector.load %arg3[%c1, %c0_10, %c0_11] : memref<9x96x256xbf16, #tpu.memory_space<vmem>>, vector<1x96x256xbf16>
      %14 = vector.shape_cast %13 : vector<1x96x256xbf16> to vector<96x256xbf16>
      %cst_12 = arith.constant dense<0.000000e+00> : vector<2x256xf32>
      %15 = tpu.matmul %12, %14, %cst_12 {dimension_numbers = #tpu.dot_dimension_numbers<[1], [0], [0], [1], [0, 0, 1, 1], [], []>} : vector<2x96xbf16>, vector<96x256xbf16>, vector<2x256xf32> -> vector<2x256xf32>
      %16 = arith.addf %11, %15 : vector<2x256xf32>
      %17 = vector.extract_strided_slice %6 {offsets = [1, 0], sizes = [2, 96], strides = [1, 1]} : vector<6x96xbf16> to vector<2x96xbf16>
      %c2 = arith.constant 2 : index
      %c0_13 = arith.constant 0 : index
      %c0_14 = arith.constant 0 : index
      %18 = vector.load %arg3[%c2, %c0_13, %c0_14] : memref<9x96x256xbf16, #tpu.memory_space<vmem>>, vector<1x96x256xbf16>
      %19 = vector.shape_cast %18 : vector<1x96x256xbf16> to vector<96x256xbf16>
      %cst_15 = arith.constant dense<0.000000e+00> : vector<2x256xf32>
      %20 = tpu.matmul %17, %19, %cst_15 {dimension_numbers = #tpu.dot_dimension_numbers<[1], [0], [0], [1], [0, 0, 1, 1], [], []>} : vector<2x96xbf16>, vector<96x256xbf16>, vector<2x256xf32> -> vector<2x256xf32>
      %21 = arith.addf %16, %20 : vector<2x256xf32>
      %c2_i32_16 = arith.constant 2 : i32
      %22 = arith.muli %arg5, %c2_i32_16 : i32
      %c1_i32_17 = arith.constant 1 : i32
      %23 = arith.addi %22, %c1_i32_17 : i32
      %c0_18 = arith.constant 0 : index
      %c0_19 = arith.constant 0 : index
      %24 = arith.index_cast %23 : i32 to index
      %c0_20 = arith.constant 0 : index
      %c0_21 = arith.constant 0 : index
      %25 = vector.load %arg2[%c0_18, %c0_19, %24, %c0_20, %c0_21] : memref<1x1x5x6x96xbf16, #tpu.memory_space<vmem>>, vector<1x1x1x6x96xbf16>
      %26 = vector.shape_cast %25 : vector<1x1x1x6x96xbf16> to vector<6x96xbf16>
      %27 = vector.extract_strided_slice %26 {offsets = [0, 0], sizes = [2, 96], strides = [1, 1]} : vector<6x96xbf16> to vector<2x96xbf16>
      %c3 = arith.constant 3 : index
      %c0_22 = arith.constant 0 : index
      %c0_23 = arith.constant 0 : index
      %28 = vector.load %arg3[%c3, %c0_22, %c0_23] : memref<9x96x256xbf16, #tpu.memory_space<vmem>>, vector<1x96x256xbf16>
      %29 = vector.shape_cast %28 : vector<1x96x256xbf16> to vector<96x256xbf16>
      %cst_24 = arith.constant dense<0.000000e+00> : vector<2x256xf32>
      %30 = tpu.matmul %27, %29, %cst_24 {dimension_numbers = #tpu.dot_dimension_numbers<[1], [0], [0], [1], [0, 0, 1, 1], [], []>} : vector<2x96xbf16>, vector<96x256xbf16>, vector<2x256xf32> -> vector<2x256xf32>
      %31 = arith.addf %21, %30 : vector<2x256xf32>
      %32 = vector.extract_strided_slice %26 {offsets = [3, 0], sizes = [2, 96], strides = [1, 1]} : vector<6x96xbf16> to vector<2x96xbf16>
      %c4 = arith.constant 4 : index
      %c0_25 = arith.constant 0 : index
      %c0_26 = arith.constant 0 : index
      %33 = vector.load %arg3[%c4, %c0_25, %c0_26] : memref<9x96x256xbf16, #tpu.memory_space<vmem>>, vector<1x96x256xbf16>
      %34 = vector.shape_cast %33 : vector<1x96x256xbf16> to vector<96x256xbf16>
      %cst_27 = arith.constant dense<0.000000e+00> : vector<2x256xf32>
      %35 = tpu.matmul %32, %34, %cst_27 {dimension_numbers = #tpu.dot_dimension_numbers<[1], [0], [0], [1], [0, 0, 1, 1], [], []>} : vector<2x96xbf16>, vector<96x256xbf16>, vector<2x256xf32> -> vector<2x256xf32>
      %36 = arith.addf %31, %35 : vector<2x256xf32>
      %37 = vector.extract_strided_slice %26 {offsets = [1, 0], sizes = [2, 96], strides = [1, 1]} : vector<6x96xbf16> to vector<2x96xbf16>
      %c5 = arith.constant 5 : index
      %c0_28 = arith.constant 0 : index
      %c0_29 = arith.constant 0 : index
      %38 = vector.load %arg3[%c5, %c0_28, %c0_29] : memref<9x96x256xbf16, #tpu.memory_space<vmem>>, vector<1x96x256xbf16>
      %39 = vector.shape_cast %38 : vector<1x96x256xbf16> to vector<96x256xbf16>
      %cst_30 = arith.constant dense<0.000000e+00> : vector<2x256xf32>
      %40 = tpu.matmul %37, %39, %cst_30 {dimension_numbers = #tpu.dot_dimension_numbers<[1], [0], [0], [1], [0, 0, 1, 1], [], []>} : vector<2x96xbf16>, vector<96x256xbf16>, vector<2x256xf32> -> vector<2x256xf32>
      %41 = arith.addf %36, %40 : vector<2x256xf32>
      %c2_i32_31 = arith.constant 2 : i32
      %42 = arith.muli %arg5, %c2_i32_31 : i32
      %c2_i32_32 = arith.constant 2 : i32
      %43 = arith.addi %42, %c2_i32_32 : i32
      %c0_33 = arith.constant 0 : index
      %c0_34 = arith.constant 0 : index
      %44 = arith.index_cast %43 : i32 to index
      %c0_35 = arith.constant 0 : index
      %c0_36 = arith.constant 0 : index
      %45 = vector.load %arg2[%c0_33, %c0_34, %44, %c0_35, %c0_36] : memref<1x1x5x6x96xbf16, #tpu.memory_space<vmem>>, vector<1x1x1x6x96xbf16>
      %46 = vector.shape_cast %45 : vector<1x1x1x6x96xbf16> to vector<6x96xbf16>
      %47 = vector.extract_strided_slice %46 {offsets = [0, 0], sizes = [2, 96], strides = [1, 1]} : vector<6x96xbf16> to vector<2x96xbf16>
      %c6 = arith.constant 6 : index
      %c0_37 = arith.constant 0 : index
      %c0_38 = arith.constant 0 : index
      %48 = vector.load %arg3[%c6, %c0_37, %c0_38] : memref<9x96x256xbf16, #tpu.memory_space<vmem>>, vector<1x96x256xbf16>
      %49 = vector.shape_cast %48 : vector<1x96x256xbf16> to vector<96x256xbf16>
      %cst_39 = arith.constant dense<0.000000e+00> : vector<2x256xf32>
      %50 = tpu.matmul %47, %49, %cst_39 {dimension_numbers = #tpu.dot_dimension_numbers<[1], [0], [0], [1], [0, 0, 1, 1], [], []>} : vector<2x96xbf16>, vector<96x256xbf16>, vector<2x256xf32> -> vector<2x256xf32>
      %51 = arith.addf %41, %50 : vector<2x256xf32>
      %52 = vector.extract_strided_slice %46 {offsets = [3, 0], sizes = [2, 96], strides = [1, 1]} : vector<6x96xbf16> to vector<2x96xbf16>
      %c7 = arith.constant 7 : index
      %c0_40 = arith.constant 0 : index
      %c0_41 = arith.constant 0 : index
      %53 = vector.load %arg3[%c7, %c0_40, %c0_41] : memref<9x96x256xbf16, #tpu.memory_space<vmem>>, vector<1x96x256xbf16>
      %54 = vector.shape_cast %53 : vector<1x96x256xbf16> to vector<96x256xbf16>
      %cst_42 = arith.constant dense<0.000000e+00> : vector<2x256xf32>
      %55 = tpu.matmul %52, %54, %cst_42 {dimension_numbers = #tpu.dot_dimension_numbers<[1], [0], [0], [1], [0, 0, 1, 1], [], []>} : vector<2x96xbf16>, vector<96x256xbf16>, vector<2x256xf32> -> vector<2x256xf32>
      %56 = arith.addf %51, %55 : vector<2x256xf32>
      %57 = vector.extract_strided_slice %46 {offsets = [1, 0], sizes = [2, 96], strides = [1, 1]} : vector<6x96xbf16> to vector<2x96xbf16>
      %c8 = arith.constant 8 : index
      %c0_43 = arith.constant 0 : index
      %c0_44 = arith.constant 0 : index
      %58 = vector.load %arg3[%c8, %c0_43, %c0_44] : memref<9x96x256xbf16, #tpu.memory_space<vmem>>, vector<1x96x256xbf16>
      %59 = vector.shape_cast %58 : vector<1x96x256xbf16> to vector<96x256xbf16>
      %cst_45 = arith.constant dense<0.000000e+00> : vector<2x256xf32>
      %60 = tpu.matmul %57, %59, %cst_45 {dimension_numbers = #tpu.dot_dimension_numbers<[1], [0], [0], [1], [0, 0, 1, 1], [], []>} : vector<2x96xbf16>, vector<96x256xbf16>, vector<2x256xf32> -> vector<2x256xf32>
      %61 = arith.addf %56, %60 : vector<2x256xf32>
      %62 = vector.extract_strided_slice %61 {offsets = [0, 0], sizes = [2, 128], strides = [1, 1]} : vector<2x256xf32> to vector<2x128xf32>
      %63 = vector.extract_strided_slice %61 {offsets = [0, 128], sizes = [2, 128], strides = [1, 1]} : vector<2x256xf32> to vector<2x128xf32>
      %64 = arith.negf %63 : vector<2x128xf32>
      %65 = math.exp %64 : vector<2x128xf32>
      %cst_46 = arith.constant 1.000000e+00 : f32
      %66 = vector.broadcast %cst_46 : f32 to vector<2x128xf32>
      %67 = arith.addf %66, %65 : vector<2x128xf32>
      %68 = arith.divf %66, %67 : vector<2x128xf32>
      %cst_47 = arith.constant 0.000000e+00 : f32
      %69 = vector.broadcast %cst_47 : f32 to vector<2x128xf32>
      %70 = arith.maximumf %62, %69 : vector<2x128xf32>
      %71 = arith.mulf %68, %70 : vector<2x128xf32>
      %72 = arith.truncf %71 : vector<2x128xf32> to vector<2x128xbf16>
      %c0_48 = arith.constant 0 : index
      %73 = arith.index_cast %arg5 : i32 to index
      %c0_49 = arith.constant 0 : index
      %c0_50 = arith.constant 0 : index
      %74 = vector.load %arg4[%c0_48, %73, %c0_49, %c0_50] : memref<1x2x2x128xbf16, #tpu.memory_space<vmem>>, vector<1x1x2x128xbf16>
      %75 = vector.shape_cast %74 : vector<1x1x2x128xbf16> to vector<2x128xbf16>
      %76 = vector.shape_cast %72 : vector<2x128xbf16> to vector<1x1x2x128xbf16>
      tpu.vector_store %arg4[%c0_48, %73, %c0_49, %c0_50], %76 {strides = array<i32>} : memref<1x2x2x128xbf16, #tpu.memory_space<vmem>>, vector<1x1x2x128xbf16>,
    }
    %c2_i32_0 = arith.constant 2 : i32
    return
  }
  func.func @transform_0(%arg0: i32, %arg1: i32) -> (i32, i32, i32, i32, i32) {
    %c0_i32 = arith.constant 0 : i32
    %c0_i32_0 = arith.constant 0 : i32
    %c0_i32_1 = arith.constant 0 : i32
    %c0_i32_2 = arith.constant 0 : i32
    return %arg0, %arg1, %c0_i32, %c0_i32_0, %c0_i32_1 : i32, i32, i32, i32, i32
  }
  func.func @transform_1(%arg0: i32, %arg1: i32) -> (i32, i32, i32) {
    %c0_i32 = arith.constant 0 : i32
    %c0_i32_0 = arith.constant 0 : i32
    %c0_i32_1 = arith.constant 0 : i32
    %c0_i32_2 = arith.constant 0 : i32
    return %c0_i32, %c0_i32_0, %c0_i32_1 : i32, i32, i32
  }
  func.func @transform_2(%arg0: i32, %arg1: i32) -> (i32, i32, i32, i32) {
    %c0_i32 = arith.constant 0 : i32
    %c0_i32_0 = arith.constant 0 : i32
    %c0_i32_1 = arith.constant 0 : i32
    return %arg0, %arg1, %c0_i32, %c0_i32_0 : i32, i32, i32, i32
  }
}

module attributes {stable_mosaic.version = 11 : i64} {
  func.func @_gated_conv_kernel(%arg0: i32, %arg1: i32, %arg2: memref<1x1x4x4x128xbf16, #tpu.memory_space<vmem>>, %arg3: memref<9x128x256xbf16, #tpu.memory_space<vmem>>, %arg4: memref<1x2x2x128xbf16, #tpu.memory_space<vmem>>) attributes {dimension_semantics = [#tpu.dimension_semantics<parallel>, #tpu.dimension_semantics<parallel>], iteration_bounds = array<i64: 2, 1>, scalar_prefetch = 0 : i64, scratch_operands = 0 : i64, tpu.core_type = #tpu.core_type<tc>, window_params = [{transform_indices = @transform_0, window_bounds = array<i64: 1, 1, 4, 4, 128>}, {pipeline_mode = #tpu.pipeline_mode<synchronous>, transform_indices = @transform_1, window_bounds = array<i64: 9, 128, 256>}, {transform_indices = @transform_2, window_bounds = array<i64: 1, 2, 2, 128>}]} {
    %c0_i32 = arith.constant 0 : i32
    %c2_i32 = arith.constant 2 : i32
    %0 = arith.addi %c0_i32, %c2_i32 : i32
    %c1_i32 = arith.constant 1 : i32
    scf.for %arg5 = %c0_i32 to %0 step %c1_i32  : i32 {
      %cst = arith.constant 0.000000e+00 : f32
      %1 = vector.broadcast %cst : f32 to vector<2x256xf32>
      %c1_i32_1 = arith.constant 1 : i32
      %2 = arith.muli %arg5, %c1_i32_1 : i32
      %c0_i32_2 = arith.constant 0 : i32
      %3 = arith.addi %2, %c0_i32_2 : i32
      %c0 = arith.constant 0 : index
      %c0_3 = arith.constant 0 : index
      %4 = arith.index_cast %3 : i32 to index
      %c0_4 = arith.constant 0 : index
      %c0_5 = arith.constant 0 : index
      %5 = vector.load %arg2[%c0, %c0_3, %4, %c0_4, %c0_5] : memref<1x1x4x4x128xbf16, #tpu.memory_space<vmem>>, vector<1x1x1x4x128xbf16>
      %6 = vector.shape_cast %5 : vector<1x1x1x4x128xbf16> to vector<4x128xbf16>
      %7 = vector.extract_strided_slice %6 {offsets = [0, 0], sizes = [2, 128], strides = [1, 1]} : vector<4x128xbf16> to vector<2x128xbf16>
      %c0_6 = arith.constant 0 : index
      %c0_7 = arith.constant 0 : index
      %c0_8 = arith.constant 0 : index
      %8 = vector.load %arg3[%c0_6, %c0_7, %c0_8] : memref<9x128x256xbf16, #tpu.memory_space<vmem>>, vector<1x128x256xbf16>
      %9 = vector.shape_cast %8 : vector<1x128x256xbf16> to vector<128x256xbf16>
      %cst_9 = arith.constant dense<0.000000e+00> : vector<2x256xf32>
      %10 = tpu.matmul %7, %9, %cst_9 {dimension_numbers = #tpu.dot_dimension_numbers<[1], [0], [0], [1], [0, 0, 1, 1], [], []>} : vector<2x128xbf16>, vector<128x256xbf16>, vector<2x256xf32> -> vector<2x256xf32>
      %11 = arith.addf %1, %10 : vector<2x256xf32>
      %12 = vector.extract_strided_slice %6 {offsets = [1, 0], sizes = [2, 128], strides = [1, 1]} : vector<4x128xbf16> to vector<2x128xbf16>
      %c1 = arith.constant 1 : index
      %c0_10 = arith.constant 0 : index
      %c0_11 = arith.constant 0 : index
      %13 = vector.load %arg3[%c1, %c0_10, %c0_11] : memref<9x128x256xbf16, #tpu.memory_space<vmem>>, vector<1x128x256xbf16>
      %14 = vector.shape_cast %13 : vector<1x128x256xbf16> to vector<128x256xbf16>
      %cst_12 = arith.constant dense<0.000000e+00> : vector<2x256xf32>
      %15 = tpu.matmul %12, %14, %cst_12 {dimension_numbers = #tpu.dot_dimension_numbers<[1], [0], [0], [1], [0, 0, 1, 1], [], []>} : vector<2x128xbf16>, vector<128x256xbf16>, vector<2x256xf32> -> vector<2x256xf32>
      %16 = arith.addf %11, %15 : vector<2x256xf32>
      %17 = vector.extract_strided_slice %6 {offsets = [2, 0], sizes = [2, 128], strides = [1, 1]} : vector<4x128xbf16> to vector<2x128xbf16>
      %c2 = arith.constant 2 : index
      %c0_13 = arith.constant 0 : index
      %c0_14 = arith.constant 0 : index
      %18 = vector.load %arg3[%c2, %c0_13, %c0_14] : memref<9x128x256xbf16, #tpu.memory_space<vmem>>, vector<1x128x256xbf16>
      %19 = vector.shape_cast %18 : vector<1x128x256xbf16> to vector<128x256xbf16>
      %cst_15 = arith.constant dense<0.000000e+00> : vector<2x256xf32>
      %20 = tpu.matmul %17, %19, %cst_15 {dimension_numbers = #tpu.dot_dimension_numbers<[1], [0], [0], [1], [0, 0, 1, 1], [], []>} : vector<2x128xbf16>, vector<128x256xbf16>, vector<2x256xf32> -> vector<2x256xf32>
      %21 = arith.addf %16, %20 : vector<2x256xf32>
      %c1_i32_16 = arith.constant 1 : i32
      %22 = arith.muli %arg5, %c1_i32_16 : i32
      %c1_i32_17 = arith.constant 1 : i32
      %23 = arith.addi %22, %c1_i32_17 : i32
      %c0_18 = arith.constant 0 : index
      %c0_19 = arith.constant 0 : index
      %24 = arith.index_cast %23 : i32 to index
      %c0_20 = arith.constant 0 : index
      %c0_21 = arith.constant 0 : index
      %25 = vector.load %arg2[%c0_18, %c0_19, %24, %c0_20, %c0_21] : memref<1x1x4x4x128xbf16, #tpu.memory_space<vmem>>, vector<1x1x1x4x128xbf16>
      %26 = vector.shape_cast %25 : vector<1x1x1x4x128xbf16> to vector<4x128xbf16>
      %27 = vector.extract_strided_slice %26 {offsets = [0, 0], sizes = [2, 128], strides = [1, 1]} : vector<4x128xbf16> to vector<2x128xbf16>
      %c3 = arith.constant 3 : index
      %c0_22 = arith.constant 0 : index
      %c0_23 = arith.constant 0 : index
      %28 = vector.load %arg3[%c3, %c0_22, %c0_23] : memref<9x128x256xbf16, #tpu.memory_space<vmem>>, vector<1x128x256xbf16>
      %29 = vector.shape_cast %28 : vector<1x128x256xbf16> to vector<128x256xbf16>
      %cst_24 = arith.constant dense<0.000000e+00> : vector<2x256xf32>
      %30 = tpu.matmul %27, %29, %cst_24 {dimension_numbers = #tpu.dot_dimension_numbers<[1], [0], [0], [1], [0, 0, 1, 1], [], []>} : vector<2x128xbf16>, vector<128x256xbf16>, vector<2x256xf32> -> vector<2x256xf32>
      %31 = arith.addf %21, %30 : vector<2x256xf32>
      %32 = vector.extract_strided_slice %26 {offsets = [1, 0], sizes = [2, 128], strides = [1, 1]} : vector<4x128xbf16> to vector<2x128xbf16>
      %c4 = arith.constant 4 : index
      %c0_25 = arith.constant 0 : index
      %c0_26 = arith.constant 0 : index
      %33 = vector.load %arg3[%c4, %c0_25, %c0_26] : memref<9x128x256xbf16, #tpu.memory_space<vmem>>, vector<1x128x256xbf16>
      %34 = vector.shape_cast %33 : vector<1x128x256xbf16> to vector<128x256xbf16>
      %cst_27 = arith.constant dense<0.000000e+00> : vector<2x256xf32>
      %35 = tpu.matmul %32, %34, %cst_27 {dimension_numbers = #tpu.dot_dimension_numbers<[1], [0], [0], [1], [0, 0, 1, 1], [], []>} : vector<2x128xbf16>, vector<128x256xbf16>, vector<2x256xf32> -> vector<2x256xf32>
      %36 = arith.addf %31, %35 : vector<2x256xf32>
      %37 = vector.extract_strided_slice %26 {offsets = [2, 0], sizes = [2, 128], strides = [1, 1]} : vector<4x128xbf16> to vector<2x128xbf16>
      %c5 = arith.constant 5 : index
      %c0_28 = arith.constant 0 : index
      %c0_29 = arith.constant 0 : index
      %38 = vector.load %arg3[%c5, %c0_28, %c0_29] : memref<9x128x256xbf16, #tpu.memory_space<vmem>>, vector<1x128x256xbf16>
      %39 = vector.shape_cast %38 : vector<1x128x256xbf16> to vector<128x256xbf16>
      %cst_30 = arith.constant dense<0.000000e+00> : vector<2x256xf32>
      %40 = tpu.matmul %37, %39, %cst_30 {dimension_numbers = #tpu.dot_dimension_numbers<[1], [0], [0], [1], [0, 0, 1, 1], [], []>} : vector<2x128xbf16>, vector<128x256xbf16>, vector<2x256xf32> -> vector<2x256xf32>
      %41 = arith.addf %36, %40 : vector<2x256xf32>
      %c1_i32_31 = arith.constant 1 : i32
      %42 = arith.muli %arg5, %c1_i32_31 : i32
      %c2_i32_32 = arith.constant 2 : i32
      %43 = arith.addi %42, %c2_i32_32 : i32
      %c0_33 = arith.constant 0 : index
      %c0_34 = arith.constant 0 : index
      %44 = arith.index_cast %43 : i32 to index
      %c0_35 = arith.constant 0 : index
      %c0_36 = arith.constant 0 : index
      %45 = vector.load %arg2[%c0_33, %c0_34, %44, %c0_35, %c0_36] : memref<1x1x4x4x128xbf16, #tpu.memory_space<vmem>>, vector<1x1x1x4x128xbf16>
      %46 = vector.shape_cast %45 : vector<1x1x1x4x128xbf16> to vector<4x128xbf16>
      %47 = vector.extract_strided_slice %46 {offsets = [0, 0], sizes = [2, 128], strides = [1, 1]} : vector<4x128xbf16> to vector<2x128xbf16>
      %c6 = arith.constant 6 : index
      %c0_37 = arith.constant 0 : index
      %c0_38 = arith.constant 0 : index
      %48 = vector.load %arg3[%c6, %c0_37, %c0_38] : memref<9x128x256xbf16, #tpu.memory_space<vmem>>, vector<1x128x256xbf16>
      %49 = vector.shape_cast %48 : vector<1x128x256xbf16> to vector<128x256xbf16>
      %cst_39 = arith.constant dense<0.000000e+00> : vector<2x256xf32>
      %50 = tpu.matmul %47, %49, %cst_39 {dimension_numbers = #tpu.dot_dimension_numbers<[1], [0], [0], [1], [0, 0, 1, 1], [], []>} : vector<2x128xbf16>, vector<128x256xbf16>, vector<2x256xf32> -> vector<2x256xf32>
      %51 = arith.addf %41, %50 : vector<2x256xf32>
      %52 = vector.extract_strided_slice %46 {offsets = [1, 0], sizes = [2, 128], strides = [1, 1]} : vector<4x128xbf16> to vector<2x128xbf16>
      %c7 = arith.constant 7 : index
      %c0_40 = arith.constant 0 : index
      %c0_41 = arith.constant 0 : index
      %53 = vector.load %arg3[%c7, %c0_40, %c0_41] : memref<9x128x256xbf16, #tpu.memory_space<vmem>>, vector<1x128x256xbf16>
      %54 = vector.shape_cast %53 : vector<1x128x256xbf16> to vector<128x256xbf16>
      %cst_42 = arith.constant dense<0.000000e+00> : vector<2x256xf32>
      %55 = tpu.matmul %52, %54, %cst_42 {dimension_numbers = #tpu.dot_dimension_numbers<[1], [0], [0], [1], [0, 0, 1, 1], [], []>} : vector<2x128xbf16>, vector<128x256xbf16>, vector<2x256xf32> -> vector<2x256xf32>
      %56 = arith.addf %51, %55 : vector<2x256xf32>
      %57 = vector.extract_strided_slice %46 {offsets = [2, 0], sizes = [2, 128], strides = [1, 1]} : vector<4x128xbf16> to vector<2x128xbf16>
      %c8 = arith.constant 8 : index
      %c0_43 = arith.constant 0 : index
      %c0_44 = arith.constant 0 : index
      %58 = vector.load %arg3[%c8, %c0_43, %c0_44] : memref<9x128x256xbf16, #tpu.memory_space<vmem>>, vector<1x128x256xbf16>
      %59 = vector.shape_cast %58 : vector<1x128x256xbf16> to vector<128x256xbf16>
      %cst_45 = arith.constant dense<0.000000e+00> : vector<2x256xf32>
      %60 = tpu.matmul %57, %59, %cst_45 {dimension_numbers = #tpu.dot_dimension_numbers<[1], [0], [0], [1], [0, 0, 1, 1], [], []>} : vector<2x128xbf16>, vector<128x256xbf16>, vector<2x256xf32> -> vector<2x256xf32>
      %61 = arith.addf %56, %60 : vector<2x256xf32>
      %62 = vector.extract_strided_slice %61 {offsets = [0, 0], sizes = [2, 128], strides = [1, 1]} : vector<2x256xf32> to vector<2x128xf32>
      %63 = vector.extract_strided_slice %61 {offsets = [0, 128], sizes = [2, 128], strides = [1, 1]} : vector<2x256xf32> to vector<2x128xf32>
      %64 = arith.negf %63 : vector<2x128xf32>
      %65 = math.exp %64 : vector<2x128xf32>
      %cst_46 = arith.constant 1.000000e+00 : f32
      %66 = vector.broadcast %cst_46 : f32 to vector<2x128xf32>
      %67 = arith.addf %66, %65 : vector<2x128xf32>
      %68 = arith.divf %66, %67 : vector<2x128xf32>
      %cst_47 = arith.constant 0.000000e+00 : f32
      %69 = vector.broadcast %cst_47 : f32 to vector<2x128xf32>
      %70 = arith.maximumf %62, %69 : vector<2x128xf32>
      %71 = arith.mulf %68, %70 : vector<2x128xf32>
      %72 = arith.truncf %71 : vector<2x128xf32> to vector<2x128xbf16>
      %c0_48 = arith.constant 0 : index
      %73 = arith.index_cast %arg5 : i32 to index
      %c0_49 = arith.constant 0 : index
      %c0_50 = arith.constant 0 : index
      %74 = vector.load %arg4[%c0_48, %73, %c0_49, %c0_50] : memref<1x2x2x128xbf16, #tpu.memory_space<vmem>>, vector<1x1x2x128xbf16>
      %75 = vector.shape_cast %74 : vector<1x1x2x128xbf16> to vector<2x128xbf16>
      %76 = vector.shape_cast %72 : vector<2x128xbf16> to vector<1x1x2x128xbf16>
      tpu.vector_store %arg4[%c0_48, %73, %c0_49, %c0_50], %76 {strides = array<i32>} : memref<1x2x2x128xbf16, #tpu.memory_space<vmem>>, vector<1x1x2x128xbf16>,
    }
    %c2_i32_0 = arith.constant 2 : i32
    return
  }
  func.func @transform_0(%arg0: i32, %arg1: i32) -> (i32, i32, i32, i32, i32) {
    %c0_i32 = arith.constant 0 : i32
    %c0_i32_0 = arith.constant 0 : i32
    %c0_i32_1 = arith.constant 0 : i32
    %c0_i32_2 = arith.constant 0 : i32
    return %arg0, %arg1, %c0_i32, %c0_i32_0, %c0_i32_1 : i32, i32, i32, i32, i32
  }
  func.func @transform_1(%arg0: i32, %arg1: i32) -> (i32, i32, i32) {
    %c0_i32 = arith.constant 0 : i32
    %c0_i32_0 = arith.constant 0 : i32
    %c0_i32_1 = arith.constant 0 : i32
    %c0_i32_2 = arith.constant 0 : i32
    return %c0_i32, %c0_i32_0, %c0_i32_1 : i32, i32, i32
  }
  func.func @transform_2(%arg0: i32, %arg1: i32) -> (i32, i32, i32, i32) {
    %c0_i32 = arith.constant 0 : i32
    %c0_i32_0 = arith.constant 0 : i32
    %c0_i32_1 = arith.constant 0 : i32
    return %arg0, %arg1, %c0_i32, %c0_i32_0 : i32, i32, i32, i32
  }
}

</mosaic_0001>

<llo_original>
// kernel: _encoder_forward_nhwc.8
$region0: #{_encoder_forward_nhwc.8}
  #allocation0 [shape = 'u32[]', space=smem, size = 0x4, offset = 0x4, fixed_abs, tag = 'smem constant byte address 0x4 - core index']
  #allocation1 [shape = 'u32[144,128]{1,0:T(1,128)}', space=vmem, size = 0x12000, scoped, tag = 'internal scratch']
  %s0 = inlined_call_operand.vmem [shape: bf16[2,1,18,18,5], index: 0, kind: input, shape index: {}]
  %s1 = inlined_call_operand.vmem [shape: bf16[9,5,256], index: 1, kind: input, shape index: {}]
  %s2 = inlined_call_operand.vmem [shape: bf16[2,16,16,32], index: 2, kind: output, shape index: {}]
  %s3 = sld [smem:[#allocation0]]
  $region48: #{_encoder_forward_nhwc.8} parent=0
    _
  %s5 = ssub.s32 1, %s3
  %s6 = scalar_select 0, %s5, %s3
  loop: start=0, step=1, limit=4
  $region2: #{_encoder_forward_nhwc.8} parent=0 // loop_pre_header
    _
  $region3: #{_encoder_forward_nhwc.8} parent=0 // loop_header
    %s8 = sphi 0, %s12
    %p9 = scmp.ge.s32.totalorder %s8, 4
    %s15 = sphi 0, %s27
    %s16 = sphi 0, %s23
    %s17 = sphi 0, %s15
    %s18 = sphi 0, %s16
    %s19 = sphi 0, %s17
    %s20 = sphi 0, %s18
    %s32 = sphi 0, %s34
    %s35 = sphi 0, %s32
    %s36 = sphi 0, %s35
    %s52 = sphi 0, %s36
    %s56 = sphi 0, %s56
    %s58 = sphi 0, %s56
    %s59 = sphi 0, %s58
    %s73 = sphi 0, %s59
    %s81 = sphi 0, %s83
    %s84 = sphi 0, %s81
    %s85 = sphi 0, %s84
    %s101 = sphi 0, %s85
  $region4: #{_encoder_forward_nhwc.8} parent=0 // loop_header_branch
    %11 = sbr.rel (%p9) target = $region8
  $region5: #{_encoder_forward_nhwc.8} parent=0 // loop_body
    %s13 = ssub.s32 %s8, 1
    %s14 = ssub.s32 %s8, 2
    %s21 = sadd.s32 1, %s16
    %p22 = scmp.ge.s32.totalorder %s21, 1
    %s23 = scalar_select %p22, 0, %s21
    %s24 = sadd.s32 1, %s15
    %s25 = scalar_select %p22, %s24, %s15
    %p26 = scmp.ge.s32.totalorder %s25, 2
    %s27 = scalar_select %p26, 0, %s25
    %s28 = ssub.s32 %s15, %s27
    %s29 = ssub.s32 %s16, %s23
    %s30 = sor.u32 %s28, %s29
    %p31 = scmp.eq.s32.totalorder %s30, 0
    %s33 = sadd.s32 %s32, 1
    %s34 = scalar_select %p31, %s32, %s33
    %p37 = pneg %p31
    %p38 = scmp.eq.s32.totalorder %s8, 1
    %p39 = por %p37, %p38
    %p40 = scmp.ne.s32.totalorder %s32, %s35
    %p41 = scmp.eq.s32.totalorder %s8, 0
    %p42 = por %p40, %p41
    %p43 = scmp.ne.s32.totalorder %s32, %s35
    %p44 = scmp.eq.s32.totalorder %s13, 1
    %p45 = por %p43, %p44
    %p46 = scmp.ne.s32.totalorder %s35, %s36
    %p47 = scmp.eq.s32.totalorder %s13, 0
    %p48 = por %p46, %p47
    %p49 = scmp.ne.s32.totalorder %s35, %s36
    %p50 = scmp.eq.s32.totalorder %s14, 1
    %p51 = por %p49, %p50
    %p53 = scmp.ne.s32.totalorder %s36, %s52
    %p54 = scmp.eq.s32.totalorder %s14, 0
    %p55 = por %p53, %p54
    %s57 = sadd.s32 %s56, 1
    %p60 = scmp.eq.s32.totalorder %s8, 1
    %p61 = scmp.ne.s32.totalorder %s56, %s58
    %p62 = scmp.eq.s32.totalorder %s8, 0
    %p63 = por %p61, %p62
    %p64 = scmp.ne.s32.totalorder %s56, %s58
    %p65 = scmp.eq.s32.totalorder %s13, 1
    %p66 = por %p64, %p65
    %p67 = scmp.ne.s32.totalorder %s58, %s59
    %p68 = scmp.eq.s32.totalorder %s13, 0
    %p69 = por %p67, %p68
    %p70 = scmp.ne.s32.totalorder %s58, %s59
    %p71 = scmp.eq.s32.totalorder %s14, 1
    %p72 = por %p70, %p71
    %p74 = scmp.ne.s32.totalorder %s59, %s73
    %p75 = scmp.eq.s32.totalorder %s14, 0
    %p76 = por %p74, %p75
    %s77 = ssub.s32 %s15, %s27
    %s78 = ssub.s32 %s16, %s23
    %s79 = sor.u32 %s77, %s78
    %p80 = scmp.eq.s32.totalorder %s79, 0
    %s82 = sadd.s32 %s81, 1
    %s83 = scalar_select %p80, %s81, %s82
    %p86 = pneg %p80
    %p87 = scmp.eq.s32.totalorder %s8, 1
    %p88 = por %p86, %p87
    %p89 = scmp.ne.s32.totalorder %s81, %s84
    %p90 = scmp.eq.s32.totalorder %s8, 0
    %p91 = por %p89, %p90
    %p92 = scmp.ne.s32.totalorder %s81, %s84
    %p93 = scmp.eq.s32.totalorder %s13, 1
    %p94 = por %p92, %p93
    %p95 = scmp.ne.s32.totalorder %s84, %s85
    %p96 = scmp.eq.s32.totalorder %s13, 0
    %p97 = por %p95, %p96
    %p98 = scmp.ne.s32.totalorder %s84, %s85
    %p99 = scmp.eq.s32.totalorder %s14, 1
    %p100 = por %p98, %p99
    %p102 = scmp.ne.s32.totalorder %s85, %s101
    %p103 = scmp.eq.s32.totalorder %s14, 0
    %p104 = por %p102, %p103
    %p105 = scmp.le.s32.totalorder 1, %s8
    %p106 = scmp.lt.s32.totalorder %s8, 3
    %p107 = pnand %p105, %p106
    %p108 = pneg %p107
    // Predicated region
    $region9: #{_encoder_forward_nhwc.8} parent=5 // pred_check
      _
    $region10: #{_encoder_forward_nhwc.8} parent=5 // pred_check_branch
      %110 = sbr.rel (%p107) target = $region12
    $region11: #{_encoder_forward_nhwc.8} parent=5 // pred_region
      %s111 = ssub.s32 %s8, 1
      // Predicated region
      $region13: #{_encoder_forward_nhwc.8} parent=11 // pred_check
        %p112 = pneg %p69
      $region14: #{_encoder_forward_nhwc.8} parent=11 // pred_check_branch
        %114 = sbr.rel (%p112) target = $region16
      $region15: #{_encoder_forward_nhwc.8} parent=11 // pred_region
        _
      $region16: #{_encoder_forward_nhwc.8} parent=11 // pred_fallthru
        _
    $region12: #{_encoder_forward_nhwc.8} parent=5 // pred_fallthru
      _
    %p115 = scmp.lt.s32.totalorder %s8, 2
    // Predicated region
    $region17: #{_encoder_forward_nhwc.8} parent=5 // pred_check
      %p116 = pneg %p115
    $region18: #{_encoder_forward_nhwc.8} parent=5 // pred_check_branch
      %118 = sbr.rel (%p116) target = $region20
    $region19: #{_encoder_forward_nhwc.8} parent=5 // pred_region
      // Predicated region
      $region21: #{_encoder_forward_nhwc.8} parent=19 // pred_check
        %p119 = pneg %p42
      $region22: #{_encoder_forward_nhwc.8} parent=19 // pred_check_branch
        %121 = sbr.rel (%p119) target = $region24
      $region23: #{_encoder_forward_nhwc.8} parent=19 // pred_region
        %p122 = scmp.lt.s32.totalorder %s15, 1
        %s123 = scalar_select %p122, %s15, 1
        %p124 = scmp.lt.s32.totalorder %s16, 0
        %s125 = scalar_select %p124, %s16, 0
        %s126 = smul.addr %s125, 54
        %s127 = smul.addr %s123, 54
        %s128 = sadd.s32 %s126, %s127
        %s129 = smul.addr %s128, 4
        %s130 = scalar_lea.vmem %s0, %s129
      $region24: #{_encoder_forward_nhwc.8} parent=19 // pred_fallthru
        _
    $region20: #{_encoder_forward_nhwc.8} parent=5 // pred_fallthru
      _
    %p131 = scmp.le.s32.totalorder 1, %s8
    %p132 = scmp.lt.s32.totalorder %s8, 3
    %p133 = pnand %p131, %p132
    %p134 = pneg %p133
    // Predicated region
    $region25: #{_encoder_forward_nhwc.8} parent=5 // pred_check
      _
    $region26: #{_encoder_forward_nhwc.8} parent=5 // pred_check_branch
      %136 = sbr.rel (%p133) target = $region28
    $region27: #{_encoder_forward_nhwc.8} parent=5 // pred_region
      %s137 = ssub.s32 %s8, 1
      %p138 = scmp.lt.s32.totalorder %s17, 1
      %s139 = scalar_select %p138, %s17, 1
      %p140 = scmp.lt.s32.totalorder %s18, 0
      %s141 = scalar_select %p140, %s18, 0
      %s142 = smul.addr %s141, 54
      %s143 = smul.addr %s139, 54
      %s144 = sadd.s32 %s142, %s143
      %s145 = smul.addr %s144, 4
      %s146 = scalar_lea.vmem %s0, %s145
      %p147 = pneg %p48
      %p148 = pneg %p45
      %p149 = pneg %p69
      %p150 = pneg %p66
      %p151 = pneg %p97
      %p152 = pneg %p94
      %s153 = smul.u32 16, %s18
      %p154 = scmp.lt.s32.totalorder %s17, 1
      %s155 = scalar_select %p154, %s17, 1
      %p156 = scmp.lt.s32.totalorder %s153, 15
      %s157 = scalar_select %p156, %s153, 15
      %s158 = smul.addr %s157, 2
      %s159 = smul.addr %s155, 32
      %s160 = sadd.s32 %s158, %s159
      %s161 = smul.addr %s160, 4
      %s162 = scalar_lea.vmem %s2, %s161
      %p163 = scmp.lt.s32.totalorder %s17, 1
      %s164 = scalar_select %p163, %s17, 1
      %p165 = scmp.lt.s32.totalorder %s18, 0
      %s166 = scalar_select %p165, %s18, 0
      %s167 = smul.addr %s166, 54
      %s168 = smul.addr %s164, 54
      %s169 = sadd.s32 %s167, %s168
      %s170 = smul.addr %s169, 4
      %s171 = scalar_lea.vmem %s0, %s170
      %s172 = smul.u32 16, %s18
      %p173 = scmp.lt.s32.totalorder %s17, 1
      %s174 = scalar_select %p173, %s17, 1
      %p175 = scmp.lt.s32.totalorder %s172, 15
      %s176 = scalar_select %p175, %s172, 15
      %s177 = smul.addr %s176, 2
      %s178 = smul.addr %s174, 32
      %s179 = sadd.s32 %s177, %s178
      %s180 = smul.addr %s179, 4
      %s181 = scalar_lea.vmem %s2, %s180
      %s182 = smul.u32 16, %s18
      loop: start=0, step=1, limit=16
      $region29: #{_encoder_forward_nhwc.8} parent=27 // loop_pre_header
        _
      $region30: #{_encoder_forward_nhwc.8} parent=27 // loop_header
        %s185 = sphi 0, %s189
        %p186 = scmp.ge.s32.totalorder %s185, 16
      $region31: #{_encoder_forward_nhwc.8} parent=27 // loop_header_branch
        %188 = sbr.rel (%p186) target = $region35
      $region32: #{_encoder_forward_nhwc.8} parent=27 // loop_body
        %s190 = smul.u32 %s185, 3
        %s191 = smul.addr %s190, 4
        %s192 = scalar_lea.vmem %s171, %s191
        %v193 = vld [vmem:[%s192] sm:$0xf]
        %v194 = vld [vmem:[%s192 + $0x4] sm:$0xf]
        %v195 = vld [vmem:[%s192 + $0x8] sm:$0x1]
        %v196 = vld [vmem:[%s1] sm:$0x77]
        %s197 = scalar_lea.vmem %s1, 8
        %v198 = vld [vmem:[%s197] sm:$0x77]
        %v202 = vunpack.c.l.b16 %v193
        %v203 = vunpack.c.l.b16 %v194
        %v204 = vunpack.c.l.b16 %v195
        %v205 = vpack.c.b16 %v203, %v202
        %v206 = vpack.c.b16 %v204, %v204
        %vm207 = vsmask.f32 7424
        %v209 = vshrl.u32 %v205, 16
        %v211 = vshll.u32 %v205, 16
        %v213 = vrot.slane %v211, 1
        %v214 = vor.u32 %v209, %v213
        %v216 = vshll.u32 %v206, 16
        %v218 = vrot.slane %v216, 1
        %v219 = vsel %vm207, %v214, %v218
        %v221 = vunpack.c.l.b16 %v198
        %v222 = vunpack.c.h.b16 %v198
        %v223 = vpack.c.b16 %v221, %v221
        %v224 = vpack.c.b16 %v222, %v222
        %vm225 = vcmask 39936
        %v227 = vsel %vm225, %v219, 0
        %vm229 = vcmask 1041408
        %vm230 = vcmask 1042432
        %v231 = vsel %vm229, 4294967295, 65535
        %v232 = vsel %vm230, %v231, 0
        %v234 = vand.u32 %v223, %v232
        %v237 = vand.u32 %v224, %v232
        %239 = vmatprep.subr.bf16.mxu0 %v237
        %240 = vmatpush1.bf16.msra.mxu0 %v234
        %241 = vmatprep.subr.bf16.mxu0 0
        %242 = vmatpush1.bf16.msra.mxu0 0
        %243 = vmatprep.subr.bf16.mxu0 0
        %244 = vmatpush1.bf16.msra.mxu0 0
        %245 = vmatprep.subr.bf16.mxu0 0
        %246 = vmatpush1.bf16.msra.mxu0 0
        %247 = vmatprep.subr.bf16.mxu0 0
        %248 = vmatpush1.bf16.msra.mxu0 0
        %249 = vmatprep.subr.bf16.mxu0 0
        %250 = vmatpush1.bf16.msra.mxu0 0
        %251 = vmatprep.subr.bf16.mxu0 0
        %252 = vmatpush1.bf16.msra.mxu0 0
        %253 = vmatprep.subr.bf16.mxu0 0
        %254 = vmatpush1.bf16.msra.mxu0 0
        %255 = vmatprep.subr.bf16.mxu0 0
        %256 = vmatpush1.bf16.msra.mxu0 0
        %257 = vmatprep.subr.bf16.mxu0 0
        %258 = vmatpush1.bf16.msra.mxu0 0
        %259 = vmatprep.subr.bf16.mxu0 0
        %260 = vmatpush1.bf16.msra.mxu0 0
        %261 = vmatprep.subr.bf16.mxu0 0
        %262 = vmatpush1.bf16.msra.mxu0 0
        %263 = vmatprep.subr.bf16.mxu0 0
        %264 = vmatpush1.bf16.msra.mxu0 0
        %265 = vmatprep.subr.bf16.mxu0 0
        %266 = vmatpush1.bf16.msra.mxu0 0
        %267 = vmatprep.subr.bf16.mxu0 0
        %268 = vmatpush1.bf16.msra.mxu0 0
        %269 = vmatprep.subr.bf16.mxu0 0
        %270 = vmatpush1.bf16.msra.mxu0 0
        %271 = vmatprep.mubr.bf16.mxu0 0
        %272 = vmatmul.mubr.bf16.gmra.mrb[0].mxu0 %v227
        %v273 = vpop.f32.mrb[0].mxu0
        %v274 = vadd.f32 0.0, %v273
        %v275 = vpop.f32.mrb[0].mxu0
        %v276 = vadd.f32 0.0, %v275
        %v277 = vpop.f32.mrb[0].mxu0
        %v278 = vadd.f32 0.0, %v277
        %v279 = vpop.f32.mrb[0].mxu0
        %v280 = vadd.f32 0.0, %v279
        %281 = vdwg.mxu0
        %v283 = vunpack.c.l.b16 %v196
        %v284 = vunpack.c.h.b16 %v196
        %v285 = vpack.c.b16 %v283, %v283
        %v286 = vpack.c.b16 %v284, %v284
        %v287 = vsel %vm225, %v205, 0
        %v290 = vand.u32 %v285, %v232
        %v293 = vand.u32 %v286, %v232
        %295 = vmatprep.subr.bf16.mxu0 %v293
        %296 = vmatpush1.bf16.msra.mxu0 %v290
        %297 = vmatprep.subr.bf16.mxu0 0
        %298 = vmatpush1.bf16.msra.mxu0 0
        %299 = vmatprep.subr.bf16.mxu0 0
        %300 = vmatpush1.bf16.msra.mxu0 0
        %301 = vmatprep.subr.bf16.mxu0 0
        %302 = vmatpush1.bf16.msra.mxu0 0
        %303 = vmatprep.subr.bf16.mxu0 0
        %304 = vmatpush1.bf16.msra.mxu0 0
        %305 = vmatprep.subr.bf16.mxu0 0
        %306 = vmatpush1.bf16.msra.mxu0 0
        %307 = vmatprep.subr.bf16.mxu0 0
        %308 = vmatpush1.bf16.msra.mxu0 0
        %309 = vmatprep.subr.bf16.mxu0 0
        %310 = vmatpush1.bf16.msra.mxu0 0
        %311 = vmatprep.subr.bf16.mxu0 0
        %312 = vmatpush1.bf16.msra.mxu0 0
        %313 = vmatprep.subr.bf16.mxu0 0
        %314 = vmatpush1.bf16.msra.mxu0 0
        %315 = vmatprep.subr.bf16.mxu0 0
        %316 = vmatpush1.bf16.msra.mxu0 0
        %317 = vmatprep.subr.bf16.mxu0 0
        %318 = vmatpush1.bf16.msra.mxu0 0
        %319 = vmatprep.subr.bf16.mxu0 0
        %320 = vmatpush1.bf16.msra.mxu0 0
        %321 = vmatprep.subr.bf16.mxu0 0
        %322 = vmatpush1.bf16.msra.mxu0 0
        %323 = vmatprep.subr.bf16.mxu0 0
        %324 = vmatpush1.bf16.msra.mxu0 0
        %325 = vmatprep.subr.bf16.mxu0 0
        %326 = vmatpush1.bf16.msra.mxu0 0
        %327 = vmatprep.mubr.bf16.mxu0 0
        %328 = vmatmul.mubr.bf16.gmra.mrb[0].mxu0 %v287
        %v329 = vpop.f32.mrb[0].mxu0
        %v330 = vadd.f32 %v274, %v329
        %v331 = vpop.f32.mrb[0].mxu0
        %v332 = vadd.f32 %v276, %v331
        %v333 = vpop.f32.mrb[0].mxu0
        %v334 = vadd.f32 %v278, %v333
        %v335 = vpop.f32.mrb[0].mxu0
        %v336 = vadd.f32 %v280, %v335
        %337 = vdwg.mxu0
        %s338 = scalar_lea.vmem %s1, 16
        %v339 = vld [vmem:[%s338] sm:$0x77]
        %vm340 = vcmask 1046528
        %v341 = vrot.slane %v205, 1
        %v342 = vrot.slane %v206, 1
        %v343 = vsel %vm340, %v341, %v342
        %v345 = vunpack.c.l.b16 %v339
        %v346 = vunpack.c.h.b16 %v339
        %v347 = vpack.c.b16 %v345, %v345
        %v348 = vpack.c.b16 %v346, %v346
        %v350 = vsel %vm225, %v343, 0
        %v353 = vand.u32 %v347, %v232
        %v356 = vand.u32 %v348, %v232
        %358 = vmatprep.subr.bf16.mxu0 %v356
        %359 = vmatpush1.bf16.msra.mxu0 %v353
        %360 = vmatprep.subr.bf16.mxu0 0
        %361 = vmatpush1.bf16.msra.mxu0 0
        %362 = vmatprep.subr.bf16.mxu0 0
        %363 = vmatpush1.bf16.msra.mxu0 0
        %364 = vmatprep.subr.bf16.mxu0 0
        %365 = vmatpush1.bf16.msra.mxu0 0
        %366 = vmatprep.subr.bf16.mxu0 0
        %367 = vmatpush1.bf16.msra.mxu0 0
        %368 = vmatprep.subr.bf16.mxu0 0
        %369 = vmatpush1.bf16.msra.mxu0 0
        %370 = vmatprep.subr.bf16.mxu0 0
        %371 = vmatpush1.bf16.msra.mxu0 0
        %372 = vmatprep.subr.bf16.mxu0 0
        %373 = vmatpush1.bf16.msra.mxu0 0
        %374 = vmatprep.subr.bf16.mxu0 0
        %375 = vmatpush1.bf16.msra.mxu0 0
        %376 = vmatprep.subr.bf16.mxu0 0
        %377 = vmatpush1.bf16.msra.mxu0 0
        %378 = vmatprep.subr.bf16.mxu0 0
        %379 = vmatpush1.bf16.msra.mxu0 0
        %380 = vmatprep.subr.bf16.mxu0 0
        %381 = vmatpush1.bf16.msra.mxu0 0
        %382 = vmatprep.subr.bf16.mxu0 0
        %383 = vmatpush1.bf16.msra.mxu0 0
        %384 = vmatprep.subr.bf16.mxu0 0
        %385 = vmatpush1.bf16.msra.mxu0 0
        %386 = vmatprep.subr.bf16.mxu0 0
        %387 = vmatpush1.bf16.msra.mxu0 0
        %388 = vmatprep.subr.bf16.mxu0 0
        %389 = vmatpush1.bf16.msra.mxu0 0
        %390 = vmatprep.mubr.bf16.mxu0 0
        %391 = vmatmul.mubr.bf16.gmra.mrb[0].mxu0 %v350
        %v392 = vpop.f32.mrb[0].mxu0
        %v393 = vadd.f32 0.0, %v392
        %v394 = vpop.f32.mrb[0].mxu0
        %v395 = vadd.f32 0.0, %v394
        %v396 = vpop.f32.mrb[0].mxu0
        %v397 = vadd.f32 0.0, %v396
        %v398 = vpop.f32.mrb[0].mxu0
        %v399 = vadd.f32 0.0, %v398
        %400 = vdwg.mxu0
        %v401 = vadd.f32 %v330, %v393
        %v402 = vadd.f32 %v332, %v395
        %v403 = vadd.f32 %v334, %v397
        %v404 = vadd.f32 %v336, %v399
        %s405 = sadd.s32 %s185, 1
        %s406 = smul.u32 %s405, 3
        %s407 = smul.addr %s406, 4
        %s408 = scalar_lea.vmem %s171, %s407
        %v409 = vld [vmem:[%s408] sm:$0xf]
        %v410 = vld [vmem:[%s408 + $0x4] sm:$0xf]
        %v411 = vld [vmem:[%s408 + $0x8] sm:$0x1]
        %s412 = scalar_lea.vmem %s1, 24
        %v413 = vld [vmem:[%s412] sm:$0x77]
        %v416 = vunpack.c.l.b16 %v409
        %v417 = vunpack.c.l.b16 %v410
        %v418 = vpack.c.b16 %v417, %v416
        %v420 = vunpack.c.l.b16 %v413
        %v421 = vunpack.c.h.b16 %v413
        %v422 = vpack.c.b16 %v420, %v420
        %v423 = vpack.c.b16 %v421, %v421
        %v425 = vsel %vm225, %v418, 0
        %v428 = vand.u32 %v422, %v232
        %v431 = vand.u32 %v423, %v232
        %433 = vmatprep.subr.bf16.mxu0 %v431
        %434 = vmatpush1.bf16.msra.mxu0 %v428
        %435 = vmatprep.subr.bf16.mxu0 0
        %436 = vmatpush1.bf16.msra.mxu0 0
        %437 = vmatprep.subr.bf16.mxu0 0
        %438 = vmatpush1.bf16.msra.mxu0 0
        %439 = vmatprep.subr.bf16.mxu0 0
        %440 = vmatpush1.bf16.msra.mxu0 0
        %441 = vmatprep.subr.bf16.mxu0 0
        %442 = vmatpush1.bf16.msra.mxu0 0
        %443 = vmatprep.subr.bf16.mxu0 0
        %444 = vmatpush1.bf16.msra.mxu0 0
        %445 = vmatprep.subr.bf16.mxu0 0
        %446 = vmatpush1.bf16.msra.mxu0 0
        %447 = vmatprep.subr.bf16.mxu0 0
        %448 = vmatpush1.bf16.msra.mxu0 0
        %449 = vmatprep.subr.bf16.mxu0 0
        %450 = vmatpush1.bf16.msra.mxu0 0
        %451 = vmatprep.subr.bf16.mxu0 0
        %452 = vmatpush1.bf16.msra.mxu0 0
        %453 = vmatprep.subr.bf16.mxu0 0
        %454 = vmatpush1.bf16.msra.mxu0 0
        %455 = vmatprep.subr.bf16.mxu0 0
        %456 = vmatpush1.bf16.msra.mxu0 0
        %457 = vmatprep.subr.bf16.mxu0 0
        %458 = vmatpush1.bf16.msra.mxu0 0
        %459 = vmatprep.subr.bf16.mxu0 0
        %460 = vmatpush1.bf16.msra.mxu0 0
        %461 = vmatprep.subr.bf16.mxu0 0
        %462 = vmatpush1.bf16.msra.mxu0 0
        %463 = vmatprep.subr.bf16.mxu0 0
        %464 = vmatpush1.bf16.msra.mxu0 0
        %465 = vmatprep.mubr.bf16.mxu0 0
        %466 = vmatmul.mubr.bf16.gmra.mrb[0].mxu0 %v425
        %v467 = vpop.f32.mrb[0].mxu0
        %v468 = vadd.f32 0.0, %v467
        %v469 = vpop.f32.mrb[0].mxu0
        %v470 = vadd.f32 0.0, %v469
        %v471 = vpop.f32.mrb[0].mxu0
        %v472 = vadd.f32 0.0, %v471
        %v473 = vpop.f32.mrb[0].mxu0
        %v474 = vadd.f32 0.0, %v473
        %475 = vdwg.mxu0
        %v476 = vadd.f32 %v401, %v468
        %v477 = vadd.f32 %v402, %v470
        %v478 = vadd.f32 %v403, %v472
        %v479 = vadd.f32 %v404, %v474
        %s480 = scalar_lea.vmem %s1, 32
        %v481 = vld [vmem:[%s480] sm:$0x77]
        %v483 = vunpack.c.l.b16 %v411
        %v484 = vpack.c.b16 %v483, %v483
        %v485 = vshrl.u32 %v418, 16
        %v487 = vshll.u32 %v418, 16
        %v489 = vrot.slane %v487, 1
        %v490 = vor.u32 %v485, %v489
        %v492 = vshll.u32 %v484, 16
        %v494 = vrot.slane %v492, 1
        %v495 = vsel %vm207, %v490, %v494
        %v497 = vunpack.c.l.b16 %v481
        %v498 = vunpack.c.h.b16 %v481
        %v499 = vpack.c.b16 %v497, %v497
        %v500 = vpack.c.b16 %v498, %v498
        %v502 = vsel %vm225, %v495, 0
        %v505 = vand.u32 %v499, %v232
        %v508 = vand.u32 %v500, %v232
        %510 = vmatprep.subr.bf16.mxu0 %v508
        %511 = vmatpush1.bf16.msra.mxu0 %v505
        %512 = vmatprep.subr.bf16.mxu0 0
        %513 = vmatpush1.bf16.msra.mxu0 0
        %514 = vmatprep.subr.bf16.mxu0 0
        %515 = vmatpush1.bf16.msra.mxu0 0
        %516 = vmatprep.subr.bf16.mxu0 0
        %517 = vmatpush1.bf16.msra.mxu0 0
        %518 = vmatprep.subr.bf16.mxu0 0
        %519 = vmatpush1.bf16.msra.mxu0 0
        %520 = vmatprep.subr.bf16.mxu0 0
        %521 = vmatpush1.bf16.msra.mxu0 0
        %522 = vmatprep.subr.bf16.mxu0 0
        %523 = vmatpush1.bf16.msra.mxu0 0
        %524 = vmatprep.subr.bf16.mxu0 0
        %525 = vmatpush1.bf16.msra.mxu0 0
        %526 = vmatprep.subr.bf16.mxu0 0
        %527 = vmatpush1.bf16.msra.mxu0 0
        %528 = vmatprep.subr.bf16.mxu0 0
        %529 = vmatpush1.bf16.msra.mxu0 0
        %530 = vmatprep.subr.bf16.mxu0 0
        %531 = vmatpush1.bf16.msra.mxu0 0
        %532 = vmatprep.subr.bf16.mxu0 0
        %533 = vmatpush1.bf16.msra.mxu0 0
        %534 = vmatprep.subr.bf16.mxu0 0
        %535 = vmatpush1.bf16.msra.mxu0 0
        %536 = vmatprep.subr.bf16.mxu0 0
        %537 = vmatpush1.bf16.msra.mxu0 0
        %538 = vmatprep.subr.bf16.mxu0 0
        %539 = vmatpush1.bf16.msra.mxu0 0
        %540 = vmatprep.subr.bf16.mxu0 0
        %541 = vmatpush1.bf16.msra.mxu0 0
        %542 = vmatprep.mubr.bf16.mxu0 0
        %543 = vmatmul.mubr.bf16.gmra.mrb[0].mxu0 %v502
        %v544 = vpop.f32.mrb[0].mxu0
        %v545 = vadd.f32 0.0, %v544
        %v546 = vpop.f32.mrb[0].mxu0
        %v547 = vadd.f32 0.0, %v546
        %v548 = vpop.f32.mrb[0].mxu0
        %v549 = vadd.f32 0.0, %v548
        %v550 = vpop.f32.mrb[0].mxu0
        %v551 = vadd.f32 0.0, %v550
        %552 = vdwg.mxu0
        %v553 = vadd.f32 %v476, %v545
        %v554 = vadd.f32 %v477, %v547
        %v555 = vadd.f32 %v478, %v549
        %v556 = vadd.f32 %v479, %v551
        %s557 = scalar_lea.vmem %s1, 40
        %v558 = vld [vmem:[%s557] sm:$0x77]
        %v559 = vrot.slane %v418, 1
        %v560 = vrot.slane %v484, 1
        %v561 = vsel %vm340, %v559, %v560
        %v563 = vunpack.c.l.b16 %v558
        %v564 = vunpack.c.h.b16 %v558
        %v565 = vpack.c.b16 %v563, %v563
        %v566 = vpack.c.b16 %v564, %v564
        %v568 = vsel %vm225, %v561, 0
        %v571 = vand.u32 %v565, %v232
        %v574 = vand.u32 %v566, %v232
        %576 = vmatprep.subr.bf16.mxu0 %v574
        %577 = vmatpush1.bf16.msra.mxu0 %v571
        %578 = vmatprep.subr.bf16.mxu0 0
        %579 = vmatpush1.bf16.msra.mxu0 0
        %580 = vmatprep.subr.bf16.mxu0 0
        %581 = vmatpush1.bf16.msra.mxu0 0
        %582 = vmatprep.subr.bf16.mxu0 0
        %583 = vmatpush1.bf16.msra.mxu0 0
        %584 = vmatprep.subr.bf16.mxu0 0
        %585 = vmatpush1.bf16.msra.mxu0 0
        %586 = vmatprep.subr.bf16.mxu0 0
        %587 = vmatpush1.bf16.msra.mxu0 0
        %588 = vmatprep.subr.bf16.mxu0 0
        %589 = vmatpush1.bf16.msra.mxu0 0
        %590 = vmatprep.subr.bf16.mxu0 0
        %591 = vmatpush1.bf16.msra.mxu0 0
        %592 = vmatprep.subr.bf16.mxu0 0
        %593 = vmatpush1.bf16.msra.mxu0 0
        %594 = vmatprep.subr.bf16.mxu0 0
        %595 = vmatpush1.bf16.msra.mxu0 0
        %596 = vmatprep.subr.bf16.mxu0 0
        %597 = vmatpush1.bf16.msra.mxu0 0
        %598 = vmatprep.subr.bf16.mxu0 0
        %599 = vmatpush1.bf16.msra.mxu0 0
        %600 = vmatprep.subr.bf16.mxu0 0
        %601 = vmatpush1.bf16.msra.mxu0 0
        %602 = vmatprep.subr.bf16.mxu0 0
        %603 = vmatpush1.bf16.msra.mxu0 0
        %604 = vmatprep.subr.bf16.mxu0 0
        %605 = vmatpush1.bf16.msra.mxu0 0
        %606 = vmatprep.subr.bf16.mxu0 0
        %607 = vmatpush1.bf16.msra.mxu0 0
        %608 = vmatprep.mubr.bf16.mxu0 0
        %609 = vmatmul.mubr.bf16.gmra.mrb[0].mxu0 %v568
        %v610 = vpop.f32.mrb[0].mxu0
        %v611 = vadd.f32 0.0, %v610
        %v612 = vpop.f32.mrb[0].mxu0
        %v613 = vadd.f32 0.0, %v612
        %v614 = vpop.f32.mrb[0].mxu0
        %v615 = vadd.f32 0.0, %v614
        %v616 = vpop.f32.mrb[0].mxu0
        %v617 = vadd.f32 0.0, %v616
        %618 = vdwg.mxu0
        %v619 = vadd.f32 %v553, %v611
        %v620 = vadd.f32 %v554, %v613
        %v621 = vadd.f32 %v555, %v615
        %v622 = vadd.f32 %v556, %v617
        %s623 = sadd.s32 %s185, 2
        %s624 = smul.u32 %s623, 3
        %s625 = smul.addr %s624, 4
        %s626 = scalar_lea.vmem %s171, %s625
        %v627 = vld [vmem:[%s626] sm:$0xf]
        %v628 = vld [vmem:[%s626 + $0x4] sm:$0xf]
        %v629 = vld [vmem:[%s626 + $0x8] sm:$0x1]
        %s630 = scalar_lea.vmem %s1, 48
        %v631 = vld [vmem:[%s630] sm:$0x77]
        %v634 = vunpack.c.l.b16 %v627
        %v635 = vunpack.c.l.b16 %v628
        %v636 = vpack.c.b16 %v635, %v634
        %v638 = vunpack.c.l.b16 %v631
        %v639 = vunpack.c.h.b16 %v631
        %v640 = vpack.c.b16 %v638, %v638
        %v641 = vpack.c.b16 %v639, %v639
        %v643 = vsel %vm225, %v636, 0
        %v646 = vand.u32 %v640, %v232
        %v649 = vand.u32 %v641, %v232
        %651 = vmatprep.subr.bf16.mxu0 %v649
        %652 = vmatpush1.bf16.msra.mxu0 %v646
        %653 = vmatprep.subr.bf16.mxu0 0
        %654 = vmatpush1.bf16.msra.mxu0 0
        %655 = vmatprep.subr.bf16.mxu0 0
        %656 = vmatpush1.bf16.msra.mxu0 0
        %657 = vmatprep.subr.bf16.mxu0 0
        %658 = vmatpush1.bf16.msra.mxu0 0
        %659 = vmatprep.subr.bf16.mxu0 0
        %660 = vmatpush1.bf16.msra.mxu0 0
        %661 = vmatprep.subr.bf16.mxu0 0
        %662 = vmatpush1.bf16.msra.mxu0 0
        %663 = vmatprep.subr.bf16.mxu0 0
        %664 = vmatpush1.bf16.msra.mxu0 0
        %665 = vmatprep.subr.bf16.mxu0 0
        %666 = vmatpush1.bf16.msra.mxu0 0
        %667 = vmatprep.subr.bf16.mxu0 0
        %668 = vmatpush1.bf16.msra.mxu0 0
        %669 = vmatprep.subr.bf16.mxu0 0
        %670 = vmatpush1.bf16.msra.mxu0 0
        %671 = vmatprep.subr.bf16.mxu0 0
        %672 = vmatpush1.bf16.msra.mxu0 0
        %673 = vmatprep.subr.bf16.mxu0 0
        %674 = vmatpush1.bf16.msra.mxu0 0
        %675 = vmatprep.subr.bf16.mxu0 0
        %676 = vmatpush1.bf16.msra.mxu0 0
        %677 = vmatprep.subr.bf16.mxu0 0
        %678 = vmatpush1.bf16.msra.mxu0 0
        %679 = vmatprep.subr.bf16.mxu0 0
        %680 = vmatpush1.bf16.msra.mxu0 0
        %681 = vmatprep.subr.bf16.mxu0 0
        %682 = vmatpush1.bf16.msra.mxu0 0
        %683 = vmatprep.mubr.bf16.mxu0 0
        %684 = vmatmul.mubr.bf16.gmra.mrb[0].mxu0 %v643
        %v685 = vpop.f32.mrb[0].mxu0
        %v686 = vadd.f32 0.0, %v685
        %v687 = vpop.f32.mrb[0].mxu0
        %v688 = vadd.f32 0.0, %v687
        %v689 = vpop.f32.mrb[0].mxu0
        %v690 = vadd.f32 0.0, %v689
        %v691 = vpop.f32.mrb[0].mxu0
        %v692 = vadd.f32 0.0, %v691
        %693 = vdwg.mxu0
        %v694 = vadd.f32 %v619, %v686
        %v695 = vadd.f32 %v620, %v688
        %v696 = vadd.f32 %v621, %v690
        %v697 = vadd.f32 %v622, %v692
        %s698 = scalar_lea.vmem %s1, 56
        %v699 = vld [vmem:[%s698] sm:$0x77]
        %v701 = vunpack.c.l.b16 %v629
        %v702 = vpack.c.b16 %v701, %v701
        %v703 = vshrl.u32 %v636, 16
        %v705 = vshll.u32 %v636, 16
        %v707 = vrot.slane %v705, 1
        %v708 = vor.u32 %v703, %v707
        %v710 = vshll.u32 %v702, 16
        %v712 = vrot.slane %v710, 1
        %v713 = vsel %vm207, %v708, %v712
        %v715 = vunpack.c.l.b16 %v699
        %v716 = vunpack.c.h.b16 %v699
        %v717 = vpack.c.b16 %v715, %v715
        %v718 = vpack.c.b16 %v716, %v716
        %v720 = vsel %vm225, %v713, 0
        %v723 = vand.u32 %v717, %v232
        %v726 = vand.u32 %v718, %v232
        %728 = vmatprep.subr.bf16.mxu0 %v726
        %729 = vmatpush1.bf16.msra.mxu0 %v723
        %730 = vmatprep.subr.bf16.mxu0 0
        %731 = vmatpush1.bf16.msra.mxu0 0
        %732 = vmatprep.subr.bf16.mxu0 0
        %733 = vmatpush1.bf16.msra.mxu0 0
        %734 = vmatprep.subr.bf16.mxu0 0
        %735 = vmatpush1.bf16.msra.mxu0 0
        %736 = vmatprep.subr.bf16.mxu0 0
        %737 = vmatpush1.bf16.msra.mxu0 0
        %738 = vmatprep.subr.bf16.mxu0 0
        %739 = vmatpush1.bf16.msra.mxu0 0
        %740 = vmatprep.subr.bf16.mxu0 0
        %741 = vmatpush1.bf16.msra.mxu0 0
        %742 = vmatprep.subr.bf16.mxu0 0
        %743 = vmatpush1.bf16.msra.mxu0 0
        %744 = vmatprep.subr.bf16.mxu0 0
        %745 = vmatpush1.bf16.msra.mxu0 0
        %746 = vmatprep.subr.bf16.mxu0 0
        %747 = vmatpush1.bf16.msra.mxu0 0
        %748 = vmatprep.subr.bf16.mxu0 0
        %749 = vmatpush1.bf16.msra.mxu0 0
        %750 = vmatprep.subr.bf16.mxu0 0
        %751 = vmatpush1.bf16.msra.mxu0 0
        %752 = vmatprep.subr.bf16.mxu0 0
        %753 = vmatpush1.bf16.msra.mxu0 0
        %754 = vmatprep.subr.bf16.mxu0 0
        %755 = vmatpush1.bf16.msra.mxu0 0
        %756 = vmatprep.subr.bf16.mxu0 0
        %757 = vmatpush1.bf16.msra.mxu0 0
        %758 = vmatprep.subr.bf16.mxu0 0
        %759 = vmatpush1.bf16.msra.mxu0 0
        %760 = vmatprep.mubr.bf16.mxu0 0
        %761 = vmatmul.mubr.bf16.gmra.mrb[0].mxu0 %v720
        %v762 = vpop.f32.mrb[0].mxu0
        %v763 = vadd.f32 0.0, %v762
        %v764 = vpop.f32.mrb[0].mxu0
        %v765 = vadd.f32 0.0, %v764
        %v766 = vpop.f32.mrb[0].mxu0
        %v767 = vadd.f32 0.0, %v766
        %v768 = vpop.f32.mrb[0].mxu0
        %v769 = vadd.f32 0.0, %v768
        %770 = vdwg.mxu0
        %v771 = vadd.f32 %v694, %v763
        %v772 = vadd.f32 %v695, %v765
        %v773 = vadd.f32 %v696, %v767
        %v774 = vadd.f32 %v697, %v769
        %s775 = scalar_lea.vmem %s1, 64
        %v776 = vld [vmem:[%s775] sm:$0x77]
        %v777 = vrot.slane %v636, 1
        %v778 = vrot.slane %v702, 1
        %v779 = vsel %vm340, %v777, %v778
        %v781 = vunpack.c.l.b16 %v776
        %v782 = vunpack.c.h.b16 %v776
        %v783 = vpack.c.b16 %v781, %v781
        %v784 = vpack.c.b16 %v782, %v782
        %v786 = vsel %vm225, %v779, 0
        %v789 = vand.u32 %v783, %v232
        %v792 = vand.u32 %v784, %v232
        %794 = vmatprep.subr.bf16.mxu0 %v792
        %795 = vmatpush1.bf16.msra.mxu0 %v789
        %796 = vmatprep.subr.bf16.mxu0 0
        %797 = vmatpush1.bf16.msra.mxu0 0
        %798 = vmatprep.subr.bf16.mxu0 0
        %799 = vmatpush1.bf16.msra.mxu0 0
        %800 = vmatprep.subr.bf16.mxu0 0
        %801 = vmatpush1.bf16.msra.mxu0 0
        %802 = vmatprep.subr.bf16.mxu0 0
        %803 = vmatpush1.bf16.msra.mxu0 0
        %804 = vmatprep.subr.bf16.mxu0 0
        %805 = vmatpush1.bf16.msra.mxu0 0
        %806 = vmatprep.subr.bf16.mxu0 0
        %807 = vmatpush1.bf16.msra.mxu0 0
        %808 = vmatprep.subr.bf16.mxu0 0
        %809 = vmatpush1.bf16.msra.mxu0 0
        %810 = vmatprep.subr.bf16.mxu0 0
        %811 = vmatpush1.bf16.msra.mxu0 0
        %812 = vmatprep.subr.bf16.mxu0 0
        %813 = vmatpush1.bf16.msra.mxu0 0
        %814 = vmatprep.subr.bf16.mxu0 0
        %815 = vmatpush1.bf16.msra.mxu0 0
        %816 = vmatprep.subr.bf16.mxu0 0
        %817 = vmatpush1.bf16.msra.mxu0 0
        %818 = vmatprep.subr.bf16.mxu0 0
        %819 = vmatpush1.bf16.msra.mxu0 0
        %820 = vmatprep.subr.bf16.mxu0 0
        %821 = vmatpush1.bf16.msra.mxu0 0
        %822 = vmatprep.subr.bf16.mxu0 0
        %823 = vmatpush1.bf16.msra.mxu0 0
        %824 = vmatprep.subr.bf16.mxu0 0
        %825 = vmatpush1.bf16.msra.mxu0 0
        %826 = vmatprep.mubr.bf16.mxu0 0
        %827 = vmatmul.mubr.bf16.gmra.mrb[0].mxu0 %v786
        %v828 = vpop.f32.mrb[0].mxu0
        %v829 = vadd.f32 0.0, %v828
        %v830 = vpop.f32.mrb[0].mxu0
        %v831 = vadd.f32 0.0, %v830
        %v832 = vpop.f32.mrb[0].mxu0
        %v833 = vadd.f32 0.0, %v832
        %v834 = vpop.f32.mrb[0].mxu0
        %v835 = vadd.f32 0.0, %v834
        %836 = vdwg.mxu0
        %v837 = vadd.f32 %v771, %v829
        %v838 = vadd.f32 %v772, %v831
        %v839 = vadd.f32 %v773, %v833
        %v840 = vadd.f32 %v774, %v835
        %v841 = vxor.u32 %v838, 2147483648
        %v842 = vxor.u32 %v840, 2147483648
        %v843 = vmul.f32 %v841, 1.442695
        %v844 = vpow.pop %v843
        %v845 = vmul.f32 %v842, 1.442695
        %v846 = vpow.pop %v845
        %v847 = vadd.f32 %v844, 1.0
        %v848 = vadd.f32 %v846, 1.0
        %v849 = vrcp.pop %v847
        %v850 = vmul.f32 1.0, %v849
        %v851 = vrcp.pop %v848
        %v852 = vmul.f32 1.0, %v851
        %v853 = vmax.f32 %v837, 0.0
        %v854 = vmax.f32 %v839, 0.0
        %v855 = vmul.f32 %v850, %v853
        %v856 = vmul.f32 %v852, %v854
        %v857 = vpack.c.bf16 %v856, %v855
        %v859 = vunpack.c.l.b16 %v857
        %v860 = vunpack.c.h.b16 %v857
        %v861 = vpack.c.b16 %v859, %v859
        %v862 = vpack.c.b16 %v860, %v860
        %s865 = smul.u32 %s185, 2
        %s866 = smul.addr %s865, 4
        %s867 = scalar_lea.vmem %s181, %s866
        %vm868 = vcmask 257024
        %869 = vst.msk [vmem:[%s867] sm:$0xf] %vm868, %v861
        %870 = vst.msk [vmem:[%s867 + $0x4] sm:$0xf] %vm868, %v862
      $region33: #{_encoder_forward_nhwc.8} parent=27 // loop_footer
        %s189 = sadd.s32 1, %s185
      $region34: #{_encoder_forward_nhwc.8} parent=27 // loop_footer_branch
        %184 = sbr.rel target = $region30
      $region35: #{_encoder_forward_nhwc.8} parent=27 // loop_exit
        _
      %s871 = smul.u32 16, %s18
      %p872 = scmp.lt.s32.totalorder %s17, 1
      %s873 = scalar_select %p872, %s17, 1
      %p874 = scmp.lt.s32.totalorder %s871, 15
      %s875 = scalar_select %p874, %s871, 15
      %s876 = smul.addr %s875, 2
      %s877 = smul.addr %s873, 32
      %s878 = sadd.s32 %s876, %s877
      %s879 = smul.addr %s878, 4
      %s880 = scalar_lea.vmem %s2, %s879
      // Predicated region
      $region36: #{_encoder_forward_nhwc.8} parent=27 // pred_check
        %p881 = pneg %p94
      $region37: #{_encoder_forward_nhwc.8} parent=27 // pred_check_branch
        %883 = sbr.rel (%p881) target = $region39
      $region38: #{_encoder_forward_nhwc.8} parent=27 // pred_region
        %s884 = smul.u32 16, %s18
      $region39: #{_encoder_forward_nhwc.8} parent=27 // pred_fallthru
        _
    $region28: #{_encoder_forward_nhwc.8} parent=5 // pred_fallthru
      _
    %p885 = scmp.le.s32.totalorder 2, %s8
    // Predicated region
    $region40: #{_encoder_forward_nhwc.8} parent=5 // pred_check
      %p886 = pneg %p885
    $region41: #{_encoder_forward_nhwc.8} parent=5 // pred_check_branch
      %888 = sbr.rel (%p886) target = $region43
    $region42: #{_encoder_forward_nhwc.8} parent=5 // pred_region
      %s889 = ssub.s32 %s8, 2
      // Predicated region
      $region44: #{_encoder_forward_nhwc.8} parent=42 // pred_check
        %p890 = pneg %p100
      $region45: #{_encoder_forward_nhwc.8} parent=42 // pred_check_branch
        %892 = sbr.rel (%p890) target = $region47
      $region46: #{_encoder_forward_nhwc.8} parent=42 // pred_region
        %s893 = smul.u32 16, %s20
        %p894 = scmp.lt.s32.totalorder %s19, 1
        %s895 = scalar_select %p894, %s19, 1
        %p896 = scmp.lt.s32.totalorder %s893, 15
        %s897 = scalar_select %p896, %s893, 15
        %s898 = smul.addr %s897, 2
        %s899 = smul.addr %s895, 32
        %s900 = sadd.s32 %s898, %s899
        %s901 = smul.addr %s900, 4
        %s902 = scalar_lea.vmem %s2, %s901
      $region47: #{_encoder_forward_nhwc.8} parent=42 // pred_fallthru
        _
    $region43: #{_encoder_forward_nhwc.8} parent=5 // pred_fallthru
      _
  $region6: #{_encoder_forward_nhwc.8} parent=0 // loop_footer
    %s12 = sadd.s32 1, %s8
  $region7: #{_encoder_forward_nhwc.8} parent=0 // loop_footer_branch
    %7 = sbr.rel target = $region3
  $region8: #{_encoder_forward_nhwc.8} parent=0 // loop_exit
    _

// kernel: _encoder_forward_nhwc.9
$region0: #{_encoder_forward_nhwc.9}
  #allocation0 [shape = 'u32[]', space=smem, size = 0x4, offset = 0x4, fixed_abs, tag = 'smem constant byte address 0x4 - core index']
  #allocation1 [shape = 'u32[144,128]{1,0:T(1,128)}', space=vmem, size = 0x12000, scoped, tag = 'internal scratch']
  %s0 = inlined_call_operand.vmem [shape: bf16[2,1,17,18,32], index: 0, kind: input, shape index: {}]
  %s1 = inlined_call_operand.vmem [shape: bf16[9,32,256], index: 1, kind: input, shape index: {}]
  %s2 = inlined_call_operand.vmem [shape: bf16[2,8,8,64], index: 2, kind: output, shape index: {}]
  %s3 = sld [smem:[#allocation0]]
  $region48: #{_encoder_forward_nhwc.9} parent=0
    _
  %s5 = ssub.s32 1, %s3
  %s6 = scalar_select 0, %s5, %s3
  loop: start=0, step=1, limit=4
  $region2: #{_encoder_forward_nhwc.9} parent=0 // loop_pre_header
    _
  $region3: #{_encoder_forward_nhwc.9} parent=0 // loop_header
    %s8 = sphi 0, %s12
    %p9 = scmp.ge.s32.totalorder %s8, 4
    %s15 = sphi 0, %s27
    %s16 = sphi 0, %s23
    %s17 = sphi 0, %s15
    %s18 = sphi 0, %s16
    %s19 = sphi 0, %s17
    %s20 = sphi 0, %s18
    %s32 = sphi 0, %s34
    %s35 = sphi 0, %s32
    %s36 = sphi 0, %s35
    %s52 = sphi 0, %s36
    %s56 = sphi 0, %s56
    %s58 = sphi 0, %s56
    %s59 = sphi 0, %s58
    %s73 = sphi 0, %s59
    %s81 = sphi 0, %s83
    %s84 = sphi 0, %s81
    %s85 = sphi 0, %s84
    %s101 = sphi 0, %s85
  $region4: #{_encoder_forward_nhwc.9} parent=0 // loop_header_branch
    %11 = sbr.rel (%p9) target = $region8
  $region5: #{_encoder_forward_nhwc.9} parent=0 // loop_body
    %s13 = ssub.s32 %s8, 1
    %s14 = ssub.s32 %s8, 2
    %s21 = sadd.s32 1, %s16
    %p22 = scmp.ge.s32.totalorder %s21, 1
    %s23 = scalar_select %p22, 0, %s21
    %s24 = sadd.s32 1, %s15
    %s25 = scalar_select %p22, %s24, %s15
    %p26 = scmp.ge.s32.totalorder %s25, 2
    %s27 = scalar_select %p26, 0, %s25
    %s28 = ssub.s32 %s15, %s27
    %s29 = ssub.s32 %s16, %s23
    %s30 = sor.u32 %s28, %s29
    %p31 = scmp.eq.s32.totalorder %s30, 0
    %s33 = sadd.s32 %s32, 1
    %s34 = scalar_select %p31, %s32, %s33
    %p37 = pneg %p31
    %p38 = scmp.eq.s32.totalorder %s8, 1
    %p39 = por %p37, %p38
    %p40 = scmp.ne.s32.totalorder %s32, %s35
    %p41 = scmp.eq.s32.totalorder %s8, 0
    %p42 = por %p40, %p41
    %p43 = scmp.ne.s32.totalorder %s32, %s35
    %p44 = scmp.eq.s32.totalorder %s13, 1
    %p45 = por %p43, %p44
    %p46 = scmp.ne.s32.totalorder %s35, %s36
    %p47 = scmp.eq.s32.totalorder %s13, 0
    %p48 = por %p46, %p47
    %p49 = scmp.ne.s32.totalorder %s35, %s36
    %p50 = scmp.eq.s32.totalorder %s14, 1
    %p51 = por %p49, %p50
    %p53 = scmp.ne.s32.totalorder %s36, %s52
    %p54 = scmp.eq.s32.totalorder %s14, 0
    %p55 = por %p53, %p54
    %s57 = sadd.s32 %s56, 1
    %p60 = scmp.eq.s32.totalorder %s8, 1
    %p61 = scmp.ne.s32.totalorder %s56, %s58
    %p62 = scmp.eq.s32.totalorder %s8, 0
    %p63 = por %p61, %p62
    %p64 = scmp.ne.s32.totalorder %s56, %s58
    %p65 = scmp.eq.s32.totalorder %s13, 1
    %p66 = por %p64, %p65
    %p67 = scmp.ne.s32.totalorder %s58, %s59
    %p68 = scmp.eq.s32.totalorder %s13, 0
    %p69 = por %p67, %p68
    %p70 = scmp.ne.s32.totalorder %s58, %s59
    %p71 = scmp.eq.s32.totalorder %s14, 1
    %p72 = por %p70, %p71
    %p74 = scmp.ne.s32.totalorder %s59, %s73
    %p75 = scmp.eq.s32.totalorder %s14, 0
    %p76 = por %p74, %p75
    %s77 = ssub.s32 %s15, %s27
    %s78 = ssub.s32 %s16, %s23
    %s79 = sor.u32 %s77, %s78
    %p80 = scmp.eq.s32.totalorder %s79, 0
    %s82 = sadd.s32 %s81, 1
    %s83 = scalar_select %p80, %s81, %s82
    %p86 = pneg %p80
    %p87 = scmp.eq.s32.totalorder %s8, 1
    %p88 = por %p86, %p87
    %p89 = scmp.ne.s32.totalorder %s81, %s84
    %p90 = scmp.eq.s32.totalorder %s8, 0
    %p91 = por %p89, %p90
    %p92 = scmp.ne.s32.totalorder %s81, %s84
    %p93 = scmp.eq.s32.totalorder %s13, 1
    %p94 = por %p92, %p93
    %p95 = scmp.ne.s32.totalorder %s84, %s85
    %p96 = scmp.eq.s32.totalorder %s13, 0
    %p97 = por %p95, %p96
    %p98 = scmp.ne.s32.totalorder %s84, %s85
    %p99 = scmp.eq.s32.totalorder %s14, 1
    %p100 = por %p98, %p99
    %p102 = scmp.ne.s32.totalorder %s85, %s101
    %p103 = scmp.eq.s32.totalorder %s14, 0
    %p104 = por %p102, %p103
    %p105 = scmp.le.s32.totalorder 1, %s8
    %p106 = scmp.lt.s32.totalorder %s8, 3
    %p107 = pnand %p105, %p106
    %p108 = pneg %p107
    // Predicated region
    $region9: #{_encoder_forward_nhwc.9} parent=5 // pred_check
      _
    $region10: #{_encoder_forward_nhwc.9} parent=5 // pred_check_branch
      %110 = sbr.rel (%p107) target = $region12
    $region11: #{_encoder_forward_nhwc.9} parent=5 // pred_region
      %s111 = ssub.s32 %s8, 1
      // Predicated region
      $region13: #{_encoder_forward_nhwc.9} parent=11 // pred_check
        %p112 = pneg %p69
      $region14: #{_encoder_forward_nhwc.9} parent=11 // pred_check_branch
        %114 = sbr.rel (%p112) target = $region16
      $region15: #{_encoder_forward_nhwc.9} parent=11 // pred_region
        _
      $region16: #{_encoder_forward_nhwc.9} parent=11 // pred_fallthru
        _
    $region12: #{_encoder_forward_nhwc.9} parent=5 // pred_fallthru
      _
    %p115 = scmp.lt.s32.totalorder %s8, 2
    // Predicated region
    $region17: #{_encoder_forward_nhwc.9} parent=5 // pred_check
      %p116 = pneg %p115
    $region18: #{_encoder_forward_nhwc.9} parent=5 // pred_check_branch
      %118 = sbr.rel (%p116) target = $region20
    $region19: #{_encoder_forward_nhwc.9} parent=5 // pred_region
      // Predicated region
      $region21: #{_encoder_forward_nhwc.9} parent=19 // pred_check
        %p119 = pneg %p42
      $region22: #{_encoder_forward_nhwc.9} parent=19 // pred_check_branch
        %121 = sbr.rel (%p119) target = $region24
      $region23: #{_encoder_forward_nhwc.9} parent=19 // pred_region
        %p122 = scmp.lt.s32.totalorder %s15, 1
        %s123 = scalar_select %p122, %s15, 1
        %p124 = scmp.lt.s32.totalorder %s16, 0
        %s125 = scalar_select %p124, %s16, 0
        %s126 = smul.addr %s125, 51
        %s127 = smul.addr %s123, 51
        %s128 = sadd.s32 %s126, %s127
        %s129 = smul.addr %s128, 4
        %s130 = scalar_lea.vmem %s0, %s129
      $region24: #{_encoder_forward_nhwc.9} parent=19 // pred_fallthru
        _
    $region20: #{_encoder_forward_nhwc.9} parent=5 // pred_fallthru
      _
    %p131 = scmp.le.s32.totalorder 1, %s8
    %p132 = scmp.lt.s32.totalorder %s8, 3
    %p133 = pnand %p131, %p132
    %p134 = pneg %p133
    // Predicated region
    $region25: #{_encoder_forward_nhwc.9} parent=5 // pred_check
      _
    $region26: #{_encoder_forward_nhwc.9} parent=5 // pred_check_branch
      %136 = sbr.rel (%p133) target = $region28
    $region27: #{_encoder_forward_nhwc.9} parent=5 // pred_region
      %s137 = ssub.s32 %s8, 1
      %p138 = scmp.lt.s32.totalorder %s17, 1
      %s139 = scalar_select %p138, %s17, 1
      %p140 = scmp.lt.s32.totalorder %s18, 0
      %s141 = scalar_select %p140, %s18, 0
      %s142 = smul.addr %s141, 51
      %s143 = smul.addr %s139, 51
      %s144 = sadd.s32 %s142, %s143
      %s145 = smul.addr %s144, 4
      %s146 = scalar_lea.vmem %s0, %s145
      %p147 = pneg %p48
      %p148 = pneg %p45
      %p149 = pneg %p69
      %p150 = pneg %p66
      %p151 = pneg %p97
      %p152 = pneg %p94
      %s153 = smul.u32 8, %s18
      %p154 = scmp.lt.s32.totalorder %s17, 1
      %s155 = scalar_select %p154, %s17, 1
      %p156 = scmp.lt.s32.totalorder %s153, 7
      %s157 = scalar_select %p156, %s153, 7
      %s158 = smul.addr %s155, 8
      %s159 = sadd.s32 %s157, %s158
      %s160 = smul.addr %s159, 4
      %s161 = scalar_lea.vmem %s2, %s160
      %p162 = scmp.lt.s32.totalorder %s17, 1
      %s163 = scalar_select %p162, %s17, 1
      %p164 = scmp.lt.s32.totalorder %s18, 0
      %s165 = scalar_select %p164, %s18, 0
      %s166 = smul.addr %s165, 51
      %s167 = smul.addr %s163, 51
      %s168 = sadd.s32 %s166, %s167
      %s169 = smul.addr %s168, 4
      %s170 = scalar_lea.vmem %s0, %s169
      %s171 = smul.u32 8, %s18
      %p172 = scmp.lt.s32.totalorder %s17, 1
      %s173 = scalar_select %p172, %s17, 1
      %p174 = scmp.lt.s32.totalorder %s171, 7
      %s175 = scalar_select %p174, %s171, 7
      %s176 = smul.addr %s173, 8
      %s177 = sadd.s32 %s175, %s176
      %s178 = smul.addr %s177, 4
      %s179 = scalar_lea.vmem %s2, %s178
      %s180 = smul.u32 8, %s18
      loop: start=0, step=1, limit=8
      $region29: #{_encoder_forward_nhwc.9} parent=27 // loop_pre_header
        _
      $region30: #{_encoder_forward_nhwc.9} parent=27 // loop_header
        %s183 = sphi 0, %s187
        %p184 = scmp.ge.s32.totalorder %s183, 8
      $region31: #{_encoder_forward_nhwc.9} parent=27 // loop_header_branch
        %186 = sbr.rel (%p184) target = $region35
      $region32: #{_encoder_forward_nhwc.9} parent=27 // loop_body
        %s188 = smul.u32 %s183, 2
        %s189 = smul.u32 %s188, 3
        %s190 = smul.addr %s189, 4
        %s191 = scalar_lea.vmem %s170, %s190
        %v192 = vld [vmem:[%s191] sm:$0xf]
        %v193 = vld [vmem:[%s191 + $0x4] sm:$0xf]
        %v194 = vld [vmem:[%s191 + $0x8] sm:$0x1]
        %v195 = vld [vmem:[%s1] sm:$0xff]
        %v196 = vld [vmem:[%s1 + $0x8] sm:$0xff]
        %v197 = vld [vmem:[%s1 + $0x10] sm:$0xff]
        %v198 = vld [vmem:[%s1 + $0x18] sm:$0xff]
        %s199 = scalar_lea.vmem %s1, 32
        %v200 = vld [vmem:[%s199] sm:$0xff]
        %v201 = vld [vmem:[%s199 + $0x8] sm:$0xff]
        %v202 = vld [vmem:[%s199 + $0x10] sm:$0xff]
        %v203 = vld [vmem:[%s199 + $0x18] sm:$0xff]
        %v206 = vunpack.c.l.b16 %v193
        %v207 = vunpack.c.l.b16 %v194
        %v208 = vpack.c.b16 %v207, %v206
        %v210 = vshrl.u32 %v208, 16
        %v212 = vshll.u32 %v208, 16
        %v214 = vrot.slane %v212, 1
        %v215 = vor.u32 %v210, %v214
        %v220 = vunpack.c.l.b16 %v200
        %v221 = vunpack.c.h.b16 %v200
        %v222 = vunpack.c.l.b16 %v201
        %v223 = vunpack.c.h.b16 %v201
        %v224 = vunpack.c.l.b16 %v202
        %v225 = vunpack.c.h.b16 %v202
        %v226 = vunpack.c.l.b16 %v203
        %v227 = vunpack.c.h.b16 %v203
        %v228 = vpack.c.b16 %v222, %v220
        %v229 = vpack.c.b16 %v223, %v221
        %v230 = vpack.c.b16 %v226, %v224
        %v231 = vpack.c.b16 %v227, %v225
        %vm236 = vcmask 261120
        %v238 = vsel %vm236, %v215, 0
        %240 = vmatprep.subr.bf16.mxu0 %v229
        %241 = vmatpush1.bf16.msra.mxu0 %v228
        %242 = vmatprep.subr.bf16.mxu0 %v231
        %243 = vmatpush1.bf16.msra.mxu0 %v230
        %244 = vmatprep.subr.bf16.mxu0 0
        %245 = vmatpush1.bf16.msra.mxu0 0
        %246 = vmatprep.subr.bf16.mxu0 0
        %247 = vmatpush1.bf16.msra.mxu0 0
        %248 = vmatprep.subr.bf16.mxu0 0
        %249 = vmatpush1.bf16.msra.mxu0 0
        %250 = vmatprep.subr.bf16.mxu0 0
        %251 = vmatpush1.bf16.msra.mxu0 0
        %252 = vmatprep.subr.bf16.mxu0 0
        %253 = vmatpush1.bf16.msra.mxu0 0
        %254 = vmatprep.subr.bf16.mxu0 0
        %255 = vmatpush1.bf16.msra.mxu0 0
        %256 = vmatprep.subr.bf16.mxu0 0
        %257 = vmatpush1.bf16.msra.mxu0 0
        %258 = vmatprep.subr.bf16.mxu0 0
        %259 = vmatpush1.bf16.msra.mxu0 0
        %260 = vmatprep.subr.bf16.mxu0 0
        %261 = vmatpush1.bf16.msra.mxu0 0
        %262 = vmatprep.subr.bf16.mxu0 0
        %263 = vmatpush1.bf16.msra.mxu0 0
        %264 = vmatprep.subr.bf16.mxu0 0
        %265 = vmatpush1.bf16.msra.mxu0 0
        %266 = vmatprep.subr.bf16.mxu0 0
        %267 = vmatpush1.bf16.msra.mxu0 0
        %268 = vmatprep.subr.bf16.mxu0 0
        %269 = vmatpush1.bf16.msra.mxu0 0
        %270 = vmatprep.subr.bf16.mxu0 0
        %271 = vmatpush1.bf16.msra.mxu0 0
        %272 = vmatprep.mubr.bf16.mxu0 0
        %273 = vmatmul.mubr.bf16.gmra.mrb[0].mxu0 %v238
        %v274 = vpop.f32.mrb[0].mxu0
        %v275 = vadd.f32 0.0, %v274
        %v276 = vpop.f32.mrb[0].mxu0
        %v277 = vadd.f32 0.0, %v276
        %v278 = vpop.f32.mrb[0].mxu0
        %v279 = vpop.f32.mrb[0].mxu0
        %280 = vdwg.mxu0
        %v285 = vunpack.c.l.b16 %v195
        %v286 = vunpack.c.h.b16 %v195
        %v287 = vunpack.c.l.b16 %v196
        %v288 = vunpack.c.h.b16 %v196
        %v289 = vunpack.c.l.b16 %v197
        %v290 = vunpack.c.h.b16 %v197
        %v291 = vunpack.c.l.b16 %v198
        %v292 = vunpack.c.h.b16 %v198
        %v293 = vpack.c.b16 %v287, %v285
        %v294 = vpack.c.b16 %v288, %v286
        %v295 = vpack.c.b16 %v291, %v289
        %v296 = vpack.c.b16 %v292, %v290
        %v302 = vsel %vm236, %v192, 0
        %304 = vmatprep.subr.bf16.mxu0 %v294
        %305 = vmatpush1.bf16.msra.mxu0 %v293
        %306 = vmatprep.subr.bf16.mxu0 %v296
        %307 = vmatpush1.bf16.msra.mxu0 %v295
        %308 = vmatprep.subr.bf16.mxu0 0
        %309 = vmatpush1.bf16.msra.mxu0 0
        %310 = vmatprep.subr.bf16.mxu0 0
        %311 = vmatpush1.bf16.msra.mxu0 0
        %312 = vmatprep.subr.bf16.mxu0 0
        %313 = vmatpush1.bf16.msra.mxu0 0
        %314 = vmatprep.subr.bf16.mxu0 0
        %315 = vmatpush1.bf16.msra.mxu0 0
        %316 = vmatprep.subr.bf16.mxu0 0
        %317 = vmatpush1.bf16.msra.mxu0 0
        %318 = vmatprep.subr.bf16.mxu0 0
        %319 = vmatpush1.bf16.msra.mxu0 0
        %320 = vmatprep.subr.bf16.mxu0 0
        %321 = vmatpush1.bf16.msra.mxu0 0
        %322 = vmatprep.subr.bf16.mxu0 0
        %323 = vmatpush1.bf16.msra.mxu0 0
        %324 = vmatprep.subr.bf16.mxu0 0
        %325 = vmatpush1.bf16.msra.mxu0 0
        %326 = vmatprep.subr.bf16.mxu0 0
        %327 = vmatpush1.bf16.msra.mxu0 0
        %328 = vmatprep.subr.bf16.mxu0 0
        %329 = vmatpush1.bf16.msra.mxu0 0
        %330 = vmatprep.subr.bf16.mxu0 0
        %331 = vmatpush1.bf16.msra.mxu0 0
        %332 = vmatprep.subr.bf16.mxu0 0
        %333 = vmatpush1.bf16.msra.mxu0 0
        %334 = vmatprep.subr.bf16.mxu0 0
        %335 = vmatpush1.bf16.msra.mxu0 0
        %336 = vmatprep.mubr.bf16.mxu0 0
        %337 = vmatmul.mubr.bf16.gmra.mrb[0].mxu0 %v302
        %v338 = vpop.f32.mrb[0].mxu0
        %v339 = vadd.f32 %v275, %v338
        %v340 = vpop.f32.mrb[0].mxu0
        %v341 = vadd.f32 %v277, %v340
        %v342 = vpop.f32.mrb[0].mxu0
        %v343 = vpop.f32.mrb[0].mxu0
        %344 = vdwg.mxu0
        %s345 = scalar_lea.vmem %s1, 64
        %v346 = vld [vmem:[%s345] sm:$0xff]
        %v347 = vld [vmem:[%s345 + $0x8] sm:$0xff]
        %v348 = vld [vmem:[%s345 + $0x10] sm:$0xff]
        %v349 = vld [vmem:[%s345 + $0x18] sm:$0xff]
        %v351 = vunpack.c.l.b16 %v192
        %v352 = vpack.c.b16 %v206, %v351
        %v354 = vshrl.u32 %v352, 16
        %v356 = vshll.u32 %v352, 16
        %v358 = vrot.slane %v356, 1
        %v359 = vor.u32 %v354, %v358
        %v364 = vunpack.c.l.b16 %v346
        %v365 = vunpack.c.h.b16 %v346
        %v366 = vunpack.c.l.b16 %v347
        %v367 = vunpack.c.h.b16 %v347
        %v368 = vunpack.c.l.b16 %v348
        %v369 = vunpack.c.h.b16 %v348
        %v370 = vunpack.c.l.b16 %v349
        %v371 = vunpack.c.h.b16 %v349
        %v372 = vpack.c.b16 %v366, %v364
        %v373 = vpack.c.b16 %v367, %v365
        %v374 = vpack.c.b16 %v370, %v368
        %v375 = vpack.c.b16 %v371, %v369
        %v381 = vsel %vm236, %v359, 0
        %383 = vmatprep.subr.bf16.mxu0 %v373
        %384 = vmatpush1.bf16.msra.mxu0 %v372
        %385 = vmatprep.subr.bf16.mxu0 %v375
        %386 = vmatpush1.bf16.msra.mxu0 %v374
        %387 = vmatprep.subr.bf16.mxu0 0
        %388 = vmatpush1.bf16.msra.mxu0 0
        %389 = vmatprep.subr.bf16.mxu0 0
        %390 = vmatpush1.bf16.msra.mxu0 0
        %391 = vmatprep.subr.bf16.mxu0 0
        %392 = vmatpush1.bf16.msra.mxu0 0
        %393 = vmatprep.subr.bf16.mxu0 0
        %394 = vmatpush1.bf16.msra.mxu0 0
        %395 = vmatprep.subr.bf16.mxu0 0
        %396 = vmatpush1.bf16.msra.mxu0 0
        %397 = vmatprep.subr.bf16.mxu0 0
        %398 = vmatpush1.bf16.msra.mxu0 0
        %399 = vmatprep.subr.bf16.mxu0 0
        %400 = vmatpush1.bf16.msra.mxu0 0
        %401 = vmatprep.subr.bf16.mxu0 0
        %402 = vmatpush1.bf16.msra.mxu0 0
        %403 = vmatprep.subr.bf16.mxu0 0
        %404 = vmatpush1.bf16.msra.mxu0 0
        %405 = vmatprep.subr.bf16.mxu0 0
        %406 = vmatpush1.bf16.msra.mxu0 0
        %407 = vmatprep.subr.bf16.mxu0 0
        %408 = vmatpush1.bf16.msra.mxu0 0
        %409 = vmatprep.subr.bf16.mxu0 0
        %410 = vmatpush1.bf16.msra.mxu0 0
        %411 = vmatprep.subr.bf16.mxu0 0
        %412 = vmatpush1.bf16.msra.mxu0 0
        %413 = vmatprep.subr.bf16.mxu0 0
        %414 = vmatpush1.bf16.msra.mxu0 0
        %415 = vmatprep.mubr.bf16.mxu0 0
        %416 = vmatmul.mubr.bf16.gmra.mrb[0].mxu0 %v381
        %v417 = vpop.f32.mrb[0].mxu0
        %v418 = vadd.f32 0.0, %v417
        %v419 = vpop.f32.mrb[0].mxu0
        %v420 = vadd.f32 0.0, %v419
        %v421 = vpop.f32.mrb[0].mxu0
        %v422 = vpop.f32.mrb[0].mxu0
        %423 = vdwg.mxu0
        %v424 = vadd.f32 %v339, %v418
        %v425 = vadd.f32 %v341, %v420
        %s426 = sadd.s32 %s188, 1
        %s427 = smul.u32 %s426, 3
        %s428 = smul.addr %s427, 4
        %s429 = scalar_lea.vmem %s170, %s428
        %v430 = vld [vmem:[%s429] sm:$0xf]
        %v431 = vld [vmem:[%s429 + $0x4] sm:$0xf]
        %v432 = vld [vmem:[%s429 + $0x8] sm:$0x1]
        %s433 = scalar_lea.vmem %s1, 96
        %v434 = vld [vmem:[%s433] sm:$0xff]
        %v435 = vld [vmem:[%s433 + $0x8] sm:$0xff]
        %v436 = vld [vmem:[%s433 + $0x10] sm:$0xff]
        %v437 = vld [vmem:[%s433 + $0x18] sm:$0xff]
        %v442 = vunpack.c.l.b16 %v434
        %v443 = vunpack.c.h.b16 %v434
        %v444 = vunpack.c.l.b16 %v435
        %v445 = vunpack.c.h.b16 %v435
        %v446 = vunpack.c.l.b16 %v436
        %v447 = vunpack.c.h.b16 %v436
        %v448 = vunpack.c.l.b16 %v437
        %v449 = vunpack.c.h.b16 %v437
        %v450 = vpack.c.b16 %v444, %v442
        %v451 = vpack.c.b16 %v445, %v443
        %v452 = vpack.c.b16 %v448, %v446
        %v453 = vpack.c.b16 %v449, %v447
        %v459 = vsel %vm236, %v430, 0
        %461 = vmatprep.subr.bf16.mxu0 %v451
        %462 = vmatpush1.bf16.msra.mxu0 %v450
        %463 = vmatprep.subr.bf16.mxu0 %v453
        %464 = vmatpush1.bf16.msra.mxu0 %v452
        %465 = vmatprep.subr.bf16.mxu0 0
        %466 = vmatpush1.bf16.msra.mxu0 0
        %467 = vmatprep.subr.bf16.mxu0 0
        %468 = vmatpush1.bf16.msra.mxu0 0
        %469 = vmatprep.subr.bf16.mxu0 0
        %470 = vmatpush1.bf16.msra.mxu0 0
        %471 = vmatprep.subr.bf16.mxu0 0
        %472 = vmatpush1.bf16.msra.mxu0 0
        %473 = vmatprep.subr.bf16.mxu0 0
        %474 = vmatpush1.bf16.msra.mxu0 0
        %475 = vmatprep.subr.bf16.mxu0 0
        %476 = vmatpush1.bf16.msra.mxu0 0
        %477 = vmatprep.subr.bf16.mxu0 0
        %478 = vmatpush1.bf16.msra.mxu0 0
        %479 = vmatprep.subr.bf16.mxu0 0
        %480 = vmatpush1.bf16.msra.mxu0 0
        %481 = vmatprep.subr.bf16.mxu0 0
        %482 = vmatpush1.bf16.msra.mxu0 0
        %483 = vmatprep.subr.bf16.mxu0 0
        %484 = vmatpush1.bf16.msra.mxu0 0
        %485 = vmatprep.subr.bf16.mxu0 0
        %486 = vmatpush1.bf16.msra.mxu0 0
        %487 = vmatprep.subr.bf16.mxu0 0
        %488 = vmatpush1.bf16.msra.mxu0 0
        %489 = vmatprep.subr.bf16.mxu0 0
        %490 = vmatpush1.bf16.msra.mxu0 0
        %491 = vmatprep.subr.bf16.mxu0 0
        %492 = vmatpush1.bf16.msra.mxu0 0
        %493 = vmatprep.mubr.bf16.mxu0 0
        %494 = vmatmul.mubr.bf16.gmra.mrb[0].mxu0 %v459
        %v495 = vpop.f32.mrb[0].mxu0
        %v496 = vadd.f32 0.0, %v495
        %v497 = vpop.f32.mrb[0].mxu0
        %v498 = vadd.f32 0.0, %v497
        %v499 = vpop.f32.mrb[0].mxu0
        %v500 = vpop.f32.mrb[0].mxu0
        %501 = vdwg.mxu0
        %v502 = vadd.f32 %v424, %v496
        %v503 = vadd.f32 %v425, %v498
        %s504 = scalar_lea.vmem %s1, 128
        %v505 = vld [vmem:[%s504] sm:$0xff]
        %v506 = vld [vmem:[%s504 + $0x8] sm:$0xff]
        %v507 = vld [vmem:[%s504 + $0x10] sm:$0xff]
        %v508 = vld [vmem:[%s504 + $0x18] sm:$0xff]
        %v511 = vunpack.c.l.b16 %v431
        %v512 = vunpack.c.l.b16 %v432
        %v513 = vpack.c.b16 %v512, %v511
        %v515 = vshrl.u32 %v513, 16
        %v517 = vshll.u32 %v513, 16
        %v519 = vrot.slane %v517, 1
        %v520 = vor.u32 %v515, %v519
        %v525 = vunpack.c.l.b16 %v505
        %v526 = vunpack.c.h.b16 %v505
        %v527 = vunpack.c.l.b16 %v506
        %v528 = vunpack.c.h.b16 %v506
        %v529 = vunpack.c.l.b16 %v507
        %v530 = vunpack.c.h.b16 %v507
        %v531 = vunpack.c.l.b16 %v508
        %v532 = vunpack.c.h.b16 %v508
        %v533 = vpack.c.b16 %v527, %v525
        %v534 = vpack.c.b16 %v528, %v526
        %v535 = vpack.c.b16 %v531, %v529
        %v536 = vpack.c.b16 %v532, %v530
        %v542 = vsel %vm236, %v520, 0
        %544 = vmatprep.subr.bf16.mxu0 %v534
        %545 = vmatpush1.bf16.msra.mxu0 %v533
        %546 = vmatprep.subr.bf16.mxu0 %v536
        %547 = vmatpush1.bf16.msra.mxu0 %v535
        %548 = vmatprep.subr.bf16.mxu0 0
        %549 = vmatpush1.bf16.msra.mxu0 0
        %550 = vmatprep.subr.bf16.mxu0 0
        %551 = vmatpush1.bf16.msra.mxu0 0
        %552 = vmatprep.subr.bf16.mxu0 0
        %553 = vmatpush1.bf16.msra.mxu0 0
        %554 = vmatprep.subr.bf16.mxu0 0
        %555 = vmatpush1.bf16.msra.mxu0 0
        %556 = vmatprep.subr.bf16.mxu0 0
        %557 = vmatpush1.bf16.msra.mxu0 0
        %558 = vmatprep.subr.bf16.mxu0 0
        %559 = vmatpush1.bf16.msra.mxu0 0
        %560 = vmatprep.subr.bf16.mxu0 0
        %561 = vmatpush1.bf16.msra.mxu0 0
        %562 = vmatprep.subr.bf16.mxu0 0
        %563 = vmatpush1.bf16.msra.mxu0 0
        %564 = vmatprep.subr.bf16.mxu0 0
        %565 = vmatpush1.bf16.msra.mxu0 0
        %566 = vmatprep.subr.bf16.mxu0 0
        %567 = vmatpush1.bf16.msra.mxu0 0
        %568 = vmatprep.subr.bf16.mxu0 0
        %569 = vmatpush1.bf16.msra.mxu0 0
        %570 = vmatprep.subr.bf16.mxu0 0
        %571 = vmatpush1.bf16.msra.mxu0 0
        %572 = vmatprep.subr.bf16.mxu0 0
        %573 = vmatpush1.bf16.msra.mxu0 0
        %574 = vmatprep.subr.bf16.mxu0 0
        %575 = vmatpush1.bf16.msra.mxu0 0
        %576 = vmatprep.mubr.bf16.mxu0 0
        %577 = vmatmul.mubr.bf16.gmra.mrb[0].mxu0 %v542
        %v578 = vpop.f32.mrb[0].mxu0
        %v579 = vadd.f32 0.0, %v578
        %v580 = vpop.f32.mrb[0].mxu0
        %v581 = vadd.f32 0.0, %v580
        %v582 = vpop.f32.mrb[0].mxu0
        %v583 = vpop.f32.mrb[0].mxu0
        %584 = vdwg.mxu0
        %v585 = vadd.f32 %v502, %v579
        %v586 = vadd.f32 %v503, %v581
        %s587 = scalar_lea.vmem %s1, 160
        %v588 = vld [vmem:[%s587] sm:$0xff]
        %v589 = vld [vmem:[%s587 + $0x8] sm:$0xff]
        %v590 = vld [vmem:[%s587 + $0x10] sm:$0xff]
        %v591 = vld [vmem:[%s587 + $0x18] sm:$0xff]
        %v593 = vunpack.c.l.b16 %v430
        %v594 = vpack.c.b16 %v511, %v593
        %v596 = vshrl.u32 %v594, 16
        %v598 = vshll.u32 %v594, 16
        %v600 = vrot.slane %v598, 1
        %v601 = vor.u32 %v596, %v600
        %v606 = vunpack.c.l.b16 %v588
        %v607 = vunpack.c.h.b16 %v588
        %v608 = vunpack.c.l.b16 %v589
        %v609 = vunpack.c.h.b16 %v589
        %v610 = vunpack.c.l.b16 %v590
        %v611 = vunpack.c.h.b16 %v590
        %v612 = vunpack.c.l.b16 %v591
        %v613 = vunpack.c.h.b16 %v591
        %v614 = vpack.c.b16 %v608, %v606
        %v615 = vpack.c.b16 %v609, %v607
        %v616 = vpack.c.b16 %v612, %v610
        %v617 = vpack.c.b16 %v613, %v611
        %v623 = vsel %vm236, %v601, 0
        %625 = vmatprep.subr.bf16.mxu0 %v615
        %626 = vmatpush1.bf16.msra.mxu0 %v614
        %627 = vmatprep.subr.bf16.mxu0 %v617
        %628 = vmatpush1.bf16.msra.mxu0 %v616
        %629 = vmatprep.subr.bf16.mxu0 0
        %630 = vmatpush1.bf16.msra.mxu0 0
        %631 = vmatprep.subr.bf16.mxu0 0
        %632 = vmatpush1.bf16.msra.mxu0 0
        %633 = vmatprep.subr.bf16.mxu0 0
        %634 = vmatpush1.bf16.msra.mxu0 0
        %635 = vmatprep.subr.bf16.mxu0 0
        %636 = vmatpush1.bf16.msra.mxu0 0
        %637 = vmatprep.subr.bf16.mxu0 0
        %638 = vmatpush1.bf16.msra.mxu0 0
        %639 = vmatprep.subr.bf16.mxu0 0
        %640 = vmatpush1.bf16.msra.mxu0 0
        %641 = vmatprep.subr.bf16.mxu0 0
        %642 = vmatpush1.bf16.msra.mxu0 0
        %643 = vmatprep.subr.bf16.mxu0 0
        %644 = vmatpush1.bf16.msra.mxu0 0
        %645 = vmatprep.subr.bf16.mxu0 0
        %646 = vmatpush1.bf16.msra.mxu0 0
        %647 = vmatprep.subr.bf16.mxu0 0
        %648 = vmatpush1.bf16.msra.mxu0 0
        %649 = vmatprep.subr.bf16.mxu0 0
        %650 = vmatpush1.bf16.msra.mxu0 0
        %651 = vmatprep.subr.bf16.mxu0 0
        %652 = vmatpush1.bf16.msra.mxu0 0
        %653 = vmatprep.subr.bf16.mxu0 0
        %654 = vmatpush1.bf16.msra.mxu0 0
        %655 = vmatprep.subr.bf16.mxu0 0
        %656 = vmatpush1.bf16.msra.mxu0 0
        %657 = vmatprep.mubr.bf16.mxu0 0
        %658 = vmatmul.mubr.bf16.gmra.mrb[0].mxu0 %v623
        %v659 = vpop.f32.mrb[0].mxu0
        %v660 = vadd.f32 0.0, %v659
        %v661 = vpop.f32.mrb[0].mxu0
        %v662 = vadd.f32 0.0, %v661
        %v663 = vpop.f32.mrb[0].mxu0
        %v664 = vpop.f32.mrb[0].mxu0
        %665 = vdwg.mxu0
        %v666 = vadd.f32 %v585, %v660
        %v667 = vadd.f32 %v586, %v662
        %s668 = sadd.s32 %s188, 2
        %s669 = smul.u32 %s668, 3
        %s670 = smul.addr %s669, 4
        %s671 = scalar_lea.vmem %s170, %s670
        %v672 = vld [vmem:[%s671] sm:$0xf]
        %v673 = vld [vmem:[%s671 + $0x4] sm:$0xf]
        %v674 = vld [vmem:[%s671 + $0x8] sm:$0x1]
        %s675 = scalar_lea.vmem %s1, 192
        %v676 = vld [vmem:[%s675] sm:$0xff]
        %v677 = vld [vmem:[%s675 + $0x8] sm:$0xff]
        %v678 = vld [vmem:[%s675 + $0x10] sm:$0xff]
        %v679 = vld [vmem:[%s675 + $0x18] sm:$0xff]
        %v684 = vunpack.c.l.b16 %v676
        %v685 = vunpack.c.h.b16 %v676
        %v686 = vunpack.c.l.b16 %v677
        %v687 = vunpack.c.h.b16 %v677
        %v688 = vunpack.c.l.b16 %v678
        %v689 = vunpack.c.h.b16 %v678
        %v690 = vunpack.c.l.b16 %v679
        %v691 = vunpack.c.h.b16 %v679
        %v692 = vpack.c.b16 %v686, %v684
        %v693 = vpack.c.b16 %v687, %v685
        %v694 = vpack.c.b16 %v690, %v688
        %v695 = vpack.c.b16 %v691, %v689
        %v701 = vsel %vm236, %v672, 0
        %703 = vmatprep.subr.bf16.mxu0 %v693
        %704 = vmatpush1.bf16.msra.mxu0 %v692
        %705 = vmatprep.subr.bf16.mxu0 %v695
        %706 = vmatpush1.bf16.msra.mxu0 %v694
        %707 = vmatprep.subr.bf16.mxu0 0
        %708 = vmatpush1.bf16.msra.mxu0 0
        %709 = vmatprep.subr.bf16.mxu0 0
        %710 = vmatpush1.bf16.msra.mxu0 0
        %711 = vmatprep.subr.bf16.mxu0 0
        %712 = vmatpush1.bf16.msra.mxu0 0
        %713 = vmatprep.subr.bf16.mxu0 0
        %714 = vmatpush1.bf16.msra.mxu0 0
        %715 = vmatprep.subr.bf16.mxu0 0
        %716 = vmatpush1.bf16.msra.mxu0 0
        %717 = vmatprep.subr.bf16.mxu0 0
        %718 = vmatpush1.bf16.msra.mxu0 0
        %719 = vmatprep.subr.bf16.mxu0 0
        %720 = vmatpush1.bf16.msra.mxu0 0
        %721 = vmatprep.subr.bf16.mxu0 0
        %722 = vmatpush1.bf16.msra.mxu0 0
        %723 = vmatprep.subr.bf16.mxu0 0
        %724 = vmatpush1.bf16.msra.mxu0 0
        %725 = vmatprep.subr.bf16.mxu0 0
        %726 = vmatpush1.bf16.msra.mxu0 0
        %727 = vmatprep.subr.bf16.mxu0 0
        %728 = vmatpush1.bf16.msra.mxu0 0
        %729 = vmatprep.subr.bf16.mxu0 0
        %730 = vmatpush1.bf16.msra.mxu0 0
        %731 = vmatprep.subr.bf16.mxu0 0
        %732 = vmatpush1.bf16.msra.mxu0 0
        %733 = vmatprep.subr.bf16.mxu0 0
        %734 = vmatpush1.bf16.msra.mxu0 0
        %735 = vmatprep.mubr.bf16.mxu0 0
        %736 = vmatmul.mubr.bf16.gmra.mrb[0].mxu0 %v701
        %v737 = vpop.f32.mrb[0].mxu0
        %v738 = vadd.f32 0.0, %v737
        %v739 = vpop.f32.mrb[0].mxu0
        %v740 = vadd.f32 0.0, %v739
        %v741 = vpop.f32.mrb[0].mxu0
        %v742 = vpop.f32.mrb[0].mxu0
        %743 = vdwg.mxu0
        %v744 = vadd.f32 %v666, %v738
        %v745 = vadd.f32 %v667, %v740
        %s746 = scalar_lea.vmem %s1, 224
        %v747 = vld [vmem:[%s746] sm:$0xff]
        %v748 = vld [vmem:[%s746 + $0x8] sm:$0xff]
        %v749 = vld [vmem:[%s746 + $0x10] sm:$0xff]
        %v750 = vld [vmem:[%s746 + $0x18] sm:$0xff]
        %v753 = vunpack.c.l.b16 %v673
        %v754 = vunpack.c.l.b16 %v674
        %v755 = vpack.c.b16 %v754, %v753
        %v757 = vshrl.u32 %v755, 16
        %v759 = vshll.u32 %v755, 16
        %v761 = vrot.slane %v759, 1
        %v762 = vor.u32 %v757, %v761
        %v767 = vunpack.c.l.b16 %v747
        %v768 = vunpack.c.h.b16 %v747
        %v769 = vunpack.c.l.b16 %v748
        %v770 = vunpack.c.h.b16 %v748
        %v771 = vunpack.c.l.b16 %v749
        %v772 = vunpack.c.h.b16 %v749
        %v773 = vunpack.c.l.b16 %v750
        %v774 = vunpack.c.h.b16 %v750
        %v775 = vpack.c.b16 %v769, %v767
        %v776 = vpack.c.b16 %v770, %v768
        %v777 = vpack.c.b16 %v773, %v771
        %v778 = vpack.c.b16 %v774, %v772
        %v784 = vsel %vm236, %v762, 0
        %786 = vmatprep.subr.bf16.mxu0 %v776
        %787 = vmatpush1.bf16.msra.mxu0 %v775
        %788 = vmatprep.subr.bf16.mxu0 %v778
        %789 = vmatpush1.bf16.msra.mxu0 %v777
        %790 = vmatprep.subr.bf16.mxu0 0
        %791 = vmatpush1.bf16.msra.mxu0 0
        %792 = vmatprep.subr.bf16.mxu0 0
        %793 = vmatpush1.bf16.msra.mxu0 0
        %794 = vmatprep.subr.bf16.mxu0 0
        %795 = vmatpush1.bf16.msra.mxu0 0
        %796 = vmatprep.subr.bf16.mxu0 0
        %797 = vmatpush1.bf16.msra.mxu0 0
        %798 = vmatprep.subr.bf16.mxu0 0
        %799 = vmatpush1.bf16.msra.mxu0 0
        %800 = vmatprep.subr.bf16.mxu0 0
        %801 = vmatpush1.bf16.msra.mxu0 0
        %802 = vmatprep.subr.bf16.mxu0 0
        %803 = vmatpush1.bf16.msra.mxu0 0
        %804 = vmatprep.subr.bf16.mxu0 0
        %805 = vmatpush1.bf16.msra.mxu0 0
        %806 = vmatprep.subr.bf16.mxu0 0
        %807 = vmatpush1.bf16.msra.mxu0 0
        %808 = vmatprep.subr.bf16.mxu0 0
        %809 = vmatpush1.bf16.msra.mxu0 0
        %810 = vmatprep.subr.bf16.mxu0 0
        %811 = vmatpush1.bf16.msra.mxu0 0
        %812 = vmatprep.subr.bf16.mxu0 0
        %813 = vmatpush1.bf16.msra.mxu0 0
        %814 = vmatprep.subr.bf16.mxu0 0
        %815 = vmatpush1.bf16.msra.mxu0 0
        %816 = vmatprep.subr.bf16.mxu0 0
        %817 = vmatpush1.bf16.msra.mxu0 0
        %818 = vmatprep.mubr.bf16.mxu0 0
        %819 = vmatmul.mubr.bf16.gmra.mrb[0].mxu0 %v784
        %v820 = vpop.f32.mrb[0].mxu0
        %v821 = vadd.f32 0.0, %v820
        %v822 = vpop.f32.mrb[0].mxu0
        %v823 = vadd.f32 0.0, %v822
        %v824 = vpop.f32.mrb[0].mxu0
        %v825 = vpop.f32.mrb[0].mxu0
        %826 = vdwg.mxu0
        %v827 = vadd.f32 %v744, %v821
        %v828 = vadd.f32 %v745, %v823
        %s829 = scalar_lea.vmem %s1, 256
        %v830 = vld [vmem:[%s829] sm:$0xff]
        %v831 = vld [vmem:[%s829 + $0x8] sm:$0xff]
        %v832 = vld [vmem:[%s829 + $0x10] sm:$0xff]
        %v833 = vld [vmem:[%s829 + $0x18] sm:$0xff]
        %v835 = vunpack.c.l.b16 %v672
        %v836 = vpack.c.b16 %v753, %v835
        %v838 = vshrl.u32 %v836, 16
        %v840 = vshll.u32 %v836, 16
        %v842 = vrot.slane %v840, 1
        %v843 = vor.u32 %v838, %v842
        %v848 = vunpack.c.l.b16 %v830
        %v849 = vunpack.c.h.b16 %v830
        %v850 = vunpack.c.l.b16 %v831
        %v851 = vunpack.c.h.b16 %v831
        %v852 = vunpack.c.l.b16 %v832
        %v853 = vunpack.c.h.b16 %v832
        %v854 = vunpack.c.l.b16 %v833
        %v855 = vunpack.c.h.b16 %v833
        %v856 = vpack.c.b16 %v850, %v848
        %v857 = vpack.c.b16 %v851, %v849
        %v858 = vpack.c.b16 %v854, %v852
        %v859 = vpack.c.b16 %v855, %v853
        %v865 = vsel %vm236, %v843, 0
        %867 = vmatprep.subr.bf16.mxu0 %v857
        %868 = vmatpush1.bf16.msra.mxu0 %v856
        %869 = vmatprep.subr.bf16.mxu0 %v859
        %870 = vmatpush1.bf16.msra.mxu0 %v858
        %871 = vmatprep.subr.bf16.mxu0 0
        %872 = vmatpush1.bf16.msra.mxu0 0
        %873 = vmatprep.subr.bf16.mxu0 0
        %874 = vmatpush1.bf16.msra.mxu0 0
        %875 = vmatprep.subr.bf16.mxu0 0
        %876 = vmatpush1.bf16.msra.mxu0 0
        %877 = vmatprep.subr.bf16.mxu0 0
        %878 = vmatpush1.bf16.msra.mxu0 0
        %879 = vmatprep.subr.bf16.mxu0 0
        %880 = vmatpush1.bf16.msra.mxu0 0
        %881 = vmatprep.subr.bf16.mxu0 0
        %882 = vmatpush1.bf16.msra.mxu0 0
        %883 = vmatprep.subr.bf16.mxu0 0
        %884 = vmatpush1.bf16.msra.mxu0 0
        %885 = vmatprep.subr.bf16.mxu0 0
        %886 = vmatpush1.bf16.msra.mxu0 0
        %887 = vmatprep.subr.bf16.mxu0 0
        %888 = vmatpush1.bf16.msra.mxu0 0
        %889 = vmatprep.subr.bf16.mxu0 0
        %890 = vmatpush1.bf16.msra.mxu0 0
        %891 = vmatprep.subr.bf16.mxu0 0
        %892 = vmatpush1.bf16.msra.mxu0 0
        %893 = vmatprep.subr.bf16.mxu0 0
        %894 = vmatpush1.bf16.msra.mxu0 0
        %895 = vmatprep.subr.bf16.mxu0 0
        %896 = vmatpush1.bf16.msra.mxu0 0
        %897 = vmatprep.subr.bf16.mxu0 0
        %898 = vmatpush1.bf16.msra.mxu0 0
        %899 = vmatprep.mubr.bf16.mxu0 0
        %900 = vmatmul.mubr.bf16.gmra.mrb[0].mxu0 %v865
        %v901 = vpop.f32.mrb[0].mxu0
        %v902 = vadd.f32 0.0, %v901
        %v903 = vpop.f32.mrb[0].mxu0
        %v904 = vadd.f32 0.0, %v903
        %v905 = vpop.f32.mrb[0].mxu0
        %v906 = vpop.f32.mrb[0].mxu0
        %907 = vdwg.mxu0
        %v908 = vadd.f32 %v827, %v902
        %v909 = vadd.f32 %v828, %v904
        %v910 = vxor.u32 %v909, 2147483648
        %v911 = vmul.f32 %v910, 1.442695
        %v912 = vpow.pop %v911
        %v913 = vadd.f32 %v912, 1.0
        %v914 = vrcp.pop %v913
        %v915 = vmul.f32 1.0, %v914
        %v916 = vmax.f32 %v908, 0.0
        %v917 = vmul.f32 %v915, %v916
        %v918 = vpack.c.bf16 %v917, %v917
        %s919 = smul.addr %s183, 4
        %s920 = scalar_lea.vmem %s179, %s919
        %vm921 = vcmask 519168
        %922 = vst.msk [vmem:[%s920] sm:$0xf] %vm921, %v918
      $region33: #{_encoder_forward_nhwc.9} parent=27 // loop_footer
        %s187 = sadd.s32 1, %s183
      $region34: #{_encoder_forward_nhwc.9} parent=27 // loop_footer_branch
        %182 = sbr.rel target = $region30
      $region35: #{_encoder_forward_nhwc.9} parent=27 // loop_exit
        _
      %s923 = smul.u32 8, %s18
      %p924 = scmp.lt.s32.totalorder %s17, 1
      %s925 = scalar_select %p924, %s17, 1
      %p926 = scmp.lt.s32.totalorder %s923, 7
      %s927 = scalar_select %p926, %s923, 7
      %s928 = smul.addr %s925, 8
      %s929 = sadd.s32 %s927, %s928
      %s930 = smul.addr %s929, 4
      %s931 = scalar_lea.vmem %s2, %s930
      // Predicated region
      $region36: #{_encoder_forward_nhwc.9} parent=27 // pred_check
        %p932 = pneg %p94
      $region37: #{_encoder_forward_nhwc.9} parent=27 // pred_check_branch
        %934 = sbr.rel (%p932) target = $region39
      $region38: #{_encoder_forward_nhwc.9} parent=27 // pred_region
        %s935 = smul.u32 8, %s18
      $region39: #{_encoder_forward_nhwc.9} parent=27 // pred_fallthru
        _
    $region28: #{_encoder_forward_nhwc.9} parent=5 // pred_fallthru
      _
    %p936 = scmp.le.s32.totalorder 2, %s8
    // Predicated region
    $region40: #{_encoder_forward_nhwc.9} parent=5 // pred_check
      %p937 = pneg %p936
    $region41: #{_encoder_forward_nhwc.9} parent=5 // pred_check_branch
      %939 = sbr.rel (%p937) target = $region43
    $region42: #{_encoder_forward_nhwc.9} parent=5 // pred_region
      %s940 = ssub.s32 %s8, 2
      // Predicated region
      $region44: #{_encoder_forward_nhwc.9} parent=42 // pred_check
        %p941 = pneg %p100
      $region45: #{_encoder_forward_nhwc.9} parent=42 // pred_check_branch
        %943 = sbr.rel (%p941) target = $region47
      $region46: #{_encoder_forward_nhwc.9} parent=42 // pred_region
        %s944 = smul.u32 8, %s20
        %p945 = scmp.lt.s32.totalorder %s19, 1
        %s946 = scalar_select %p945, %s19, 1
        %p947 = scmp.lt.s32.totalorder %s944, 7
        %s948 = scalar_select %p947, %s944, 7
        %s949 = smul.addr %s946, 8
        %s950 = sadd.s32 %s948, %s949
        %s951 = smul.addr %s950, 4
        %s952 = scalar_lea.vmem %s2, %s951
      $region47: #{_encoder_forward_nhwc.9} parent=42 // pred_fallthru
        _
    $region43: #{_encoder_forward_nhwc.9} parent=5 // pred_fallthru
      _
  $region6: #{_encoder_forward_nhwc.9} parent=0 // loop_footer
    %s12 = sadd.s32 1, %s8
  $region7: #{_encoder_forward_nhwc.9} parent=0 // loop_footer_branch
    %7 = sbr.rel target = $region3
  $region8: #{_encoder_forward_nhwc.9} parent=0 // loop_exit
    _

// kernel: _encoder_forward_nhwc.10
$region0: #{_encoder_forward_nhwc.10}
  #allocation0 [shape = 'u32[]', space=smem, size = 0x4, offset = 0x4, fixed_abs, tag = 'smem constant byte address 0x4 - core index']
  #allocation1 [shape = 'u32[144,128]{1,0:T(1,128)}', space=vmem, size = 0x12000, scoped, tag = 'internal scratch']
  %s0 = inlined_call_operand.vmem [shape: bf16[2,1,10,10,64], index: 0, kind: input, shape index: {}]
  %s1 = inlined_call_operand.vmem [shape: bf16[9,64,256], index: 1, kind: input, shape index: {}]
  %s2 = inlined_call_operand.vmem [shape: bf16[2,8,8,64], index: 2, kind: output, shape index: {}]
  %s3 = sld [smem:[#allocation0]]
  $region48: #{_encoder_forward_nhwc.10} parent=0
    _
  %s5 = ssub.s32 1, %s3
  %s6 = scalar_select 0, %s5, %s3
  loop: start=0, step=1, limit=4
  $region2: #{_encoder_forward_nhwc.10} parent=0 // loop_pre_header
    _
  $region3: #{_encoder_forward_nhwc.10} parent=0 // loop_header
    %s8 = sphi 0, %s12
    %p9 = scmp.ge.s32.totalorder %s8, 4
    %s15 = sphi 0, %s27
    %s16 = sphi 0, %s23
    %s17 = sphi 0, %s15
    %s18 = sphi 0, %s16
    %s19 = sphi 0, %s17
    %s20 = sphi 0, %s18
    %s32 = sphi 0, %s34
    %s35 = sphi 0, %s32
    %s36 = sphi 0, %s35
    %s52 = sphi 0, %s36
    %s56 = sphi 0, %s56
    %s58 = sphi 0, %s56
    %s59 = sphi 0, %s58
    %s73 = sphi 0, %s59
    %s81 = sphi 0, %s83
    %s84 = sphi 0, %s81
    %s85 = sphi 0, %s84
    %s101 = sphi 0, %s85
  $region4: #{_encoder_forward_nhwc.10} parent=0 // loop_header_branch
    %11 = sbr.rel (%p9) target = $region8
  $region5: #{_encoder_forward_nhwc.10} parent=0 // loop_body
    %s13 = ssub.s32 %s8, 1
    %s14 = ssub.s32 %s8, 2
    %s21 = sadd.s32 1, %s16
    %p22 = scmp.ge.s32.totalorder %s21, 1
    %s23 = scalar_select %p22, 0, %s21
    %s24 = sadd.s32 1, %s15
    %s25 = scalar_select %p22, %s24, %s15
    %p26 = scmp.ge.s32.totalorder %s25, 2
    %s27 = scalar_select %p26, 0, %s25
    %s28 = ssub.s32 %s15, %s27
    %s29 = ssub.s32 %s16, %s23
    %s30 = sor.u32 %s28, %s29
    %p31 = scmp.eq.s32.totalorder %s30, 0
    %s33 = sadd.s32 %s32, 1
    %s34 = scalar_select %p31, %s32, %s33
    %p37 = pneg %p31
    %p38 = scmp.eq.s32.totalorder %s8, 1
    %p39 = por %p37, %p38
    %p40 = scmp.ne.s32.totalorder %s32, %s35
    %p41 = scmp.eq.s32.totalorder %s8, 0
    %p42 = por %p40, %p41
    %p43 = scmp.ne.s32.totalorder %s32, %s35
    %p44 = scmp.eq.s32.totalorder %s13, 1
    %p45 = por %p43, %p44
    %p46 = scmp.ne.s32.totalorder %s35, %s36
    %p47 = scmp.eq.s32.totalorder %s13, 0
    %p48 = por %p46, %p47
    %p49 = scmp.ne.s32.totalorder %s35, %s36
    %p50 = scmp.eq.s32.totalorder %s14, 1
    %p51 = por %p49, %p50
    %p53 = scmp.ne.s32.totalorder %s36, %s52
    %p54 = scmp.eq.s32.totalorder %s14, 0
    %p55 = por %p53, %p54
    %s57 = sadd.s32 %s56, 1
    %p60 = scmp.eq.s32.totalorder %s8, 1
    %p61 = scmp.ne.s32.totalorder %s56, %s58
    %p62 = scmp.eq.s32.totalorder %s8, 0
    %p63 = por %p61, %p62
    %p64 = scmp.ne.s32.totalorder %s56, %s58
    %p65 = scmp.eq.s32.totalorder %s13, 1
    %p66 = por %p64, %p65
    %p67 = scmp.ne.s32.totalorder %s58, %s59
    %p68 = scmp.eq.s32.totalorder %s13, 0
    %p69 = por %p67, %p68
    %p70 = scmp.ne.s32.totalorder %s58, %s59
    %p71 = scmp.eq.s32.totalorder %s14, 1
    %p72 = por %p70, %p71
    %p74 = scmp.ne.s32.totalorder %s59, %s73
    %p75 = scmp.eq.s32.totalorder %s14, 0
    %p76 = por %p74, %p75
    %s77 = ssub.s32 %s15, %s27
    %s78 = ssub.s32 %s16, %s23
    %s79 = sor.u32 %s77, %s78
    %p80 = scmp.eq.s32.totalorder %s79, 0
    %s82 = sadd.s32 %s81, 1
    %s83 = scalar_select %p80, %s81, %s82
    %p86 = pneg %p80
    %p87 = scmp.eq.s32.totalorder %s8, 1
    %p88 = por %p86, %p87
    %p89 = scmp.ne.s32.totalorder %s81, %s84
    %p90 = scmp.eq.s32.totalorder %s8, 0
    %p91 = por %p89, %p90
    %p92 = scmp.ne.s32.totalorder %s81, %s84
    %p93 = scmp.eq.s32.totalorder %s13, 1
    %p94 = por %p92, %p93
    %p95 = scmp.ne.s32.totalorder %s84, %s85
    %p96 = scmp.eq.s32.totalorder %s13, 0
    %p97 = por %p95, %p96
    %p98 = scmp.ne.s32.totalorder %s84, %s85
    %p99 = scmp.eq.s32.totalorder %s14, 1
    %p100 = por %p98, %p99
    %p102 = scmp.ne.s32.totalorder %s85, %s101
    %p103 = scmp.eq.s32.totalorder %s14, 0
    %p104 = por %p102, %p103
    %p105 = scmp.le.s32.totalorder 1, %s8
    %p106 = scmp.lt.s32.totalorder %s8, 3
    %p107 = pnand %p105, %p106
    %p108 = pneg %p107
    // Predicated region
    $region9: #{_encoder_forward_nhwc.10} parent=5 // pred_check
      _
    $region10: #{_encoder_forward_nhwc.10} parent=5 // pred_check_branch
      %110 = sbr.rel (%p107) target = $region12
    $region11: #{_encoder_forward_nhwc.10} parent=5 // pred_region
      %s111 = ssub.s32 %s8, 1
      // Predicated region
      $region13: #{_encoder_forward_nhwc.10} parent=11 // pred_check
        %p112 = pneg %p69
      $region14: #{_encoder_forward_nhwc.10} parent=11 // pred_check_branch
        %114 = sbr.rel (%p112) target = $region16
      $region15: #{_encoder_forward_nhwc.10} parent=11 // pred_region
        _
      $region16: #{_encoder_forward_nhwc.10} parent=11 // pred_fallthru
        _
    $region12: #{_encoder_forward_nhwc.10} parent=5 // pred_fallthru
      _
    %p115 = scmp.lt.s32.totalorder %s8, 2
    // Predicated region
    $region17: #{_encoder_forward_nhwc.10} parent=5 // pred_check
      %p116 = pneg %p115
    $region18: #{_encoder_forward_nhwc.10} parent=5 // pred_check_branch
      %118 = sbr.rel (%p116) target = $region20
    $region19: #{_encoder_forward_nhwc.10} parent=5 // pred_region
      // Predicated region
      $region21: #{_encoder_forward_nhwc.10} parent=19 // pred_check
        %p119 = pneg %p42
      $region22: #{_encoder_forward_nhwc.10} parent=19 // pred_check_branch
        %121 = sbr.rel (%p119) target = $region24
      $region23: #{_encoder_forward_nhwc.10} parent=19 // pred_region
        %p122 = scmp.lt.s32.totalorder %s15, 1
        %s123 = scalar_select %p122, %s15, 1
        %p124 = scmp.lt.s32.totalorder %s16, 0
        %s125 = scalar_select %p124, %s16, 0
        %s126 = smul.addr %s125, 20
        %s127 = smul.addr %s123, 20
        %s128 = sadd.s32 %s126, %s127
        %s129 = smul.addr %s128, 4
        %s130 = scalar_lea.vmem %s0, %s129
      $region24: #{_encoder_forward_nhwc.10} parent=19 // pred_fallthru
        _
    $region20: #{_encoder_forward_nhwc.10} parent=5 // pred_fallthru
      _
    %p131 = scmp.le.s32.totalorder 1, %s8
    %p132 = scmp.lt.s32.totalorder %s8, 3
    %p133 = pnand %p131, %p132
    %p134 = pneg %p133
    // Predicated region
    $region25: #{_encoder_forward_nhwc.10} parent=5 // pred_check
      _
    $region26: #{_encoder_forward_nhwc.10} parent=5 // pred_check_branch
      %136 = sbr.rel (%p133) target = $region28
    $region27: #{_encoder_forward_nhwc.10} parent=5 // pred_region
      %s137 = ssub.s32 %s8, 1
      %p138 = scmp.lt.s32.totalorder %s17, 1
      %s139 = scalar_select %p138, %s17, 1
      %p140 = scmp.lt.s32.totalorder %s18, 0
      %s141 = scalar_select %p140, %s18, 0
      %s142 = smul.addr %s141, 20
      %s143 = smul.addr %s139, 20
      %s144 = sadd.s32 %s142, %s143
      %s145 = smul.addr %s144, 4
      %s146 = scalar_lea.vmem %s0, %s145
      %p147 = pneg %p48
      %p148 = pneg %p45
      %p149 = pneg %p69
      %p150 = pneg %p66
      %p151 = pneg %p97
      %p152 = pneg %p94
      %s153 = smul.u32 8, %s18
      %p154 = scmp.lt.s32.totalorder %s17, 1
      %s155 = scalar_select %p154, %s17, 1
      %p156 = scmp.lt.s32.totalorder %s153, 7
      %s157 = scalar_select %p156, %s153, 7
      %s158 = smul.addr %s155, 8
      %s159 = sadd.s32 %s157, %s158
      %s160 = smul.addr %s159, 4
      %s161 = scalar_lea.vmem %s2, %s160
      %p162 = scmp.lt.s32.totalorder %s17, 1
      %s163 = scalar_select %p162, %s17, 1
      %p164 = scmp.lt.s32.totalorder %s18, 0
      %s165 = scalar_select %p164, %s18, 0
      %s166 = smul.addr %s165, 20
      %s167 = smul.addr %s163, 20
      %s168 = sadd.s32 %s166, %s167
      %s169 = smul.addr %s168, 4
      %s170 = scalar_lea.vmem %s0, %s169
      %s171 = smul.u32 8, %s18
      %p172 = scmp.lt.s32.totalorder %s17, 1
      %s173 = scalar_select %p172, %s17, 1
      %p174 = scmp.lt.s32.totalorder %s171, 7
      %s175 = scalar_select %p174, %s171, 7
      %s176 = smul.addr %s173, 8
      %s177 = sadd.s32 %s175, %s176
      %s178 = smul.addr %s177, 4
      %s179 = scalar_lea.vmem %s2, %s178
      %s180 = smul.u32 8, %s18
      loop: start=0, step=1, limit=8
      $region29: #{_encoder_forward_nhwc.10} parent=27 // loop_pre_header
        _
      $region30: #{_encoder_forward_nhwc.10} parent=27 // loop_header
        %s183 = sphi 0, %s187
        %p184 = scmp.ge.s32.totalorder %s183, 8
      $region31: #{_encoder_forward_nhwc.10} parent=27 // loop_header_branch
        %186 = sbr.rel (%p184) target = $region35
      $region32: #{_encoder_forward_nhwc.10} parent=27 // loop_body
        %s188 = smul.u32 %s183, 2
        %s189 = smul.addr %s188, 4
        %s190 = scalar_lea.vmem %s170, %s189
        %v191 = vld [vmem:[%s190] sm:$0xf]
        %v192 = vld [vmem:[%s190 + $0x4] sm:$0x1]
        %v193 = vld [vmem:[%s1] sm:$0xff]
        %v194 = vld [vmem:[%s1 + $0x8] sm:$0xff]
        %v195 = vld [vmem:[%s1 + $0x10] sm:$0xff]
        %v196 = vld [vmem:[%s1 + $0x18] sm:$0xff]
        %v197 = vld [vmem:[%s1 + $0x20] sm:$0xff]
        %v198 = vld [vmem:[%s1 + $0x28] sm:$0xff]
        %v199 = vld [vmem:[%s1 + $0x30] sm:$0xff]
        %v200 = vld [vmem:[%s1 + $0x38] sm:$0xff]
        %s201 = scalar_lea.vmem %s1, 64
        %v202 = vld [vmem:[%s201] sm:$0xff]
        %v203 = vld [vmem:[%s201 + $0x8] sm:$0xff]
        %v204 = vld [vmem:[%s201 + $0x10] sm:$0xff]
        %v205 = vld [vmem:[%s201 + $0x18] sm:$0xff]
        %v206 = vld [vmem:[%s201 + $0x20] sm:$0xff]
        %v207 = vld [vmem:[%s201 + $0x28] sm:$0xff]
        %v208 = vld [vmem:[%s201 + $0x30] sm:$0xff]
        %v209 = vld [vmem:[%s201 + $0x38] sm:$0xff]
        %v212 = vunpack.c.l.b16 %v191
        %v213 = vunpack.c.l.b16 %v192
        %v214 = vpack.c.b16 %v213, %v212
        %v216 = vshrl.u32 %v214, 16
        %v218 = vshll.u32 %v214, 16
        %v220 = vrot.slane %v218, 1
        %v221 = vor.u32 %v216, %v220
        %v230 = vunpack.c.l.b16 %v202
        %v231 = vunpack.c.h.b16 %v202
        %v232 = vunpack.c.l.b16 %v203
        %v233 = vunpack.c.h.b16 %v203
        %v234 = vunpack.c.l.b16 %v204
        %v235 = vunpack.c.h.b16 %v204
        %v236 = vunpack.c.l.b16 %v205
        %v237 = vunpack.c.h.b16 %v205
        %v238 = vunpack.c.l.b16 %v206
        %v239 = vunpack.c.h.b16 %v206
        %v240 = vunpack.c.l.b16 %v207
        %v241 = vunpack.c.h.b16 %v207
        %v242 = vunpack.c.l.b16 %v208
        %v243 = vunpack.c.h.b16 %v208
        %v244 = vunpack.c.l.b16 %v209
        %v245 = vunpack.c.h.b16 %v209
        %v246 = vpack.c.b16 %v232, %v230
        %v247 = vpack.c.b16 %v233, %v231
        %v248 = vpack.c.b16 %v236, %v234
        %v249 = vpack.c.b16 %v237, %v235
        %v250 = vpack.c.b16 %v240, %v238
        %v251 = vpack.c.b16 %v241, %v239
        %v252 = vpack.c.b16 %v244, %v242
        %v253 = vpack.c.b16 %v245, %v243
        %vm262 = vcmask 523264
        %v264 = vsel %vm262, %v221, 0
        %266 = vmatprep.subr.bf16.mxu0 %v247
        %267 = vmatpush1.bf16.msra.mxu0 %v246
        %268 = vmatprep.subr.bf16.mxu0 %v249
        %269 = vmatpush1.bf16.msra.mxu0 %v248
        %270 = vmatprep.subr.bf16.mxu0 %v251
        %271 = vmatpush1.bf16.msra.mxu0 %v250
        %272 = vmatprep.subr.bf16.mxu0 %v253
        %273 = vmatpush1.bf16.msra.mxu0 %v252
        %274 = vmatprep.subr.bf16.mxu0 0
        %275 = vmatpush1.bf16.msra.mxu0 0
        %276 = vmatprep.subr.bf16.mxu0 0
        %277 = vmatpush1.bf16.msra.mxu0 0
        %278 = vmatprep.subr.bf16.mxu0 0
        %279 = vmatpush1.bf16.msra.mxu0 0
        %280 = vmatprep.subr.bf16.mxu0 0
        %281 = vmatpush1.bf16.msra.mxu0 0
        %282 = vmatprep.subr.bf16.mxu0 0
        %283 = vmatpush1.bf16.msra.mxu0 0
        %284 = vmatprep.subr.bf16.mxu0 0
        %285 = vmatpush1.bf16.msra.mxu0 0
        %286 = vmatprep.subr.bf16.mxu0 0
        %287 = vmatpush1.bf16.msra.mxu0 0
        %288 = vmatprep.subr.bf16.mxu0 0
        %289 = vmatpush1.bf16.msra.mxu0 0
        %290 = vmatprep.subr.bf16.mxu0 0
        %291 = vmatpush1.bf16.msra.mxu0 0
        %292 = vmatprep.subr.bf16.mxu0 0
        %293 = vmatpush1.bf16.msra.mxu0 0
        %294 = vmatprep.subr.bf16.mxu0 0
        %295 = vmatpush1.bf16.msra.mxu0 0
        %296 = vmatprep.subr.bf16.mxu0 0
        %297 = vmatpush1.bf16.msra.mxu0 0
        %298 = vmatprep.mubr.bf16.mxu0 0
        %299 = vmatmul.mubr.bf16.gmra.mrb[0].mxu0 %v264
        %v300 = vpop.f32.mrb[0].mxu0
        %v301 = vadd.f32 0.0, %v300
        %v302 = vpop.f32.mrb[0].mxu0
        %v303 = vadd.f32 0.0, %v302
        %v304 = vpop.f32.mrb[0].mxu0
        %v305 = vpop.f32.mrb[0].mxu0
        %306 = vdwg.mxu0
        %v315 = vunpack.c.l.b16 %v193
        %v316 = vunpack.c.h.b16 %v193
        %v317 = vunpack.c.l.b16 %v194
        %v318 = vunpack.c.h.b16 %v194
        %v319 = vunpack.c.l.b16 %v195
        %v320 = vunpack.c.h.b16 %v195
        %v321 = vunpack.c.l.b16 %v196
        %v322 = vunpack.c.h.b16 %v196
        %v323 = vunpack.c.l.b16 %v197
        %v324 = vunpack.c.h.b16 %v197
        %v325 = vunpack.c.l.b16 %v198
        %v326 = vunpack.c.h.b16 %v198
        %v327 = vunpack.c.l.b16 %v199
        %v328 = vunpack.c.h.b16 %v199
        %v329 = vunpack.c.l.b16 %v200
        %v330 = vunpack.c.h.b16 %v200
        %v331 = vpack.c.b16 %v317, %v315
        %v332 = vpack.c.b16 %v318, %v316
        %v333 = vpack.c.b16 %v321, %v319
        %v334 = vpack.c.b16 %v322, %v320
        %v335 = vpack.c.b16 %v325, %v323
        %v336 = vpack.c.b16 %v326, %v324
        %v337 = vpack.c.b16 %v329, %v327
        %v338 = vpack.c.b16 %v330, %v328
        %v348 = vsel %vm262, %v191, 0
        %350 = vmatprep.subr.bf16.mxu0 %v332
        %351 = vmatpush1.bf16.msra.mxu0 %v331
        %352 = vmatprep.subr.bf16.mxu0 %v334
        %353 = vmatpush1.bf16.msra.mxu0 %v333
        %354 = vmatprep.subr.bf16.mxu0 %v336
        %355 = vmatpush1.bf16.msra.mxu0 %v335
        %356 = vmatprep.subr.bf16.mxu0 %v338
        %357 = vmatpush1.bf16.msra.mxu0 %v337
        %358 = vmatprep.subr.bf16.mxu0 0
        %359 = vmatpush1.bf16.msra.mxu0 0
        %360 = vmatprep.subr.bf16.mxu0 0
        %361 = vmatpush1.bf16.msra.mxu0 0
        %362 = vmatprep.subr.bf16.mxu0 0
        %363 = vmatpush1.bf16.msra.mxu0 0
        %364 = vmatprep.subr.bf16.mxu0 0
        %365 = vmatpush1.bf16.msra.mxu0 0
        %366 = vmatprep.subr.bf16.mxu0 0
        %367 = vmatpush1.bf16.msra.mxu0 0
        %368 = vmatprep.subr.bf16.mxu0 0
        %369 = vmatpush1.bf16.msra.mxu0 0
        %370 = vmatprep.subr.bf16.mxu0 0
        %371 = vmatpush1.bf16.msra.mxu0 0
        %372 = vmatprep.subr.bf16.mxu0 0
        %373 = vmatpush1.bf16.msra.mxu0 0
        %374 = vmatprep.subr.bf16.mxu0 0
        %375 = vmatpush1.bf16.msra.mxu0 0
        %376 = vmatprep.subr.bf16.mxu0 0
        %377 = vmatpush1.bf16.msra.mxu0 0
        %378 = vmatprep.subr.bf16.mxu0 0
        %379 = vmatpush1.bf16.msra.mxu0 0
        %380 = vmatprep.subr.bf16.mxu0 0
        %381 = vmatpush1.bf16.msra.mxu0 0
        %382 = vmatprep.mubr.bf16.mxu0 0
        %383 = vmatmul.mubr.bf16.gmra.mrb[0].mxu0 %v348
        %v384 = vpop.f32.mrb[0].mxu0
        %v385 = vadd.f32 %v301, %v384
        %v386 = vpop.f32.mrb[0].mxu0
        %v387 = vadd.f32 %v303, %v386
        %v388 = vpop.f32.mrb[0].mxu0
        %v389 = vpop.f32.mrb[0].mxu0
        %390 = vdwg.mxu0
        %s391 = scalar_lea.vmem %s1, 128
        %v392 = vld [vmem:[%s391] sm:$0xff]
        %v393 = vld [vmem:[%s391 + $0x8] sm:$0xff]
        %v394 = vld [vmem:[%s391 + $0x10] sm:$0xff]
        %v395 = vld [vmem:[%s391 + $0x18] sm:$0xff]
        %v396 = vld [vmem:[%s391 + $0x20] sm:$0xff]
        %v397 = vld [vmem:[%s391 + $0x28] sm:$0xff]
        %v398 = vld [vmem:[%s391 + $0x30] sm:$0xff]
        %v399 = vld [vmem:[%s391 + $0x38] sm:$0xff]
        %v400 = vrot.slane %v214, 1
        %v409 = vunpack.c.l.b16 %v392
        %v410 = vunpack.c.h.b16 %v392
        %v411 = vunpack.c.l.b16 %v393
        %v412 = vunpack.c.h.b16 %v393
        %v413 = vunpack.c.l.b16 %v394
        %v414 = vunpack.c.h.b16 %v394
        %v415 = vunpack.c.l.b16 %v395
        %v416 = vunpack.c.h.b16 %v395
        %v417 = vunpack.c.l.b16 %v396
        %v418 = vunpack.c.h.b16 %v396
        %v419 = vunpack.c.l.b16 %v397
        %v420 = vunpack.c.h.b16 %v397
        %v421 = vunpack.c.l.b16 %v398
        %v422 = vunpack.c.h.b16 %v398
        %v423 = vunpack.c.l.b16 %v399
        %v424 = vunpack.c.h.b16 %v399
        %v425 = vpack.c.b16 %v411, %v409
        %v426 = vpack.c.b16 %v412, %v410
        %v427 = vpack.c.b16 %v415, %v413
        %v428 = vpack.c.b16 %v416, %v414
        %v429 = vpack.c.b16 %v419, %v417
        %v430 = vpack.c.b16 %v420, %v418
        %v431 = vpack.c.b16 %v423, %v421
        %v432 = vpack.c.b16 %v424, %v422
        %v442 = vsel %vm262, %v400, 0
        %444 = vmatprep.subr.bf16.mxu0 %v426
        %445 = vmatpush1.bf16.msra.mxu0 %v425
        %446 = vmatprep.subr.bf16.mxu0 %v428
        %447 = vmatpush1.bf16.msra.mxu0 %v427
        %448 = vmatprep.subr.bf16.mxu0 %v430
        %449 = vmatpush1.bf16.msra.mxu0 %v429
        %450 = vmatprep.subr.bf16.mxu0 %v432
        %451 = vmatpush1.bf16.msra.mxu0 %v431
        %452 = vmatprep.subr.bf16.mxu0 0
        %453 = vmatpush1.bf16.msra.mxu0 0
        %454 = vmatprep.subr.bf16.mxu0 0
        %455 = vmatpush1.bf16.msra.mxu0 0
        %456 = vmatprep.subr.bf16.mxu0 0
        %457 = vmatpush1.bf16.msra.mxu0 0
        %458 = vmatprep.subr.bf16.mxu0 0
        %459 = vmatpush1.bf16.msra.mxu0 0
        %460 = vmatprep.subr.bf16.mxu0 0
        %461 = vmatpush1.bf16.msra.mxu0 0
        %462 = vmatprep.subr.bf16.mxu0 0
        %463 = vmatpush1.bf16.msra.mxu0 0
        %464 = vmatprep.subr.bf16.mxu0 0
        %465 = vmatpush1.bf16.msra.mxu0 0
        %466 = vmatprep.subr.bf16.mxu0 0
        %467 = vmatpush1.bf16.msra.mxu0 0
        %468 = vmatprep.subr.bf16.mxu0 0
        %469 = vmatpush1.bf16.msra.mxu0 0
        %470 = vmatprep.subr.bf16.mxu0 0
        %471 = vmatpush1.bf16.msra.mxu0 0
        %472 = vmatprep.subr.bf16.mxu0 0
        %473 = vmatpush1.bf16.msra.mxu0 0
        %474 = vmatprep.subr.bf16.mxu0 0
        %475 = vmatpush1.bf16.msra.mxu0 0
        %476 = vmatprep.mubr.bf16.mxu0 0
        %477 = vmatmul.mubr.bf16.gmra.mrb[0].mxu0 %v442
        %v478 = vpop.f32.mrb[0].mxu0
        %v479 = vadd.f32 0.0, %v478
        %v480 = vpop.f32.mrb[0].mxu0
        %v481 = vadd.f32 0.0, %v480
        %v482 = vpop.f32.mrb[0].mxu0
        %v483 = vpop.f32.mrb[0].mxu0
        %484 = vdwg.mxu0
        %v485 = vadd.f32 %v385, %v479
        %v486 = vadd.f32 %v387, %v481
        %s487 = sadd.s32 %s183, 1
        %s488 = smul.u32 %s487, 2
        %s489 = smul.addr %s488, 4
        %s490 = scalar_lea.vmem %s170, %s489
        %v491 = vld [vmem:[%s490] sm:$0xf]
        %v492 = vld [vmem:[%s490 + $0x4] sm:$0x1]
        %s493 = scalar_lea.vmem %s1, 192
        %v494 = vld [vmem:[%s493] sm:$0xff]
        %v495 = vld [vmem:[%s493 + $0x8] sm:$0xff]
        %v496 = vld [vmem:[%s493 + $0x10] sm:$0xff]
        %v497 = vld [vmem:[%s493 + $0x18] sm:$0xff]
        %v498 = vld [vmem:[%s493 + $0x20] sm:$0xff]
        %v499 = vld [vmem:[%s493 + $0x28] sm:$0xff]
        %v500 = vld [vmem:[%s493 + $0x30] sm:$0xff]
        %v501 = vld [vmem:[%s493 + $0x38] sm:$0xff]
        %v510 = vunpack.c.l.b16 %v494
        %v511 = vunpack.c.h.b16 %v494
        %v512 = vunpack.c.l.b16 %v495
        %v513 = vunpack.c.h.b16 %v495
        %v514 = vunpack.c.l.b16 %v496
        %v515 = vunpack.c.h.b16 %v496
        %v516 = vunpack.c.l.b16 %v497
        %v517 = vunpack.c.h.b16 %v497
        %v518 = vunpack.c.l.b16 %v498
        %v519 = vunpack.c.h.b16 %v498
        %v520 = vunpack.c.l.b16 %v499
        %v521 = vunpack.c.h.b16 %v499
        %v522 = vunpack.c.l.b16 %v500
        %v523 = vunpack.c.h.b16 %v500
        %v524 = vunpack.c.l.b16 %v501
        %v525 = vunpack.c.h.b16 %v501
        %v526 = vpack.c.b16 %v512, %v510
        %v527 = vpack.c.b16 %v513, %v511
        %v528 = vpack.c.b16 %v516, %v514
        %v529 = vpack.c.b16 %v517, %v515
        %v530 = vpack.c.b16 %v520, %v518
        %v531 = vpack.c.b16 %v521, %v519
        %v532 = vpack.c.b16 %v524, %v522
        %v533 = vpack.c.b16 %v525, %v523
        %v543 = vsel %vm262, %v491, 0
        %545 = vmatprep.subr.bf16.mxu0 %v527
        %546 = vmatpush1.bf16.msra.mxu0 %v526
        %547 = vmatprep.subr.bf16.mxu0 %v529
        %548 = vmatpush1.bf16.msra.mxu0 %v528
        %549 = vmatprep.subr.bf16.mxu0 %v531
        %550 = vmatpush1.bf16.msra.mxu0 %v530
        %551 = vmatprep.subr.bf16.mxu0 %v533
        %552 = vmatpush1.bf16.msra.mxu0 %v532
        %553 = vmatprep.subr.bf16.mxu0 0
        %554 = vmatpush1.bf16.msra.mxu0 0
        %555 = vmatprep.subr.bf16.mxu0 0
        %556 = vmatpush1.bf16.msra.mxu0 0
        %557 = vmatprep.subr.bf16.mxu0 0
        %558 = vmatpush1.bf16.msra.mxu0 0
        %559 = vmatprep.subr.bf16.mxu0 0
        %560 = vmatpush1.bf16.msra.mxu0 0
        %561 = vmatprep.subr.bf16.mxu0 0
        %562 = vmatpush1.bf16.msra.mxu0 0
        %563 = vmatprep.subr.bf16.mxu0 0
        %564 = vmatpush1.bf16.msra.mxu0 0
        %565 = vmatprep.subr.bf16.mxu0 0
        %566 = vmatpush1.bf16.msra.mxu0 0
        %567 = vmatprep.subr.bf16.mxu0 0
        %568 = vmatpush1.bf16.msra.mxu0 0
        %569 = vmatprep.subr.bf16.mxu0 0
        %570 = vmatpush1.bf16.msra.mxu0 0
        %571 = vmatprep.subr.bf16.mxu0 0
        %572 = vmatpush1.bf16.msra.mxu0 0
        %573 = vmatprep.subr.bf16.mxu0 0
        %574 = vmatpush1.bf16.msra.mxu0 0
        %575 = vmatprep.subr.bf16.mxu0 0
        %576 = vmatpush1.bf16.msra.mxu0 0
        %577 = vmatprep.mubr.bf16.mxu0 0
        %578 = vmatmul.mubr.bf16.gmra.mrb[0].mxu0 %v543
        %v579 = vpop.f32.mrb[0].mxu0
        %v580 = vadd.f32 0.0, %v579
        %v581 = vpop.f32.mrb[0].mxu0
        %v582 = vadd.f32 0.0, %v581
        %v583 = vpop.f32.mrb[0].mxu0
        %v584 = vpop.f32.mrb[0].mxu0
        %585 = vdwg.mxu0
        %v586 = vadd.f32 %v485, %v580
        %v587 = vadd.f32 %v486, %v582
        %s588 = scalar_lea.vmem %s1, 256
        %v589 = vld [vmem:[%s588] sm:$0xff]
        %v590 = vld [vmem:[%s588 + $0x8] sm:$0xff]
        %v591 = vld [vmem:[%s588 + $0x10] sm:$0xff]
        %v592 = vld [vmem:[%s588 + $0x18] sm:$0xff]
        %v593 = vld [vmem:[%s588 + $0x20] sm:$0xff]
        %v594 = vld [vmem:[%s588 + $0x28] sm:$0xff]
        %v595 = vld [vmem:[%s588 + $0x30] sm:$0xff]
        %v596 = vld [vmem:[%s588 + $0x38] sm:$0xff]
        %v599 = vunpack.c.l.b16 %v491
        %v600 = vunpack.c.l.b16 %v492
        %v601 = vpack.c.b16 %v600, %v599
        %v603 = vshrl.u32 %v601, 16
        %v605 = vshll.u32 %v601, 16
        %v607 = vrot.slane %v605, 1
        %v608 = vor.u32 %v603, %v607
        %v617 = vunpack.c.l.b16 %v589
        %v618 = vunpack.c.h.b16 %v589
        %v619 = vunpack.c.l.b16 %v590
        %v620 = vunpack.c.h.b16 %v590
        %v621 = vunpack.c.l.b16 %v591
        %v622 = vunpack.c.h.b16 %v591
        %v623 = vunpack.c.l.b16 %v592
        %v624 = vunpack.c.h.b16 %v592
        %v625 = vunpack.c.l.b16 %v593
        %v626 = vunpack.c.h.b16 %v593
        %v627 = vunpack.c.l.b16 %v594
        %v628 = vunpack.c.h.b16 %v594
        %v629 = vunpack.c.l.b16 %v595
        %v630 = vunpack.c.h.b16 %v595
        %v631 = vunpack.c.l.b16 %v596
        %v632 = vunpack.c.h.b16 %v596
        %v633 = vpack.c.b16 %v619, %v617
        %v634 = vpack.c.b16 %v620, %v618
        %v635 = vpack.c.b16 %v623, %v621
        %v636 = vpack.c.b16 %v624, %v622
        %v637 = vpack.c.b16 %v627, %v625
        %v638 = vpack.c.b16 %v628, %v626
        %v639 = vpack.c.b16 %v631, %v629
        %v640 = vpack.c.b16 %v632, %v630
        %v650 = vsel %vm262, %v608, 0
        %652 = vmatprep.subr.bf16.mxu0 %v634
        %653 = vmatpush1.bf16.msra.mxu0 %v633
        %654 = vmatprep.subr.bf16.mxu0 %v636
        %655 = vmatpush1.bf16.msra.mxu0 %v635
        %656 = vmatprep.subr.bf16.mxu0 %v638
        %657 = vmatpush1.bf16.msra.mxu0 %v637
        %658 = vmatprep.subr.bf16.mxu0 %v640
        %659 = vmatpush1.bf16.msra.mxu0 %v639
        %660 = vmatprep.subr.bf16.mxu0 0
        %661 = vmatpush1.bf16.msra.mxu0 0
        %662 = vmatprep.subr.bf16.mxu0 0
        %663 = vmatpush1.bf16.msra.mxu0 0
        %664 = vmatprep.subr.bf16.mxu0 0
        %665 = vmatpush1.bf16.msra.mxu0 0
        %666 = vmatprep.subr.bf16.mxu0 0
        %667 = vmatpush1.bf16.msra.mxu0 0
        %668 = vmatprep.subr.bf16.mxu0 0
        %669 = vmatpush1.bf16.msra.mxu0 0
        %670 = vmatprep.subr.bf16.mxu0 0
        %671 = vmatpush1.bf16.msra.mxu0 0
        %672 = vmatprep.subr.bf16.mxu0 0
        %673 = vmatpush1.bf16.msra.mxu0 0
        %674 = vmatprep.subr.bf16.mxu0 0
        %675 = vmatpush1.bf16.msra.mxu0 0
        %676 = vmatprep.subr.bf16.mxu0 0
        %677 = vmatpush1.bf16.msra.mxu0 0
        %678 = vmatprep.subr.bf16.mxu0 0
        %679 = vmatpush1.bf16.msra.mxu0 0
        %680 = vmatprep.subr.bf16.mxu0 0
        %681 = vmatpush1.bf16.msra.mxu0 0
        %682 = vmatprep.subr.bf16.mxu0 0
        %683 = vmatpush1.bf16.msra.mxu0 0
        %684 = vmatprep.mubr.bf16.mxu0 0
        %685 = vmatmul.mubr.bf16.gmra.mrb[0].mxu0 %v650
        %v686 = vpop.f32.mrb[0].mxu0
        %v687 = vadd.f32 0.0, %v686
        %v688 = vpop.f32.mrb[0].mxu0
        %v689 = vadd.f32 0.0, %v688
        %v690 = vpop.f32.mrb[0].mxu0
        %v691 = vpop.f32.mrb[0].mxu0
        %692 = vdwg.mxu0
        %v693 = vadd.f32 %v586, %v687
        %v694 = vadd.f32 %v587, %v689
        %s695 = scalar_lea.vmem %s1, 320
        %v696 = vld [vmem:[%s695] sm:$0xff]
        %v697 = vld [vmem:[%s695 + $0x8] sm:$0xff]
        %v698 = vld [vmem:[%s695 + $0x10] sm:$0xff]
        %v699 = vld [vmem:[%s695 + $0x18] sm:$0xff]
        %v700 = vld [vmem:[%s695 + $0x20] sm:$0xff]
        %v701 = vld [vmem:[%s695 + $0x28] sm:$0xff]
        %v702 = vld [vmem:[%s695 + $0x30] sm:$0xff]
        %v703 = vld [vmem:[%s695 + $0x38] sm:$0xff]
        %v704 = vrot.slane %v601, 1
        %v713 = vunpack.c.l.b16 %v696
        %v714 = vunpack.c.h.b16 %v696
        %v715 = vunpack.c.l.b16 %v697
        %v716 = vunpack.c.h.b16 %v697
        %v717 = vunpack.c.l.b16 %v698
        %v718 = vunpack.c.h.b16 %v698
        %v719 = vunpack.c.l.b16 %v699
        %v720 = vunpack.c.h.b16 %v699
        %v721 = vunpack.c.l.b16 %v700
        %v722 = vunpack.c.h.b16 %v700
        %v723 = vunpack.c.l.b16 %v701
        %v724 = vunpack.c.h.b16 %v701
        %v725 = vunpack.c.l.b16 %v702
        %v726 = vunpack.c.h.b16 %v702
        %v727 = vunpack.c.l.b16 %v703
        %v728 = vunpack.c.h.b16 %v703
        %v729 = vpack.c.b16 %v715, %v713
        %v730 = vpack.c.b16 %v716, %v714
        %v731 = vpack.c.b16 %v719, %v717
        %v732 = vpack.c.b16 %v720, %v718
        %v733 = vpack.c.b16 %v723, %v721
        %v734 = vpack.c.b16 %v724, %v722
        %v735 = vpack.c.b16 %v727, %v725
        %v736 = vpack.c.b16 %v728, %v726
        %v746 = vsel %vm262, %v704, 0
        %748 = vmatprep.subr.bf16.mxu0 %v730
        %749 = vmatpush1.bf16.msra.mxu0 %v729
        %750 = vmatprep.subr.bf16.mxu0 %v732
        %751 = vmatpush1.bf16.msra.mxu0 %v731
        %752 = vmatprep.subr.bf16.mxu0 %v734
        %753 = vmatpush1.bf16.msra.mxu0 %v733
        %754 = vmatprep.subr.bf16.mxu0 %v736
        %755 = vmatpush1.bf16.msra.mxu0 %v735
        %756 = vmatprep.subr.bf16.mxu0 0
        %757 = vmatpush1.bf16.msra.mxu0 0
        %758 = vmatprep.subr.bf16.mxu0 0
        %759 = vmatpush1.bf16.msra.mxu0 0
        %760 = vmatprep.subr.bf16.mxu0 0
        %761 = vmatpush1.bf16.msra.mxu0 0
        %762 = vmatprep.subr.bf16.mxu0 0
        %763 = vmatpush1.bf16.msra.mxu0 0
        %764 = vmatprep.subr.bf16.mxu0 0
        %765 = vmatpush1.bf16.msra.mxu0 0
        %766 = vmatprep.subr.bf16.mxu0 0
        %767 = vmatpush1.bf16.msra.mxu0 0
        %768 = vmatprep.subr.bf16.mxu0 0
        %769 = vmatpush1.bf16.msra.mxu0 0
        %770 = vmatprep.subr.bf16.mxu0 0
        %771 = vmatpush1.bf16.msra.mxu0 0
        %772 = vmatprep.subr.bf16.mxu0 0
        %773 = vmatpush1.bf16.msra.mxu0 0
        %774 = vmatprep.subr.bf16.mxu0 0
        %775 = vmatpush1.bf16.msra.mxu0 0
        %776 = vmatprep.subr.bf16.mxu0 0
        %777 = vmatpush1.bf16.msra.mxu0 0
        %778 = vmatprep.subr.bf16.mxu0 0
        %779 = vmatpush1.bf16.msra.mxu0 0
        %780 = vmatprep.mubr.bf16.mxu0 0
        %781 = vmatmul.mubr.bf16.gmra.mrb[0].mxu0 %v746
        %v782 = vpop.f32.mrb[0].mxu0
        %v783 = vadd.f32 0.0, %v782
        %v784 = vpop.f32.mrb[0].mxu0
        %v785 = vadd.f32 0.0, %v784
        %v786 = vpop.f32.mrb[0].mxu0
        %v787 = vpop.f32.mrb[0].mxu0
        %788 = vdwg.mxu0
        %v789 = vadd.f32 %v693, %v783
        %v790 = vadd.f32 %v694, %v785
        %s791 = sadd.s32 %s183, 2
        %s792 = smul.u32 %s791, 2
        %s793 = smul.addr %s792, 4
        %s794 = scalar_lea.vmem %s170, %s793
        %v795 = vld [vmem:[%s794] sm:$0xf]
        %v796 = vld [vmem:[%s794 + $0x4] sm:$0x1]
        %s797 = scalar_lea.vmem %s1, 384
        %v798 = vld [vmem:[%s797] sm:$0xff]
        %v799 = vld [vmem:[%s797 + $0x8] sm:$0xff]
        %v800 = vld [vmem:[%s797 + $0x10] sm:$0xff]
        %v801 = vld [vmem:[%s797 + $0x18] sm:$0xff]
        %v802 = vld [vmem:[%s797 + $0x20] sm:$0xff]
        %v803 = vld [vmem:[%s797 + $0x28] sm:$0xff]
        %v804 = vld [vmem:[%s797 + $0x30] sm:$0xff]
        %v805 = vld [vmem:[%s797 + $0x38] sm:$0xff]
        %v814 = vunpack.c.l.b16 %v798
        %v815 = vunpack.c.h.b16 %v798
        %v816 = vunpack.c.l.b16 %v799
        %v817 = vunpack.c.h.b16 %v799
        %v818 = vunpack.c.l.b16 %v800
        %v819 = vunpack.c.h.b16 %v800
        %v820 = vunpack.c.l.b16 %v801
        %v821 = vunpack.c.h.b16 %v801
        %v822 = vunpack.c.l.b16 %v802
        %v823 = vunpack.c.h.b16 %v802
        %v824 = vunpack.c.l.b16 %v803
        %v825 = vunpack.c.h.b16 %v803
        %v826 = vunpack.c.l.b16 %v804
        %v827 = vunpack.c.h.b16 %v804
        %v828 = vunpack.c.l.b16 %v805
        %v829 = vunpack.c.h.b16 %v805
        %v830 = vpack.c.b16 %v816, %v814
        %v831 = vpack.c.b16 %v817, %v815
        %v832 = vpack.c.b16 %v820, %v818
        %v833 = vpack.c.b16 %v821, %v819
        %v834 = vpack.c.b16 %v824, %v822
        %v835 = vpack.c.b16 %v825, %v823
        %v836 = vpack.c.b16 %v828, %v826
        %v837 = vpack.c.b16 %v829, %v827
        %v847 = vsel %vm262, %v795, 0
        %849 = vmatprep.subr.bf16.mxu0 %v831
        %850 = vmatpush1.bf16.msra.mxu0 %v830
        %851 = vmatprep.subr.bf16.mxu0 %v833
        %852 = vmatpush1.bf16.msra.mxu0 %v832
        %853 = vmatprep.subr.bf16.mxu0 %v835
        %854 = vmatpush1.bf16.msra.mxu0 %v834
        %855 = vmatprep.subr.bf16.mxu0 %v837
        %856 = vmatpush1.bf16.msra.mxu0 %v836
        %857 = vmatprep.subr.bf16.mxu0 0
        %858 = vmatpush1.bf16.msra.mxu0 0
        %859 = vmatprep.subr.bf16.mxu0 0
        %860 = vmatpush1.bf16.msra.mxu0 0
        %861 = vmatprep.subr.bf16.mxu0 0
        %862 = vmatpush1.bf16.msra.mxu0 0
        %863 = vmatprep.subr.bf16.mxu0 0
        %864 = vmatpush1.bf16.msra.mxu0 0
        %865 = vmatprep.subr.bf16.mxu0 0
        %866 = vmatpush1.bf16.msra.mxu0 0
        %867 = vmatprep.subr.bf16.mxu0 0
        %868 = vmatpush1.bf16.msra.mxu0 0
        %869 = vmatprep.subr.bf16.mxu0 0
        %870 = vmatpush1.bf16.msra.mxu0 0
        %871 = vmatprep.subr.bf16.mxu0 0
        %872 = vmatpush1.bf16.msra.mxu0 0
        %873 = vmatprep.subr.bf16.mxu0 0
        %874 = vmatpush1.bf16.msra.mxu0 0
        %875 = vmatprep.subr.bf16.mxu0 0
        %876 = vmatpush1.bf16.msra.mxu0 0
        %877 = vmatprep.subr.bf16.mxu0 0
        %878 = vmatpush1.bf16.msra.mxu0 0
        %879 = vmatprep.subr.bf16.mxu0 0
        %880 = vmatpush1.bf16.msra.mxu0 0
        %881 = vmatprep.mubr.bf16.mxu0 0
        %882 = vmatmul.mubr.bf16.gmra.mrb[0].mxu0 %v847
        %v883 = vpop.f32.mrb[0].mxu0
        %v884 = vadd.f32 0.0, %v883
        %v885 = vpop.f32.mrb[0].mxu0
        %v886 = vadd.f32 0.0, %v885
        %v887 = vpop.f32.mrb[0].mxu0
        %v888 = vpop.f32.mrb[0].mxu0
        %889 = vdwg.mxu0
        %v890 = vadd.f32 %v789, %v884
        %v891 = vadd.f32 %v790, %v886
        %s892 = scalar_lea.vmem %s1, 448
        %v893 = vld [vmem:[%s892] sm:$0xff]
        %v894 = vld [vmem:[%s892 + $0x8] sm:$0xff]
        %v895 = vld [vmem:[%s892 + $0x10] sm:$0xff]
        %v896 = vld [vmem:[%s892 + $0x18] sm:$0xff]
        %v897 = vld [vmem:[%s892 + $0x20] sm:$0xff]
        %v898 = vld [vmem:[%s892 + $0x28] sm:$0xff]
        %v899 = vld [vmem:[%s892 + $0x30] sm:$0xff]
        %v900 = vld [vmem:[%s892 + $0x38] sm:$0xff]
        %v903 = vunpack.c.l.b16 %v795
        %v904 = vunpack.c.l.b16 %v796
        %v905 = vpack.c.b16 %v904, %v903
        %v907 = vshrl.u32 %v905, 16
        %v909 = vshll.u32 %v905, 16
        %v911 = vrot.slane %v909, 1
        %v912 = vor.u32 %v907, %v911
        %v921 = vunpack.c.l.b16 %v893
        %v922 = vunpack.c.h.b16 %v893
        %v923 = vunpack.c.l.b16 %v894
        %v924 = vunpack.c.h.b16 %v894
        %v925 = vunpack.c.l.b16 %v895
        %v926 = vunpack.c.h.b16 %v895
        %v927 = vunpack.c.l.b16 %v896
        %v928 = vunpack.c.h.b16 %v896
        %v929 = vunpack.c.l.b16 %v897
        %v930 = vunpack.c.h.b16 %v897
        %v931 = vunpack.c.l.b16 %v898
        %v932 = vunpack.c.h.b16 %v898
        %v933 = vunpack.c.l.b16 %v899
        %v934 = vunpack.c.h.b16 %v899
        %v935 = vunpack.c.l.b16 %v900
        %v936 = vunpack.c.h.b16 %v900
        %v937 = vpack.c.b16 %v923, %v921
        %v938 = vpack.c.b16 %v924, %v922
        %v939 = vpack.c.b16 %v927, %v925
        %v940 = vpack.c.b16 %v928, %v926
        %v941 = vpack.c.b16 %v931, %v929
        %v942 = vpack.c.b16 %v932, %v930
        %v943 = vpack.c.b16 %v935, %v933
        %v944 = vpack.c.b16 %v936, %v934
        %v954 = vsel %vm262, %v912, 0
        %956 = vmatprep.subr.bf16.mxu0 %v938
        %957 = vmatpush1.bf16.msra.mxu0 %v937
        %958 = vmatprep.subr.bf16.mxu0 %v940
        %959 = vmatpush1.bf16.msra.mxu0 %v939
        %960 = vmatprep.subr.bf16.mxu0 %v942
        %961 = vmatpush1.bf16.msra.mxu0 %v941
        %962 = vmatprep.subr.bf16.mxu0 %v944
        %963 = vmatpush1.bf16.msra.mxu0 %v943
        %964 = vmatprep.subr.bf16.mxu0 0
        %965 = vmatpush1.bf16.msra.mxu0 0
        %966 = vmatprep.subr.bf16.mxu0 0
        %967 = vmatpush1.bf16.msra.mxu0 0
        %968 = vmatprep.subr.bf16.mxu0 0
        %969 = vmatpush1.bf16.msra.mxu0 0
        %970 = vmatprep.subr.bf16.mxu0 0
        %971 = vmatpush1.bf16.msra.mxu0 0
        %972 = vmatprep.subr.bf16.mxu0 0
        %973 = vmatpush1.bf16.msra.mxu0 0
        %974 = vmatprep.subr.bf16.mxu0 0
        %975 = vmatpush1.bf16.msra.mxu0 0
        %976 = vmatprep.subr.bf16.mxu0 0
        %977 = vmatpush1.bf16.msra.mxu0 0
        %978 = vmatprep.subr.bf16.mxu0 0
        %979 = vmatpush1.bf16.msra.mxu0 0
        %980 = vmatprep.subr.bf16.mxu0 0
        %981 = vmatpush1.bf16.msra.mxu0 0
        %982 = vmatprep.subr.bf16.mxu0 0
        %983 = vmatpush1.bf16.msra.mxu0 0
        %984 = vmatprep.subr.bf16.mxu0 0
        %985 = vmatpush1.bf16.msra.mxu0 0
        %986 = vmatprep.subr.bf16.mxu0 0
        %987 = vmatpush1.bf16.msra.mxu0 0
        %988 = vmatprep.mubr.bf16.mxu0 0
        %989 = vmatmul.mubr.bf16.gmra.mrb[0].mxu0 %v954
        %v990 = vpop.f32.mrb[0].mxu0
        %v991 = vadd.f32 0.0, %v990
        %v992 = vpop.f32.mrb[0].mxu0
        %v993 = vadd.f32 0.0, %v992
        %v994 = vpop.f32.mrb[0].mxu0
        %v995 = vpop.f32.mrb[0].mxu0
        %996 = vdwg.mxu0
        %v997 = vadd.f32 %v890, %v991
        %v998 = vadd.f32 %v891, %v993
        %s999 = scalar_lea.vmem %s1, 512
        %v1000 = vld [vmem:[%s999] sm:$0xff]
        %v1001 = vld [vmem:[%s999 + $0x8] sm:$0xff]
        %v1002 = vld [vmem:[%s999 + $0x10] sm:$0xff]
        %v1003 = vld [vmem:[%s999 + $0x18] sm:$0xff]
        %v1004 = vld [vmem:[%s999 + $0x20] sm:$0xff]
        %v1005 = vld [vmem:[%s999 + $0x28] sm:$0xff]
        %v1006 = vld [vmem:[%s999 + $0x30] sm:$0xff]
        %v1007 = vld [vmem:[%s999 + $0x38] sm:$0xff]
        %v1008 = vrot.slane %v905, 1
        %v1017 = vunpack.c.l.b16 %v1000
        %v1018 = vunpack.c.h.b16 %v1000
        %v1019 = vunpack.c.l.b16 %v1001
        %v1020 = vunpack.c.h.b16 %v1001
        %v1021 = vunpack.c.l.b16 %v1002
        %v1022 = vunpack.c.h.b16 %v1002
        %v1023 = vunpack.c.l.b16 %v1003
        %v1024 = vunpack.c.h.b16 %v1003
        %v1025 = vunpack.c.l.b16 %v1004
        %v1026 = vunpack.c.h.b16 %v1004
        %v1027 = vunpack.c.l.b16 %v1005
        %v1028 = vunpack.c.h.b16 %v1005
        %v1029 = vunpack.c.l.b16 %v1006
        %v1030 = vunpack.c.h.b16 %v1006
        %v1031 = vunpack.c.l.b16 %v1007
        %v1032 = vunpack.c.h.b16 %v1007
        %v1033 = vpack.c.b16 %v1019, %v1017
        %v1034 = vpack.c.b16 %v1020, %v1018
        %v1035 = vpack.c.b16 %v1023, %v1021
        %v1036 = vpack.c.b16 %v1024, %v1022
        %v1037 = vpack.c.b16 %v1027, %v1025
        %v1038 = vpack.c.b16 %v1028, %v1026
        %v1039 = vpack.c.b16 %v1031, %v1029
        %v1040 = vpack.c.b16 %v1032, %v1030
        %v1050 = vsel %vm262, %v1008, 0
        %1052 = vmatprep.subr.bf16.mxu0 %v1034
        %1053 = vmatpush1.bf16.msra.mxu0 %v1033
        %1054 = vmatprep.subr.bf16.mxu0 %v1036
        %1055 = vmatpush1.bf16.msra.mxu0 %v1035
        %1056 = vmatprep.subr.bf16.mxu0 %v1038
        %1057 = vmatpush1.bf16.msra.mxu0 %v1037
        %1058 = vmatprep.subr.bf16.mxu0 %v1040
        %1059 = vmatpush1.bf16.msra.mxu0 %v1039
        %1060 = vmatprep.subr.bf16.mxu0 0
        %1061 = vmatpush1.bf16.msra.mxu0 0
        %1062 = vmatprep.subr.bf16.mxu0 0
        %1063 = vmatpush1.bf16.msra.mxu0 0
        %1064 = vmatprep.subr.bf16.mxu0 0
        %1065 = vmatpush1.bf16.msra.mxu0 0
        %1066 = vmatprep.subr.bf16.mxu0 0
        %1067 = vmatpush1.bf16.msra.mxu0 0
        %1068 = vmatprep.subr.bf16.mxu0 0
        %1069 = vmatpush1.bf16.msra.mxu0 0
        %1070 = vmatprep.subr.bf16.mxu0 0
        %1071 = vmatpush1.bf16.msra.mxu0 0
        %1072 = vmatprep.subr.bf16.mxu0 0
        %1073 = vmatpush1.bf16.msra.mxu0 0
        %1074 = vmatprep.subr.bf16.mxu0 0
        %1075 = vmatpush1.bf16.msra.mxu0 0
        %1076 = vmatprep.subr.bf16.mxu0 0
        %1077 = vmatpush1.bf16.msra.mxu0 0
        %1078 = vmatprep.subr.bf16.mxu0 0
        %1079 = vmatpush1.bf16.msra.mxu0 0
        %1080 = vmatprep.subr.bf16.mxu0 0
        %1081 = vmatpush1.bf16.msra.mxu0 0
        %1082 = vmatprep.subr.bf16.mxu0 0
        %1083 = vmatpush1.bf16.msra.mxu0 0
        %1084 = vmatprep.mubr.bf16.mxu0 0
        %1085 = vmatmul.mubr.bf16.gmra.mrb[0].mxu0 %v1050
        %v1086 = vpop.f32.mrb[0].mxu0
        %v1087 = vadd.f32 0.0, %v1086
        %v1088 = vpop.f32.mrb[0].mxu0
        %v1089 = vadd.f32 0.0, %v1088
        %v1090 = vpop.f32.mrb[0].mxu0
        %v1091 = vpop.f32.mrb[0].mxu0
        %1092 = vdwg.mxu0
        %v1093 = vadd.f32 %v997, %v1087
        %v1094 = vadd.f32 %v998, %v1089
        %v1095 = vxor.u32 %v1094, 2147483648
        %v1096 = vmul.f32 %v1095, 1.442695
        %v1097 = vpow.pop %v1096
        %v1098 = vadd.f32 %v1097, 1.0
        %v1099 = vrcp.pop %v1098
        %v1100 = vmul.f32 1.0, %v1099
        %v1101 = vmax.f32 %v1093, 0.0
        %v1102 = vmul.f32 %v1100, %v1101
        %v1103 = vpack.c.bf16 %v1102, %v1102
        %s1104 = smul.addr %s183, 4
        %s1105 = scalar_lea.vmem %s179, %s1104
        %vm1106 = vcmask 519168
        %1107 = vst.msk [vmem:[%s1105] sm:$0xf] %vm1106, %v1103
      $region33: #{_encoder_forward_nhwc.10} parent=27 // loop_footer
        %s187 = sadd.s32 1, %s183
      $region34: #{_encoder_forward_nhwc.10} parent=27 // loop_footer_branch
        %182 = sbr.rel target = $region30
      $region35: #{_encoder_forward_nhwc.10} parent=27 // loop_exit
        _
      %s1108 = smul.u32 8, %s18
      %p1109 = scmp.lt.s32.totalorder %s17, 1
      %s1110 = scalar_select %p1109, %s17, 1
      %p1111 = scmp.lt.s32.totalorder %s1108, 7
      %s1112 = scalar_select %p1111, %s1108, 7
      %s1113 = smul.addr %s1110, 8
      %s1114 = sadd.s32 %s1112, %s1113
      %s1115 = smul.addr %s1114, 4
      %s1116 = scalar_lea.vmem %s2, %s1115
      // Predicated region
      $region36: #{_encoder_forward_nhwc.10} parent=27 // pred_check
        %p1117 = pneg %p94
      $region37: #{_encoder_forward_nhwc.10} parent=27 // pred_check_branch
        %1119 = sbr.rel (%p1117) target = $region39
      $region38: #{_encoder_forward_nhwc.10} parent=27 // pred_region
        %s1120 = smul.u32 8, %s18
      $region39: #{_encoder_forward_nhwc.10} parent=27 // pred_fallthru
        _
    $region28: #{_encoder_forward_nhwc.10} parent=5 // pred_fallthru
      _
    %p1121 = scmp.le.s32.totalorder 2, %s8
    // Predicated region
    $region40: #{_encoder_forward_nhwc.10} parent=5 // pred_check
      %p1122 = pneg %p1121
    $region41: #{_encoder_forward_nhwc.10} parent=5 // pred_check_branch
      %1124 = sbr.rel (%p1122) target = $region43
    $region42: #{_encoder_forward_nhwc.10} parent=5 // pred_region
      %s1125 = ssub.s32 %s8, 2
      // Predicated region
      $region44: #{_encoder_forward_nhwc.10} parent=42 // pred_check
        %p1126 = pneg %p100
      $region45: #{_encoder_forward_nhwc.10} parent=42 // pred_check_branch
        %1128 = sbr.rel (%p1126) target = $region47
      $region46: #{_encoder_forward_nhwc.10} parent=42 // pred_region
        %s1129 = smul.u32 8, %s20
        %p1130 = scmp.lt.s32.totalorder %s19, 1
        %s1131 = scalar_select %p1130, %s19, 1
        %p1132 = scmp.lt.s32.totalorder %s1129, 7
        %s1133 = scalar_select %p1132, %s1129, 7
        %s1134 = smul.addr %s1131, 8
        %s1135 = sadd.s32 %s1133, %s1134
        %s1136 = smul.addr %s1135, 4
        %s1137 = scalar_lea.vmem %s2, %s1136
      $region47: #{_encoder_forward_nhwc.10} parent=42 // pred_fallthru
        _
    $region43: #{_encoder_forward_nhwc.10} parent=5 // pred_fallthru
      _
  $region6: #{_encoder_forward_nhwc.10} parent=0 // loop_footer
    %s12 = sadd.s32 1, %s8
  $region7: #{_encoder_forward_nhwc.10} parent=0 // loop_footer_branch
    %7 = sbr.rel target = $region3
  $region8: #{_encoder_forward_nhwc.10} parent=0 // loop_exit
    _

// kernel: _encoder_forward_nhwc.11
$region0: #{_encoder_forward_nhwc.11}
  #allocation0 [shape = 'u32[]', space=smem, size = 0x4, offset = 0x4, fixed_abs, tag = 'smem constant byte address 0x4 - core index']
  #allocation1 [shape = 'u32[144,128]{1,0:T(1,128)}', space=vmem, size = 0x12000, scoped, tag = 'internal scratch']
  %s0 = inlined_call_operand.vmem [shape: bf16[2,1,9,10,64], index: 0, kind: input, shape index: {}]
  %s1 = inlined_call_operand.vmem [shape: bf16[9,64,256], index: 1, kind: input, shape index: {}]
  %s2 = inlined_call_operand.vmem [shape: bf16[2,4,4,96], index: 2, kind: output, shape index: {}]
  %s3 = sld [smem:[#allocation0]]
  $region48: #{_encoder_forward_nhwc.11} parent=0
    _
  %s5 = ssub.s32 1, %s3
  %s6 = scalar_select 0, %s5, %s3
  loop: start=0, step=1, limit=4
  $region2: #{_encoder_forward_nhwc.11} parent=0 // loop_pre_header
    _
  $region3: #{_encoder_forward_nhwc.11} parent=0 // loop_header
    %s8 = sphi 0, %s12
    %p9 = scmp.ge.s32.totalorder %s8, 4
    %s15 = sphi 0, %s27
    %s16 = sphi 0, %s23
    %s17 = sphi 0, %s15
    %s18 = sphi 0, %s16
    %s19 = sphi 0, %s17
    %s20 = sphi 0, %s18
    %s32 = sphi 0, %s34
    %s35 = sphi 0, %s32
    %s36 = sphi 0, %s35
    %s52 = sphi 0, %s36
    %s56 = sphi 0, %s56
    %s58 = sphi 0, %s56
    %s59 = sphi 0, %s58
    %s73 = sphi 0, %s59
    %s81 = sphi 0, %s83
    %s84 = sphi 0, %s81
    %s85 = sphi 0, %s84
    %s101 = sphi 0, %s85
  $region4: #{_encoder_forward_nhwc.11} parent=0 // loop_header_branch
    %11 = sbr.rel (%p9) target = $region8
  $region5: #{_encoder_forward_nhwc.11} parent=0 // loop_body
    %s13 = ssub.s32 %s8, 1
    %s14 = ssub.s32 %s8, 2
    %s21 = sadd.s32 1, %s16
    %p22 = scmp.ge.s32.totalorder %s21, 1
    %s23 = scalar_select %p22, 0, %s21
    %s24 = sadd.s32 1, %s15
    %s25 = scalar_select %p22, %s24, %s15
    %p26 = scmp.ge.s32.totalorder %s25, 2
    %s27 = scalar_select %p26, 0, %s25
    %s28 = ssub.s32 %s15, %s27
    %s29 = ssub.s32 %s16, %s23
    %s30 = sor.u32 %s28, %s29
    %p31 = scmp.eq.s32.totalorder %s30, 0
    %s33 = sadd.s32 %s32, 1
    %s34 = scalar_select %p31, %s32, %s33
    %p37 = pneg %p31
    %p38 = scmp.eq.s32.totalorder %s8, 1
    %p39 = por %p37, %p38
    %p40 = scmp.ne.s32.totalorder %s32, %s35
    %p41 = scmp.eq.s32.totalorder %s8, 0
    %p42 = por %p40, %p41
    %p43 = scmp.ne.s32.totalorder %s32, %s35
    %p44 = scmp.eq.s32.totalorder %s13, 1
    %p45 = por %p43, %p44
    %p46 = scmp.ne.s32.totalorder %s35, %s36
    %p47 = scmp.eq.s32.totalorder %s13, 0
    %p48 = por %p46, %p47
    %p49 = scmp.ne.s32.totalorder %s35, %s36
    %p50 = scmp.eq.s32.totalorder %s14, 1
    %p51 = por %p49, %p50
    %p53 = scmp.ne.s32.totalorder %s36, %s52
    %p54 = scmp.eq.s32.totalorder %s14, 0
    %p55 = por %p53, %p54
    %s57 = sadd.s32 %s56, 1
    %p60 = scmp.eq.s32.totalorder %s8, 1
    %p61 = scmp.ne.s32.totalorder %s56, %s58
    %p62 = scmp.eq.s32.totalorder %s8, 0
    %p63 = por %p61, %p62
    %p64 = scmp.ne.s32.totalorder %s56, %s58
    %p65 = scmp.eq.s32.totalorder %s13, 1
    %p66 = por %p64, %p65
    %p67 = scmp.ne.s32.totalorder %s58, %s59
    %p68 = scmp.eq.s32.totalorder %s13, 0
    %p69 = por %p67, %p68
    %p70 = scmp.ne.s32.totalorder %s58, %s59
    %p71 = scmp.eq.s32.totalorder %s14, 1
    %p72 = por %p70, %p71
    %p74 = scmp.ne.s32.totalorder %s59, %s73
    %p75 = scmp.eq.s32.totalorder %s14, 0
    %p76 = por %p74, %p75
    %s77 = ssub.s32 %s15, %s27
    %s78 = ssub.s32 %s16, %s23
    %s79 = sor.u32 %s77, %s78
    %p80 = scmp.eq.s32.totalorder %s79, 0
    %s82 = sadd.s32 %s81, 1
    %s83 = scalar_select %p80, %s81, %s82
    %p86 = pneg %p80
    %p87 = scmp.eq.s32.totalorder %s8, 1
    %p88 = por %p86, %p87
    %p89 = scmp.ne.s32.totalorder %s81, %s84
    %p90 = scmp.eq.s32.totalorder %s8, 0
    %p91 = por %p89, %p90
    %p92 = scmp.ne.s32.totalorder %s81, %s84
    %p93 = scmp.eq.s32.totalorder %s13, 1
    %p94 = por %p92, %p93
    %p95 = scmp.ne.s32.totalorder %s84, %s85
    %p96 = scmp.eq.s32.totalorder %s13, 0
    %p97 = por %p95, %p96
    %p98 = scmp.ne.s32.totalorder %s84, %s85
    %p99 = scmp.eq.s32.totalorder %s14, 1
    %p100 = por %p98, %p99
    %p102 = scmp.ne.s32.totalorder %s85, %s101
    %p103 = scmp.eq.s32.totalorder %s14, 0
    %p104 = por %p102, %p103
    %p105 = scmp.le.s32.totalorder 1, %s8
    %p106 = scmp.lt.s32.totalorder %s8, 3
    %p107 = pnand %p105, %p106
    %p108 = pneg %p107
    // Predicated region
    $region9: #{_encoder_forward_nhwc.11} parent=5 // pred_check
      _
    $region10: #{_encoder_forward_nhwc.11} parent=5 // pred_check_branch
      %110 = sbr.rel (%p107) target = $region12
    $region11: #{_encoder_forward_nhwc.11} parent=5 // pred_region
      %s111 = ssub.s32 %s8, 1
      // Predicated region
      $region13: #{_encoder_forward_nhwc.11} parent=11 // pred_check
        %p112 = pneg %p69
      $region14: #{_encoder_forward_nhwc.11} parent=11 // pred_check_branch
        %114 = sbr.rel (%p112) target = $region16
      $region15: #{_encoder_forward_nhwc.11} parent=11 // pred_region
        _
      $region16: #{_encoder_forward_nhwc.11} parent=11 // pred_fallthru
        _
    $region12: #{_encoder_forward_nhwc.11} parent=5 // pred_fallthru
      _
    %p115 = scmp.lt.s32.totalorder %s8, 2
    // Predicated region
    $region17: #{_encoder_forward_nhwc.11} parent=5 // pred_check
      %p116 = pneg %p115
    $region18: #{_encoder_forward_nhwc.11} parent=5 // pred_check_branch
      %118 = sbr.rel (%p116) target = $region20
    $region19: #{_encoder_forward_nhwc.11} parent=5 // pred_region
      // Predicated region
      $region21: #{_encoder_forward_nhwc.11} parent=19 // pred_check
        %p119 = pneg %p42
      $region22: #{_encoder_forward_nhwc.11} parent=19 // pred_check_branch
        %121 = sbr.rel (%p119) target = $region24
      $region23: #{_encoder_forward_nhwc.11} parent=19 // pred_region
        %p122 = scmp.lt.s32.totalorder %s15, 1
        %s123 = scalar_select %p122, %s15, 1
        %p124 = scmp.lt.s32.totalorder %s16, 0
        %s125 = scalar_select %p124, %s16, 0
        %s126 = smul.addr %s125, 18
        %s127 = smul.addr %s123, 18
        %s128 = sadd.s32 %s126, %s127
        %s129 = smul.addr %s128, 4
        %s130 = scalar_lea.vmem %s0, %s129
      $region24: #{_encoder_forward_nhwc.11} parent=19 // pred_fallthru
        _
    $region20: #{_encoder_forward_nhwc.11} parent=5 // pred_fallthru
      _
    %p131 = scmp.le.s32.totalorder 1, %s8
    %p132 = scmp.lt.s32.totalorder %s8, 3
    %p133 = pnand %p131, %p132
    %p134 = pneg %p133
    // Predicated region
    $region25: #{_encoder_forward_nhwc.11} parent=5 // pred_check
      _
    $region26: #{_encoder_forward_nhwc.11} parent=5 // pred_check_branch
      %136 = sbr.rel (%p133) target = $region28
    $region27: #{_encoder_forward_nhwc.11} parent=5 // pred_region
      %s137 = ssub.s32 %s8, 1
      %p138 = scmp.lt.s32.totalorder %s17, 1
      %s139 = scalar_select %p138, %s17, 1
      %p140 = scmp.lt.s32.totalorder %s18, 0
      %s141 = scalar_select %p140, %s18, 0
      %s142 = smul.addr %s141, 18
      %s143 = smul.addr %s139, 18
      %s144 = sadd.s32 %s142, %s143
      %s145 = smul.addr %s144, 4
      %s146 = scalar_lea.vmem %s0, %s145
      %p147 = pneg %p48
      %p148 = pneg %p45
      %p149 = pneg %p69
      %p150 = pneg %p66
      %p151 = pneg %p97
      %p152 = pneg %p94
      %s153 = smul.u32 4, %s18
      %p154 = scmp.lt.s32.totalorder %s17, 1
      %s155 = scalar_select %p154, %s17, 1
      %p156 = scmp.lt.s32.totalorder %s153, 3
      %s157 = scalar_select %p156, %s153, 3
      %s158 = smul.addr %s155, 4
      %s159 = sadd.s32 %s157, %s158
      %s160 = smul.addr %s159, 2
      %s161 = scalar_lea.vmem %s2, %s160
      %p162 = scmp.lt.s32.totalorder %s17, 1
      %s163 = scalar_select %p162, %s17, 1
      %p164 = scmp.lt.s32.totalorder %s18, 0
      %s165 = scalar_select %p164, %s18, 0
      %s166 = smul.addr %s165, 18
      %s167 = smul.addr %s163, 18
      %s168 = sadd.s32 %s166, %s167
      %s169 = smul.addr %s168, 4
      %s170 = scalar_lea.vmem %s0, %s169
      %s171 = smul.u32 4, %s18
      %p172 = scmp.lt.s32.totalorder %s17, 1
      %s173 = scalar_select %p172, %s17, 1
      %p174 = scmp.lt.s32.totalorder %s171, 3
      %s175 = scalar_select %p174, %s171, 3
      %s176 = smul.addr %s173, 4
      %s177 = sadd.s32 %s175, %s176
      %s178 = smul.addr %s177, 2
      %s179 = scalar_lea.vmem %s2, %s178
      %s180 = smul.u32 4, %s18
      loop: start=0, step=1, limit=4
      $region29: #{_encoder_forward_nhwc.11} parent=27 // loop_pre_header
        _
      $region30: #{_encoder_forward_nhwc.11} parent=27 // loop_header
        %s183 = sphi 0, %s187
        %p184 = scmp.ge.s32.totalorder %s183, 4
      $region31: #{_encoder_forward_nhwc.11} parent=27 // loop_header_branch
        %186 = sbr.rel (%p184) target = $region35
      $region32: #{_encoder_forward_nhwc.11} parent=27 // loop_body
        %s188 = smul.u32 %s183, 2
        %s189 = smul.u32 %s188, 2
        %s190 = smul.addr %s189, 4
        %s191 = scalar_lea.vmem %s170, %s190
        %v192 = vld [vmem:[%s191] sm:$0xf]
        %v193 = vld [vmem:[%s191 + $0x4] sm:$0x1]
        %v194 = vld [vmem:[%s1] sm:$0xff]
        %v195 = vld [vmem:[%s1 + $0x8] sm:$0xff]
        %v196 = vld [vmem:[%s1 + $0x10] sm:$0xff]
        %v197 = vld [vmem:[%s1 + $0x18] sm:$0xff]
        %v198 = vld [vmem:[%s1 + $0x20] sm:$0xff]
        %v199 = vld [vmem:[%s1 + $0x28] sm:$0xff]
        %v200 = vld [vmem:[%s1 + $0x30] sm:$0xff]
        %v201 = vld [vmem:[%s1 + $0x38] sm:$0xff]
        %s202 = scalar_lea.vmem %s1, 64
        %v203 = vld [vmem:[%s202] sm:$0xff]
        %v204 = vld [vmem:[%s202 + $0x8] sm:$0xff]
        %v205 = vld [vmem:[%s202 + $0x10] sm:$0xff]
        %v206 = vld [vmem:[%s202 + $0x18] sm:$0xff]
        %v207 = vld [vmem:[%s202 + $0x20] sm:$0xff]
        %v208 = vld [vmem:[%s202 + $0x28] sm:$0xff]
        %v209 = vld [vmem:[%s202 + $0x30] sm:$0xff]
        %v210 = vld [vmem:[%s202 + $0x38] sm:$0xff]
        %v213 = vunpack.c.l.b16 %v192
        %v214 = vunpack.c.l.b16 %v193
        %v215 = vpack.c.b16 %v214, %v213
        %v217 = vshrl.u32 %v215, 16
        %v219 = vrot.slane %v217, 2
        %v220 = vshll.u32 %v215, 16
        %v222 = vrot.slane %v220, 3
        %v223 = vor.u32 %v219, %v222
        %v232 = vunpack.c.l.b16 %v203
        %v233 = vunpack.c.h.b16 %v203
        %v234 = vunpack.c.l.b16 %v204
        %v235 = vunpack.c.h.b16 %v204
        %v236 = vunpack.c.l.b16 %v205
        %v237 = vunpack.c.h.b16 %v205
        %v238 = vunpack.c.l.b16 %v206
        %v239 = vunpack.c.h.b16 %v206
        %v240 = vunpack.c.l.b16 %v207
        %v241 = vunpack.c.h.b16 %v207
        %v242 = vunpack.c.l.b16 %v208
        %v243 = vunpack.c.h.b16 %v208
        %v244 = vunpack.c.l.b16 %v209
        %v245 = vunpack.c.h.b16 %v209
        %v246 = vunpack.c.l.b16 %v210
        %v247 = vunpack.c.h.b16 %v210
        %v248 = vpack.c.b16 %v234, %v232
        %v249 = vpack.c.b16 %v235, %v233
        %v250 = vpack.c.b16 %v238, %v236
        %v251 = vpack.c.b16 %v239, %v237
        %v252 = vpack.c.b16 %v242, %v240
        %v253 = vpack.c.b16 %v243, %v241
        %v254 = vpack.c.b16 %v246, %v244
        %v255 = vpack.c.b16 %v247, %v245
        %vm264 = vcmask 523264
        %v266 = vsel %vm264, %v223, 0
        %268 = vmatprep.subr.bf16.mxu0 %v249
        %269 = vmatpush1.bf16.msra.mxu0 %v248
        %270 = vmatprep.subr.bf16.mxu0 %v251
        %271 = vmatpush1.bf16.msra.mxu0 %v250
        %272 = vmatprep.subr.bf16.mxu0 %v253
        %273 = vmatpush1.bf16.msra.mxu0 %v252
        %274 = vmatprep.subr.bf16.mxu0 %v255
        %275 = vmatpush1.bf16.msra.mxu0 %v254
        %276 = vmatprep.subr.bf16.mxu0 0
        %277 = vmatpush1.bf16.msra.mxu0 0
        %278 = vmatprep.subr.bf16.mxu0 0
        %279 = vmatpush1.bf16.msra.mxu0 0
        %280 = vmatprep.subr.bf16.mxu0 0
        %281 = vmatpush1.bf16.msra.mxu0 0
        %282 = vmatprep.subr.bf16.mxu0 0
        %283 = vmatpush1.bf16.msra.mxu0 0
        %284 = vmatprep.subr.bf16.mxu0 0
        %285 = vmatpush1.bf16.msra.mxu0 0
        %286 = vmatprep.subr.bf16.mxu0 0
        %287 = vmatpush1.bf16.msra.mxu0 0
        %288 = vmatprep.subr.bf16.mxu0 0
        %289 = vmatpush1.bf16.msra.mxu0 0
        %290 = vmatprep.subr.bf16.mxu0 0
        %291 = vmatpush1.bf16.msra.mxu0 0
        %292 = vmatprep.subr.bf16.mxu0 0
        %293 = vmatpush1.bf16.msra.mxu0 0
        %294 = vmatprep.subr.bf16.mxu0 0
        %295 = vmatpush1.bf16.msra.mxu0 0
        %296 = vmatprep.subr.bf16.mxu0 0
        %297 = vmatpush1.bf16.msra.mxu0 0
        %298 = vmatprep.subr.bf16.mxu0 0
        %299 = vmatpush1.bf16.msra.mxu0 0
        %300 = vmatprep.mubr.bf16.mxu0 0
        %301 = vmatmul.mubr.bf16.gmra.mrb[0].mxu0 %v266
        %v302 = vpop.f32.mrb[0].mxu0
        %v303 = vadd.f32 0.0, %v302
        %v304 = vpop.f32.mrb[0].mxu0
        %v305 = vadd.f32 0.0, %v304
        %v306 = vpop.f32.mrb[0].mxu0
        %v307 = vpop.f32.mrb[0].mxu0
        %308 = vdwg.mxu0
        %v317 = vunpack.c.l.b16 %v194
        %v318 = vunpack.c.h.b16 %v194
        %v319 = vunpack.c.l.b16 %v195
        %v320 = vunpack.c.h.b16 %v195
        %v321 = vunpack.c.l.b16 %v196
        %v322 = vunpack.c.h.b16 %v196
        %v323 = vunpack.c.l.b16 %v197
        %v324 = vunpack.c.h.b16 %v197
        %v325 = vunpack.c.l.b16 %v198
        %v326 = vunpack.c.h.b16 %v198
        %v327 = vunpack.c.l.b16 %v199
        %v328 = vunpack.c.h.b16 %v199
        %v329 = vunpack.c.l.b16 %v200
        %v330 = vunpack.c.h.b16 %v200
        %v331 = vunpack.c.l.b16 %v201
        %v332 = vunpack.c.h.b16 %v201
        %v333 = vpack.c.b16 %v319, %v317
        %v334 = vpack.c.b16 %v320, %v318
        %v335 = vpack.c.b16 %v323, %v321
        %v336 = vpack.c.b16 %v324, %v322
        %v337 = vpack.c.b16 %v327, %v325
        %v338 = vpack.c.b16 %v328, %v326
        %v339 = vpack.c.b16 %v331, %v329
        %v340 = vpack.c.b16 %v332, %v330
        %v350 = vsel %vm264, %v192, 0
        %352 = vmatprep.subr.bf16.mxu0 %v334
        %353 = vmatpush1.bf16.msra.mxu0 %v333
        %354 = vmatprep.subr.bf16.mxu0 %v336
        %355 = vmatpush1.bf16.msra.mxu0 %v335
        %356 = vmatprep.subr.bf16.mxu0 %v338
        %357 = vmatpush1.bf16.msra.mxu0 %v337
        %358 = vmatprep.subr.bf16.mxu0 %v340
        %359 = vmatpush1.bf16.msra.mxu0 %v339
        %360 = vmatprep.subr.bf16.mxu0 0
        %361 = vmatpush1.bf16.msra.mxu0 0
        %362 = vmatprep.subr.bf16.mxu0 0
        %363 = vmatpush1.bf16.msra.mxu0 0
        %364 = vmatprep.subr.bf16.mxu0 0
        %365 = vmatpush1.bf16.msra.mxu0 0
        %366 = vmatprep.subr.bf16.mxu0 0
        %367 = vmatpush1.bf16.msra.mxu0 0
        %368 = vmatprep.subr.bf16.mxu0 0
        %369 = vmatpush1.bf16.msra.mxu0 0
        %370 = vmatprep.subr.bf16.mxu0 0
        %371 = vmatpush1.bf16.msra.mxu0 0
        %372 = vmatprep.subr.bf16.mxu0 0
        %373 = vmatpush1.bf16.msra.mxu0 0
        %374 = vmatprep.subr.bf16.mxu0 0
        %375 = vmatpush1.bf16.msra.mxu0 0
        %376 = vmatprep.subr.bf16.mxu0 0
        %377 = vmatpush1.bf16.msra.mxu0 0
        %378 = vmatprep.subr.bf16.mxu0 0
        %379 = vmatpush1.bf16.msra.mxu0 0
        %380 = vmatprep.subr.bf16.mxu0 0
        %381 = vmatpush1.bf16.msra.mxu0 0
        %382 = vmatprep.subr.bf16.mxu0 0
        %383 = vmatpush1.bf16.msra.mxu0 0
        %384 = vmatprep.mubr.bf16.mxu0 0
        %385 = vmatmul.mubr.bf16.gmra.mrb[0].mxu0 %v350
        %v386 = vpop.f32.mrb[0].mxu0
        %v387 = vadd.f32 %v303, %v386
        %v388 = vpop.f32.mrb[0].mxu0
        %v389 = vadd.f32 %v305, %v388
        %v390 = vpop.f32.mrb[0].mxu0
        %v391 = vpop.f32.mrb[0].mxu0
        %392 = vdwg.mxu0
        %s393 = scalar_lea.vmem %s1, 128
        %v394 = vld [vmem:[%s393] sm:$0xff]
        %v395 = vld [vmem:[%s393 + $0x8] sm:$0xff]
        %v396 = vld [vmem:[%s393 + $0x10] sm:$0xff]
        %v397 = vld [vmem:[%s393 + $0x18] sm:$0xff]
        %v398 = vld [vmem:[%s393 + $0x20] sm:$0xff]
        %v399 = vld [vmem:[%s393 + $0x28] sm:$0xff]
        %v400 = vld [vmem:[%s393 + $0x30] sm:$0xff]
        %v401 = vld [vmem:[%s393 + $0x38] sm:$0xff]
        %v402 = vpack.c.b16 %v213, %v213
        %v404 = vshrl.u32 %v402, 16
        %v406 = vshll.u32 %v402, 16
        %v408 = vrot.slane %v406, 1
        %v409 = vor.u32 %v404, %v408
        %v418 = vunpack.c.l.b16 %v394
        %v419 = vunpack.c.h.b16 %v394
        %v420 = vunpack.c.l.b16 %v395
        %v421 = vunpack.c.h.b16 %v395
        %v422 = vunpack.c.l.b16 %v396
        %v423 = vunpack.c.h.b16 %v396
        %v424 = vunpack.c.l.b16 %v397
        %v425 = vunpack.c.h.b16 %v397
        %v426 = vunpack.c.l.b16 %v398
        %v427 = vunpack.c.h.b16 %v398
        %v428 = vunpack.c.l.b16 %v399
        %v429 = vunpack.c.h.b16 %v399
        %v430 = vunpack.c.l.b16 %v400
        %v431 = vunpack.c.h.b16 %v400
        %v432 = vunpack.c.l.b16 %v401
        %v433 = vunpack.c.h.b16 %v401
        %v434 = vpack.c.b16 %v420, %v418
        %v435 = vpack.c.b16 %v421, %v419
        %v436 = vpack.c.b16 %v424, %v422
        %v437 = vpack.c.b16 %v425, %v423
        %v438 = vpack.c.b16 %v428, %v426
        %v439 = vpack.c.b16 %v429, %v427
        %v440 = vpack.c.b16 %v432, %v430
        %v441 = vpack.c.b16 %v433, %v431
        %v451 = vsel %vm264, %v409, 0
        %453 = vmatprep.subr.bf16.mxu0 %v435
        %454 = vmatpush1.bf16.msra.mxu0 %v434
        %455 = vmatprep.subr.bf16.mxu0 %v437
        %456 = vmatpush1.bf16.msra.mxu0 %v436
        %457 = vmatprep.subr.bf16.mxu0 %v439
        %458 = vmatpush1.bf16.msra.mxu0 %v438
        %459 = vmatprep.subr.bf16.mxu0 %v441
        %460 = vmatpush1.bf16.msra.mxu0 %v440
        %461 = vmatprep.subr.bf16.mxu0 0
        %462 = vmatpush1.bf16.msra.mxu0 0
        %463 = vmatprep.subr.bf16.mxu0 0
        %464 = vmatpush1.bf16.msra.mxu0 0
        %465 = vmatprep.subr.bf16.mxu0 0
        %466 = vmatpush1.bf16.msra.mxu0 0
        %467 = vmatprep.subr.bf16.mxu0 0
        %468 = vmatpush1.bf16.msra.mxu0 0
        %469 = vmatprep.subr.bf16.mxu0 0
        %470 = vmatpush1.bf16.msra.mxu0 0
        %471 = vmatprep.subr.bf16.mxu0 0
        %472 = vmatpush1.bf16.msra.mxu0 0
        %473 = vmatprep.subr.bf16.mxu0 0
        %474 = vmatpush1.bf16.msra.mxu0 0
        %475 = vmatprep.subr.bf16.mxu0 0
        %476 = vmatpush1.bf16.msra.mxu0 0
        %477 = vmatprep.subr.bf16.mxu0 0
        %478 = vmatpush1.bf16.msra.mxu0 0
        %479 = vmatprep.subr.bf16.mxu0 0
        %480 = vmatpush1.bf16.msra.mxu0 0
        %481 = vmatprep.subr.bf16.mxu0 0
        %482 = vmatpush1.bf16.msra.mxu0 0
        %483 = vmatprep.subr.bf16.mxu0 0
        %484 = vmatpush1.bf16.msra.mxu0 0
        %485 = vmatprep.mubr.bf16.mxu0 0
        %486 = vmatmul.mubr.bf16.gmra.mrb[0].mxu0 %v451
        %v487 = vpop.f32.mrb[0].mxu0
        %v488 = vadd.f32 0.0, %v487
        %v489 = vpop.f32.mrb[0].mxu0
        %v490 = vadd.f32 0.0, %v489
        %v491 = vpop.f32.mrb[0].mxu0
        %v492 = vpop.f32.mrb[0].mxu0
        %493 = vdwg.mxu0
        %v494 = vadd.f32 %v387, %v488
        %v495 = vadd.f32 %v389, %v490
        %s496 = sadd.s32 %s188, 1
        %s497 = smul.u32 %s496, 2
        %s498 = smul.addr %s497, 4
        %s499 = scalar_lea.vmem %s170, %s498
        %v500 = vld [vmem:[%s499] sm:$0xf]
        %v501 = vld [vmem:[%s499 + $0x4] sm:$0x1]
        %s502 = scalar_lea.vmem %s1, 192
        %v503 = vld [vmem:[%s502] sm:$0xff]
        %v504 = vld [vmem:[%s502 + $0x8] sm:$0xff]
        %v505 = vld [vmem:[%s502 + $0x10] sm:$0xff]
        %v506 = vld [vmem:[%s502 + $0x18] sm:$0xff]
        %v507 = vld [vmem:[%s502 + $0x20] sm:$0xff]
        %v508 = vld [vmem:[%s502 + $0x28] sm:$0xff]
        %v509 = vld [vmem:[%s502 + $0x30] sm:$0xff]
        %v510 = vld [vmem:[%s502 + $0x38] sm:$0xff]
        %v519 = vunpack.c.l.b16 %v503
        %v520 = vunpack.c.h.b16 %v503
        %v521 = vunpack.c.l.b16 %v504
        %v522 = vunpack.c.h.b16 %v504
        %v523 = vunpack.c.l.b16 %v505
        %v524 = vunpack.c.h.b16 %v505
        %v525 = vunpack.c.l.b16 %v506
        %v526 = vunpack.c.h.b16 %v506
        %v527 = vunpack.c.l.b16 %v507
        %v528 = vunpack.c.h.b16 %v507
        %v529 = vunpack.c.l.b16 %v508
        %v530 = vunpack.c.h.b16 %v508
        %v531 = vunpack.c.l.b16 %v509
        %v532 = vunpack.c.h.b16 %v509
        %v533 = vunpack.c.l.b16 %v510
        %v534 = vunpack.c.h.b16 %v510
        %v535 = vpack.c.b16 %v521, %v519
        %v536 = vpack.c.b16 %v522, %v520
        %v537 = vpack.c.b16 %v525, %v523
        %v538 = vpack.c.b16 %v526, %v524
        %v539 = vpack.c.b16 %v529, %v527
        %v540 = vpack.c.b16 %v530, %v528
        %v541 = vpack.c.b16 %v533, %v531
        %v542 = vpack.c.b16 %v534, %v532
        %v552 = vsel %vm264, %v500, 0
        %554 = vmatprep.subr.bf16.mxu0 %v536
        %555 = vmatpush1.bf16.msra.mxu0 %v535
        %556 = vmatprep.subr.bf16.mxu0 %v538
        %557 = vmatpush1.bf16.msra.mxu0 %v537
        %558 = vmatprep.subr.bf16.mxu0 %v540
        %559 = vmatpush1.bf16.msra.mxu0 %v539
        %560 = vmatprep.subr.bf16.mxu0 %v542
        %561 = vmatpush1.bf16.msra.mxu0 %v541
        %562 = vmatprep.subr.bf16.mxu0 0
        %563 = vmatpush1.bf16.msra.mxu0 0
        %564 = vmatprep.subr.bf16.mxu0 0
        %565 = vmatpush1.bf16.msra.mxu0 0
        %566 = vmatprep.subr.bf16.mxu0 0
        %567 = vmatpush1.bf16.msra.mxu0 0
        %568 = vmatprep.subr.bf16.mxu0 0
        %569 = vmatpush1.bf16.msra.mxu0 0
        %570 = vmatprep.subr.bf16.mxu0 0
        %571 = vmatpush1.bf16.msra.mxu0 0
        %572 = vmatprep.subr.bf16.mxu0 0
        %573 = vmatpush1.bf16.msra.mxu0 0
        %574 = vmatprep.subr.bf16.mxu0 0
        %575 = vmatpush1.bf16.msra.mxu0 0
        %576 = vmatprep.subr.bf16.mxu0 0
        %577 = vmatpush1.bf16.msra.mxu0 0
        %578 = vmatprep.subr.bf16.mxu0 0
        %579 = vmatpush1.bf16.msra.mxu0 0
        %580 = vmatprep.subr.bf16.mxu0 0
        %581 = vmatpush1.bf16.msra.mxu0 0
        %582 = vmatprep.subr.bf16.mxu0 0
        %583 = vmatpush1.bf16.msra.mxu0 0
        %584 = vmatprep.subr.bf16.mxu0 0
        %585 = vmatpush1.bf16.msra.mxu0 0
        %586 = vmatprep.mubr.bf16.mxu0 0
        %587 = vmatmul.mubr.bf16.gmra.mrb[0].mxu0 %v552
        %v588 = vpop.f32.mrb[0].mxu0
        %v589 = vadd.f32 0.0, %v588
        %v590 = vpop.f32.mrb[0].mxu0
        %v591 = vadd.f32 0.0, %v590
        %v592 = vpop.f32.mrb[0].mxu0
        %v593 = vpop.f32.mrb[0].mxu0
        %594 = vdwg.mxu0
        %v595 = vadd.f32 %v494, %v589
        %v596 = vadd.f32 %v495, %v591
        %s597 = scalar_lea.vmem %s1, 256
        %v598 = vld [vmem:[%s597] sm:$0xff]
        %v599 = vld [vmem:[%s597 + $0x8] sm:$0xff]
        %v600 = vld [vmem:[%s597 + $0x10] sm:$0xff]
        %v601 = vld [vmem:[%s597 + $0x18] sm:$0xff]
        %v602 = vld [vmem:[%s597 + $0x20] sm:$0xff]
        %v603 = vld [vmem:[%s597 + $0x28] sm:$0xff]
        %v604 = vld [vmem:[%s597 + $0x30] sm:$0xff]
        %v605 = vld [vmem:[%s597 + $0x38] sm:$0xff]
        %v608 = vunpack.c.l.b16 %v500
        %v609 = vunpack.c.l.b16 %v501
        %v610 = vpack.c.b16 %v609, %v608
        %v612 = vshrl.u32 %v610, 16
        %v614 = vrot.slane %v612, 2
        %v615 = vshll.u32 %v610, 16
        %v617 = vrot.slane %v615, 3
        %v618 = vor.u32 %v614, %v617
        %v627 = vunpack.c.l.b16 %v598
        %v628 = vunpack.c.h.b16 %v598
        %v629 = vunpack.c.l.b16 %v599
        %v630 = vunpack.c.h.b16 %v599
        %v631 = vunpack.c.l.b16 %v600
        %v632 = vunpack.c.h.b16 %v600
        %v633 = vunpack.c.l.b16 %v601
        %v634 = vunpack.c.h.b16 %v601
        %v635 = vunpack.c.l.b16 %v602
        %v636 = vunpack.c.h.b16 %v602
        %v637 = vunpack.c.l.b16 %v603
        %v638 = vunpack.c.h.b16 %v603
        %v639 = vunpack.c.l.b16 %v604
        %v640 = vunpack.c.h.b16 %v604
        %v641 = vunpack.c.l.b16 %v605
        %v642 = vunpack.c.h.b16 %v605
        %v643 = vpack.c.b16 %v629, %v627
        %v644 = vpack.c.b16 %v630, %v628
        %v645 = vpack.c.b16 %v633, %v631
        %v646 = vpack.c.b16 %v634, %v632
        %v647 = vpack.c.b16 %v637, %v635
        %v648 = vpack.c.b16 %v638, %v636
        %v649 = vpack.c.b16 %v641, %v639
        %v650 = vpack.c.b16 %v642, %v640
        %v660 = vsel %vm264, %v618, 0
        %662 = vmatprep.subr.bf16.mxu0 %v644
        %663 = vmatpush1.bf16.msra.mxu0 %v643
        %664 = vmatprep.subr.bf16.mxu0 %v646
        %665 = vmatpush1.bf16.msra.mxu0 %v645
        %666 = vmatprep.subr.bf16.mxu0 %v648
        %667 = vmatpush1.bf16.msra.mxu0 %v647
        %668 = vmatprep.subr.bf16.mxu0 %v650
        %669 = vmatpush1.bf16.msra.mxu0 %v649
        %670 = vmatprep.subr.bf16.mxu0 0
        %671 = vmatpush1.bf16.msra.mxu0 0
        %672 = vmatprep.subr.bf16.mxu0 0
        %673 = vmatpush1.bf16.msra.mxu0 0
        %674 = vmatprep.subr.bf16.mxu0 0
        %675 = vmatpush1.bf16.msra.mxu0 0
        %676 = vmatprep.subr.bf16.mxu0 0
        %677 = vmatpush1.bf16.msra.mxu0 0
        %678 = vmatprep.subr.bf16.mxu0 0
        %679 = vmatpush1.bf16.msra.mxu0 0
        %680 = vmatprep.subr.bf16.mxu0 0
        %681 = vmatpush1.bf16.msra.mxu0 0
        %682 = vmatprep.subr.bf16.mxu0 0
        %683 = vmatpush1.bf16.msra.mxu0 0
        %684 = vmatprep.subr.bf16.mxu0 0
        %685 = vmatpush1.bf16.msra.mxu0 0
        %686 = vmatprep.subr.bf16.mxu0 0
        %687 = vmatpush1.bf16.msra.mxu0 0
        %688 = vmatprep.subr.bf16.mxu0 0
        %689 = vmatpush1.bf16.msra.mxu0 0
        %690 = vmatprep.subr.bf16.mxu0 0
        %691 = vmatpush1.bf16.msra.mxu0 0
        %692 = vmatprep.subr.bf16.mxu0 0
        %693 = vmatpush1.bf16.msra.mxu0 0
        %694 = vmatprep.mubr.bf16.mxu0 0
        %695 = vmatmul.mubr.bf16.gmra.mrb[0].mxu0 %v660
        %v696 = vpop.f32.mrb[0].mxu0
        %v697 = vadd.f32 0.0, %v696
        %v698 = vpop.f32.mrb[0].mxu0
        %v699 = vadd.f32 0.0, %v698
        %v700 = vpop.f32.mrb[0].mxu0
        %v701 = vpop.f32.mrb[0].mxu0
        %702 = vdwg.mxu0
        %v703 = vadd.f32 %v595, %v697
        %v704 = vadd.f32 %v596, %v699
        %s705 = scalar_lea.vmem %s1, 320
        %v706 = vld [vmem:[%s705] sm:$0xff]
        %v707 = vld [vmem:[%s705 + $0x8] sm:$0xff]
        %v708 = vld [vmem:[%s705 + $0x10] sm:$0xff]
        %v709 = vld [vmem:[%s705 + $0x18] sm:$0xff]
        %v710 = vld [vmem:[%s705 + $0x20] sm:$0xff]
        %v711 = vld [vmem:[%s705 + $0x28] sm:$0xff]
        %v712 = vld [vmem:[%s705 + $0x30] sm:$0xff]
        %v713 = vld [vmem:[%s705 + $0x38] sm:$0xff]
        %v714 = vpack.c.b16 %v608, %v608
        %v716 = vshrl.u32 %v714, 16
        %v718 = vshll.u32 %v714, 16
        %v720 = vrot.slane %v718, 1
        %v721 = vor.u32 %v716, %v720
        %v730 = vunpack.c.l.b16 %v706
        %v731 = vunpack.c.h.b16 %v706
        %v732 = vunpack.c.l.b16 %v707
        %v733 = vunpack.c.h.b16 %v707
        %v734 = vunpack.c.l.b16 %v708
        %v735 = vunpack.c.h.b16 %v708
        %v736 = vunpack.c.l.b16 %v709
        %v737 = vunpack.c.h.b16 %v709
        %v738 = vunpack.c.l.b16 %v710
        %v739 = vunpack.c.h.b16 %v710
        %v740 = vunpack.c.l.b16 %v711
        %v741 = vunpack.c.h.b16 %v711
        %v742 = vunpack.c.l.b16 %v712
        %v743 = vunpack.c.h.b16 %v712
        %v744 = vunpack.c.l.b16 %v713
        %v745 = vunpack.c.h.b16 %v713
        %v746 = vpack.c.b16 %v732, %v730
        %v747 = vpack.c.b16 %v733, %v731
        %v748 = vpack.c.b16 %v736, %v734
        %v749 = vpack.c.b16 %v737, %v735
        %v750 = vpack.c.b16 %v740, %v738
        %v751 = vpack.c.b16 %v741, %v739
        %v752 = vpack.c.b16 %v744, %v742
        %v753 = vpack.c.b16 %v745, %v743
        %v763 = vsel %vm264, %v721, 0
        %765 = vmatprep.subr.bf16.mxu0 %v747
        %766 = vmatpush1.bf16.msra.mxu0 %v746
        %767 = vmatprep.subr.bf16.mxu0 %v749
        %768 = vmatpush1.bf16.msra.mxu0 %v748
        %769 = vmatprep.subr.bf16.mxu0 %v751
        %770 = vmatpush1.bf16.msra.mxu0 %v750
        %771 = vmatprep.subr.bf16.mxu0 %v753
        %772 = vmatpush1.bf16.msra.mxu0 %v752
        %773 = vmatprep.subr.bf16.mxu0 0
        %774 = vmatpush1.bf16.msra.mxu0 0
        %775 = vmatprep.subr.bf16.mxu0 0
        %776 = vmatpush1.bf16.msra.mxu0 0
        %777 = vmatprep.subr.bf16.mxu0 0
        %778 = vmatpush1.bf16.msra.mxu0 0
        %779 = vmatprep.subr.bf16.mxu0 0
        %780 = vmatpush1.bf16.msra.mxu0 0
        %781 = vmatprep.subr.bf16.mxu0 0
        %782 = vmatpush1.bf16.msra.mxu0 0
        %783 = vmatprep.subr.bf16.mxu0 0
        %784 = vmatpush1.bf16.msra.mxu0 0
        %785 = vmatprep.subr.bf16.mxu0 0
        %786 = vmatpush1.bf16.msra.mxu0 0
        %787 = vmatprep.subr.bf16.mxu0 0
        %788 = vmatpush1.bf16.msra.mxu0 0
        %789 = vmatprep.subr.bf16.mxu0 0
        %790 = vmatpush1.bf16.msra.mxu0 0
        %791 = vmatprep.subr.bf16.mxu0 0
        %792 = vmatpush1.bf16.msra.mxu0 0
        %793 = vmatprep.subr.bf16.mxu0 0
        %794 = vmatpush1.bf16.msra.mxu0 0
        %795 = vmatprep.subr.bf16.mxu0 0
        %796 = vmatpush1.bf16.msra.mxu0 0
        %797 = vmatprep.mubr.bf16.mxu0 0
        %798 = vmatmul.mubr.bf16.gmra.mrb[0].mxu0 %v763
        %v799 = vpop.f32.mrb[0].mxu0
        %v800 = vadd.f32 0.0, %v799
        %v801 = vpop.f32.mrb[0].mxu0
        %v802 = vadd.f32 0.0, %v801
        %v803 = vpop.f32.mrb[0].mxu0
        %v804 = vpop.f32.mrb[0].mxu0
        %805 = vdwg.mxu0
        %v806 = vadd.f32 %v703, %v800
        %v807 = vadd.f32 %v704, %v802
        %s808 = sadd.s32 %s188, 2
        %s809 = smul.u32 %s808, 2
        %s810 = smul.addr %s809, 4
        %s811 = scalar_lea.vmem %s170, %s810
        %v812 = vld [vmem:[%s811] sm:$0xf]
        %v813 = vld [vmem:[%s811 + $0x4] sm:$0x1]
        %s814 = scalar_lea.vmem %s1, 384
        %v815 = vld [vmem:[%s814] sm:$0xff]
        %v816 = vld [vmem:[%s814 + $0x8] sm:$0xff]
        %v817 = vld [vmem:[%s814 + $0x10] sm:$0xff]
        %v818 = vld [vmem:[%s814 + $0x18] sm:$0xff]
        %v819 = vld [vmem:[%s814 + $0x20] sm:$0xff]
        %v820 = vld [vmem:[%s814 + $0x28] sm:$0xff]
        %v821 = vld [vmem:[%s814 + $0x30] sm:$0xff]
        %v822 = vld [vmem:[%s814 + $0x38] sm:$0xff]
        %v831 = vunpack.c.l.b16 %v815
        %v832 = vunpack.c.h.b16 %v815
        %v833 = vunpack.c.l.b16 %v816
        %v834 = vunpack.c.h.b16 %v816
        %v835 = vunpack.c.l.b16 %v817
        %v836 = vunpack.c.h.b16 %v817
        %v837 = vunpack.c.l.b16 %v818
        %v838 = vunpack.c.h.b16 %v818
        %v839 = vunpack.c.l.b16 %v819
        %v840 = vunpack.c.h.b16 %v819
        %v841 = vunpack.c.l.b16 %v820
        %v842 = vunpack.c.h.b16 %v820
        %v843 = vunpack.c.l.b16 %v821
        %v844 = vunpack.c.h.b16 %v821
        %v845 = vunpack.c.l.b16 %v822
        %v846 = vunpack.c.h.b16 %v822
        %v847 = vpack.c.b16 %v833, %v831
        %v848 = vpack.c.b16 %v834, %v832
        %v849 = vpack.c.b16 %v837, %v835
        %v850 = vpack.c.b16 %v838, %v836
        %v851 = vpack.c.b16 %v841, %v839
        %v852 = vpack.c.b16 %v842, %v840
        %v853 = vpack.c.b16 %v845, %v843
        %v854 = vpack.c.b16 %v846, %v844
        %v864 = vsel %vm264, %v812, 0
        %866 = vmatprep.subr.bf16.mxu0 %v848
        %867 = vmatpush1.bf16.msra.mxu0 %v847
        %868 = vmatprep.subr.bf16.mxu0 %v850
        %869 = vmatpush1.bf16.msra.mxu0 %v849
        %870 = vmatprep.subr.bf16.mxu0 %v852
        %871 = vmatpush1.bf16.msra.mxu0 %v851
        %872 = vmatprep.subr.bf16.mxu0 %v854
        %873 = vmatpush1.bf16.msra.mxu0 %v853
        %874 = vmatprep.subr.bf16.mxu0 0
        %875 = vmatpush1.bf16.msra.mxu0 0
        %876 = vmatprep.subr.bf16.mxu0 0
        %877 = vmatpush1.bf16.msra.mxu0 0
        %878 = vmatprep.subr.bf16.mxu0 0
        %879 = vmatpush1.bf16.msra.mxu0 0
        %880 = vmatprep.subr.bf16.mxu0 0
        %881 = vmatpush1.bf16.msra.mxu0 0
        %882 = vmatprep.subr.bf16.mxu0 0
        %883 = vmatpush1.bf16.msra.mxu0 0
        %884 = vmatprep.subr.bf16.mxu0 0
        %885 = vmatpush1.bf16.msra.mxu0 0
        %886 = vmatprep.subr.bf16.mxu0 0
        %887 = vmatpush1.bf16.msra.mxu0 0
        %888 = vmatprep.subr.bf16.mxu0 0
        %889 = vmatpush1.bf16.msra.mxu0 0
        %890 = vmatprep.subr.bf16.mxu0 0
        %891 = vmatpush1.bf16.msra.mxu0 0
        %892 = vmatprep.subr.bf16.mxu0 0
        %893 = vmatpush1.bf16.msra.mxu0 0
        %894 = vmatprep.subr.bf16.mxu0 0
        %895 = vmatpush1.bf16.msra.mxu0 0
        %896 = vmatprep.subr.bf16.mxu0 0
        %897 = vmatpush1.bf16.msra.mxu0 0
        %898 = vmatprep.mubr.bf16.mxu0 0
        %899 = vmatmul.mubr.bf16.gmra.mrb[0].mxu0 %v864
        %v900 = vpop.f32.mrb[0].mxu0
        %v901 = vadd.f32 0.0, %v900
        %v902 = vpop.f32.mrb[0].mxu0
        %v903 = vadd.f32 0.0, %v902
        %v904 = vpop.f32.mrb[0].mxu0
        %v905 = vpop.f32.mrb[0].mxu0
        %906 = vdwg.mxu0
        %v907 = vadd.f32 %v806, %v901
        %v908 = vadd.f32 %v807, %v903
        %s909 = scalar_lea.vmem %s1, 448
        %v910 = vld [vmem:[%s909] sm:$0xff]
        %v911 = vld [vmem:[%s909 + $0x8] sm:$0xff]
        %v912 = vld [vmem:[%s909 + $0x10] sm:$0xff]
        %v913 = vld [vmem:[%s909 + $0x18] sm:$0xff]
        %v914 = vld [vmem:[%s909 + $0x20] sm:$0xff]
        %v915 = vld [vmem:[%s909 + $0x28] sm:$0xff]
        %v916 = vld [vmem:[%s909 + $0x30] sm:$0xff]
        %v917 = vld [vmem:[%s909 + $0x38] sm:$0xff]
        %v920 = vunpack.c.l.b16 %v812
        %v921 = vunpack.c.l.b16 %v813
        %v922 = vpack.c.b16 %v921, %v920
        %v924 = vshrl.u32 %v922, 16
        %v926 = vrot.slane %v924, 2
        %v927 = vshll.u32 %v922, 16
        %v929 = vrot.slane %v927, 3
        %v930 = vor.u32 %v926, %v929
        %v939 = vunpack.c.l.b16 %v910
        %v940 = vunpack.c.h.b16 %v910
        %v941 = vunpack.c.l.b16 %v911
        %v942 = vunpack.c.h.b16 %v911
        %v943 = vunpack.c.l.b16 %v912
        %v944 = vunpack.c.h.b16 %v912
        %v945 = vunpack.c.l.b16 %v913
        %v946 = vunpack.c.h.b16 %v913
        %v947 = vunpack.c.l.b16 %v914
        %v948 = vunpack.c.h.b16 %v914
        %v949 = vunpack.c.l.b16 %v915
        %v950 = vunpack.c.h.b16 %v915
        %v951 = vunpack.c.l.b16 %v916
        %v952 = vunpack.c.h.b16 %v916
        %v953 = vunpack.c.l.b16 %v917
        %v954 = vunpack.c.h.b16 %v917
        %v955 = vpack.c.b16 %v941, %v939
        %v956 = vpack.c.b16 %v942, %v940
        %v957 = vpack.c.b16 %v945, %v943
        %v958 = vpack.c.b16 %v946, %v944
        %v959 = vpack.c.b16 %v949, %v947
        %v960 = vpack.c.b16 %v950, %v948
        %v961 = vpack.c.b16 %v953, %v951
        %v962 = vpack.c.b16 %v954, %v952
        %v972 = vsel %vm264, %v930, 0
        %974 = vmatprep.subr.bf16.mxu0 %v956
        %975 = vmatpush1.bf16.msra.mxu0 %v955
        %976 = vmatprep.subr.bf16.mxu0 %v958
        %977 = vmatpush1.bf16.msra.mxu0 %v957
        %978 = vmatprep.subr.bf16.mxu0 %v960
        %979 = vmatpush1.bf16.msra.mxu0 %v959
        %980 = vmatprep.subr.bf16.mxu0 %v962
        %981 = vmatpush1.bf16.msra.mxu0 %v961
        %982 = vmatprep.subr.bf16.mxu0 0
        %983 = vmatpush1.bf16.msra.mxu0 0
        %984 = vmatprep.subr.bf16.mxu0 0
        %985 = vmatpush1.bf16.msra.mxu0 0
        %986 = vmatprep.subr.bf16.mxu0 0
        %987 = vmatpush1.bf16.msra.mxu0 0
        %988 = vmatprep.subr.bf16.mxu0 0
        %989 = vmatpush1.bf16.msra.mxu0 0
        %990 = vmatprep.subr.bf16.mxu0 0
        %991 = vmatpush1.bf16.msra.mxu0 0
        %992 = vmatprep.subr.bf16.mxu0 0
        %993 = vmatpush1.bf16.msra.mxu0 0
        %994 = vmatprep.subr.bf16.mxu0 0
        %995 = vmatpush1.bf16.msra.mxu0 0
        %996 = vmatprep.subr.bf16.mxu0 0
        %997 = vmatpush1.bf16.msra.mxu0 0
        %998 = vmatprep.subr.bf16.mxu0 0
        %999 = vmatpush1.bf16.msra.mxu0 0
        %1000 = vmatprep.subr.bf16.mxu0 0
        %1001 = vmatpush1.bf16.msra.mxu0 0
        %1002 = vmatprep.subr.bf16.mxu0 0
        %1003 = vmatpush1.bf16.msra.mxu0 0
        %1004 = vmatprep.subr.bf16.mxu0 0
        %1005 = vmatpush1.bf16.msra.mxu0 0
        %1006 = vmatprep.mubr.bf16.mxu0 0
        %1007 = vmatmul.mubr.bf16.gmra.mrb[0].mxu0 %v972
        %v1008 = vpop.f32.mrb[0].mxu0
        %v1009 = vadd.f32 0.0, %v1008
        %v1010 = vpop.f32.mrb[0].mxu0
        %v1011 = vadd.f32 0.0, %v1010
        %v1012 = vpop.f32.mrb[0].mxu0
        %v1013 = vpop.f32.mrb[0].mxu0
        %1014 = vdwg.mxu0
        %v1015 = vadd.f32 %v907, %v1009
        %v1016 = vadd.f32 %v908, %v1011
        %s1017 = scalar_lea.vmem %s1, 512
        %v1018 = vld [vmem:[%s1017] sm:$0xff]
        %v1019 = vld [vmem:[%s1017 + $0x8] sm:$0xff]
        %v1020 = vld [vmem:[%s1017 + $0x10] sm:$0xff]
        %v1021 = vld [vmem:[%s1017 + $0x18] sm:$0xff]
        %v1022 = vld [vmem:[%s1017 + $0x20] sm:$0xff]
        %v1023 = vld [vmem:[%s1017 + $0x28] sm:$0xff]
        %v1024 = vld [vmem:[%s1017 + $0x30] sm:$0xff]
        %v1025 = vld [vmem:[%s1017 + $0x38] sm:$0xff]
        %v1026 = vpack.c.b16 %v920, %v920
        %v1028 = vshrl.u32 %v1026, 16
        %v1030 = vshll.u32 %v1026, 16
        %v1032 = vrot.slane %v1030, 1
        %v1033 = vor.u32 %v1028, %v1032
        %v1042 = vunpack.c.l.b16 %v1018
        %v1043 = vunpack.c.h.b16 %v1018
        %v1044 = vunpack.c.l.b16 %v1019
        %v1045 = vunpack.c.h.b16 %v1019
        %v1046 = vunpack.c.l.b16 %v1020
        %v1047 = vunpack.c.h.b16 %v1020
        %v1048 = vunpack.c.l.b16 %v1021
        %v1049 = vunpack.c.h.b16 %v1021
        %v1050 = vunpack.c.l.b16 %v1022
        %v1051 = vunpack.c.h.b16 %v1022
        %v1052 = vunpack.c.l.b16 %v1023
        %v1053 = vunpack.c.h.b16 %v1023
        %v1054 = vunpack.c.l.b16 %v1024
        %v1055 = vunpack.c.h.b16 %v1024
        %v1056 = vunpack.c.l.b16 %v1025
        %v1057 = vunpack.c.h.b16 %v1025
        %v1058 = vpack.c.b16 %v1044, %v1042
        %v1059 = vpack.c.b16 %v1045, %v1043
        %v1060 = vpack.c.b16 %v1048, %v1046
        %v1061 = vpack.c.b16 %v1049, %v1047
        %v1062 = vpack.c.b16 %v1052, %v1050
        %v1063 = vpack.c.b16 %v1053, %v1051
        %v1064 = vpack.c.b16 %v1056, %v1054
        %v1065 = vpack.c.b16 %v1057, %v1055
        %v1075 = vsel %vm264, %v1033, 0
        %1077 = vmatprep.subr.bf16.mxu0 %v1059
        %1078 = vmatpush1.bf16.msra.mxu0 %v1058
        %1079 = vmatprep.subr.bf16.mxu0 %v1061
        %1080 = vmatpush1.bf16.msra.mxu0 %v1060
        %1081 = vmatprep.subr.bf16.mxu0 %v1063
        %1082 = vmatpush1.bf16.msra.mxu0 %v1062
        %1083 = vmatprep.subr.bf16.mxu0 %v1065
        %1084 = vmatpush1.bf16.msra.mxu0 %v1064
        %1085 = vmatprep.subr.bf16.mxu0 0
        %1086 = vmatpush1.bf16.msra.mxu0 0
        %1087 = vmatprep.subr.bf16.mxu0 0
        %1088 = vmatpush1.bf16.msra.mxu0 0
        %1089 = vmatprep.subr.bf16.mxu0 0
        %1090 = vmatpush1.bf16.msra.mxu0 0
        %1091 = vmatprep.subr.bf16.mxu0 0
        %1092 = vmatpush1.bf16.msra.mxu0 0
        %1093 = vmatprep.subr.bf16.mxu0 0
        %1094 = vmatpush1.bf16.msra.mxu0 0
        %1095 = vmatprep.subr.bf16.mxu0 0
        %1096 = vmatpush1.bf16.msra.mxu0 0
        %1097 = vmatprep.subr.bf16.mxu0 0
        %1098 = vmatpush1.bf16.msra.mxu0 0
        %1099 = vmatprep.subr.bf16.mxu0 0
        %1100 = vmatpush1.bf16.msra.mxu0 0
        %1101 = vmatprep.subr.bf16.mxu0 0
        %1102 = vmatpush1.bf16.msra.mxu0 0
        %1103 = vmatprep.subr.bf16.mxu0 0
        %1104 = vmatpush1.bf16.msra.mxu0 0
        %1105 = vmatprep.subr.bf16.mxu0 0
        %1106 = vmatpush1.bf16.msra.mxu0 0
        %1107 = vmatprep.subr.bf16.mxu0 0
        %1108 = vmatpush1.bf16.msra.mxu0 0
        %1109 = vmatprep.mubr.bf16.mxu0 0
        %1110 = vmatmul.mubr.bf16.gmra.mrb[0].mxu0 %v1075
        %v1111 = vpop.f32.mrb[0].mxu0
        %v1112 = vadd.f32 0.0, %v1111
        %v1113 = vpop.f32.mrb[0].mxu0
        %v1114 = vadd.f32 0.0, %v1113
        %v1115 = vpop.f32.mrb[0].mxu0
        %v1116 = vpop.f32.mrb[0].mxu0
        %1117 = vdwg.mxu0
        %v1118 = vadd.f32 %v1015, %v1112
        %v1119 = vadd.f32 %v1016, %v1114
        %v1120 = vxor.u32 %v1119, 2147483648
        %v1121 = vmul.f32 %v1120, 1.442695
        %v1122 = vpow.pop %v1121
        %v1123 = vadd.f32 %v1122, 1.0
        %v1124 = vrcp.pop %v1123
        %v1125 = vmul.f32 1.0, %v1124
        %v1126 = vmax.f32 %v1118, 0.0
        %v1127 = vmul.f32 %v1125, %v1126
        %v1128 = vpack.c.bf16 %v1127, %v1127
        %s1129 = smul.addr %s183, 2
        %s1130 = scalar_lea.vmem %s179, %s1129
        %vm1131 = vcmask 779264
        %1132 = vst.msk [vmem:[%s1130] sm:$0x3] %vm1131, %v1128
      $region33: #{_encoder_forward_nhwc.11} parent=27 // loop_footer
        %s187 = sadd.s32 1, %s183
      $region34: #{_encoder_forward_nhwc.11} parent=27 // loop_footer_branch
        %182 = sbr.rel target = $region30
      $region35: #{_encoder_forward_nhwc.11} parent=27 // loop_exit
        _
      %s1133 = smul.u32 4, %s18
      %p1134 = scmp.lt.s32.totalorder %s17, 1
      %s1135 = scalar_select %p1134, %s17, 1
      %p1136 = scmp.lt.s32.totalorder %s1133, 3
      %s1137 = scalar_select %p1136, %s1133, 3
      %s1138 = smul.addr %s1135, 4
      %s1139 = sadd.s32 %s1137, %s1138
      %s1140 = smul.addr %s1139, 2
      %s1141 = scalar_lea.vmem %s2, %s1140
      // Predicated region
      $region36: #{_encoder_forward_nhwc.11} parent=27 // pred_check
        %p1142 = pneg %p94
      $region37: #{_encoder_forward_nhwc.11} parent=27 // pred_check_branch
        %1144 = sbr.rel (%p1142) target = $region39
      $region38: #{_encoder_forward_nhwc.11} parent=27 // pred_region
        %s1145 = smul.u32 4, %s18
      $region39: #{_encoder_forward_nhwc.11} parent=27 // pred_fallthru
        _
    $region28: #{_encoder_forward_nhwc.11} parent=5 // pred_fallthru
      _
    %p1146 = scmp.le.s32.totalorder 2, %s8
    // Predicated region
    $region40: #{_encoder_forward_nhwc.11} parent=5 // pred_check
      %p1147 = pneg %p1146
    $region41: #{_encoder_forward_nhwc.11} parent=5 // pred_check_branch
      %1149 = sbr.rel (%p1147) target = $region43
    $region42: #{_encoder_forward_nhwc.11} parent=5 // pred_region
      %s1150 = ssub.s32 %s8, 2
      // Predicated region
      $region44: #{_encoder_forward_nhwc.11} parent=42 // pred_check
        %p1151 = pneg %p100
      $region45: #{_encoder_forward_nhwc.11} parent=42 // pred_check_branch
        %1153 = sbr.rel (%p1151) target = $region47
      $region46: #{_encoder_forward_nhwc.11} parent=42 // pred_region
        %s1154 = smul.u32 4, %s20
        %p1155 = scmp.lt.s32.totalorder %s19, 1
        %s1156 = scalar_select %p1155, %s19, 1
        %p1157 = scmp.lt.s32.totalorder %s1154, 3
        %s1158 = scalar_select %p1157, %s1154, 3
        %s1159 = smul.addr %s1156, 4
        %s1160 = sadd.s32 %s1158, %s1159
        %s1161 = smul.addr %s1160, 2
        %s1162 = scalar_lea.vmem %s2, %s1161
      $region47: #{_encoder_forward_nhwc.11} parent=42 // pred_fallthru
        _
    $region43: #{_encoder_forward_nhwc.11} parent=5 // pred_fallthru
      _
  $region6: #{_encoder_forward_nhwc.11} parent=0 // loop_footer
    %s12 = sadd.s32 1, %s8
  $region7: #{_encoder_forward_nhwc.11} parent=0 // loop_footer_branch
    %7 = sbr.rel target = $region3
  $region8: #{_encoder_forward_nhwc.11} parent=0 // loop_exit
    _

// kernel: _encoder_forward_nhwc.12
$region0: #{_encoder_forward_nhwc.12}
  #allocation0 [shape = 'u32[]', space=smem, size = 0x4, offset = 0x4, fixed_abs, tag = 'smem constant byte address 0x4 - core index']
  #allocation1 [shape = 'u32[144,128]{1,0:T(1,128)}', space=vmem, size = 0x12000, scoped, tag = 'internal scratch']
  %s0 = inlined_call_operand.vmem [shape: bf16[2,1,6,6,96], index: 0, kind: input, shape index: {}]
  %s1 = inlined_call_operand.vmem [shape: bf16[9,96,256], index: 1, kind: input, shape index: {}]
  %s2 = inlined_call_operand.vmem [shape: bf16[2,4,4,96], index: 2, kind: output, shape index: {}]
  %s3 = sld [smem:[#allocation0]]
  $region48: #{_encoder_forward_nhwc.12} parent=0
    _
  %s5 = ssub.s32 1, %s3
  %s6 = scalar_select 0, %s5, %s3
  loop: start=0, step=1, limit=4
  $region2: #{_encoder_forward_nhwc.12} parent=0 // loop_pre_header
    _
  $region3: #{_encoder_forward_nhwc.12} parent=0 // loop_header
    %s8 = sphi 0, %s12
    %p9 = scmp.ge.s32.totalorder %s8, 4
    %s15 = sphi 0, %s27
    %s16 = sphi 0, %s23
    %s17 = sphi 0, %s15
    %s18 = sphi 0, %s16
    %s19 = sphi 0, %s17
    %s20 = sphi 0, %s18
    %s32 = sphi 0, %s34
    %s35 = sphi 0, %s32
    %s36 = sphi 0, %s35
    %s52 = sphi 0, %s36
    %s56 = sphi 0, %s56
    %s58 = sphi 0, %s56
    %s59 = sphi 0, %s58
    %s73 = sphi 0, %s59
    %s81 = sphi 0, %s83
    %s84 = sphi 0, %s81
    %s85 = sphi 0, %s84
    %s101 = sphi 0, %s85
  $region4: #{_encoder_forward_nhwc.12} parent=0 // loop_header_branch
    %11 = sbr.rel (%p9) target = $region8
  $region5: #{_encoder_forward_nhwc.12} parent=0 // loop_body
    %s13 = ssub.s32 %s8, 1
    %s14 = ssub.s32 %s8, 2
    %s21 = sadd.s32 1, %s16
    %p22 = scmp.ge.s32.totalorder %s21, 1
    %s23 = scalar_select %p22, 0, %s21
    %s24 = sadd.s32 1, %s15
    %s25 = scalar_select %p22, %s24, %s15
    %p26 = scmp.ge.s32.totalorder %s25, 2
    %s27 = scalar_select %p26, 0, %s25
    %s28 = ssub.s32 %s15, %s27
    %s29 = ssub.s32 %s16, %s23
    %s30 = sor.u32 %s28, %s29
    %p31 = scmp.eq.s32.totalorder %s30, 0
    %s33 = sadd.s32 %s32, 1
    %s34 = scalar_select %p31, %s32, %s33
    %p37 = pneg %p31
    %p38 = scmp.eq.s32.totalorder %s8, 1
    %p39 = por %p37, %p38
    %p40 = scmp.ne.s32.totalorder %s32, %s35
    %p41 = scmp.eq.s32.totalorder %s8, 0
    %p42 = por %p40, %p41
    %p43 = scmp.ne.s32.totalorder %s32, %s35
    %p44 = scmp.eq.s32.totalorder %s13, 1
    %p45 = por %p43, %p44
    %p46 = scmp.ne.s32.totalorder %s35, %s36
    %p47 = scmp.eq.s32.totalorder %s13, 0
    %p48 = por %p46, %p47
    %p49 = scmp.ne.s32.totalorder %s35, %s36
    %p50 = scmp.eq.s32.totalorder %s14, 1
    %p51 = por %p49, %p50
    %p53 = scmp.ne.s32.totalorder %s36, %s52
    %p54 = scmp.eq.s32.totalorder %s14, 0
    %p55 = por %p53, %p54
    %s57 = sadd.s32 %s56, 1
    %p60 = scmp.eq.s32.totalorder %s8, 1
    %p61 = scmp.ne.s32.totalorder %s56, %s58
    %p62 = scmp.eq.s32.totalorder %s8, 0
    %p63 = por %p61, %p62
    %p64 = scmp.ne.s32.totalorder %s56, %s58
    %p65 = scmp.eq.s32.totalorder %s13, 1
    %p66 = por %p64, %p65
    %p67 = scmp.ne.s32.totalorder %s58, %s59
    %p68 = scmp.eq.s32.totalorder %s13, 0
    %p69 = por %p67, %p68
    %p70 = scmp.ne.s32.totalorder %s58, %s59
    %p71 = scmp.eq.s32.totalorder %s14, 1
    %p72 = por %p70, %p71
    %p74 = scmp.ne.s32.totalorder %s59, %s73
    %p75 = scmp.eq.s32.totalorder %s14, 0
    %p76 = por %p74, %p75
    %s77 = ssub.s32 %s15, %s27
    %s78 = ssub.s32 %s16, %s23
    %s79 = sor.u32 %s77, %s78
    %p80 = scmp.eq.s32.totalorder %s79, 0
    %s82 = sadd.s32 %s81, 1
    %s83 = scalar_select %p80, %s81, %s82
    %p86 = pneg %p80
    %p87 = scmp.eq.s32.totalorder %s8, 1
    %p88 = por %p86, %p87
    %p89 = scmp.ne.s32.totalorder %s81, %s84
    %p90 = scmp.eq.s32.totalorder %s8, 0
    %p91 = por %p89, %p90
    %p92 = scmp.ne.s32.totalorder %s81, %s84
    %p93 = scmp.eq.s32.totalorder %s13, 1
    %p94 = por %p92, %p93
    %p95 = scmp.ne.s32.totalorder %s84, %s85
    %p96 = scmp.eq.s32.totalorder %s13, 0
    %p97 = por %p95, %p96
    %p98 = scmp.ne.s32.totalorder %s84, %s85
    %p99 = scmp.eq.s32.totalorder %s14, 1
    %p100 = por %p98, %p99
    %p102 = scmp.ne.s32.totalorder %s85, %s101
    %p103 = scmp.eq.s32.totalorder %s14, 0
    %p104 = por %p102, %p103
    %p105 = scmp.le.s32.totalorder 1, %s8
    %p106 = scmp.lt.s32.totalorder %s8, 3
    %p107 = pnand %p105, %p106
    %p108 = pneg %p107
    // Predicated region
    $region9: #{_encoder_forward_nhwc.12} parent=5 // pred_check
      _
    $region10: #{_encoder_forward_nhwc.12} parent=5 // pred_check_branch
      %110 = sbr.rel (%p107) target = $region12
    $region11: #{_encoder_forward_nhwc.12} parent=5 // pred_region
      %s111 = ssub.s32 %s8, 1
      // Predicated region
      $region13: #{_encoder_forward_nhwc.12} parent=11 // pred_check
        %p112 = pneg %p69
      $region14: #{_encoder_forward_nhwc.12} parent=11 // pred_check_branch
        %114 = sbr.rel (%p112) target = $region16
      $region15: #{_encoder_forward_nhwc.12} parent=11 // pred_region
        _
      $region16: #{_encoder_forward_nhwc.12} parent=11 // pred_fallthru
        _
    $region12: #{_encoder_forward_nhwc.12} parent=5 // pred_fallthru
      _
    %p115 = scmp.lt.s32.totalorder %s8, 2
    // Predicated region
    $region17: #{_encoder_forward_nhwc.12} parent=5 // pred_check
      %p116 = pneg %p115
    $region18: #{_encoder_forward_nhwc.12} parent=5 // pred_check_branch
      %118 = sbr.rel (%p116) target = $region20
    $region19: #{_encoder_forward_nhwc.12} parent=5 // pred_region
      // Predicated region
      $region21: #{_encoder_forward_nhwc.12} parent=19 // pred_check
        %p119 = pneg %p42
      $region22: #{_encoder_forward_nhwc.12} parent=19 // pred_check_branch
        %121 = sbr.rel (%p119) target = $region24
      $region23: #{_encoder_forward_nhwc.12} parent=19 // pred_region
        %p122 = scmp.lt.s32.totalorder %s15, 1
        %s123 = scalar_select %p122, %s15, 1
        %p124 = scmp.lt.s32.totalorder %s16, 0
        %s125 = scalar_select %p124, %s16, 0
        %s126 = smul.addr %s125, 6
        %s127 = smul.addr %s123, 6
        %s128 = sadd.s32 %s126, %s127
        %s129 = smul.addr %s128, 4
        %s130 = scalar_lea.vmem %s0, %s129
      $region24: #{_encoder_forward_nhwc.12} parent=19 // pred_fallthru
        _
    $region20: #{_encoder_forward_nhwc.12} parent=5 // pred_fallthru
      _
    %p131 = scmp.le.s32.totalorder 1, %s8
    %p132 = scmp.lt.s32.totalorder %s8, 3
    %p133 = pnand %p131, %p132
    %p134 = pneg %p133
    // Predicated region
    $region25: #{_encoder_forward_nhwc.12} parent=5 // pred_check
      _
    $region26: #{_encoder_forward_nhwc.12} parent=5 // pred_check_branch
      %136 = sbr.rel (%p133) target = $region28
    $region27: #{_encoder_forward_nhwc.12} parent=5 // pred_region
      %s137 = ssub.s32 %s8, 1
      %p138 = scmp.lt.s32.totalorder %s17, 1
      %s139 = scalar_select %p138, %s17, 1
      %p140 = scmp.lt.s32.totalorder %s18, 0
      %s141 = scalar_select %p140, %s18, 0
      %s142 = smul.addr %s141, 6
      %s143 = smul.addr %s139, 6
      %s144 = sadd.s32 %s142, %s143
      %s145 = smul.addr %s144, 4
      %s146 = scalar_lea.vmem %s0, %s145
      %p147 = pneg %p48
      %p148 = pneg %p45
      %p149 = pneg %p69
      %p150 = pneg %p66
      %p151 = pneg %p97
      %p152 = pneg %p94
      %s153 = smul.u32 4, %s18
      %p154 = scmp.lt.s32.totalorder %s17, 1
      %s155 = scalar_select %p154, %s17, 1
      %p156 = scmp.lt.s32.totalorder %s153, 3
      %s157 = scalar_select %p156, %s153, 3
      %s158 = smul.addr %s155, 4
      %s159 = sadd.s32 %s157, %s158
      %s160 = smul.addr %s159, 2
      %s161 = scalar_lea.vmem %s2, %s160
      %p162 = scmp.lt.s32.totalorder %s17, 1
      %s163 = scalar_select %p162, %s17, 1
      %p164 = scmp.lt.s32.totalorder %s18, 0
      %s165 = scalar_select %p164, %s18, 0
      %s166 = smul.addr %s165, 6
      %s167 = smul.addr %s163, 6
      %s168 = sadd.s32 %s166, %s167
      %s169 = smul.addr %s168, 4
      %s170 = scalar_lea.vmem %s0, %s169
      %s171 = smul.u32 4, %s18
      %p172 = scmp.lt.s32.totalorder %s17, 1
      %s173 = scalar_select %p172, %s17, 1
      %p174 = scmp.lt.s32.totalorder %s171, 3
      %s175 = scalar_select %p174, %s171, 3
      %s176 = smul.addr %s173, 4
      %s177 = sadd.s32 %s175, %s176
      %s178 = smul.addr %s177, 2
      %s179 = scalar_lea.vmem %s2, %s178
      %s180 = smul.u32 4, %s18
      loop: start=0, step=1, limit=4
      $region29: #{_encoder_forward_nhwc.12} parent=27 // loop_pre_header
        _
      $region30: #{_encoder_forward_nhwc.12} parent=27 // loop_header
        %s183 = sphi 0, %s187
        %p184 = scmp.ge.s32.totalorder %s183, 4
      $region31: #{_encoder_forward_nhwc.12} parent=27 // loop_header_branch
        %186 = sbr.rel (%p184) target = $region35
      $region32: #{_encoder_forward_nhwc.12} parent=27 // loop_body
        %s188 = smul.addr %s183, 4
        %s189 = scalar_lea.vmem %s170, %s188
        %v190 = vld [vmem:[%s189] sm:$0x7]
        %v191 = vld [vmem:[%s1] sm:$0xff]
        %v192 = vld [vmem:[%s1 + $0x8] sm:$0xff]
        %v193 = vld [vmem:[%s1 + $0x10] sm:$0xff]
        %v194 = vld [vmem:[%s1 + $0x18] sm:$0xff]
        %v195 = vld [vmem:[%s1 + $0x20] sm:$0xff]
        %v196 = vld [vmem:[%s1 + $0x28] sm:$0xff]
        %v197 = vld [vmem:[%s1 + $0x30] sm:$0xff]
        %v198 = vld [vmem:[%s1 + $0x38] sm:$0xff]
        %v199 = vld [vmem:[%s1 + $0x40] sm:$0xff]
        %v200 = vld [vmem:[%s1 + $0x48] sm:$0xff]
        %v201 = vld [vmem:[%s1 + $0x50] sm:$0xff]
        %v202 = vld [vmem:[%s1 + $0x58] sm:$0xff]
        %s203 = scalar_lea.vmem %s1, 96
        %v204 = vld [vmem:[%s203] sm:$0xff]
        %v205 = vld [vmem:[%s203 + $0x8] sm:$0xff]
        %v206 = vld [vmem:[%s203 + $0x10] sm:$0xff]
        %v207 = vld [vmem:[%s203 + $0x18] sm:$0xff]
        %v208 = vld [vmem:[%s203 + $0x20] sm:$0xff]
        %v209 = vld [vmem:[%s203 + $0x28] sm:$0xff]
        %v210 = vld [vmem:[%s203 + $0x30] sm:$0xff]
        %v211 = vld [vmem:[%s203 + $0x38] sm:$0xff]
        %v212 = vld [vmem:[%s203 + $0x40] sm:$0xff]
        %v213 = vld [vmem:[%s203 + $0x48] sm:$0xff]
        %v214 = vld [vmem:[%s203 + $0x50] sm:$0xff]
        %v215 = vld [vmem:[%s203 + $0x58] sm:$0xff]
        %v217 = vunpack.c.l.b16 %v190
        %v218 = vpack.c.b16 %v217, %v217
        %v220 = vshrl.u32 %v218, 16
        %v222 = vshll.u32 %v218, 16
        %v224 = vrot.slane %v222, 1
        %v225 = vor.u32 %v220, %v224
        %v238 = vunpack.c.l.b16 %v204
        %v239 = vunpack.c.h.b16 %v204
        %v240 = vunpack.c.l.b16 %v205
        %v241 = vunpack.c.h.b16 %v205
        %v242 = vunpack.c.l.b16 %v206
        %v243 = vunpack.c.h.b16 %v206
        %v244 = vunpack.c.l.b16 %v207
        %v245 = vunpack.c.h.b16 %v207
        %v246 = vunpack.c.l.b16 %v208
        %v247 = vunpack.c.h.b16 %v208
        %v248 = vunpack.c.l.b16 %v209
        %v249 = vunpack.c.h.b16 %v209
        %v250 = vunpack.c.l.b16 %v210
        %v251 = vunpack.c.h.b16 %v210
        %v252 = vunpack.c.l.b16 %v211
        %v253 = vunpack.c.h.b16 %v211
        %v254 = vunpack.c.l.b16 %v212
        %v255 = vunpack.c.h.b16 %v212
        %v256 = vunpack.c.l.b16 %v213
        %v257 = vunpack.c.h.b16 %v213
        %v258 = vunpack.c.l.b16 %v214
        %v259 = vunpack.c.h.b16 %v214
        %v260 = vunpack.c.l.b16 %v215
        %v261 = vunpack.c.h.b16 %v215
        %v262 = vpack.c.b16 %v240, %v238
        %v263 = vpack.c.b16 %v241, %v239
        %v264 = vpack.c.b16 %v244, %v242
        %v265 = vpack.c.b16 %v245, %v243
        %v266 = vpack.c.b16 %v248, %v246
        %v267 = vpack.c.b16 %v249, %v247
        %v268 = vpack.c.b16 %v252, %v250
        %v269 = vpack.c.b16 %v253, %v251
        %v270 = vpack.c.b16 %v256, %v254
        %v271 = vpack.c.b16 %v257, %v255
        %v272 = vpack.c.b16 %v260, %v258
        %v273 = vpack.c.b16 %v261, %v259
        %vm286 = vcmask 785408
        %v288 = vsel %vm286, %v225, 0
        %290 = vmatprep.subr.bf16.mxu0 %v263
        %291 = vmatpush1.bf16.msra.mxu0 %v262
        %292 = vmatprep.subr.bf16.mxu0 %v265
        %293 = vmatpush1.bf16.msra.mxu0 %v264
        %294 = vmatprep.subr.bf16.mxu0 %v267
        %295 = vmatpush1.bf16.msra.mxu0 %v266
        %296 = vmatprep.subr.bf16.mxu0 %v269
        %297 = vmatpush1.bf16.msra.mxu0 %v268
        %298 = vmatprep.subr.bf16.mxu0 %v271
        %299 = vmatpush1.bf16.msra.mxu0 %v270
        %300 = vmatprep.subr.bf16.mxu0 %v273
        %301 = vmatpush1.bf16.msra.mxu0 %v272
        %302 = vmatprep.subr.bf16.mxu0 0
        %303 = vmatpush1.bf16.msra.mxu0 0
        %304 = vmatprep.subr.bf16.mxu0 0
        %305 = vmatpush1.bf16.msra.mxu0 0
        %306 = vmatprep.subr.bf16.mxu0 0
        %307 = vmatpush1.bf16.msra.mxu0 0
        %308 = vmatprep.subr.bf16.mxu0 0
        %309 = vmatpush1.bf16.msra.mxu0 0
        %310 = vmatprep.subr.bf16.mxu0 0
        %311 = vmatpush1.bf16.msra.mxu0 0
        %312 = vmatprep.subr.bf16.mxu0 0
        %313 = vmatpush1.bf16.msra.mxu0 0
        %314 = vmatprep.subr.bf16.mxu0 0
        %315 = vmatpush1.bf16.msra.mxu0 0
        %316 = vmatprep.subr.bf16.mxu0 0
        %317 = vmatpush1.bf16.msra.mxu0 0
        %318 = vmatprep.subr.bf16.mxu0 0
        %319 = vmatpush1.bf16.msra.mxu0 0
        %320 = vmatprep.subr.bf16.mxu0 0
        %321 = vmatpush1.bf16.msra.mxu0 0
        %322 = vmatprep.mubr.bf16.mxu0 0
        %323 = vmatmul.mubr.bf16.gmra.mrb[0].mxu0 %v288
        %v324 = vpop.f32.mrb[0].mxu0
        %v325 = vadd.f32 0.0, %v324
        %v326 = vpop.f32.mrb[0].mxu0
        %v327 = vadd.f32 0.0, %v326
        %v328 = vpop.f32.mrb[0].mxu0
        %v329 = vpop.f32.mrb[0].mxu0
        %330 = vdwg.mxu0
        %v343 = vunpack.c.l.b16 %v191
        %v344 = vunpack.c.h.b16 %v191
        %v345 = vunpack.c.l.b16 %v192
        %v346 = vunpack.c.h.b16 %v192
        %v347 = vunpack.c.l.b16 %v193
        %v348 = vunpack.c.h.b16 %v193
        %v349 = vunpack.c.l.b16 %v194
        %v350 = vunpack.c.h.b16 %v194
        %v351 = vunpack.c.l.b16 %v195
        %v352 = vunpack.c.h.b16 %v195
        %v353 = vunpack.c.l.b16 %v196
        %v354 = vunpack.c.h.b16 %v196
        %v355 = vunpack.c.l.b16 %v197
        %v356 = vunpack.c.h.b16 %v197
        %v357 = vunpack.c.l.b16 %v198
        %v358 = vunpack.c.h.b16 %v198
        %v359 = vunpack.c.l.b16 %v199
        %v360 = vunpack.c.h.b16 %v199
        %v361 = vunpack.c.l.b16 %v200
        %v362 = vunpack.c.h.b16 %v200
        %v363 = vunpack.c.l.b16 %v201
        %v364 = vunpack.c.h.b16 %v201
        %v365 = vunpack.c.l.b16 %v202
        %v366 = vunpack.c.h.b16 %v202
        %v367 = vpack.c.b16 %v345, %v343
        %v368 = vpack.c.b16 %v346, %v344
        %v369 = vpack.c.b16 %v349, %v347
        %v370 = vpack.c.b16 %v350, %v348
        %v371 = vpack.c.b16 %v353, %v351
        %v372 = vpack.c.b16 %v354, %v352
        %v373 = vpack.c.b16 %v357, %v355
        %v374 = vpack.c.b16 %v358, %v356
        %v375 = vpack.c.b16 %v361, %v359
        %v376 = vpack.c.b16 %v362, %v360
        %v377 = vpack.c.b16 %v365, %v363
        %v378 = vpack.c.b16 %v366, %v364
        %v392 = vsel %vm286, %v190, 0
        %394 = vmatprep.subr.bf16.mxu0 %v368
        %395 = vmatpush1.bf16.msra.mxu0 %v367
        %396 = vmatprep.subr.bf16.mxu0 %v370
        %397 = vmatpush1.bf16.msra.mxu0 %v369
        %398 = vmatprep.subr.bf16.mxu0 %v372
        %399 = vmatpush1.bf16.msra.mxu0 %v371
        %400 = vmatprep.subr.bf16.mxu0 %v374
        %401 = vmatpush1.bf16.msra.mxu0 %v373
        %402 = vmatprep.subr.bf16.mxu0 %v376
        %403 = vmatpush1.bf16.msra.mxu0 %v375
        %404 = vmatprep.subr.bf16.mxu0 %v378
        %405 = vmatpush1.bf16.msra.mxu0 %v377
        %406 = vmatprep.subr.bf16.mxu0 0
        %407 = vmatpush1.bf16.msra.mxu0 0
        %408 = vmatprep.subr.bf16.mxu0 0
        %409 = vmatpush1.bf16.msra.mxu0 0
        %410 = vmatprep.subr.bf16.mxu0 0
        %411 = vmatpush1.bf16.msra.mxu0 0
        %412 = vmatprep.subr.bf16.mxu0 0
        %413 = vmatpush1.bf16.msra.mxu0 0
        %414 = vmatprep.subr.bf16.mxu0 0
        %415 = vmatpush1.bf16.msra.mxu0 0
        %416 = vmatprep.subr.bf16.mxu0 0
        %417 = vmatpush1.bf16.msra.mxu0 0
        %418 = vmatprep.subr.bf16.mxu0 0
        %419 = vmatpush1.bf16.msra.mxu0 0
        %420 = vmatprep.subr.bf16.mxu0 0
        %421 = vmatpush1.bf16.msra.mxu0 0
        %422 = vmatprep.subr.bf16.mxu0 0
        %423 = vmatpush1.bf16.msra.mxu0 0
        %424 = vmatprep.subr.bf16.mxu0 0
        %425 = vmatpush1.bf16.msra.mxu0 0
        %426 = vmatprep.mubr.bf16.mxu0 0
        %427 = vmatmul.mubr.bf16.gmra.mrb[0].mxu0 %v392
        %v428 = vpop.f32.mrb[0].mxu0
        %v429 = vadd.f32 %v325, %v428
        %v430 = vpop.f32.mrb[0].mxu0
        %v431 = vadd.f32 %v327, %v430
        %v432 = vpop.f32.mrb[0].mxu0
        %v433 = vpop.f32.mrb[0].mxu0
        %434 = vdwg.mxu0
        %s435 = scalar_lea.vmem %s1, 192
        %v436 = vld [vmem:[%s435] sm:$0xff]
        %v437 = vld [vmem:[%s435 + $0x8] sm:$0xff]
        %v438 = vld [vmem:[%s435 + $0x10] sm:$0xff]
        %v439 = vld [vmem:[%s435 + $0x18] sm:$0xff]
        %v440 = vld [vmem:[%s435 + $0x20] sm:$0xff]
        %v441 = vld [vmem:[%s435 + $0x28] sm:$0xff]
        %v442 = vld [vmem:[%s435 + $0x30] sm:$0xff]
        %v443 = vld [vmem:[%s435 + $0x38] sm:$0xff]
        %v444 = vld [vmem:[%s435 + $0x40] sm:$0xff]
        %v445 = vld [vmem:[%s435 + $0x48] sm:$0xff]
        %v446 = vld [vmem:[%s435 + $0x50] sm:$0xff]
        %v447 = vld [vmem:[%s435 + $0x58] sm:$0xff]
        %v448 = vrot.slane %v218, 1
        %v461 = vunpack.c.l.b16 %v436
        %v462 = vunpack.c.h.b16 %v436
        %v463 = vunpack.c.l.b16 %v437
        %v464 = vunpack.c.h.b16 %v437
        %v465 = vunpack.c.l.b16 %v438
        %v466 = vunpack.c.h.b16 %v438
        %v467 = vunpack.c.l.b16 %v439
        %v468 = vunpack.c.h.b16 %v439
        %v469 = vunpack.c.l.b16 %v440
        %v470 = vunpack.c.h.b16 %v440
        %v471 = vunpack.c.l.b16 %v441
        %v472 = vunpack.c.h.b16 %v441
        %v473 = vunpack.c.l.b16 %v442
        %v474 = vunpack.c.h.b16 %v442
        %v475 = vunpack.c.l.b16 %v443
        %v476 = vunpack.c.h.b16 %v443
        %v477 = vunpack.c.l.b16 %v444
        %v478 = vunpack.c.h.b16 %v444
        %v479 = vunpack.c.l.b16 %v445
        %v480 = vunpack.c.h.b16 %v445
        %v481 = vunpack.c.l.b16 %v446
        %v482 = vunpack.c.h.b16 %v446
        %v483 = vunpack.c.l.b16 %v447
        %v484 = vunpack.c.h.b16 %v447
        %v485 = vpack.c.b16 %v463, %v461
        %v486 = vpack.c.b16 %v464, %v462
        %v487 = vpack.c.b16 %v467, %v465
        %v488 = vpack.c.b16 %v468, %v466
        %v489 = vpack.c.b16 %v471, %v469
        %v490 = vpack.c.b16 %v472, %v470
        %v491 = vpack.c.b16 %v475, %v473
        %v492 = vpack.c.b16 %v476, %v474
        %v493 = vpack.c.b16 %v479, %v477
        %v494 = vpack.c.b16 %v480, %v478
        %v495 = vpack.c.b16 %v483, %v481
        %v496 = vpack.c.b16 %v484, %v482
        %v510 = vsel %vm286, %v448, 0
        %512 = vmatprep.subr.bf16.mxu0 %v486
        %513 = vmatpush1.bf16.msra.mxu0 %v485
        %514 = vmatprep.subr.bf16.mxu0 %v488
        %515 = vmatpush1.bf16.msra.mxu0 %v487
        %516 = vmatprep.subr.bf16.mxu0 %v490
        %517 = vmatpush1.bf16.msra.mxu0 %v489
        %518 = vmatprep.subr.bf16.mxu0 %v492
        %519 = vmatpush1.bf16.msra.mxu0 %v491
        %520 = vmatprep.subr.bf16.mxu0 %v494
        %521 = vmatpush1.bf16.msra.mxu0 %v493
        %522 = vmatprep.subr.bf16.mxu0 %v496
        %523 = vmatpush1.bf16.msra.mxu0 %v495
        %524 = vmatprep.subr.bf16.mxu0 0
        %525 = vmatpush1.bf16.msra.mxu0 0
        %526 = vmatprep.subr.bf16.mxu0 0
        %527 = vmatpush1.bf16.msra.mxu0 0
        %528 = vmatprep.subr.bf16.mxu0 0
        %529 = vmatpush1.bf16.msra.mxu0 0
        %530 = vmatprep.subr.bf16.mxu0 0
        %531 = vmatpush1.bf16.msra.mxu0 0
        %532 = vmatprep.subr.bf16.mxu0 0
        %533 = vmatpush1.bf16.msra.mxu0 0
        %534 = vmatprep.subr.bf16.mxu0 0
        %535 = vmatpush1.bf16.msra.mxu0 0
        %536 = vmatprep.subr.bf16.mxu0 0
        %537 = vmatpush1.bf16.msra.mxu0 0
        %538 = vmatprep.subr.bf16.mxu0 0
        %539 = vmatpush1.bf16.msra.mxu0 0
        %540 = vmatprep.subr.bf16.mxu0 0
        %541 = vmatpush1.bf16.msra.mxu0 0
        %542 = vmatprep.subr.bf16.mxu0 0
        %543 = vmatpush1.bf16.msra.mxu0 0
        %544 = vmatprep.mubr.bf16.mxu0 0
        %545 = vmatmul.mubr.bf16.gmra.mrb[0].mxu0 %v510
        %v546 = vpop.f32.mrb[0].mxu0
        %v547 = vadd.f32 0.0, %v546
        %v548 = vpop.f32.mrb[0].mxu0
        %v549 = vadd.f32 0.0, %v548
        %v550 = vpop.f32.mrb[0].mxu0
        %v551 = vpop.f32.mrb[0].mxu0
        %552 = vdwg.mxu0
        %v553 = vadd.f32 %v429, %v547
        %v554 = vadd.f32 %v431, %v549
        %s555 = sadd.s32 %s183, 1
        %s556 = smul.addr %s555, 4
        %s557 = scalar_lea.vmem %s170, %s556
        %v558 = vld [vmem:[%s557] sm:$0x7]
        %s559 = scalar_lea.vmem %s1, 288
        %v560 = vld [vmem:[%s559] sm:$0xff]
        %v561 = vld [vmem:[%s559 + $0x8] sm:$0xff]
        %v562 = vld [vmem:[%s559 + $0x10] sm:$0xff]
        %v563 = vld [vmem:[%s559 + $0x18] sm:$0xff]
        %v564 = vld [vmem:[%s559 + $0x20] sm:$0xff]
        %v565 = vld [vmem:[%s559 + $0x28] sm:$0xff]
        %v566 = vld [vmem:[%s559 + $0x30] sm:$0xff]
        %v567 = vld [vmem:[%s559 + $0x38] sm:$0xff]
        %v568 = vld [vmem:[%s559 + $0x40] sm:$0xff]
        %v569 = vld [vmem:[%s559 + $0x48] sm:$0xff]
        %v570 = vld [vmem:[%s559 + $0x50] sm:$0xff]
        %v571 = vld [vmem:[%s559 + $0x58] sm:$0xff]
        %v584 = vunpack.c.l.b16 %v560
        %v585 = vunpack.c.h.b16 %v560
        %v586 = vunpack.c.l.b16 %v561
        %v587 = vunpack.c.h.b16 %v561
        %v588 = vunpack.c.l.b16 %v562
        %v589 = vunpack.c.h.b16 %v562
        %v590 = vunpack.c.l.b16 %v563
        %v591 = vunpack.c.h.b16 %v563
        %v592 = vunpack.c.l.b16 %v564
        %v593 = vunpack.c.h.b16 %v564
        %v594 = vunpack.c.l.b16 %v565
        %v595 = vunpack.c.h.b16 %v565
        %v596 = vunpack.c.l.b16 %v566
        %v597 = vunpack.c.h.b16 %v566
        %v598 = vunpack.c.l.b16 %v567
        %v599 = vunpack.c.h.b16 %v567
        %v600 = vunpack.c.l.b16 %v568
        %v601 = vunpack.c.h.b16 %v568
        %v602 = vunpack.c.l.b16 %v569
        %v603 = vunpack.c.h.b16 %v569
        %v604 = vunpack.c.l.b16 %v570
        %v605 = vunpack.c.h.b16 %v570
        %v606 = vunpack.c.l.b16 %v571
        %v607 = vunpack.c.h.b16 %v571
        %v608 = vpack.c.b16 %v586, %v584
        %v609 = vpack.c.b16 %v587, %v585
        %v610 = vpack.c.b16 %v590, %v588
        %v611 = vpack.c.b16 %v591, %v589
        %v612 = vpack.c.b16 %v594, %v592
        %v613 = vpack.c.b16 %v595, %v593
        %v614 = vpack.c.b16 %v598, %v596
        %v615 = vpack.c.b16 %v599, %v597
        %v616 = vpack.c.b16 %v602, %v600
        %v617 = vpack.c.b16 %v603, %v601
        %v618 = vpack.c.b16 %v606, %v604
        %v619 = vpack.c.b16 %v607, %v605
        %v633 = vsel %vm286, %v558, 0
        %635 = vmatprep.subr.bf16.mxu0 %v609
        %636 = vmatpush1.bf16.msra.mxu0 %v608
        %637 = vmatprep.subr.bf16.mxu0 %v611
        %638 = vmatpush1.bf16.msra.mxu0 %v610
        %639 = vmatprep.subr.bf16.mxu0 %v613
        %640 = vmatpush1.bf16.msra.mxu0 %v612
        %641 = vmatprep.subr.bf16.mxu0 %v615
        %642 = vmatpush1.bf16.msra.mxu0 %v614
        %643 = vmatprep.subr.bf16.mxu0 %v617
        %644 = vmatpush1.bf16.msra.mxu0 %v616
        %645 = vmatprep.subr.bf16.mxu0 %v619
        %646 = vmatpush1.bf16.msra.mxu0 %v618
        %647 = vmatprep.subr.bf16.mxu0 0
        %648 = vmatpush1.bf16.msra.mxu0 0
        %649 = vmatprep.subr.bf16.mxu0 0
        %650 = vmatpush1.bf16.msra.mxu0 0
        %651 = vmatprep.subr.bf16.mxu0 0
        %652 = vmatpush1.bf16.msra.mxu0 0
        %653 = vmatprep.subr.bf16.mxu0 0
        %654 = vmatpush1.bf16.msra.mxu0 0
        %655 = vmatprep.subr.bf16.mxu0 0
        %656 = vmatpush1.bf16.msra.mxu0 0
        %657 = vmatprep.subr.bf16.mxu0 0
        %658 = vmatpush1.bf16.msra.mxu0 0
        %659 = vmatprep.subr.bf16.mxu0 0
        %660 = vmatpush1.bf16.msra.mxu0 0
        %661 = vmatprep.subr.bf16.mxu0 0
        %662 = vmatpush1.bf16.msra.mxu0 0
        %663 = vmatprep.subr.bf16.mxu0 0
        %664 = vmatpush1.bf16.msra.mxu0 0
        %665 = vmatprep.subr.bf16.mxu0 0
        %666 = vmatpush1.bf16.msra.mxu0 0
        %667 = vmatprep.mubr.bf16.mxu0 0
        %668 = vmatmul.mubr.bf16.gmra.mrb[0].mxu0 %v633
        %v669 = vpop.f32.mrb[0].mxu0
        %v670 = vadd.f32 0.0, %v669
        %v671 = vpop.f32.mrb[0].mxu0
        %v672 = vadd.f32 0.0, %v671
        %v673 = vpop.f32.mrb[0].mxu0
        %v674 = vpop.f32.mrb[0].mxu0
        %675 = vdwg.mxu0
        %v676 = vadd.f32 %v553, %v670
        %v677 = vadd.f32 %v554, %v672
        %s678 = scalar_lea.vmem %s1, 384
        %v679 = vld [vmem:[%s678] sm:$0xff]
        %v680 = vld [vmem:[%s678 + $0x8] sm:$0xff]
        %v681 = vld [vmem:[%s678 + $0x10] sm:$0xff]
        %v682 = vld [vmem:[%s678 + $0x18] sm:$0xff]
        %v683 = vld [vmem:[%s678 + $0x20] sm:$0xff]
        %v684 = vld [vmem:[%s678 + $0x28] sm:$0xff]
        %v685 = vld [vmem:[%s678 + $0x30] sm:$0xff]
        %v686 = vld [vmem:[%s678 + $0x38] sm:$0xff]
        %v687 = vld [vmem:[%s678 + $0x40] sm:$0xff]
        %v688 = vld [vmem:[%s678 + $0x48] sm:$0xff]
        %v689 = vld [vmem:[%s678 + $0x50] sm:$0xff]
        %v690 = vld [vmem:[%s678 + $0x58] sm:$0xff]
        %v692 = vunpack.c.l.b16 %v558
        %v693 = vpack.c.b16 %v692, %v692
        %v695 = vshrl.u32 %v693, 16
        %v697 = vshll.u32 %v693, 16
        %v699 = vrot.slane %v697, 1
        %v700 = vor.u32 %v695, %v699
        %v713 = vunpack.c.l.b16 %v679
        %v714 = vunpack.c.h.b16 %v679
        %v715 = vunpack.c.l.b16 %v680
        %v716 = vunpack.c.h.b16 %v680
        %v717 = vunpack.c.l.b16 %v681
        %v718 = vunpack.c.h.b16 %v681
        %v719 = vunpack.c.l.b16 %v682
        %v720 = vunpack.c.h.b16 %v682
        %v721 = vunpack.c.l.b16 %v683
        %v722 = vunpack.c.h.b16 %v683
        %v723 = vunpack.c.l.b16 %v684
        %v724 = vunpack.c.h.b16 %v684
        %v725 = vunpack.c.l.b16 %v685
        %v726 = vunpack.c.h.b16 %v685
        %v727 = vunpack.c.l.b16 %v686
        %v728 = vunpack.c.h.b16 %v686
        %v729 = vunpack.c.l.b16 %v687
        %v730 = vunpack.c.h.b16 %v687
        %v731 = vunpack.c.l.b16 %v688
        %v732 = vunpack.c.h.b16 %v688
        %v733 = vunpack.c.l.b16 %v689
        %v734 = vunpack.c.h.b16 %v689
        %v735 = vunpack.c.l.b16 %v690
        %v736 = vunpack.c.h.b16 %v690
        %v737 = vpack.c.b16 %v715, %v713
        %v738 = vpack.c.b16 %v716, %v714
        %v739 = vpack.c.b16 %v719, %v717
        %v740 = vpack.c.b16 %v720, %v718
        %v741 = vpack.c.b16 %v723, %v721
        %v742 = vpack.c.b16 %v724, %v722
        %v743 = vpack.c.b16 %v727, %v725
        %v744 = vpack.c.b16 %v728, %v726
        %v745 = vpack.c.b16 %v731, %v729
        %v746 = vpack.c.b16 %v732, %v730
        %v747 = vpack.c.b16 %v735, %v733
        %v748 = vpack.c.b16 %v736, %v734
        %v762 = vsel %vm286, %v700, 0
        %764 = vmatprep.subr.bf16.mxu0 %v738
        %765 = vmatpush1.bf16.msra.mxu0 %v737
        %766 = vmatprep.subr.bf16.mxu0 %v740
        %767 = vmatpush1.bf16.msra.mxu0 %v739
        %768 = vmatprep.subr.bf16.mxu0 %v742
        %769 = vmatpush1.bf16.msra.mxu0 %v741
        %770 = vmatprep.subr.bf16.mxu0 %v744
        %771 = vmatpush1.bf16.msra.mxu0 %v743
        %772 = vmatprep.subr.bf16.mxu0 %v746
        %773 = vmatpush1.bf16.msra.mxu0 %v745
        %774 = vmatprep.subr.bf16.mxu0 %v748
        %775 = vmatpush1.bf16.msra.mxu0 %v747
        %776 = vmatprep.subr.bf16.mxu0 0
        %777 = vmatpush1.bf16.msra.mxu0 0
        %778 = vmatprep.subr.bf16.mxu0 0
        %779 = vmatpush1.bf16.msra.mxu0 0
        %780 = vmatprep.subr.bf16.mxu0 0
        %781 = vmatpush1.bf16.msra.mxu0 0
        %782 = vmatprep.subr.bf16.mxu0 0
        %783 = vmatpush1.bf16.msra.mxu0 0
        %784 = vmatprep.subr.bf16.mxu0 0
        %785 = vmatpush1.bf16.msra.mxu0 0
        %786 = vmatprep.subr.bf16.mxu0 0
        %787 = vmatpush1.bf16.msra.mxu0 0
        %788 = vmatprep.subr.bf16.mxu0 0
        %789 = vmatpush1.bf16.msra.mxu0 0
        %790 = vmatprep.subr.bf16.mxu0 0
        %791 = vmatpush1.bf16.msra.mxu0 0
        %792 = vmatprep.subr.bf16.mxu0 0
        %793 = vmatpush1.bf16.msra.mxu0 0
        %794 = vmatprep.subr.bf16.mxu0 0
        %795 = vmatpush1.bf16.msra.mxu0 0
        %796 = vmatprep.mubr.bf16.mxu0 0
        %797 = vmatmul.mubr.bf16.gmra.mrb[0].mxu0 %v762
        %v798 = vpop.f32.mrb[0].mxu0
        %v799 = vadd.f32 0.0, %v798
        %v800 = vpop.f32.mrb[0].mxu0
        %v801 = vadd.f32 0.0, %v800
        %v802 = vpop.f32.mrb[0].mxu0
        %v803 = vpop.f32.mrb[0].mxu0
        %804 = vdwg.mxu0
        %v805 = vadd.f32 %v676, %v799
        %v806 = vadd.f32 %v677, %v801
        %s807 = scalar_lea.vmem %s1, 480
        %v808 = vld [vmem:[%s807] sm:$0xff]
        %v809 = vld [vmem:[%s807 + $0x8] sm:$0xff]
        %v810 = vld [vmem:[%s807 + $0x10] sm:$0xff]
        %v811 = vld [vmem:[%s807 + $0x18] sm:$0xff]
        %v812 = vld [vmem:[%s807 + $0x20] sm:$0xff]
        %v813 = vld [vmem:[%s807 + $0x28] sm:$0xff]
        %v814 = vld [vmem:[%s807 + $0x30] sm:$0xff]
        %v815 = vld [vmem:[%s807 + $0x38] sm:$0xff]
        %v816 = vld [vmem:[%s807 + $0x40] sm:$0xff]
        %v817 = vld [vmem:[%s807 + $0x48] sm:$0xff]
        %v818 = vld [vmem:[%s807 + $0x50] sm:$0xff]
        %v819 = vld [vmem:[%s807 + $0x58] sm:$0xff]
        %v820 = vrot.slane %v693, 1
        %v833 = vunpack.c.l.b16 %v808
        %v834 = vunpack.c.h.b16 %v808
        %v835 = vunpack.c.l.b16 %v809
        %v836 = vunpack.c.h.b16 %v809
        %v837 = vunpack.c.l.b16 %v810
        %v838 = vunpack.c.h.b16 %v810
        %v839 = vunpack.c.l.b16 %v811
        %v840 = vunpack.c.h.b16 %v811
        %v841 = vunpack.c.l.b16 %v812
        %v842 = vunpack.c.h.b16 %v812
        %v843 = vunpack.c.l.b16 %v813
        %v844 = vunpack.c.h.b16 %v813
        %v845 = vunpack.c.l.b16 %v814
        %v846 = vunpack.c.h.b16 %v814
        %v847 = vunpack.c.l.b16 %v815
        %v848 = vunpack.c.h.b16 %v815
        %v849 = vunpack.c.l.b16 %v816
        %v850 = vunpack.c.h.b16 %v816
        %v851 = vunpack.c.l.b16 %v817
        %v852 = vunpack.c.h.b16 %v817
        %v853 = vunpack.c.l.b16 %v818
        %v854 = vunpack.c.h.b16 %v818
        %v855 = vunpack.c.l.b16 %v819
        %v856 = vunpack.c.h.b16 %v819
        %v857 = vpack.c.b16 %v835, %v833
        %v858 = vpack.c.b16 %v836, %v834
        %v859 = vpack.c.b16 %v839, %v837
        %v860 = vpack.c.b16 %v840, %v838
        %v861 = vpack.c.b16 %v843, %v841
        %v862 = vpack.c.b16 %v844, %v842
        %v863 = vpack.c.b16 %v847, %v845
        %v864 = vpack.c.b16 %v848, %v846
        %v865 = vpack.c.b16 %v851, %v849
        %v866 = vpack.c.b16 %v852, %v850
        %v867 = vpack.c.b16 %v855, %v853
        %v868 = vpack.c.b16 %v856, %v854
        %v882 = vsel %vm286, %v820, 0
        %884 = vmatprep.subr.bf16.mxu0 %v858
        %885 = vmatpush1.bf16.msra.mxu0 %v857
        %886 = vmatprep.subr.bf16.mxu0 %v860
        %887 = vmatpush1.bf16.msra.mxu0 %v859
        %888 = vmatprep.subr.bf16.mxu0 %v862
        %889 = vmatpush1.bf16.msra.mxu0 %v861
        %890 = vmatprep.subr.bf16.mxu0 %v864
        %891 = vmatpush1.bf16.msra.mxu0 %v863
        %892 = vmatprep.subr.bf16.mxu0 %v866
        %893 = vmatpush1.bf16.msra.mxu0 %v865
        %894 = vmatprep.subr.bf16.mxu0 %v868
        %895 = vmatpush1.bf16.msra.mxu0 %v867
        %896 = vmatprep.subr.bf16.mxu0 0
        %897 = vmatpush1.bf16.msra.mxu0 0
        %898 = vmatprep.subr.bf16.mxu0 0
        %899 = vmatpush1.bf16.msra.mxu0 0
        %900 = vmatprep.subr.bf16.mxu0 0
        %901 = vmatpush1.bf16.msra.mxu0 0
        %902 = vmatprep.subr.bf16.mxu0 0
        %903 = vmatpush1.bf16.msra.mxu0 0
        %904 = vmatprep.subr.bf16.mxu0 0
        %905 = vmatpush1.bf16.msra.mxu0 0
        %906 = vmatprep.subr.bf16.mxu0 0
        %907 = vmatpush1.bf16.msra.mxu0 0
        %908 = vmatprep.subr.bf16.mxu0 0
        %909 = vmatpush1.bf16.msra.mxu0 0
        %910 = vmatprep.subr.bf16.mxu0 0
        %911 = vmatpush1.bf16.msra.mxu0 0
        %912 = vmatprep.subr.bf16.mxu0 0
        %913 = vmatpush1.bf16.msra.mxu0 0
        %914 = vmatprep.subr.bf16.mxu0 0
        %915 = vmatpush1.bf16.msra.mxu0 0
        %916 = vmatprep.mubr.bf16.mxu0 0
        %917 = vmatmul.mubr.bf16.gmra.mrb[0].mxu0 %v882
        %v918 = vpop.f32.mrb[0].mxu0
        %v919 = vadd.f32 0.0, %v918
        %v920 = vpop.f32.mrb[0].mxu0
        %v921 = vadd.f32 0.0, %v920
        %v922 = vpop.f32.mrb[0].mxu0
        %v923 = vpop.f32.mrb[0].mxu0
        %924 = vdwg.mxu0
        %v925 = vadd.f32 %v805, %v919
        %v926 = vadd.f32 %v806, %v921
        %s927 = sadd.s32 %s183, 2
        %s928 = smul.addr %s927, 4
        %s929 = scalar_lea.vmem %s170, %s928
        %v930 = vld [vmem:[%s929] sm:$0x7]
        %s931 = scalar_lea.vmem %s1, 576
        %v932 = vld [vmem:[%s931] sm:$0xff]
        %v933 = vld [vmem:[%s931 + $0x8] sm:$0xff]
        %v934 = vld [vmem:[%s931 + $0x10] sm:$0xff]
        %v935 = vld [vmem:[%s931 + $0x18] sm:$0xff]
        %v936 = vld [vmem:[%s931 + $0x20] sm:$0xff]
        %v937 = vld [vmem:[%s931 + $0x28] sm:$0xff]
        %v938 = vld [vmem:[%s931 + $0x30] sm:$0xff]
        %v939 = vld [vmem:[%s931 + $0x38] sm:$0xff]
        %v940 = vld [vmem:[%s931 + $0x40] sm:$0xff]
        %v941 = vld [vmem:[%s931 + $0x48] sm:$0xff]
        %v942 = vld [vmem:[%s931 + $0x50] sm:$0xff]
        %v943 = vld [vmem:[%s931 + $0x58] sm:$0xff]
        %v956 = vunpack.c.l.b16 %v932
        %v957 = vunpack.c.h.b16 %v932
        %v958 = vunpack.c.l.b16 %v933
        %v959 = vunpack.c.h.b16 %v933
        %v960 = vunpack.c.l.b16 %v934
        %v961 = vunpack.c.h.b16 %v934
        %v962 = vunpack.c.l.b16 %v935
        %v963 = vunpack.c.h.b16 %v935
        %v964 = vunpack.c.l.b16 %v936
        %v965 = vunpack.c.h.b16 %v936
        %v966 = vunpack.c.l.b16 %v937
        %v967 = vunpack.c.h.b16 %v937
        %v968 = vunpack.c.l.b16 %v938
        %v969 = vunpack.c.h.b16 %v938
        %v970 = vunpack.c.l.b16 %v939
        %v971 = vunpack.c.h.b16 %v939
        %v972 = vunpack.c.l.b16 %v940
        %v973 = vunpack.c.h.b16 %v940
        %v974 = vunpack.c.l.b16 %v941
        %v975 = vunpack.c.h.b16 %v941
        %v976 = vunpack.c.l.b16 %v942
        %v977 = vunpack.c.h.b16 %v942
        %v978 = vunpack.c.l.b16 %v943
        %v979 = vunpack.c.h.b16 %v943
        %v980 = vpack.c.b16 %v958, %v956
        %v981 = vpack.c.b16 %v959, %v957
        %v982 = vpack.c.b16 %v962, %v960
        %v983 = vpack.c.b16 %v963, %v961
        %v984 = vpack.c.b16 %v966, %v964
        %v985 = vpack.c.b16 %v967, %v965
        %v986 = vpack.c.b16 %v970, %v968
        %v987 = vpack.c.b16 %v971, %v969
        %v988 = vpack.c.b16 %v974, %v972
        %v989 = vpack.c.b16 %v975, %v973
        %v990 = vpack.c.b16 %v978, %v976
        %v991 = vpack.c.b16 %v979, %v977
        %v1005 = vsel %vm286, %v930, 0
        %1007 = vmatprep.subr.bf16.mxu0 %v981
        %1008 = vmatpush1.bf16.msra.mxu0 %v980
        %1009 = vmatprep.subr.bf16.mxu0 %v983
        %1010 = vmatpush1.bf16.msra.mxu0 %v982
        %1011 = vmatprep.subr.bf16.mxu0 %v985
        %1012 = vmatpush1.bf16.msra.mxu0 %v984
        %1013 = vmatprep.subr.bf16.mxu0 %v987
        %1014 = vmatpush1.bf16.msra.mxu0 %v986
        %1015 = vmatprep.subr.bf16.mxu0 %v989
        %1016 = vmatpush1.bf16.msra.mxu0 %v988
        %1017 = vmatprep.subr.bf16.mxu0 %v991
        %1018 = vmatpush1.bf16.msra.mxu0 %v990
        %1019 = vmatprep.subr.bf16.mxu0 0
        %1020 = vmatpush1.bf16.msra.mxu0 0
        %1021 = vmatprep.subr.bf16.mxu0 0
        %1022 = vmatpush1.bf16.msra.mxu0 0
        %1023 = vmatprep.subr.bf16.mxu0 0
        %1024 = vmatpush1.bf16.msra.mxu0 0
        %1025 = vmatprep.subr.bf16.mxu0 0
        %1026 = vmatpush1.bf16.msra.mxu0 0
        %1027 = vmatprep.subr.bf16.mxu0 0
        %1028 = vmatpush1.bf16.msra.mxu0 0
        %1029 = vmatprep.subr.bf16.mxu0 0
        %1030 = vmatpush1.bf16.msra.mxu0 0
        %1031 = vmatprep.subr.bf16.mxu0 0
        %1032 = vmatpush1.bf16.msra.mxu0 0
        %1033 = vmatprep.subr.bf16.mxu0 0
        %1034 = vmatpush1.bf16.msra.mxu0 0
        %1035 = vmatprep.subr.bf16.mxu0 0
        %1036 = vmatpush1.bf16.msra.mxu0 0
        %1037 = vmatprep.subr.bf16.mxu0 0
        %1038 = vmatpush1.bf16.msra.mxu0 0
        %1039 = vmatprep.mubr.bf16.mxu0 0
        %1040 = vmatmul.mubr.bf16.gmra.mrb[0].mxu0 %v1005
        %v1041 = vpop.f32.mrb[0].mxu0
        %v1042 = vadd.f32 0.0, %v1041
        %v1043 = vpop.f32.mrb[0].mxu0
        %v1044 = vadd.f32 0.0, %v1043
        %v1045 = vpop.f32.mrb[0].mxu0
        %v1046 = vpop.f32.mrb[0].mxu0
        %1047 = vdwg.mxu0
        %v1048 = vadd.f32 %v925, %v1042
        %v1049 = vadd.f32 %v926, %v1044
        %s1050 = scalar_lea.vmem %s1, 672
        %v1051 = vld [vmem:[%s1050] sm:$0xff]
        %v1052 = vld [vmem:[%s1050 + $0x8] sm:$0xff]
        %v1053 = vld [vmem:[%s1050 + $0x10] sm:$0xff]
        %v1054 = vld [vmem:[%s1050 + $0x18] sm:$0xff]
        %v1055 = vld [vmem:[%s1050 + $0x20] sm:$0xff]
        %v1056 = vld [vmem:[%s1050 + $0x28] sm:$0xff]
        %v1057 = vld [vmem:[%s1050 + $0x30] sm:$0xff]
        %v1058 = vld [vmem:[%s1050 + $0x38] sm:$0xff]
        %v1059 = vld [vmem:[%s1050 + $0x40] sm:$0xff]
        %v1060 = vld [vmem:[%s1050 + $0x48] sm:$0xff]
        %v1061 = vld [vmem:[%s1050 + $0x50] sm:$0xff]
        %v1062 = vld [vmem:[%s1050 + $0x58] sm:$0xff]
        %v1064 = vunpack.c.l.b16 %v930
        %v1065 = vpack.c.b16 %v1064, %v1064
        %v1067 = vshrl.u32 %v1065, 16
        %v1069 = vshll.u32 %v1065, 16
        %v1071 = vrot.slane %v1069, 1
        %v1072 = vor.u32 %v1067, %v1071
        %v1085 = vunpack.c.l.b16 %v1051
        %v1086 = vunpack.c.h.b16 %v1051
        %v1087 = vunpack.c.l.b16 %v1052
        %v1088 = vunpack.c.h.b16 %v1052
        %v1089 = vunpack.c.l.b16 %v1053
        %v1090 = vunpack.c.h.b16 %v1053
        %v1091 = vunpack.c.l.b16 %v1054
        %v1092 = vunpack.c.h.b16 %v1054
        %v1093 = vunpack.c.l.b16 %v1055
        %v1094 = vunpack.c.h.b16 %v1055
        %v1095 = vunpack.c.l.b16 %v1056
        %v1096 = vunpack.c.h.b16 %v1056
        %v1097 = vunpack.c.l.b16 %v1057
        %v1098 = vunpack.c.h.b16 %v1057
        %v1099 = vunpack.c.l.b16 %v1058
        %v1100 = vunpack.c.h.b16 %v1058
        %v1101 = vunpack.c.l.b16 %v1059
        %v1102 = vunpack.c.h.b16 %v1059
        %v1103 = vunpack.c.l.b16 %v1060
        %v1104 = vunpack.c.h.b16 %v1060
        %v1105 = vunpack.c.l.b16 %v1061
        %v1106 = vunpack.c.h.b16 %v1061
        %v1107 = vunpack.c.l.b16 %v1062
        %v1108 = vunpack.c.h.b16 %v1062
        %v1109 = vpack.c.b16 %v1087, %v1085
        %v1110 = vpack.c.b16 %v1088, %v1086
        %v1111 = vpack.c.b16 %v1091, %v1089
        %v1112 = vpack.c.b16 %v1092, %v1090
        %v1113 = vpack.c.b16 %v1095, %v1093
        %v1114 = vpack.c.b16 %v1096, %v1094
        %v1115 = vpack.c.b16 %v1099, %v1097
        %v1116 = vpack.c.b16 %v1100, %v1098
        %v1117 = vpack.c.b16 %v1103, %v1101
        %v1118 = vpack.c.b16 %v1104, %v1102
        %v1119 = vpack.c.b16 %v1107, %v1105
        %v1120 = vpack.c.b16 %v1108, %v1106
        %v1134 = vsel %vm286, %v1072, 0
        %1136 = vmatprep.subr.bf16.mxu0 %v1110
        %1137 = vmatpush1.bf16.msra.mxu0 %v1109
        %1138 = vmatprep.subr.bf16.mxu0 %v1112
        %1139 = vmatpush1.bf16.msra.mxu0 %v1111
        %1140 = vmatprep.subr.bf16.mxu0 %v1114
        %1141 = vmatpush1.bf16.msra.mxu0 %v1113
        %1142 = vmatprep.subr.bf16.mxu0 %v1116
        %1143 = vmatpush1.bf16.msra.mxu0 %v1115
        %1144 = vmatprep.subr.bf16.mxu0 %v1118
        %1145 = vmatpush1.bf16.msra.mxu0 %v1117
        %1146 = vmatprep.subr.bf16.mxu0 %v1120
        %1147 = vmatpush1.bf16.msra.mxu0 %v1119
        %1148 = vmatprep.subr.bf16.mxu0 0
        %1149 = vmatpush1.bf16.msra.mxu0 0
        %1150 = vmatprep.subr.bf16.mxu0 0
        %1151 = vmatpush1.bf16.msra.mxu0 0
        %1152 = vmatprep.subr.bf16.mxu0 0
        %1153 = vmatpush1.bf16.msra.mxu0 0
        %1154 = vmatprep.subr.bf16.mxu0 0
        %1155 = vmatpush1.bf16.msra.mxu0 0
        %1156 = vmatprep.subr.bf16.mxu0 0
        %1157 = vmatpush1.bf16.msra.mxu0 0
        %1158 = vmatprep.subr.bf16.mxu0 0
        %1159 = vmatpush1.bf16.msra.mxu0 0
        %1160 = vmatprep.subr.bf16.mxu0 0
        %1161 = vmatpush1.bf16.msra.mxu0 0
        %1162 = vmatprep.subr.bf16.mxu0 0
        %1163 = vmatpush1.bf16.msra.mxu0 0
        %1164 = vmatprep.subr.bf16.mxu0 0
        %1165 = vmatpush1.bf16.msra.mxu0 0
        %1166 = vmatprep.subr.bf16.mxu0 0
        %1167 = vmatpush1.bf16.msra.mxu0 0
        %1168 = vmatprep.mubr.bf16.mxu0 0
        %1169 = vmatmul.mubr.bf16.gmra.mrb[0].mxu0 %v1134
        %v1170 = vpop.f32.mrb[0].mxu0
        %v1171 = vadd.f32 0.0, %v1170
        %v1172 = vpop.f32.mrb[0].mxu0
        %v1173 = vadd.f32 0.0, %v1172
        %v1174 = vpop.f32.mrb[0].mxu0
        %v1175 = vpop.f32.mrb[0].mxu0
        %1176 = vdwg.mxu0
        %v1177 = vadd.f32 %v1048, %v1171
        %v1178 = vadd.f32 %v1049, %v1173
        %s1179 = scalar_lea.vmem %s1, 768
        %v1180 = vld [vmem:[%s1179] sm:$0xff]
        %v1181 = vld [vmem:[%s1179 + $0x8] sm:$0xff]
        %v1182 = vld [vmem:[%s1179 + $0x10] sm:$0xff]
        %v1183 = vld [vmem:[%s1179 + $0x18] sm:$0xff]
        %v1184 = vld [vmem:[%s1179 + $0x20] sm:$0xff]
        %v1185 = vld [vmem:[%s1179 + $0x28] sm:$0xff]
        %v1186 = vld [vmem:[%s1179 + $0x30] sm:$0xff]
        %v1187 = vld [vmem:[%s1179 + $0x38] sm:$0xff]
        %v1188 = vld [vmem:[%s1179 + $0x40] sm:$0xff]
        %v1189 = vld [vmem:[%s1179 + $0x48] sm:$0xff]
        %v1190 = vld [vmem:[%s1179 + $0x50] sm:$0xff]
        %v1191 = vld [vmem:[%s1179 + $0x58] sm:$0xff]
        %v1192 = vrot.slane %v1065, 1
        %v1205 = vunpack.c.l.b16 %v1180
        %v1206 = vunpack.c.h.b16 %v1180
        %v1207 = vunpack.c.l.b16 %v1181
        %v1208 = vunpack.c.h.b16 %v1181
        %v1209 = vunpack.c.l.b16 %v1182
        %v1210 = vunpack.c.h.b16 %v1182
        %v1211 = vunpack.c.l.b16 %v1183
        %v1212 = vunpack.c.h.b16 %v1183
        %v1213 = vunpack.c.l.b16 %v1184
        %v1214 = vunpack.c.h.b16 %v1184
        %v1215 = vunpack.c.l.b16 %v1185
        %v1216 = vunpack.c.h.b16 %v1185
        %v1217 = vunpack.c.l.b16 %v1186
        %v1218 = vunpack.c.h.b16 %v1186
        %v1219 = vunpack.c.l.b16 %v1187
        %v1220 = vunpack.c.h.b16 %v1187
        %v1221 = vunpack.c.l.b16 %v1188
        %v1222 = vunpack.c.h.b16 %v1188
        %v1223 = vunpack.c.l.b16 %v1189
        %v1224 = vunpack.c.h.b16 %v1189
        %v1225 = vunpack.c.l.b16 %v1190
        %v1226 = vunpack.c.h.b16 %v1190
        %v1227 = vunpack.c.l.b16 %v1191
        %v1228 = vunpack.c.h.b16 %v1191
        %v1229 = vpack.c.b16 %v1207, %v1205
        %v1230 = vpack.c.b16 %v1208, %v1206
        %v1231 = vpack.c.b16 %v1211, %v1209
        %v1232 = vpack.c.b16 %v1212, %v1210
        %v1233 = vpack.c.b16 %v1215, %v1213
        %v1234 = vpack.c.b16 %v1216, %v1214
        %v1235 = vpack.c.b16 %v1219, %v1217
        %v1236 = vpack.c.b16 %v1220, %v1218
        %v1237 = vpack.c.b16 %v1223, %v1221
        %v1238 = vpack.c.b16 %v1224, %v1222
        %v1239 = vpack.c.b16 %v1227, %v1225
        %v1240 = vpack.c.b16 %v1228, %v1226
        %v1254 = vsel %vm286, %v1192, 0
        %1256 = vmatprep.subr.bf16.mxu0 %v1230
        %1257 = vmatpush1.bf16.msra.mxu0 %v1229
        %1258 = vmatprep.subr.bf16.mxu0 %v1232
        %1259 = vmatpush1.bf16.msra.mxu0 %v1231
        %1260 = vmatprep.subr.bf16.mxu0 %v1234
        %1261 = vmatpush1.bf16.msra.mxu0 %v1233
        %1262 = vmatprep.subr.bf16.mxu0 %v1236
        %1263 = vmatpush1.bf16.msra.mxu0 %v1235
        %1264 = vmatprep.subr.bf16.mxu0 %v1238
        %1265 = vmatpush1.bf16.msra.mxu0 %v1237
        %1266 = vmatprep.subr.bf16.mxu0 %v1240
        %1267 = vmatpush1.bf16.msra.mxu0 %v1239
        %1268 = vmatprep.subr.bf16.mxu0 0
        %1269 = vmatpush1.bf16.msra.mxu0 0
        %1270 = vmatprep.subr.bf16.mxu0 0
        %1271 = vmatpush1.bf16.msra.mxu0 0
        %1272 = vmatprep.subr.bf16.mxu0 0
        %1273 = vmatpush1.bf16.msra.mxu0 0
        %1274 = vmatprep.subr.bf16.mxu0 0
        %1275 = vmatpush1.bf16.msra.mxu0 0
        %1276 = vmatprep.subr.bf16.mxu0 0
        %1277 = vmatpush1.bf16.msra.mxu0 0
        %1278 = vmatprep.subr.bf16.mxu0 0
        %1279 = vmatpush1.bf16.msra.mxu0 0
        %1280 = vmatprep.subr.bf16.mxu0 0
        %1281 = vmatpush1.bf16.msra.mxu0 0
        %1282 = vmatprep.subr.bf16.mxu0 0
        %1283 = vmatpush1.bf16.msra.mxu0 0
        %1284 = vmatprep.subr.bf16.mxu0 0
        %1285 = vmatpush1.bf16.msra.mxu0 0
        %1286 = vmatprep.subr.bf16.mxu0 0
        %1287 = vmatpush1.bf16.msra.mxu0 0
        %1288 = vmatprep.mubr.bf16.mxu0 0
        %1289 = vmatmul.mubr.bf16.gmra.mrb[0].mxu0 %v1254
        %v1290 = vpop.f32.mrb[0].mxu0
        %v1291 = vadd.f32 0.0, %v1290
        %v1292 = vpop.f32.mrb[0].mxu0
        %v1293 = vadd.f32 0.0, %v1292
        %v1294 = vpop.f32.mrb[0].mxu0
        %v1295 = vpop.f32.mrb[0].mxu0
        %1296 = vdwg.mxu0
        %v1297 = vadd.f32 %v1177, %v1291
        %v1298 = vadd.f32 %v1178, %v1293
        %v1299 = vxor.u32 %v1298, 2147483648
        %v1300 = vmul.f32 %v1299, 1.442695
        %v1301 = vpow.pop %v1300
        %v1302 = vadd.f32 %v1301, 1.0
        %v1303 = vrcp.pop %v1302
        %v1304 = vmul.f32 1.0, %v1303
        %v1305 = vmax.f32 %v1297, 0.0
        %v1306 = vmul.f32 %v1304, %v1305
        %v1307 = vpack.c.bf16 %v1306, %v1306
        %s1308 = smul.addr %s183, 2
        %s1309 = scalar_lea.vmem %s179, %s1308
        %vm1310 = vcmask 779264
        %1311 = vst.msk [vmem:[%s1309] sm:$0x3] %vm1310, %v1307
      $region33: #{_encoder_forward_nhwc.12} parent=27 // loop_footer
        %s187 = sadd.s32 1, %s183
      $region34: #{_encoder_forward_nhwc.12} parent=27 // loop_footer_branch
        %182 = sbr.rel target = $region30
      $region35: #{_encoder_forward_nhwc.12} parent=27 // loop_exit
        _
      %s1312 = smul.u32 4, %s18
      %p1313 = scmp.lt.s32.totalorder %s17, 1
      %s1314 = scalar_select %p1313, %s17, 1
      %p1315 = scmp.lt.s32.totalorder %s1312, 3
      %s1316 = scalar_select %p1315, %s1312, 3
      %s1317 = smul.addr %s1314, 4
      %s1318 = sadd.s32 %s1316, %s1317
      %s1319 = smul.addr %s1318, 2
      %s1320 = scalar_lea.vmem %s2, %s1319
      // Predicated region
      $region36: #{_encoder_forward_nhwc.12} parent=27 // pred_check
        %p1321 = pneg %p94
      $region37: #{_encoder_forward_nhwc.12} parent=27 // pred_check_branch
        %1323 = sbr.rel (%p1321) target = $region39
      $region38: #{_encoder_forward_nhwc.12} parent=27 // pred_region
        %s1324 = smul.u32 4, %s18
      $region39: #{_encoder_forward_nhwc.12} parent=27 // pred_fallthru
        _
    $region28: #{_encoder_forward_nhwc.12} parent=5 // pred_fallthru
      _
    %p1325 = scmp.le.s32.totalorder 2, %s8
    // Predicated region
    $region40: #{_encoder_forward_nhwc.12} parent=5 // pred_check
      %p1326 = pneg %p1325
    $region41: #{_encoder_forward_nhwc.12} parent=5 // pred_check_branch
      %1328 = sbr.rel (%p1326) target = $region43
    $region42: #{_encoder_forward_nhwc.12} parent=5 // pred_region
      %s1329 = ssub.s32 %s8, 2
      // Predicated region
      $region44: #{_encoder_forward_nhwc.12} parent=42 // pred_check
        %p1330 = pneg %p100
      $region45: #{_encoder_forward_nhwc.12} parent=42 // pred_check_branch
        %1332 = sbr.rel (%p1330) target = $region47
      $region46: #{_encoder_forward_nhwc.12} parent=42 // pred_region
        %s1333 = smul.u32 4, %s20
        %p1334 = scmp.lt.s32.totalorder %s19, 1
        %s1335 = scalar_select %p1334, %s19, 1
        %p1336 = scmp.lt.s32.totalorder %s1333, 3
        %s1337 = scalar_select %p1336, %s1333, 3
        %s1338 = smul.addr %s1335, 4
        %s1339 = sadd.s32 %s1337, %s1338
        %s1340 = smul.addr %s1339, 2
        %s1341 = scalar_lea.vmem %s2, %s1340
      $region47: #{_encoder_forward_nhwc.12} parent=42 // pred_fallthru
        _
    $region43: #{_encoder_forward_nhwc.12} parent=5 // pred_fallthru
      _
  $region6: #{_encoder_forward_nhwc.12} parent=0 // loop_footer
    %s12 = sadd.s32 1, %s8
  $region7: #{_encoder_forward_nhwc.12} parent=0 // loop_footer_branch
    %7 = sbr.rel target = $region3
  $region8: #{_encoder_forward_nhwc.12} parent=0 // loop_exit
    _

// kernel: _encoder_forward_nhwc.13
$region0: #{_encoder_forward_nhwc.13}
  #allocation0 [shape = 'u32[]', space=smem, size = 0x4, offset = 0x4, fixed_abs, tag = 'smem constant byte address 0x4 - core index']
  #allocation1 [shape = 'u32[144,128]{1,0:T(1,128)}', space=vmem, size = 0x12000, scoped, tag = 'internal scratch']
  %s0 = inlined_call_operand.vmem [shape: bf16[2,1,5,6,96], index: 0, kind: input, shape index: {}]
  %s1 = inlined_call_operand.vmem [shape: bf16[9,96,256], index: 1, kind: input, shape index: {}]
  %s2 = inlined_call_operand.vmem [shape: bf16[2,2,2,128], index: 2, kind: output, shape index: {}]
  %s3 = sld [smem:[#allocation0]]
  $region48: #{_encoder_forward_nhwc.13} parent=0
    _
  %s5 = ssub.s32 1, %s3
  %s6 = scalar_select 0, %s5, %s3
  loop: start=0, step=1, limit=4
  $region2: #{_encoder_forward_nhwc.13} parent=0 // loop_pre_header
    _
  $region3: #{_encoder_forward_nhwc.13} parent=0 // loop_header
    %s8 = sphi 0, %s12
    %p9 = scmp.ge.s32.totalorder %s8, 4
    %s15 = sphi 0, %s27
    %s16 = sphi 0, %s23
    %s17 = sphi 0, %s15
    %s18 = sphi 0, %s16
    %s19 = sphi 0, %s17
    %s20 = sphi 0, %s18
    %s32 = sphi 0, %s34
    %s35 = sphi 0, %s32
    %s36 = sphi 0, %s35
    %s52 = sphi 0, %s36
    %s56 = sphi 0, %s56
    %s58 = sphi 0, %s56
    %s59 = sphi 0, %s58
    %s73 = sphi 0, %s59
    %s81 = sphi 0, %s83
    %s84 = sphi 0, %s81
    %s85 = sphi 0, %s84
    %s101 = sphi 0, %s85
  $region4: #{_encoder_forward_nhwc.13} parent=0 // loop_header_branch
    %11 = sbr.rel (%p9) target = $region8
  $region5: #{_encoder_forward_nhwc.13} parent=0 // loop_body
    %s13 = ssub.s32 %s8, 1
    %s14 = ssub.s32 %s8, 2
    %s21 = sadd.s32 1, %s16
    %p22 = scmp.ge.s32.totalorder %s21, 1
    %s23 = scalar_select %p22, 0, %s21
    %s24 = sadd.s32 1, %s15
    %s25 = scalar_select %p22, %s24, %s15
    %p26 = scmp.ge.s32.totalorder %s25, 2
    %s27 = scalar_select %p26, 0, %s25
    %s28 = ssub.s32 %s15, %s27
    %s29 = ssub.s32 %s16, %s23
    %s30 = sor.u32 %s28, %s29
    %p31 = scmp.eq.s32.totalorder %s30, 0
    %s33 = sadd.s32 %s32, 1
    %s34 = scalar_select %p31, %s32, %s33
    %p37 = pneg %p31
    %p38 = scmp.eq.s32.totalorder %s8, 1
    %p39 = por %p37, %p38
    %p40 = scmp.ne.s32.totalorder %s32, %s35
    %p41 = scmp.eq.s32.totalorder %s8, 0
    %p42 = por %p40, %p41
    %p43 = scmp.ne.s32.totalorder %s32, %s35
    %p44 = scmp.eq.s32.totalorder %s13, 1
    %p45 = por %p43, %p44
    %p46 = scmp.ne.s32.totalorder %s35, %s36
    %p47 = scmp.eq.s32.totalorder %s13, 0
    %p48 = por %p46, %p47
    %p49 = scmp.ne.s32.totalorder %s35, %s36
    %p50 = scmp.eq.s32.totalorder %s14, 1
    %p51 = por %p49, %p50
    %p53 = scmp.ne.s32.totalorder %s36, %s52
    %p54 = scmp.eq.s32.totalorder %s14, 0
    %p55 = por %p53, %p54
    %s57 = sadd.s32 %s56, 1
    %p60 = scmp.eq.s32.totalorder %s8, 1
    %p61 = scmp.ne.s32.totalorder %s56, %s58
    %p62 = scmp.eq.s32.totalorder %s8, 0
    %p63 = por %p61, %p62
    %p64 = scmp.ne.s32.totalorder %s56, %s58
    %p65 = scmp.eq.s32.totalorder %s13, 1
    %p66 = por %p64, %p65
    %p67 = scmp.ne.s32.totalorder %s58, %s59
    %p68 = scmp.eq.s32.totalorder %s13, 0
    %p69 = por %p67, %p68
    %p70 = scmp.ne.s32.totalorder %s58, %s59
    %p71 = scmp.eq.s32.totalorder %s14, 1
    %p72 = por %p70, %p71
    %p74 = scmp.ne.s32.totalorder %s59, %s73
    %p75 = scmp.eq.s32.totalorder %s14, 0
    %p76 = por %p74, %p75
    %s77 = ssub.s32 %s15, %s27
    %s78 = ssub.s32 %s16, %s23
    %s79 = sor.u32 %s77, %s78
    %p80 = scmp.eq.s32.totalorder %s79, 0
    %s82 = sadd.s32 %s81, 1
    %s83 = scalar_select %p80, %s81, %s82
    %p86 = pneg %p80
    %p87 = scmp.eq.s32.totalorder %s8, 1
    %p88 = por %p86, %p87
    %p89 = scmp.ne.s32.totalorder %s81, %s84
    %p90 = scmp.eq.s32.totalorder %s8, 0
    %p91 = por %p89, %p90
    %p92 = scmp.ne.s32.totalorder %s81, %s84
    %p93 = scmp.eq.s32.totalorder %s13, 1
    %p94 = por %p92, %p93
    %p95 = scmp.ne.s32.totalorder %s84, %s85
    %p96 = scmp.eq.s32.totalorder %s13, 0
    %p97 = por %p95, %p96
    %p98 = scmp.ne.s32.totalorder %s84, %s85
    %p99 = scmp.eq.s32.totalorder %s14, 1
    %p100 = por %p98, %p99
    %p102 = scmp.ne.s32.totalorder %s85, %s101
    %p103 = scmp.eq.s32.totalorder %s14, 0
    %p104 = por %p102, %p103
    %p105 = scmp.le.s32.totalorder 1, %s8
    %p106 = scmp.lt.s32.totalorder %s8, 3
    %p107 = pnand %p105, %p106
    %p108 = pneg %p107
    // Predicated region
    $region9: #{_encoder_forward_nhwc.13} parent=5 // pred_check
      _
    $region10: #{_encoder_forward_nhwc.13} parent=5 // pred_check_branch
      %110 = sbr.rel (%p107) target = $region12
    $region11: #{_encoder_forward_nhwc.13} parent=5 // pred_region
      %s111 = ssub.s32 %s8, 1
      // Predicated region
      $region13: #{_encoder_forward_nhwc.13} parent=11 // pred_check
        %p112 = pneg %p69
      $region14: #{_encoder_forward_nhwc.13} parent=11 // pred_check_branch
        %114 = sbr.rel (%p112) target = $region16
      $region15: #{_encoder_forward_nhwc.13} parent=11 // pred_region
        _
      $region16: #{_encoder_forward_nhwc.13} parent=11 // pred_fallthru
        _
    $region12: #{_encoder_forward_nhwc.13} parent=5 // pred_fallthru
      _
    %p115 = scmp.lt.s32.totalorder %s8, 2
    // Predicated region
    $region17: #{_encoder_forward_nhwc.13} parent=5 // pred_check
      %p116 = pneg %p115
    $region18: #{_encoder_forward_nhwc.13} parent=5 // pred_check_branch
      %118 = sbr.rel (%p116) target = $region20
    $region19: #{_encoder_forward_nhwc.13} parent=5 // pred_region
      // Predicated region
      $region21: #{_encoder_forward_nhwc.13} parent=19 // pred_check
        %p119 = pneg %p42
      $region22: #{_encoder_forward_nhwc.13} parent=19 // pred_check_branch
        %121 = sbr.rel (%p119) target = $region24
      $region23: #{_encoder_forward_nhwc.13} parent=19 // pred_region
        %p122 = scmp.lt.s32.totalorder %s15, 1
        %s123 = scalar_select %p122, %s15, 1
        %p124 = scmp.lt.s32.totalorder %s16, 0
        %s125 = scalar_select %p124, %s16, 0
        %s126 = smul.addr %s125, 5
        %s127 = smul.addr %s123, 5
        %s128 = sadd.s32 %s126, %s127
        %s129 = smul.addr %s128, 4
        %s130 = scalar_lea.vmem %s0, %s129
      $region24: #{_encoder_forward_nhwc.13} parent=19 // pred_fallthru
        _
    $region20: #{_encoder_forward_nhwc.13} parent=5 // pred_fallthru
      _
    %p131 = scmp.le.s32.totalorder 1, %s8
    %p132 = scmp.lt.s32.totalorder %s8, 3
    %p133 = pnand %p131, %p132
    %p134 = pneg %p133
    // Predicated region
    $region25: #{_encoder_forward_nhwc.13} parent=5 // pred_check
      _
    $region26: #{_encoder_forward_nhwc.13} parent=5 // pred_check_branch
      %136 = sbr.rel (%p133) target = $region28
    $region27: #{_encoder_forward_nhwc.13} parent=5 // pred_region
      %s137 = ssub.s32 %s8, 1
      %p138 = scmp.lt.s32.totalorder %s17, 1
      %s139 = scalar_select %p138, %s17, 1
      %p140 = scmp.lt.s32.totalorder %s18, 0
      %s141 = scalar_select %p140, %s18, 0
      %s142 = smul.addr %s141, 5
      %s143 = smul.addr %s139, 5
      %s144 = sadd.s32 %s142, %s143
      %s145 = smul.addr %s144, 4
      %s146 = scalar_lea.vmem %s0, %s145
      %p147 = pneg %p48
      %p148 = pneg %p45
      %p149 = pneg %p69
      %p150 = pneg %p66
      %p151 = pneg %p97
      %p152 = pneg %p94
      %s153 = smul.u32 2, %s18
      %p154 = scmp.lt.s32.totalorder %s17, 1
      %s155 = scalar_select %p154, %s17, 1
      %p156 = scmp.lt.s32.totalorder %s153, 1
      %s157 = scalar_select %p156, %s153, 1
      %s158 = smul.addr %s155, 2
      %s159 = sadd.s32 %s157, %s158
      %s160 = scalar_lea.vmem %s2, %s159
      %p161 = scmp.lt.s32.totalorder %s17, 1
      %s162 = scalar_select %p161, %s17, 1
      %p163 = scmp.lt.s32.totalorder %s18, 0
      %s164 = scalar_select %p163, %s18, 0
      %s165 = smul.addr %s164, 5
      %s166 = smul.addr %s162, 5
      %s167 = sadd.s32 %s165, %s166
      %s168 = smul.addr %s167, 4
      %s169 = scalar_lea.vmem %s0, %s168
      %s170 = smul.u32 2, %s18
      %p171 = scmp.lt.s32.totalorder %s17, 1
      %s172 = scalar_select %p171, %s17, 1
      %p173 = scmp.lt.s32.totalorder %s170, 1
      %s174 = scalar_select %p173, %s170, 1
      %s175 = smul.addr %s172, 2
      %s176 = sadd.s32 %s174, %s175
      %s177 = scalar_lea.vmem %s2, %s176
      %s178 = smul.u32 2, %s18
      loop: start=0, step=1, limit=2
      $region29: #{_encoder_forward_nhwc.13} parent=27 // loop_pre_header
        _
      $region30: #{_encoder_forward_nhwc.13} parent=27 // loop_header
        %s181 = sphi 0, %s185
        %p182 = scmp.ge.s32.totalorder %s181, 2
      $region31: #{_encoder_forward_nhwc.13} parent=27 // loop_header_branch
        %184 = sbr.rel (%p182) target = $region35
      $region32: #{_encoder_forward_nhwc.13} parent=27 // loop_body
        %s186 = smul.u32 %s181, 2
        %s187 = smul.addr %s186, 4
        %s188 = scalar_lea.vmem %s169, %s187
        %v189 = vld [vmem:[%s188] sm:$0x7]
        %v190 = vld [vmem:[%s1] sm:$0xff]
        %v191 = vld [vmem:[%s1 + $0x8] sm:$0xff]
        %v192 = vld [vmem:[%s1 + $0x10] sm:$0xff]
        %v193 = vld [vmem:[%s1 + $0x18] sm:$0xff]
        %v194 = vld [vmem:[%s1 + $0x20] sm:$0xff]
        %v195 = vld [vmem:[%s1 + $0x28] sm:$0xff]
        %v196 = vld [vmem:[%s1 + $0x30] sm:$0xff]
        %v197 = vld [vmem:[%s1 + $0x38] sm:$0xff]
        %v198 = vld [vmem:[%s1 + $0x40] sm:$0xff]
        %v199 = vld [vmem:[%s1 + $0x48] sm:$0xff]
        %v200 = vld [vmem:[%s1 + $0x50] sm:$0xff]
        %v201 = vld [vmem:[%s1 + $0x58] sm:$0xff]
        %s202 = scalar_lea.vmem %s1, 96
        %v203 = vld [vmem:[%s202] sm:$0xff]
        %v204 = vld [vmem:[%s202 + $0x8] sm:$0xff]
        %v205 = vld [vmem:[%s202 + $0x10] sm:$0xff]
        %v206 = vld [vmem:[%s202 + $0x18] sm:$0xff]
        %v207 = vld [vmem:[%s202 + $0x20] sm:$0xff]
        %v208 = vld [vmem:[%s202 + $0x28] sm:$0xff]
        %v209 = vld [vmem:[%s202 + $0x30] sm:$0xff]
        %v210 = vld [vmem:[%s202 + $0x38] sm:$0xff]
        %v211 = vld [vmem:[%s202 + $0x40] sm:$0xff]
        %v212 = vld [vmem:[%s202 + $0x48] sm:$0xff]
        %v213 = vld [vmem:[%s202 + $0x50] sm:$0xff]
        %v214 = vld [vmem:[%s202 + $0x58] sm:$0xff]
        %v216 = vunpack.c.l.b16 %v189
        %v217 = vpack.c.b16 %v216, %v216
        %v219 = vshrl.u32 %v217, 16
        %v221 = vrot.slane %v219, 1
        %v222 = vshll.u32 %v217, 16
        %v224 = vrot.slane %v222, 2
        %v225 = vor.u32 %v221, %v224
        %v238 = vunpack.c.l.b16 %v203
        %v239 = vunpack.c.h.b16 %v203
        %v240 = vunpack.c.l.b16 %v204
        %v241 = vunpack.c.h.b16 %v204
        %v242 = vunpack.c.l.b16 %v205
        %v243 = vunpack.c.h.b16 %v205
        %v244 = vunpack.c.l.b16 %v206
        %v245 = vunpack.c.h.b16 %v206
        %v246 = vunpack.c.l.b16 %v207
        %v247 = vunpack.c.h.b16 %v207
        %v248 = vunpack.c.l.b16 %v208
        %v249 = vunpack.c.h.b16 %v208
        %v250 = vunpack.c.l.b16 %v209
        %v251 = vunpack.c.h.b16 %v209
        %v252 = vunpack.c.l.b16 %v210
        %v253 = vunpack.c.h.b16 %v210
        %v254 = vunpack.c.l.b16 %v211
        %v255 = vunpack.c.h.b16 %v211
        %v256 = vunpack.c.l.b16 %v212
        %v257 = vunpack.c.h.b16 %v212
        %v258 = vunpack.c.l.b16 %v213
        %v259 = vunpack.c.h.b16 %v213
        %v260 = vunpack.c.l.b16 %v214
        %v261 = vunpack.c.h.b16 %v214
        %v262 = vpack.c.b16 %v240, %v238
        %v263 = vpack.c.b16 %v241, %v239
        %v264 = vpack.c.b16 %v244, %v242
        %v265 = vpack.c.b16 %v245, %v243
        %v266 = vpack.c.b16 %v248, %v246
        %v267 = vpack.c.b16 %v249, %v247
        %v268 = vpack.c.b16 %v252, %v250
        %v269 = vpack.c.b16 %v253, %v251
        %v270 = vpack.c.b16 %v256, %v254
        %v271 = vpack.c.b16 %v257, %v255
        %v272 = vpack.c.b16 %v260, %v258
        %v273 = vpack.c.b16 %v261, %v259
        %vm286 = vcmask 785408
        %v288 = vsel %vm286, %v225, 0
        %290 = vmatprep.subr.bf16.mxu0 %v263
        %291 = vmatpush1.bf16.msra.mxu0 %v262
        %292 = vmatprep.subr.bf16.mxu0 %v265
        %293 = vmatpush1.bf16.msra.mxu0 %v264
        %294 = vmatprep.subr.bf16.mxu0 %v267
        %295 = vmatpush1.bf16.msra.mxu0 %v266
        %296 = vmatprep.subr.bf16.mxu0 %v269
        %297 = vmatpush1.bf16.msra.mxu0 %v268
        %298 = vmatprep.subr.bf16.mxu0 %v271
        %299 = vmatpush1.bf16.msra.mxu0 %v270
        %300 = vmatprep.subr.bf16.mxu0 %v273
        %301 = vmatpush1.bf16.msra.mxu0 %v272
        %302 = vmatprep.subr.bf16.mxu0 0
        %303 = vmatpush1.bf16.msra.mxu0 0
        %304 = vmatprep.subr.bf16.mxu0 0
        %305 = vmatpush1.bf16.msra.mxu0 0
        %306 = vmatprep.subr.bf16.mxu0 0
        %307 = vmatpush1.bf16.msra.mxu0 0
        %308 = vmatprep.subr.bf16.mxu0 0
        %309 = vmatpush1.bf16.msra.mxu0 0
        %310 = vmatprep.subr.bf16.mxu0 0
        %311 = vmatpush1.bf16.msra.mxu0 0
        %312 = vmatprep.subr.bf16.mxu0 0
        %313 = vmatpush1.bf16.msra.mxu0 0
        %314 = vmatprep.subr.bf16.mxu0 0
        %315 = vmatpush1.bf16.msra.mxu0 0
        %316 = vmatprep.subr.bf16.mxu0 0
        %317 = vmatpush1.bf16.msra.mxu0 0
        %318 = vmatprep.subr.bf16.mxu0 0
        %319 = vmatpush1.bf16.msra.mxu0 0
        %320 = vmatprep.subr.bf16.mxu0 0
        %321 = vmatpush1.bf16.msra.mxu0 0
        %322 = vmatprep.mubr.bf16.mxu0 0
        %323 = vmatmul.mubr.bf16.gmra.mrb[0].mxu0 %v288
        %v324 = vpop.f32.mrb[0].mxu0
        %v325 = vadd.f32 0.0, %v324
        %v326 = vpop.f32.mrb[0].mxu0
        %v327 = vadd.f32 0.0, %v326
        %v328 = vpop.f32.mrb[0].mxu0
        %v329 = vpop.f32.mrb[0].mxu0
        %330 = vdwg.mxu0
        %v343 = vunpack.c.l.b16 %v190
        %v344 = vunpack.c.h.b16 %v190
        %v345 = vunpack.c.l.b16 %v191
        %v346 = vunpack.c.h.b16 %v191
        %v347 = vunpack.c.l.b16 %v192
        %v348 = vunpack.c.h.b16 %v192
        %v349 = vunpack.c.l.b16 %v193
        %v350 = vunpack.c.h.b16 %v193
        %v351 = vunpack.c.l.b16 %v194
        %v352 = vunpack.c.h.b16 %v194
        %v353 = vunpack.c.l.b16 %v195
        %v354 = vunpack.c.h.b16 %v195
        %v355 = vunpack.c.l.b16 %v196
        %v356 = vunpack.c.h.b16 %v196
        %v357 = vunpack.c.l.b16 %v197
        %v358 = vunpack.c.h.b16 %v197
        %v359 = vunpack.c.l.b16 %v198
        %v360 = vunpack.c.h.b16 %v198
        %v361 = vunpack.c.l.b16 %v199
        %v362 = vunpack.c.h.b16 %v199
        %v363 = vunpack.c.l.b16 %v200
        %v364 = vunpack.c.h.b16 %v200
        %v365 = vunpack.c.l.b16 %v201
        %v366 = vunpack.c.h.b16 %v201
        %v367 = vpack.c.b16 %v345, %v343
        %v368 = vpack.c.b16 %v346, %v344
        %v369 = vpack.c.b16 %v349, %v347
        %v370 = vpack.c.b16 %v350, %v348
        %v371 = vpack.c.b16 %v353, %v351
        %v372 = vpack.c.b16 %v354, %v352
        %v373 = vpack.c.b16 %v357, %v355
        %v374 = vpack.c.b16 %v358, %v356
        %v375 = vpack.c.b16 %v361, %v359
        %v376 = vpack.c.b16 %v362, %v360
        %v377 = vpack.c.b16 %v365, %v363
        %v378 = vpack.c.b16 %v366, %v364
        %v392 = vsel %vm286, %v189, 0
        %394 = vmatprep.subr.bf16.mxu0 %v368
        %395 = vmatpush1.bf16.msra.mxu0 %v367
        %396 = vmatprep.subr.bf16.mxu0 %v370
        %397 = vmatpush1.bf16.msra.mxu0 %v369
        %398 = vmatprep.subr.bf16.mxu0 %v372
        %399 = vmatpush1.bf16.msra.mxu0 %v371
        %400 = vmatprep.subr.bf16.mxu0 %v374
        %401 = vmatpush1.bf16.msra.mxu0 %v373
        %402 = vmatprep.subr.bf16.mxu0 %v376
        %403 = vmatpush1.bf16.msra.mxu0 %v375
        %404 = vmatprep.subr.bf16.mxu0 %v378
        %405 = vmatpush1.bf16.msra.mxu0 %v377
        %406 = vmatprep.subr.bf16.mxu0 0
        %407 = vmatpush1.bf16.msra.mxu0 0
        %408 = vmatprep.subr.bf16.mxu0 0
        %409 = vmatpush1.bf16.msra.mxu0 0
        %410 = vmatprep.subr.bf16.mxu0 0
        %411 = vmatpush1.bf16.msra.mxu0 0
        %412 = vmatprep.subr.bf16.mxu0 0
        %413 = vmatpush1.bf16.msra.mxu0 0
        %414 = vmatprep.subr.bf16.mxu0 0
        %415 = vmatpush1.bf16.msra.mxu0 0
        %416 = vmatprep.subr.bf16.mxu0 0
        %417 = vmatpush1.bf16.msra.mxu0 0
        %418 = vmatprep.subr.bf16.mxu0 0
        %419 = vmatpush1.bf16.msra.mxu0 0
        %420 = vmatprep.subr.bf16.mxu0 0
        %421 = vmatpush1.bf16.msra.mxu0 0
        %422 = vmatprep.subr.bf16.mxu0 0
        %423 = vmatpush1.bf16.msra.mxu0 0
        %424 = vmatprep.subr.bf16.mxu0 0
        %425 = vmatpush1.bf16.msra.mxu0 0
        %426 = vmatprep.mubr.bf16.mxu0 0
        %427 = vmatmul.mubr.bf16.gmra.mrb[0].mxu0 %v392
        %v428 = vpop.f32.mrb[0].mxu0
        %v429 = vadd.f32 %v325, %v428
        %v430 = vpop.f32.mrb[0].mxu0
        %v431 = vadd.f32 %v327, %v430
        %v432 = vpop.f32.mrb[0].mxu0
        %v433 = vpop.f32.mrb[0].mxu0
        %434 = vdwg.mxu0
        %s435 = scalar_lea.vmem %s1, 192
        %v436 = vld [vmem:[%s435] sm:$0xff]
        %v437 = vld [vmem:[%s435 + $0x8] sm:$0xff]
        %v438 = vld [vmem:[%s435 + $0x10] sm:$0xff]
        %v439 = vld [vmem:[%s435 + $0x18] sm:$0xff]
        %v440 = vld [vmem:[%s435 + $0x20] sm:$0xff]
        %v441 = vld [vmem:[%s435 + $0x28] sm:$0xff]
        %v442 = vld [vmem:[%s435 + $0x30] sm:$0xff]
        %v443 = vld [vmem:[%s435 + $0x38] sm:$0xff]
        %v444 = vld [vmem:[%s435 + $0x40] sm:$0xff]
        %v445 = vld [vmem:[%s435 + $0x48] sm:$0xff]
        %v446 = vld [vmem:[%s435 + $0x50] sm:$0xff]
        %v447 = vld [vmem:[%s435 + $0x58] sm:$0xff]
        %v448 = vrot.slane %v222, 1
        %v449 = vor.u32 %v219, %v448
        %v462 = vunpack.c.l.b16 %v436
        %v463 = vunpack.c.h.b16 %v436
        %v464 = vunpack.c.l.b16 %v437
        %v465 = vunpack.c.h.b16 %v437
        %v466 = vunpack.c.l.b16 %v438
        %v467 = vunpack.c.h.b16 %v438
        %v468 = vunpack.c.l.b16 %v439
        %v469 = vunpack.c.h.b16 %v439
        %v470 = vunpack.c.l.b16 %v440
        %v471 = vunpack.c.h.b16 %v440
        %v472 = vunpack.c.l.b16 %v441
        %v473 = vunpack.c.h.b16 %v441
        %v474 = vunpack.c.l.b16 %v442
        %v475 = vunpack.c.h.b16 %v442
        %v476 = vunpack.c.l.b16 %v443
        %v477 = vunpack.c.h.b16 %v443
        %v478 = vunpack.c.l.b16 %v444
        %v479 = vunpack.c.h.b16 %v444
        %v480 = vunpack.c.l.b16 %v445
        %v481 = vunpack.c.h.b16 %v445
        %v482 = vunpack.c.l.b16 %v446
        %v483 = vunpack.c.h.b16 %v446
        %v484 = vunpack.c.l.b16 %v447
        %v485 = vunpack.c.h.b16 %v447
        %v486 = vpack.c.b16 %v464, %v462
        %v487 = vpack.c.b16 %v465, %v463
        %v488 = vpack.c.b16 %v468, %v466
        %v489 = vpack.c.b16 %v469, %v467
        %v490 = vpack.c.b16 %v472, %v470
        %v491 = vpack.c.b16 %v473, %v471
        %v492 = vpack.c.b16 %v476, %v474
        %v493 = vpack.c.b16 %v477, %v475
        %v494 = vpack.c.b16 %v480, %v478
        %v495 = vpack.c.b16 %v481, %v479
        %v496 = vpack.c.b16 %v484, %v482
        %v497 = vpack.c.b16 %v485, %v483
        %v511 = vsel %vm286, %v449, 0
        %513 = vmatprep.subr.bf16.mxu0 %v487
        %514 = vmatpush1.bf16.msra.mxu0 %v486
        %515 = vmatprep.subr.bf16.mxu0 %v489
        %516 = vmatpush1.bf16.msra.mxu0 %v488
        %517 = vmatprep.subr.bf16.mxu0 %v491
        %518 = vmatpush1.bf16.msra.mxu0 %v490
        %519 = vmatprep.subr.bf16.mxu0 %v493
        %520 = vmatpush1.bf16.msra.mxu0 %v492
        %521 = vmatprep.subr.bf16.mxu0 %v495
        %522 = vmatpush1.bf16.msra.mxu0 %v494
        %523 = vmatprep.subr.bf16.mxu0 %v497
        %524 = vmatpush1.bf16.msra.mxu0 %v496
        %525 = vmatprep.subr.bf16.mxu0 0
        %526 = vmatpush1.bf16.msra.mxu0 0
        %527 = vmatprep.subr.bf16.mxu0 0
        %528 = vmatpush1.bf16.msra.mxu0 0
        %529 = vmatprep.subr.bf16.mxu0 0
        %530 = vmatpush1.bf16.msra.mxu0 0
        %531 = vmatprep.subr.bf16.mxu0 0
        %532 = vmatpush1.bf16.msra.mxu0 0
        %533 = vmatprep.subr.bf16.mxu0 0
        %534 = vmatpush1.bf16.msra.mxu0 0
        %535 = vmatprep.subr.bf16.mxu0 0
        %536 = vmatpush1.bf16.msra.mxu0 0
        %537 = vmatprep.subr.bf16.mxu0 0
        %538 = vmatpush1.bf16.msra.mxu0 0
        %539 = vmatprep.subr.bf16.mxu0 0
        %540 = vmatpush1.bf16.msra.mxu0 0
        %541 = vmatprep.subr.bf16.mxu0 0
        %542 = vmatpush1.bf16.msra.mxu0 0
        %543 = vmatprep.subr.bf16.mxu0 0
        %544 = vmatpush1.bf16.msra.mxu0 0
        %545 = vmatprep.mubr.bf16.mxu0 0
        %546 = vmatmul.mubr.bf16.gmra.mrb[0].mxu0 %v511
        %v547 = vpop.f32.mrb[0].mxu0
        %v548 = vadd.f32 0.0, %v547
        %v549 = vpop.f32.mrb[0].mxu0
        %v550 = vadd.f32 0.0, %v549
        %v551 = vpop.f32.mrb[0].mxu0
        %v552 = vpop.f32.mrb[0].mxu0
        %553 = vdwg.mxu0
        %v554 = vadd.f32 %v429, %v548
        %v555 = vadd.f32 %v431, %v550
        %s556 = sadd.s32 %s186, 1
        %s557 = smul.addr %s556, 4
        %s558 = scalar_lea.vmem %s169, %s557
        %v559 = vld [vmem:[%s558] sm:$0x7]
        %s560 = scalar_lea.vmem %s1, 288
        %v561 = vld [vmem:[%s560] sm:$0xff]
        %v562 = vld [vmem:[%s560 + $0x8] sm:$0xff]
        %v563 = vld [vmem:[%s560 + $0x10] sm:$0xff]
        %v564 = vld [vmem:[%s560 + $0x18] sm:$0xff]
        %v565 = vld [vmem:[%s560 + $0x20] sm:$0xff]
        %v566 = vld [vmem:[%s560 + $0x28] sm:$0xff]
        %v567 = vld [vmem:[%s560 + $0x30] sm:$0xff]
        %v568 = vld [vmem:[%s560 + $0x38] sm:$0xff]
        %v569 = vld [vmem:[%s560 + $0x40] sm:$0xff]
        %v570 = vld [vmem:[%s560 + $0x48] sm:$0xff]
        %v571 = vld [vmem:[%s560 + $0x50] sm:$0xff]
        %v572 = vld [vmem:[%s560 + $0x58] sm:$0xff]
        %v585 = vunpack.c.l.b16 %v561
        %v586 = vunpack.c.h.b16 %v561
        %v587 = vunpack.c.l.b16 %v562
        %v588 = vunpack.c.h.b16 %v562
        %v589 = vunpack.c.l.b16 %v563
        %v590 = vunpack.c.h.b16 %v563
        %v591 = vunpack.c.l.b16 %v564
        %v592 = vunpack.c.h.b16 %v564
        %v593 = vunpack.c.l.b16 %v565
        %v594 = vunpack.c.h.b16 %v565
        %v595 = vunpack.c.l.b16 %v566
        %v596 = vunpack.c.h.b16 %v566
        %v597 = vunpack.c.l.b16 %v567
        %v598 = vunpack.c.h.b16 %v567
        %v599 = vunpack.c.l.b16 %v568
        %v600 = vunpack.c.h.b16 %v568
        %v601 = vunpack.c.l.b16 %v569
        %v602 = vunpack.c.h.b16 %v569
        %v603 = vunpack.c.l.b16 %v570
        %v604 = vunpack.c.h.b16 %v570
        %v605 = vunpack.c.l.b16 %v571
        %v606 = vunpack.c.h.b16 %v571
        %v607 = vunpack.c.l.b16 %v572
        %v608 = vunpack.c.h.b16 %v572
        %v609 = vpack.c.b16 %v587, %v585
        %v610 = vpack.c.b16 %v588, %v586
        %v611 = vpack.c.b16 %v591, %v589
        %v612 = vpack.c.b16 %v592, %v590
        %v613 = vpack.c.b16 %v595, %v593
        %v614 = vpack.c.b16 %v596, %v594
        %v615 = vpack.c.b16 %v599, %v597
        %v616 = vpack.c.b16 %v600, %v598
        %v617 = vpack.c.b16 %v603, %v601
        %v618 = vpack.c.b16 %v604, %v602
        %v619 = vpack.c.b16 %v607, %v605
        %v620 = vpack.c.b16 %v608, %v606
        %v634 = vsel %vm286, %v559, 0
        %636 = vmatprep.subr.bf16.mxu0 %v610
        %637 = vmatpush1.bf16.msra.mxu0 %v609
        %638 = vmatprep.subr.bf16.mxu0 %v612
        %639 = vmatpush1.bf16.msra.mxu0 %v611
        %640 = vmatprep.subr.bf16.mxu0 %v614
        %641 = vmatpush1.bf16.msra.mxu0 %v613
        %642 = vmatprep.subr.bf16.mxu0 %v616
        %643 = vmatpush1.bf16.msra.mxu0 %v615
        %644 = vmatprep.subr.bf16.mxu0 %v618
        %645 = vmatpush1.bf16.msra.mxu0 %v617
        %646 = vmatprep.subr.bf16.mxu0 %v620
        %647 = vmatpush1.bf16.msra.mxu0 %v619
        %648 = vmatprep.subr.bf16.mxu0 0
        %649 = vmatpush1.bf16.msra.mxu0 0
        %650 = vmatprep.subr.bf16.mxu0 0
        %651 = vmatpush1.bf16.msra.mxu0 0
        %652 = vmatprep.subr.bf16.mxu0 0
        %653 = vmatpush1.bf16.msra.mxu0 0
        %654 = vmatprep.subr.bf16.mxu0 0
        %655 = vmatpush1.bf16.msra.mxu0 0
        %656 = vmatprep.subr.bf16.mxu0 0
        %657 = vmatpush1.bf16.msra.mxu0 0
        %658 = vmatprep.subr.bf16.mxu0 0
        %659 = vmatpush1.bf16.msra.mxu0 0
        %660 = vmatprep.subr.bf16.mxu0 0
        %661 = vmatpush1.bf16.msra.mxu0 0
        %662 = vmatprep.subr.bf16.mxu0 0
        %663 = vmatpush1.bf16.msra.mxu0 0
        %664 = vmatprep.subr.bf16.mxu0 0
        %665 = vmatpush1.bf16.msra.mxu0 0
        %666 = vmatprep.subr.bf16.mxu0 0
        %667 = vmatpush1.bf16.msra.mxu0 0
        %668 = vmatprep.mubr.bf16.mxu0 0
        %669 = vmatmul.mubr.bf16.gmra.mrb[0].mxu0 %v634
        %v670 = vpop.f32.mrb[0].mxu0
        %v671 = vadd.f32 0.0, %v670
        %v672 = vpop.f32.mrb[0].mxu0
        %v673 = vadd.f32 0.0, %v672
        %v674 = vpop.f32.mrb[0].mxu0
        %v675 = vpop.f32.mrb[0].mxu0
        %676 = vdwg.mxu0
        %v677 = vadd.f32 %v554, %v671
        %v678 = vadd.f32 %v555, %v673
        %s679 = scalar_lea.vmem %s1, 384
        %v680 = vld [vmem:[%s679] sm:$0xff]
        %v681 = vld [vmem:[%s679 + $0x8] sm:$0xff]
        %v682 = vld [vmem:[%s679 + $0x10] sm:$0xff]
        %v683 = vld [vmem:[%s679 + $0x18] sm:$0xff]
        %v684 = vld [vmem:[%s679 + $0x20] sm:$0xff]
        %v685 = vld [vmem:[%s679 + $0x28] sm:$0xff]
        %v686 = vld [vmem:[%s679 + $0x30] sm:$0xff]
        %v687 = vld [vmem:[%s679 + $0x38] sm:$0xff]
        %v688 = vld [vmem:[%s679 + $0x40] sm:$0xff]
        %v689 = vld [vmem:[%s679 + $0x48] sm:$0xff]
        %v690 = vld [vmem:[%s679 + $0x50] sm:$0xff]
        %v691 = vld [vmem:[%s679 + $0x58] sm:$0xff]
        %v693 = vunpack.c.l.b16 %v559
        %v694 = vpack.c.b16 %v693, %v693
        %v696 = vshrl.u32 %v694, 16
        %v698 = vrot.slane %v696, 1
        %v699 = vshll.u32 %v694, 16
        %v701 = vrot.slane %v699, 2
        %v702 = vor.u32 %v698, %v701
        %v715 = vunpack.c.l.b16 %v680
        %v716 = vunpack.c.h.b16 %v680
        %v717 = vunpack.c.l.b16 %v681
        %v718 = vunpack.c.h.b16 %v681
        %v719 = vunpack.c.l.b16 %v682
        %v720 = vunpack.c.h.b16 %v682
        %v721 = vunpack.c.l.b16 %v683
        %v722 = vunpack.c.h.b16 %v683
        %v723 = vunpack.c.l.b16 %v684
        %v724 = vunpack.c.h.b16 %v684
        %v725 = vunpack.c.l.b16 %v685
        %v726 = vunpack.c.h.b16 %v685
        %v727 = vunpack.c.l.b16 %v686
        %v728 = vunpack.c.h.b16 %v686
        %v729 = vunpack.c.l.b16 %v687
        %v730 = vunpack.c.h.b16 %v687
        %v731 = vunpack.c.l.b16 %v688
        %v732 = vunpack.c.h.b16 %v688
        %v733 = vunpack.c.l.b16 %v689
        %v734 = vunpack.c.h.b16 %v689
        %v735 = vunpack.c.l.b16 %v690
        %v736 = vunpack.c.h.b16 %v690
        %v737 = vunpack.c.l.b16 %v691
        %v738 = vunpack.c.h.b16 %v691
        %v739 = vpack.c.b16 %v717, %v715
        %v740 = vpack.c.b16 %v718, %v716
        %v741 = vpack.c.b16 %v721, %v719
        %v742 = vpack.c.b16 %v722, %v720
        %v743 = vpack.c.b16 %v725, %v723
        %v744 = vpack.c.b16 %v726, %v724
        %v745 = vpack.c.b16 %v729, %v727
        %v746 = vpack.c.b16 %v730, %v728
        %v747 = vpack.c.b16 %v733, %v731
        %v748 = vpack.c.b16 %v734, %v732
        %v749 = vpack.c.b16 %v737, %v735
        %v750 = vpack.c.b16 %v738, %v736
        %v764 = vsel %vm286, %v702, 0
        %766 = vmatprep.subr.bf16.mxu0 %v740
        %767 = vmatpush1.bf16.msra.mxu0 %v739
        %768 = vmatprep.subr.bf16.mxu0 %v742
        %769 = vmatpush1.bf16.msra.mxu0 %v741
        %770 = vmatprep.subr.bf16.mxu0 %v744
        %771 = vmatpush1.bf16.msra.mxu0 %v743
        %772 = vmatprep.subr.bf16.mxu0 %v746
        %773 = vmatpush1.bf16.msra.mxu0 %v745
        %774 = vmatprep.subr.bf16.mxu0 %v748
        %775 = vmatpush1.bf16.msra.mxu0 %v747
        %776 = vmatprep.subr.bf16.mxu0 %v750
        %777 = vmatpush1.bf16.msra.mxu0 %v749
        %778 = vmatprep.subr.bf16.mxu0 0
        %779 = vmatpush1.bf16.msra.mxu0 0
        %780 = vmatprep.subr.bf16.mxu0 0
        %781 = vmatpush1.bf16.msra.mxu0 0
        %782 = vmatprep.subr.bf16.mxu0 0
        %783 = vmatpush1.bf16.msra.mxu0 0
        %784 = vmatprep.subr.bf16.mxu0 0
        %785 = vmatpush1.bf16.msra.mxu0 0
        %786 = vmatprep.subr.bf16.mxu0 0
        %787 = vmatpush1.bf16.msra.mxu0 0
        %788 = vmatprep.subr.bf16.mxu0 0
        %789 = vmatpush1.bf16.msra.mxu0 0
        %790 = vmatprep.subr.bf16.mxu0 0
        %791 = vmatpush1.bf16.msra.mxu0 0
        %792 = vmatprep.subr.bf16.mxu0 0
        %793 = vmatpush1.bf16.msra.mxu0 0
        %794 = vmatprep.subr.bf16.mxu0 0
        %795 = vmatpush1.bf16.msra.mxu0 0
        %796 = vmatprep.subr.bf16.mxu0 0
        %797 = vmatpush1.bf16.msra.mxu0 0
        %798 = vmatprep.mubr.bf16.mxu0 0
        %799 = vmatmul.mubr.bf16.gmra.mrb[0].mxu0 %v764
        %v800 = vpop.f32.mrb[0].mxu0
        %v801 = vadd.f32 0.0, %v800
        %v802 = vpop.f32.mrb[0].mxu0
        %v803 = vadd.f32 0.0, %v802
        %v804 = vpop.f32.mrb[0].mxu0
        %v805 = vpop.f32.mrb[0].mxu0
        %806 = vdwg.mxu0
        %v807 = vadd.f32 %v677, %v801
        %v808 = vadd.f32 %v678, %v803
        %s809 = scalar_lea.vmem %s1, 480
        %v810 = vld [vmem:[%s809] sm:$0xff]
        %v811 = vld [vmem:[%s809 + $0x8] sm:$0xff]
        %v812 = vld [vmem:[%s809 + $0x10] sm:$0xff]
        %v813 = vld [vmem:[%s809 + $0x18] sm:$0xff]
        %v814 = vld [vmem:[%s809 + $0x20] sm:$0xff]
        %v815 = vld [vmem:[%s809 + $0x28] sm:$0xff]
        %v816 = vld [vmem:[%s809 + $0x30] sm:$0xff]
        %v817 = vld [vmem:[%s809 + $0x38] sm:$0xff]
        %v818 = vld [vmem:[%s809 + $0x40] sm:$0xff]
        %v819 = vld [vmem:[%s809 + $0x48] sm:$0xff]
        %v820 = vld [vmem:[%s809 + $0x50] sm:$0xff]
        %v821 = vld [vmem:[%s809 + $0x58] sm:$0xff]
        %v822 = vrot.slane %v699, 1
        %v823 = vor.u32 %v696, %v822
        %v836 = vunpack.c.l.b16 %v810
        %v837 = vunpack.c.h.b16 %v810
        %v838 = vunpack.c.l.b16 %v811
        %v839 = vunpack.c.h.b16 %v811
        %v840 = vunpack.c.l.b16 %v812
        %v841 = vunpack.c.h.b16 %v812
        %v842 = vunpack.c.l.b16 %v813
        %v843 = vunpack.c.h.b16 %v813
        %v844 = vunpack.c.l.b16 %v814
        %v845 = vunpack.c.h.b16 %v814
        %v846 = vunpack.c.l.b16 %v815
        %v847 = vunpack.c.h.b16 %v815
        %v848 = vunpack.c.l.b16 %v816
        %v849 = vunpack.c.h.b16 %v816
        %v850 = vunpack.c.l.b16 %v817
        %v851 = vunpack.c.h.b16 %v817
        %v852 = vunpack.c.l.b16 %v818
        %v853 = vunpack.c.h.b16 %v818
        %v854 = vunpack.c.l.b16 %v819
        %v855 = vunpack.c.h.b16 %v819
        %v856 = vunpack.c.l.b16 %v820
        %v857 = vunpack.c.h.b16 %v820
        %v858 = vunpack.c.l.b16 %v821
        %v859 = vunpack.c.h.b16 %v821
        %v860 = vpack.c.b16 %v838, %v836
        %v861 = vpack.c.b16 %v839, %v837
        %v862 = vpack.c.b16 %v842, %v840
        %v863 = vpack.c.b16 %v843, %v841
        %v864 = vpack.c.b16 %v846, %v844
        %v865 = vpack.c.b16 %v847, %v845
        %v866 = vpack.c.b16 %v850, %v848
        %v867 = vpack.c.b16 %v851, %v849
        %v868 = vpack.c.b16 %v854, %v852
        %v869 = vpack.c.b16 %v855, %v853
        %v870 = vpack.c.b16 %v858, %v856
        %v871 = vpack.c.b16 %v859, %v857
        %v885 = vsel %vm286, %v823, 0
        %887 = vmatprep.subr.bf16.mxu0 %v861
        %888 = vmatpush1.bf16.msra.mxu0 %v860
        %889 = vmatprep.subr.bf16.mxu0 %v863
        %890 = vmatpush1.bf16.msra.mxu0 %v862
        %891 = vmatprep.subr.bf16.mxu0 %v865
        %892 = vmatpush1.bf16.msra.mxu0 %v864
        %893 = vmatprep.subr.bf16.mxu0 %v867
        %894 = vmatpush1.bf16.msra.mxu0 %v866
        %895 = vmatprep.subr.bf16.mxu0 %v869
        %896 = vmatpush1.bf16.msra.mxu0 %v868
        %897 = vmatprep.subr.bf16.mxu0 %v871
        %898 = vmatpush1.bf16.msra.mxu0 %v870
        %899 = vmatprep.subr.bf16.mxu0 0
        %900 = vmatpush1.bf16.msra.mxu0 0
        %901 = vmatprep.subr.bf16.mxu0 0
        %902 = vmatpush1.bf16.msra.mxu0 0
        %903 = vmatprep.subr.bf16.mxu0 0
        %904 = vmatpush1.bf16.msra.mxu0 0
        %905 = vmatprep.subr.bf16.mxu0 0
        %906 = vmatpush1.bf16.msra.mxu0 0
        %907 = vmatprep.subr.bf16.mxu0 0
        %908 = vmatpush1.bf16.msra.mxu0 0
        %909 = vmatprep.subr.bf16.mxu0 0
        %910 = vmatpush1.bf16.msra.mxu0 0
        %911 = vmatprep.subr.bf16.mxu0 0
        %912 = vmatpush1.bf16.msra.mxu0 0
        %913 = vmatprep.subr.bf16.mxu0 0
        %914 = vmatpush1.bf16.msra.mxu0 0
        %915 = vmatprep.subr.bf16.mxu0 0
        %916 = vmatpush1.bf16.msra.mxu0 0
        %917 = vmatprep.subr.bf16.mxu0 0
        %918 = vmatpush1.bf16.msra.mxu0 0
        %919 = vmatprep.mubr.bf16.mxu0 0
        %920 = vmatmul.mubr.bf16.gmra.mrb[0].mxu0 %v885
        %v921 = vpop.f32.mrb[0].mxu0
        %v922 = vadd.f32 0.0, %v921
        %v923 = vpop.f32.mrb[0].mxu0
        %v924 = vadd.f32 0.0, %v923
        %v925 = vpop.f32.mrb[0].mxu0
        %v926 = vpop.f32.mrb[0].mxu0
        %927 = vdwg.mxu0
        %v928 = vadd.f32 %v807, %v922
        %v929 = vadd.f32 %v808, %v924
        %s930 = sadd.s32 %s186, 2
        %s931 = smul.addr %s930, 4
        %s932 = scalar_lea.vmem %s169, %s931
        %v933 = vld [vmem:[%s932] sm:$0x7]
        %s934 = scalar_lea.vmem %s1, 576
        %v935 = vld [vmem:[%s934] sm:$0xff]
        %v936 = vld [vmem:[%s934 + $0x8] sm:$0xff]
        %v937 = vld [vmem:[%s934 + $0x10] sm:$0xff]
        %v938 = vld [vmem:[%s934 + $0x18] sm:$0xff]
        %v939 = vld [vmem:[%s934 + $0x20] sm:$0xff]
        %v940 = vld [vmem:[%s934 + $0x28] sm:$0xff]
        %v941 = vld [vmem:[%s934 + $0x30] sm:$0xff]
        %v942 = vld [vmem:[%s934 + $0x38] sm:$0xff]
        %v943 = vld [vmem:[%s934 + $0x40] sm:$0xff]
        %v944 = vld [vmem:[%s934 + $0x48] sm:$0xff]
        %v945 = vld [vmem:[%s934 + $0x50] sm:$0xff]
        %v946 = vld [vmem:[%s934 + $0x58] sm:$0xff]
        %v959 = vunpack.c.l.b16 %v935
        %v960 = vunpack.c.h.b16 %v935
        %v961 = vunpack.c.l.b16 %v936
        %v962 = vunpack.c.h.b16 %v936
        %v963 = vunpack.c.l.b16 %v937
        %v964 = vunpack.c.h.b16 %v937
        %v965 = vunpack.c.l.b16 %v938
        %v966 = vunpack.c.h.b16 %v938
        %v967 = vunpack.c.l.b16 %v939
        %v968 = vunpack.c.h.b16 %v939
        %v969 = vunpack.c.l.b16 %v940
        %v970 = vunpack.c.h.b16 %v940
        %v971 = vunpack.c.l.b16 %v941
        %v972 = vunpack.c.h.b16 %v941
        %v973 = vunpack.c.l.b16 %v942
        %v974 = vunpack.c.h.b16 %v942
        %v975 = vunpack.c.l.b16 %v943
        %v976 = vunpack.c.h.b16 %v943
        %v977 = vunpack.c.l.b16 %v944
        %v978 = vunpack.c.h.b16 %v944
        %v979 = vunpack.c.l.b16 %v945
        %v980 = vunpack.c.h.b16 %v945
        %v981 = vunpack.c.l.b16 %v946
        %v982 = vunpack.c.h.b16 %v946
        %v983 = vpack.c.b16 %v961, %v959
        %v984 = vpack.c.b16 %v962, %v960
        %v985 = vpack.c.b16 %v965, %v963
        %v986 = vpack.c.b16 %v966, %v964
        %v987 = vpack.c.b16 %v969, %v967
        %v988 = vpack.c.b16 %v970, %v968
        %v989 = vpack.c.b16 %v973, %v971
        %v990 = vpack.c.b16 %v974, %v972
        %v991 = vpack.c.b16 %v977, %v975
        %v992 = vpack.c.b16 %v978, %v976
        %v993 = vpack.c.b16 %v981, %v979
        %v994 = vpack.c.b16 %v982, %v980
        %v1008 = vsel %vm286, %v933, 0
        %1010 = vmatprep.subr.bf16.mxu0 %v984
        %1011 = vmatpush1.bf16.msra.mxu0 %v983
        %1012 = vmatprep.subr.bf16.mxu0 %v986
        %1013 = vmatpush1.bf16.msra.mxu0 %v985
        %1014 = vmatprep.subr.bf16.mxu0 %v988
        %1015 = vmatpush1.bf16.msra.mxu0 %v987
        %1016 = vmatprep.subr.bf16.mxu0 %v990
        %1017 = vmatpush1.bf16.msra.mxu0 %v989
        %1018 = vmatprep.subr.bf16.mxu0 %v992
        %1019 = vmatpush1.bf16.msra.mxu0 %v991
        %1020 = vmatprep.subr.bf16.mxu0 %v994
        %1021 = vmatpush1.bf16.msra.mxu0 %v993
        %1022 = vmatprep.subr.bf16.mxu0 0
        %1023 = vmatpush1.bf16.msra.mxu0 0
        %1024 = vmatprep.subr.bf16.mxu0 0
        %1025 = vmatpush1.bf16.msra.mxu0 0
        %1026 = vmatprep.subr.bf16.mxu0 0
        %1027 = vmatpush1.bf16.msra.mxu0 0
        %1028 = vmatprep.subr.bf16.mxu0 0
        %1029 = vmatpush1.bf16.msra.mxu0 0
        %1030 = vmatprep.subr.bf16.mxu0 0
        %1031 = vmatpush1.bf16.msra.mxu0 0
        %1032 = vmatprep.subr.bf16.mxu0 0
        %1033 = vmatpush1.bf16.msra.mxu0 0
        %1034 = vmatprep.subr.bf16.mxu0 0
        %1035 = vmatpush1.bf16.msra.mxu0 0
        %1036 = vmatprep.subr.bf16.mxu0 0
        %1037 = vmatpush1.bf16.msra.mxu0 0
        %1038 = vmatprep.subr.bf16.mxu0 0
        %1039 = vmatpush1.bf16.msra.mxu0 0
        %1040 = vmatprep.subr.bf16.mxu0 0
        %1041 = vmatpush1.bf16.msra.mxu0 0
        %1042 = vmatprep.mubr.bf16.mxu0 0
        %1043 = vmatmul.mubr.bf16.gmra.mrb[0].mxu0 %v1008
        %v1044 = vpop.f32.mrb[0].mxu0
        %v1045 = vadd.f32 0.0, %v1044
        %v1046 = vpop.f32.mrb[0].mxu0
        %v1047 = vadd.f32 0.0, %v1046
        %v1048 = vpop.f32.mrb[0].mxu0
        %v1049 = vpop.f32.mrb[0].mxu0
        %1050 = vdwg.mxu0
        %v1051 = vadd.f32 %v928, %v1045
        %v1052 = vadd.f32 %v929, %v1047
        %s1053 = scalar_lea.vmem %s1, 672
        %v1054 = vld [vmem:[%s1053] sm:$0xff]
        %v1055 = vld [vmem:[%s1053 + $0x8] sm:$0xff]
        %v1056 = vld [vmem:[%s1053 + $0x10] sm:$0xff]
        %v1057 = vld [vmem:[%s1053 + $0x18] sm:$0xff]
        %v1058 = vld [vmem:[%s1053 + $0x20] sm:$0xff]
        %v1059 = vld [vmem:[%s1053 + $0x28] sm:$0xff]
        %v1060 = vld [vmem:[%s1053 + $0x30] sm:$0xff]
        %v1061 = vld [vmem:[%s1053 + $0x38] sm:$0xff]
        %v1062 = vld [vmem:[%s1053 + $0x40] sm:$0xff]
        %v1063 = vld [vmem:[%s1053 + $0x48] sm:$0xff]
        %v1064 = vld [vmem:[%s1053 + $0x50] sm:$0xff]
        %v1065 = vld [vmem:[%s1053 + $0x58] sm:$0xff]
        %v1067 = vunpack.c.l.b16 %v933
        %v1068 = vpack.c.b16 %v1067, %v1067
        %v1070 = vshrl.u32 %v1068, 16
        %v1072 = vrot.slane %v1070, 1
        %v1073 = vshll.u32 %v1068, 16
        %v1075 = vrot.slane %v1073, 2
        %v1076 = vor.u32 %v1072, %v1075
        %v1089 = vunpack.c.l.b16 %v1054
        %v1090 = vunpack.c.h.b16 %v1054
        %v1091 = vunpack.c.l.b16 %v1055
        %v1092 = vunpack.c.h.b16 %v1055
        %v1093 = vunpack.c.l.b16 %v1056
        %v1094 = vunpack.c.h.b16 %v1056
        %v1095 = vunpack.c.l.b16 %v1057
        %v1096 = vunpack.c.h.b16 %v1057
        %v1097 = vunpack.c.l.b16 %v1058
        %v1098 = vunpack.c.h.b16 %v1058
        %v1099 = vunpack.c.l.b16 %v1059
        %v1100 = vunpack.c.h.b16 %v1059
        %v1101 = vunpack.c.l.b16 %v1060
        %v1102 = vunpack.c.h.b16 %v1060
        %v1103 = vunpack.c.l.b16 %v1061
        %v1104 = vunpack.c.h.b16 %v1061
        %v1105 = vunpack.c.l.b16 %v1062
        %v1106 = vunpack.c.h.b16 %v1062
        %v1107 = vunpack.c.l.b16 %v1063
        %v1108 = vunpack.c.h.b16 %v1063
        %v1109 = vunpack.c.l.b16 %v1064
        %v1110 = vunpack.c.h.b16 %v1064
        %v1111 = vunpack.c.l.b16 %v1065
        %v1112 = vunpack.c.h.b16 %v1065
        %v1113 = vpack.c.b16 %v1091, %v1089
        %v1114 = vpack.c.b16 %v1092, %v1090
        %v1115 = vpack.c.b16 %v1095, %v1093
        %v1116 = vpack.c.b16 %v1096, %v1094
        %v1117 = vpack.c.b16 %v1099, %v1097
        %v1118 = vpack.c.b16 %v1100, %v1098
        %v1119 = vpack.c.b16 %v1103, %v1101
        %v1120 = vpack.c.b16 %v1104, %v1102
        %v1121 = vpack.c.b16 %v1107, %v1105
        %v1122 = vpack.c.b16 %v1108, %v1106
        %v1123 = vpack.c.b16 %v1111, %v1109
        %v1124 = vpack.c.b16 %v1112, %v1110
        %v1138 = vsel %vm286, %v1076, 0
        %1140 = vmatprep.subr.bf16.mxu0 %v1114
        %1141 = vmatpush1.bf16.msra.mxu0 %v1113
        %1142 = vmatprep.subr.bf16.mxu0 %v1116
        %1143 = vmatpush1.bf16.msra.mxu0 %v1115
        %1144 = vmatprep.subr.bf16.mxu0 %v1118
        %1145 = vmatpush1.bf16.msra.mxu0 %v1117
        %1146 = vmatprep.subr.bf16.mxu0 %v1120
        %1147 = vmatpush1.bf16.msra.mxu0 %v1119
        %1148 = vmatprep.subr.bf16.mxu0 %v1122
        %1149 = vmatpush1.bf16.msra.mxu0 %v1121
        %1150 = vmatprep.subr.bf16.mxu0 %v1124
        %1151 = vmatpush1.bf16.msra.mxu0 %v1123
        %1152 = vmatprep.subr.bf16.mxu0 0
        %1153 = vmatpush1.bf16.msra.mxu0 0
        %1154 = vmatprep.subr.bf16.mxu0 0
        %1155 = vmatpush1.bf16.msra.mxu0 0
        %1156 = vmatprep.subr.bf16.mxu0 0
        %1157 = vmatpush1.bf16.msra.mxu0 0
        %1158 = vmatprep.subr.bf16.mxu0 0
        %1159 = vmatpush1.bf16.msra.mxu0 0
        %1160 = vmatprep.subr.bf16.mxu0 0
        %1161 = vmatpush1.bf16.msra.mxu0 0
        %1162 = vmatprep.subr.bf16.mxu0 0
        %1163 = vmatpush1.bf16.msra.mxu0 0
        %1164 = vmatprep.subr.bf16.mxu0 0
        %1165 = vmatpush1.bf16.msra.mxu0 0
        %1166 = vmatprep.subr.bf16.mxu0 0
        %1167 = vmatpush1.bf16.msra.mxu0 0
        %1168 = vmatprep.subr.bf16.mxu0 0
        %1169 = vmatpush1.bf16.msra.mxu0 0
        %1170 = vmatprep.subr.bf16.mxu0 0
        %1171 = vmatpush1.bf16.msra.mxu0 0
        %1172 = vmatprep.mubr.bf16.mxu0 0
        %1173 = vmatmul.mubr.bf16.gmra.mrb[0].mxu0 %v1138
        %v1174 = vpop.f32.mrb[0].mxu0
        %v1175 = vadd.f32 0.0, %v1174
        %v1176 = vpop.f32.mrb[0].mxu0
        %v1177 = vadd.f32 0.0, %v1176
        %v1178 = vpop.f32.mrb[0].mxu0
        %v1179 = vpop.f32.mrb[0].mxu0
        %1180 = vdwg.mxu0
        %v1181 = vadd.f32 %v1051, %v1175
        %v1182 = vadd.f32 %v1052, %v1177
        %s1183 = scalar_lea.vmem %s1, 768
        %v1184 = vld [vmem:[%s1183] sm:$0xff]
        %v1185 = vld [vmem:[%s1183 + $0x8] sm:$0xff]
        %v1186 = vld [vmem:[%s1183 + $0x10] sm:$0xff]
        %v1187 = vld [vmem:[%s1183 + $0x18] sm:$0xff]
        %v1188 = vld [vmem:[%s1183 + $0x20] sm:$0xff]
        %v1189 = vld [vmem:[%s1183 + $0x28] sm:$0xff]
        %v1190 = vld [vmem:[%s1183 + $0x30] sm:$0xff]
        %v1191 = vld [vmem:[%s1183 + $0x38] sm:$0xff]
        %v1192 = vld [vmem:[%s1183 + $0x40] sm:$0xff]
        %v1193 = vld [vmem:[%s1183 + $0x48] sm:$0xff]
        %v1194 = vld [vmem:[%s1183 + $0x50] sm:$0xff]
        %v1195 = vld [vmem:[%s1183 + $0x58] sm:$0xff]
        %v1196 = vrot.slane %v1073, 1
        %v1197 = vor.u32 %v1070, %v1196
        %v1210 = vunpack.c.l.b16 %v1184
        %v1211 = vunpack.c.h.b16 %v1184
        %v1212 = vunpack.c.l.b16 %v1185
        %v1213 = vunpack.c.h.b16 %v1185
        %v1214 = vunpack.c.l.b16 %v1186
        %v1215 = vunpack.c.h.b16 %v1186
        %v1216 = vunpack.c.l.b16 %v1187
        %v1217 = vunpack.c.h.b16 %v1187
        %v1218 = vunpack.c.l.b16 %v1188
        %v1219 = vunpack.c.h.b16 %v1188
        %v1220 = vunpack.c.l.b16 %v1189
        %v1221 = vunpack.c.h.b16 %v1189
        %v1222 = vunpack.c.l.b16 %v1190
        %v1223 = vunpack.c.h.b16 %v1190
        %v1224 = vunpack.c.l.b16 %v1191
        %v1225 = vunpack.c.h.b16 %v1191
        %v1226 = vunpack.c.l.b16 %v1192
        %v1227 = vunpack.c.h.b16 %v1192
        %v1228 = vunpack.c.l.b16 %v1193
        %v1229 = vunpack.c.h.b16 %v1193
        %v1230 = vunpack.c.l.b16 %v1194
        %v1231 = vunpack.c.h.b16 %v1194
        %v1232 = vunpack.c.l.b16 %v1195
        %v1233 = vunpack.c.h.b16 %v1195
        %v1234 = vpack.c.b16 %v1212, %v1210
        %v1235 = vpack.c.b16 %v1213, %v1211
        %v1236 = vpack.c.b16 %v1216, %v1214
        %v1237 = vpack.c.b16 %v1217, %v1215
        %v1238 = vpack.c.b16 %v1220, %v1218
        %v1239 = vpack.c.b16 %v1221, %v1219
        %v1240 = vpack.c.b16 %v1224, %v1222
        %v1241 = vpack.c.b16 %v1225, %v1223
        %v1242 = vpack.c.b16 %v1228, %v1226
        %v1243 = vpack.c.b16 %v1229, %v1227
        %v1244 = vpack.c.b16 %v1232, %v1230
        %v1245 = vpack.c.b16 %v1233, %v1231
        %v1259 = vsel %vm286, %v1197, 0
        %1261 = vmatprep.subr.bf16.mxu0 %v1235
        %1262 = vmatpush1.bf16.msra.mxu0 %v1234
        %1263 = vmatprep.subr.bf16.mxu0 %v1237
        %1264 = vmatpush1.bf16.msra.mxu0 %v1236
        %1265 = vmatprep.subr.bf16.mxu0 %v1239
        %1266 = vmatpush1.bf16.msra.mxu0 %v1238
        %1267 = vmatprep.subr.bf16.mxu0 %v1241
        %1268 = vmatpush1.bf16.msra.mxu0 %v1240
        %1269 = vmatprep.subr.bf16.mxu0 %v1243
        %1270 = vmatpush1.bf16.msra.mxu0 %v1242
        %1271 = vmatprep.subr.bf16.mxu0 %v1245
        %1272 = vmatpush1.bf16.msra.mxu0 %v1244
        %1273 = vmatprep.subr.bf16.mxu0 0
        %1274 = vmatpush1.bf16.msra.mxu0 0
        %1275 = vmatprep.subr.bf16.mxu0 0
        %1276 = vmatpush1.bf16.msra.mxu0 0
        %1277 = vmatprep.subr.bf16.mxu0 0
        %1278 = vmatpush1.bf16.msra.mxu0 0
        %1279 = vmatprep.subr.bf16.mxu0 0
        %1280 = vmatpush1.bf16.msra.mxu0 0
        %1281 = vmatprep.subr.bf16.mxu0 0
        %1282 = vmatpush1.bf16.msra.mxu0 0
        %1283 = vmatprep.subr.bf16.mxu0 0
        %1284 = vmatpush1.bf16.msra.mxu0 0
        %1285 = vmatprep.subr.bf16.mxu0 0
        %1286 = vmatpush1.bf16.msra.mxu0 0
        %1287 = vmatprep.subr.bf16.mxu0 0
        %1288 = vmatpush1.bf16.msra.mxu0 0
        %1289 = vmatprep.subr.bf16.mxu0 0
        %1290 = vmatpush1.bf16.msra.mxu0 0
        %1291 = vmatprep.subr.bf16.mxu0 0
        %1292 = vmatpush1.bf16.msra.mxu0 0
        %1293 = vmatprep.mubr.bf16.mxu0 0
        %1294 = vmatmul.mubr.bf16.gmra.mrb[0].mxu0 %v1259
        %v1295 = vpop.f32.mrb[0].mxu0
        %v1296 = vadd.f32 0.0, %v1295
        %v1297 = vpop.f32.mrb[0].mxu0
        %v1298 = vadd.f32 0.0, %v1297
        %v1299 = vpop.f32.mrb[0].mxu0
        %v1300 = vpop.f32.mrb[0].mxu0
        %1301 = vdwg.mxu0
        %v1302 = vadd.f32 %v1181, %v1296
        %v1303 = vadd.f32 %v1182, %v1298
        %v1304 = vxor.u32 %v1303, 2147483648
        %v1305 = vmul.f32 %v1304, 1.442695
        %v1306 = vpow.pop %v1305
        %v1307 = vadd.f32 %v1306, 1.0
        %v1308 = vrcp.pop %v1307
        %v1309 = vmul.f32 1.0, %v1308
        %v1310 = vmax.f32 %v1302, 0.0
        %v1311 = vmul.f32 %v1309, %v1310
        %v1312 = vpack.c.bf16 %v1311, %v1311
        %s1313 = scalar_lea.vmem %s177, %s181
        %1314 = vst [vmem:[%s1313] sm:$0x1] %v1312
      $region33: #{_encoder_forward_nhwc.13} parent=27 // loop_footer
        %s185 = sadd.s32 1, %s181
      $region34: #{_encoder_forward_nhwc.13} parent=27 // loop_footer_branch
        %180 = sbr.rel target = $region30
      $region35: #{_encoder_forward_nhwc.13} parent=27 // loop_exit
        _
      %s1315 = smul.u32 2, %s18
      %p1316 = scmp.lt.s32.totalorder %s17, 1
      %s1317 = scalar_select %p1316, %s17, 1
      %p1318 = scmp.lt.s32.totalorder %s1315, 1
      %s1319 = scalar_select %p1318, %s1315, 1
      %s1320 = smul.addr %s1317, 2
      %s1321 = sadd.s32 %s1319, %s1320
      %s1322 = scalar_lea.vmem %s2, %s1321
      // Predicated region
      $region36: #{_encoder_forward_nhwc.13} parent=27 // pred_check
        %p1323 = pneg %p94
      $region37: #{_encoder_forward_nhwc.13} parent=27 // pred_check_branch
        %1325 = sbr.rel (%p1323) target = $region39
      $region38: #{_encoder_forward_nhwc.13} parent=27 // pred_region
        %s1326 = smul.u32 2, %s18
      $region39: #{_encoder_forward_nhwc.13} parent=27 // pred_fallthru
        _
    $region28: #{_encoder_forward_nhwc.13} parent=5 // pred_fallthru
      _
    %p1327 = scmp.le.s32.totalorder 2, %s8
    // Predicated region
    $region40: #{_encoder_forward_nhwc.13} parent=5 // pred_check
      %p1328 = pneg %p1327
    $region41: #{_encoder_forward_nhwc.13} parent=5 // pred_check_branch
      %1330 = sbr.rel (%p1328) target = $region43
    $region42: #{_encoder_forward_nhwc.13} parent=5 // pred_region
      %s1331 = ssub.s32 %s8, 2
      // Predicated region
      $region44: #{_encoder_forward_nhwc.13} parent=42 // pred_check
        %p1332 = pneg %p100
      $region45: #{_encoder_forward_nhwc.13} parent=42 // pred_check_branch
        %1334 = sbr.rel (%p1332) target = $region47
      $region46: #{_encoder_forward_nhwc.13} parent=42 // pred_region
        %s1335 = smul.u32 2, %s20
        %p1336 = scmp.lt.s32.totalorder %s19, 1
        %s1337 = scalar_select %p1336, %s19, 1
        %p1338 = scmp.lt.s32.totalorder %s1335, 1
        %s1339 = scalar_select %p1338, %s1335, 1
        %s1340 = smul.addr %s1337, 2
        %s1341 = sadd.s32 %s1339, %s1340
        %s1342 = scalar_lea.vmem %s2, %s1341
      $region47: #{_encoder_forward_nhwc.13} parent=42 // pred_fallthru
        _
    $region43: #{_encoder_forward_nhwc.13} parent=5 // pred_fallthru
      _
  $region6: #{_encoder_forward_nhwc.13} parent=0 // loop_footer
    %s12 = sadd.s32 1, %s8
  $region7: #{_encoder_forward_nhwc.13} parent=0 // loop_footer_branch
    %7 = sbr.rel target = $region3
  $region8: #{_encoder_forward_nhwc.13} parent=0 // loop_exit
    _

// kernel: _encoder_forward_nhwc.14
$region0: #{_encoder_forward_nhwc.14}
  #allocation0 [shape = 'u32[]', space=smem, size = 0x4, offset = 0x4, fixed_abs, tag = 'smem constant byte address 0x4 - core index']
  #allocation1 [shape = 'u32[144,128]{1,0:T(1,128)}', space=vmem, size = 0x12000, scoped, tag = 'internal scratch']
  %s0 = inlined_call_operand.vmem [shape: bf16[2,1,4,4,128], index: 0, kind: input, shape index: {}]
  %s1 = inlined_call_operand.vmem [shape: bf16[9,128,256], index: 1, kind: input, shape index: {}]
  %s2 = inlined_call_operand.vmem [shape: bf16[2,2,2,128], index: 2, kind: output, shape index: {}]
  %s3 = sld [smem:[#allocation0]]
  $region48: #{_encoder_forward_nhwc.14} parent=0
    _
  %s5 = ssub.s32 1, %s3
  %s6 = scalar_select 0, %s5, %s3
  loop: start=0, step=1, limit=4
  $region2: #{_encoder_forward_nhwc.14} parent=0 // loop_pre_header
    _
  $region3: #{_encoder_forward_nhwc.14} parent=0 // loop_header
    %s8 = sphi 0, %s12
    %p9 = scmp.ge.s32.totalorder %s8, 4
    %s15 = sphi 0, %s27
    %s16 = sphi 0, %s23
    %s17 = sphi 0, %s15
    %s18 = sphi 0, %s16
    %s19 = sphi 0, %s17
    %s20 = sphi 0, %s18
    %s32 = sphi 0, %s34
    %s35 = sphi 0, %s32
    %s36 = sphi 0, %s35
    %s52 = sphi 0, %s36
    %s56 = sphi 0, %s56
    %s58 = sphi 0, %s56
    %s59 = sphi 0, %s58
    %s73 = sphi 0, %s59
    %s81 = sphi 0, %s83
    %s84 = sphi 0, %s81
    %s85 = sphi 0, %s84
    %s101 = sphi 0, %s85
  $region4: #{_encoder_forward_nhwc.14} parent=0 // loop_header_branch
    %11 = sbr.rel (%p9) target = $region8
  $region5: #{_encoder_forward_nhwc.14} parent=0 // loop_body
    %s13 = ssub.s32 %s8, 1
    %s14 = ssub.s32 %s8, 2
    %s21 = sadd.s32 1, %s16
    %p22 = scmp.ge.s32.totalorder %s21, 1
    %s23 = scalar_select %p22, 0, %s21
    %s24 = sadd.s32 1, %s15
    %s25 = scalar_select %p22, %s24, %s15
    %p26 = scmp.ge.s32.totalorder %s25, 2
    %s27 = scalar_select %p26, 0, %s25
    %s28 = ssub.s32 %s15, %s27
    %s29 = ssub.s32 %s16, %s23
    %s30 = sor.u32 %s28, %s29
    %p31 = scmp.eq.s32.totalorder %s30, 0
    %s33 = sadd.s32 %s32, 1
    %s34 = scalar_select %p31, %s32, %s33
    %p37 = pneg %p31
    %p38 = scmp.eq.s32.totalorder %s8, 1
    %p39 = por %p37, %p38
    %p40 = scmp.ne.s32.totalorder %s32, %s35
    %p41 = scmp.eq.s32.totalorder %s8, 0
    %p42 = por %p40, %p41
    %p43 = scmp.ne.s32.totalorder %s32, %s35
    %p44 = scmp.eq.s32.totalorder %s13, 1
    %p45 = por %p43, %p44
    %p46 = scmp.ne.s32.totalorder %s35, %s36
    %p47 = scmp.eq.s32.totalorder %s13, 0
    %p48 = por %p46, %p47
    %p49 = scmp.ne.s32.totalorder %s35, %s36
    %p50 = scmp.eq.s32.totalorder %s14, 1
    %p51 = por %p49, %p50
    %p53 = scmp.ne.s32.totalorder %s36, %s52
    %p54 = scmp.eq.s32.totalorder %s14, 0
    %p55 = por %p53, %p54
    %s57 = sadd.s32 %s56, 1
    %p60 = scmp.eq.s32.totalorder %s8, 1
    %p61 = scmp.ne.s32.totalorder %s56, %s58
    %p62 = scmp.eq.s32.totalorder %s8, 0
    %p63 = por %p61, %p62
    %p64 = scmp.ne.s32.totalorder %s56, %s58
    %p65 = scmp.eq.s32.totalorder %s13, 1
    %p66 = por %p64, %p65
    %p67 = scmp.ne.s32.totalorder %s58, %s59
    %p68 = scmp.eq.s32.totalorder %s13, 0
    %p69 = por %p67, %p68
    %p70 = scmp.ne.s32.totalorder %s58, %s59
    %p71 = scmp.eq.s32.totalorder %s14, 1
    %p72 = por %p70, %p71
    %p74 = scmp.ne.s32.totalorder %s59, %s73
    %p75 = scmp.eq.s32.totalorder %s14, 0
    %p76 = por %p74, %p75
    %s77 = ssub.s32 %s15, %s27
    %s78 = ssub.s32 %s16, %s23
    %s79 = sor.u32 %s77, %s78
    %p80 = scmp.eq.s32.totalorder %s79, 0
    %s82 = sadd.s32 %s81, 1
    %s83 = scalar_select %p80, %s81, %s82
    %p86 = pneg %p80
    %p87 = scmp.eq.s32.totalorder %s8, 1
    %p88 = por %p86, %p87
    %p89 = scmp.ne.s32.totalorder %s81, %s84
    %p90 = scmp.eq.s32.totalorder %s8, 0
    %p91 = por %p89, %p90
    %p92 = scmp.ne.s32.totalorder %s81, %s84
    %p93 = scmp.eq.s32.totalorder %s13, 1
    %p94 = por %p92, %p93
    %p95 = scmp.ne.s32.totalorder %s84, %s85
    %p96 = scmp.eq.s32.totalorder %s13, 0
    %p97 = por %p95, %p96
    %p98 = scmp.ne.s32.totalorder %s84, %s85
    %p99 = scmp.eq.s32.totalorder %s14, 1
    %p100 = por %p98, %p99
    %p102 = scmp.ne.s32.totalorder %s85, %s101
    %p103 = scmp.eq.s32.totalorder %s14, 0
    %p104 = por %p102, %p103
    %p105 = scmp.le.s32.totalorder 1, %s8
    %p106 = scmp.lt.s32.totalorder %s8, 3
    %p107 = pnand %p105, %p106
    %p108 = pneg %p107
    // Predicated region
    $region9: #{_encoder_forward_nhwc.14} parent=5 // pred_check
      _
    $region10: #{_encoder_forward_nhwc.14} parent=5 // pred_check_branch
      %110 = sbr.rel (%p107) target = $region12
    $region11: #{_encoder_forward_nhwc.14} parent=5 // pred_region
      %s111 = ssub.s32 %s8, 1
      // Predicated region
      $region13: #{_encoder_forward_nhwc.14} parent=11 // pred_check
        %p112 = pneg %p69
      $region14: #{_encoder_forward_nhwc.14} parent=11 // pred_check_branch
        %114 = sbr.rel (%p112) target = $region16
      $region15: #{_encoder_forward_nhwc.14} parent=11 // pred_region
        _
      $region16: #{_encoder_forward_nhwc.14} parent=11 // pred_fallthru
        _
    $region12: #{_encoder_forward_nhwc.14} parent=5 // pred_fallthru
      _
    %p115 = scmp.lt.s32.totalorder %s8, 2
    // Predicated region
    $region17: #{_encoder_forward_nhwc.14} parent=5 // pred_check
      %p116 = pneg %p115
    $region18: #{_encoder_forward_nhwc.14} parent=5 // pred_check_branch
      %118 = sbr.rel (%p116) target = $region20
    $region19: #{_encoder_forward_nhwc.14} parent=5 // pred_region
      // Predicated region
      $region21: #{_encoder_forward_nhwc.14} parent=19 // pred_check
        %p119 = pneg %p42
      $region22: #{_encoder_forward_nhwc.14} parent=19 // pred_check_branch
        %121 = sbr.rel (%p119) target = $region24
      $region23: #{_encoder_forward_nhwc.14} parent=19 // pred_region
        %p122 = scmp.lt.s32.totalorder %s15, 1
        %s123 = scalar_select %p122, %s15, 1
        %p124 = scmp.lt.s32.totalorder %s16, 0
        %s125 = scalar_select %p124, %s16, 0
        %s126 = smul.addr %s125, 4
        %s127 = smul.addr %s123, 4
        %s128 = sadd.s32 %s126, %s127
        %s129 = smul.addr %s128, 2
        %s130 = scalar_lea.vmem %s0, %s129
      $region24: #{_encoder_forward_nhwc.14} parent=19 // pred_fallthru
        _
    $region20: #{_encoder_forward_nhwc.14} parent=5 // pred_fallthru
      _
    %p131 = scmp.le.s32.totalorder 1, %s8
    %p132 = scmp.lt.s32.totalorder %s8, 3
    %p133 = pnand %p131, %p132
    %p134 = pneg %p133
    // Predicated region
    $region25: #{_encoder_forward_nhwc.14} parent=5 // pred_check
      _
    $region26: #{_encoder_forward_nhwc.14} parent=5 // pred_check_branch
      %136 = sbr.rel (%p133) target = $region28
    $region27: #{_encoder_forward_nhwc.14} parent=5 // pred_region
      %s137 = ssub.s32 %s8, 1
      %p138 = scmp.lt.s32.totalorder %s17, 1
      %s139 = scalar_select %p138, %s17, 1
      %p140 = scmp.lt.s32.totalorder %s18, 0
      %s141 = scalar_select %p140, %s18, 0
      %s142 = smul.addr %s141, 4
      %s143 = smul.addr %s139, 4
      %s144 = sadd.s32 %s142, %s143
      %s145 = smul.addr %s144, 2
      %s146 = scalar_lea.vmem %s0, %s145
      %p147 = pneg %p48
      %p148 = pneg %p45
      %p149 = pneg %p69
      %p150 = pneg %p66
      %p151 = pneg %p97
      %p152 = pneg %p94
      %s153 = smul.u32 2, %s18
      %p154 = scmp.lt.s32.totalorder %s17, 1
      %s155 = scalar_select %p154, %s17, 1
      %p156 = scmp.lt.s32.totalorder %s153, 1
      %s157 = scalar_select %p156, %s153, 1
      %s158 = smul.addr %s155, 2
      %s159 = sadd.s32 %s157, %s158
      %s160 = scalar_lea.vmem %s2, %s159
      %p161 = scmp.lt.s32.totalorder %s17, 1
      %s162 = scalar_select %p161, %s17, 1
      %p163 = scmp.lt.s32.totalorder %s18, 0
      %s164 = scalar_select %p163, %s18, 0
      %s165 = smul.addr %s164, 4
      %s166 = smul.addr %s162, 4
      %s167 = sadd.s32 %s165, %s166
      %s168 = smul.addr %s167, 2
      %s169 = scalar_lea.vmem %s0, %s168
      %s170 = smul.u32 2, %s18
      %p171 = scmp.lt.s32.totalorder %s17, 1
      %s172 = scalar_select %p171, %s17, 1
      %p173 = scmp.lt.s32.totalorder %s170, 1
      %s174 = scalar_select %p173, %s170, 1
      %s175 = smul.addr %s172, 2
      %s176 = sadd.s32 %s174, %s175
      %s177 = scalar_lea.vmem %s2, %s176
      %s178 = smul.u32 2, %s18
      loop: start=0, step=1, limit=2
      $region29: #{_encoder_forward_nhwc.14} parent=27 // loop_pre_header
        _
      $region30: #{_encoder_forward_nhwc.14} parent=27 // loop_header
        %s181 = sphi 0, %s185
        %p182 = scmp.ge.s32.totalorder %s181, 2
      $region31: #{_encoder_forward_nhwc.14} parent=27 // loop_header_branch
        %184 = sbr.rel (%p182) target = $region35
      $region32: #{_encoder_forward_nhwc.14} parent=27 // loop_body
        %s186 = smul.addr %s181, 2
        %s187 = scalar_lea.vmem %s169, %s186
        %v188 = vld [vmem:[%s187] sm:$0x3]
        %v189 = vld [vmem:[%s1] sm:$0xff]
        %v190 = vld [vmem:[%s1 + $0x8] sm:$0xff]
        %v191 = vld [vmem:[%s1 + $0x10] sm:$0xff]
        %v192 = vld [vmem:[%s1 + $0x18] sm:$0xff]
        %v193 = vld [vmem:[%s1 + $0x20] sm:$0xff]
        %v194 = vld [vmem:[%s1 + $0x28] sm:$0xff]
        %v195 = vld [vmem:[%s1 + $0x30] sm:$0xff]
        %v196 = vld [vmem:[%s1 + $0x38] sm:$0xff]
        %v197 = vld [vmem:[%s1 + $0x40] sm:$0xff]
        %v198 = vld [vmem:[%s1 + $0x48] sm:$0xff]
        %v199 = vld [vmem:[%s1 + $0x50] sm:$0xff]
        %v200 = vld [vmem:[%s1 + $0x58] sm:$0xff]
        %v201 = vld [vmem:[%s1 + $0x60] sm:$0xff]
        %v202 = vld [vmem:[%s1 + $0x68] sm:$0xff]
        %v203 = vld [vmem:[%s1 + $0x70] sm:$0xff]
        %v204 = vld [vmem:[%s1 + $0x78] sm:$0xff]
        %s205 = scalar_lea.vmem %s1, 128
        %v206 = vld [vmem:[%s205] sm:$0xff]
        %v207 = vld [vmem:[%s205 + $0x8] sm:$0xff]
        %v208 = vld [vmem:[%s205 + $0x10] sm:$0xff]
        %v209 = vld [vmem:[%s205 + $0x18] sm:$0xff]
        %v210 = vld [vmem:[%s205 + $0x20] sm:$0xff]
        %v211 = vld [vmem:[%s205 + $0x28] sm:$0xff]
        %v212 = vld [vmem:[%s205 + $0x30] sm:$0xff]
        %v213 = vld [vmem:[%s205 + $0x38] sm:$0xff]
        %v214 = vld [vmem:[%s205 + $0x40] sm:$0xff]
        %v215 = vld [vmem:[%s205 + $0x48] sm:$0xff]
        %v216 = vld [vmem:[%s205 + $0x50] sm:$0xff]
        %v217 = vld [vmem:[%s205 + $0x58] sm:$0xff]
        %v218 = vld [vmem:[%s205 + $0x60] sm:$0xff]
        %v219 = vld [vmem:[%s205 + $0x68] sm:$0xff]
        %v220 = vld [vmem:[%s205 + $0x70] sm:$0xff]
        %v221 = vld [vmem:[%s205 + $0x78] sm:$0xff]
        %v224 = vunpack.c.l.s4 1983009808
        %v225 = vunpack.c.0.s8 %v224
        %v226 = vlaneseq
        %v227 = vshrl.u32 %v226, 7
        %v228 = vsub.s32 %v225, %v227
        %v229 = vrot.slane %v188, %v228
        %v231 = vshrl.u32 %v229, 16
        %v233 = vshll.u32 %v229, 16
        %v235 = vrot.slane %v233, 1
        %v236 = vor.u32 %v231, %v235
        %v254 = vunpack.c.l.b16 %v206
        %v255 = vunpack.c.h.b16 %v206
        %v256 = vunpack.c.l.b16 %v207
        %v257 = vunpack.c.h.b16 %v207
        %v258 = vunpack.c.l.b16 %v208
        %v259 = vunpack.c.h.b16 %v208
        %v260 = vunpack.c.l.b16 %v209
        %v261 = vunpack.c.h.b16 %v209
        %v262 = vunpack.c.l.b16 %v210
        %v263 = vunpack.c.h.b16 %v210
        %v264 = vunpack.c.l.b16 %v211
        %v265 = vunpack.c.h.b16 %v211
        %v266 = vunpack.c.l.b16 %v212
        %v267 = vunpack.c.h.b16 %v212
        %v268 = vunpack.c.l.b16 %v213
        %v269 = vunpack.c.h.b16 %v213
        %v270 = vunpack.c.l.b16 %v214
        %v271 = vunpack.c.h.b16 %v214
        %v272 = vunpack.c.l.b16 %v215
        %v273 = vunpack.c.h.b16 %v215
        %v274 = vunpack.c.l.b16 %v216
        %v275 = vunpack.c.h.b16 %v216
        %v276 = vunpack.c.l.b16 %v217
        %v277 = vunpack.c.h.b16 %v217
        %v278 = vunpack.c.l.b16 %v218
        %v279 = vunpack.c.h.b16 %v218
        %v280 = vunpack.c.l.b16 %v219
        %v281 = vunpack.c.h.b16 %v219
        %v282 = vunpack.c.l.b16 %v220
        %v283 = vunpack.c.h.b16 %v220
        %v284 = vunpack.c.l.b16 %v221
        %v285 = vunpack.c.h.b16 %v221
        %v286 = vpack.c.b16 %v256, %v254
        %v287 = vpack.c.b16 %v257, %v255
        %v288 = vpack.c.b16 %v260, %v258
        %v289 = vpack.c.b16 %v261, %v259
        %v290 = vpack.c.b16 %v264, %v262
        %v291 = vpack.c.b16 %v265, %v263
        %v292 = vpack.c.b16 %v268, %v266
        %v293 = vpack.c.b16 %v269, %v267
        %v294 = vpack.c.b16 %v272, %v270
        %v295 = vpack.c.b16 %v273, %v271
        %v296 = vpack.c.b16 %v276, %v274
        %v297 = vpack.c.b16 %v277, %v275
        %v298 = vpack.c.b16 %v280, %v278
        %v299 = vpack.c.b16 %v281, %v279
        %v300 = vpack.c.b16 %v284, %v282
        %v301 = vpack.c.b16 %v285, %v283
        %318 = vmatprep.subr.bf16.mxu0 %v287
        %319 = vmatpush1.bf16.msra.mxu0 %v286
        %320 = vmatprep.subr.bf16.mxu0 %v289
        %321 = vmatpush1.bf16.msra.mxu0 %v288
        %322 = vmatprep.subr.bf16.mxu0 %v291
        %323 = vmatpush1.bf16.msra.mxu0 %v290
        %324 = vmatprep.subr.bf16.mxu0 %v293
        %325 = vmatpush1.bf16.msra.mxu0 %v292
        %326 = vmatprep.subr.bf16.mxu0 %v295
        %327 = vmatpush1.bf16.msra.mxu0 %v294
        %328 = vmatprep.subr.bf16.mxu0 %v297
        %329 = vmatpush1.bf16.msra.mxu0 %v296
        %330 = vmatprep.subr.bf16.mxu0 %v299
        %331 = vmatpush1.bf16.msra.mxu0 %v298
        %332 = vmatprep.subr.bf16.mxu0 %v301
        %333 = vmatpush1.bf16.msra.mxu0 %v300
        %334 = vmatprep.subr.bf16.mxu0 0
        %335 = vmatpush1.bf16.msra.mxu0 0
        %336 = vmatprep.subr.bf16.mxu0 0
        %337 = vmatpush1.bf16.msra.mxu0 0
        %338 = vmatprep.subr.bf16.mxu0 0
        %339 = vmatpush1.bf16.msra.mxu0 0
        %340 = vmatprep.subr.bf16.mxu0 0
        %341 = vmatpush1.bf16.msra.mxu0 0
        %342 = vmatprep.subr.bf16.mxu0 0
        %343 = vmatpush1.bf16.msra.mxu0 0
        %344 = vmatprep.subr.bf16.mxu0 0
        %345 = vmatpush1.bf16.msra.mxu0 0
        %346 = vmatprep.subr.bf16.mxu0 0
        %347 = vmatpush1.bf16.msra.mxu0 0
        %348 = vmatprep.subr.bf16.mxu0 0
        %349 = vmatpush1.bf16.msra.mxu0 0
        %350 = vmatprep.mubr.bf16.mxu0 0
        %351 = vmatmul.mubr.bf16.gmra.mrb[0].mxu0 %v236
        %v352 = vpop.f32.mrb[0].mxu0
        %v353 = vadd.f32 0.0, %v352
        %v354 = vpop.f32.mrb[0].mxu0
        %v355 = vadd.f32 0.0, %v354
        %v356 = vpop.f32.mrb[0].mxu0
        %v357 = vpop.f32.mrb[0].mxu0
        %358 = vdwg.mxu0
        %v375 = vunpack.c.l.b16 %v189
        %v376 = vunpack.c.h.b16 %v189
        %v377 = vunpack.c.l.b16 %v190
        %v378 = vunpack.c.h.b16 %v190
        %v379 = vunpack.c.l.b16 %v191
        %v380 = vunpack.c.h.b16 %v191
        %v381 = vunpack.c.l.b16 %v192
        %v382 = vunpack.c.h.b16 %v192
        %v383 = vunpack.c.l.b16 %v193
        %v384 = vunpack.c.h.b16 %v193
        %v385 = vunpack.c.l.b16 %v194
        %v386 = vunpack.c.h.b16 %v194
        %v387 = vunpack.c.l.b16 %v195
        %v388 = vunpack.c.h.b16 %v195
        %v389 = vunpack.c.l.b16 %v196
        %v390 = vunpack.c.h.b16 %v196
        %v391 = vunpack.c.l.b16 %v197
        %v392 = vunpack.c.h.b16 %v197
        %v393 = vunpack.c.l.b16 %v198
        %v394 = vunpack.c.h.b16 %v198
        %v395 = vunpack.c.l.b16 %v199
        %v396 = vunpack.c.h.b16 %v199
        %v397 = vunpack.c.l.b16 %v200
        %v398 = vunpack.c.h.b16 %v200
        %v399 = vunpack.c.l.b16 %v201
        %v400 = vunpack.c.h.b16 %v201
        %v401 = vunpack.c.l.b16 %v202
        %v402 = vunpack.c.h.b16 %v202
        %v403 = vunpack.c.l.b16 %v203
        %v404 = vunpack.c.h.b16 %v203
        %v405 = vunpack.c.l.b16 %v204
        %v406 = vunpack.c.h.b16 %v204
        %v407 = vpack.c.b16 %v377, %v375
        %v408 = vpack.c.b16 %v378, %v376
        %v409 = vpack.c.b16 %v381, %v379
        %v410 = vpack.c.b16 %v382, %v380
        %v411 = vpack.c.b16 %v385, %v383
        %v412 = vpack.c.b16 %v386, %v384
        %v413 = vpack.c.b16 %v389, %v387
        %v414 = vpack.c.b16 %v390, %v388
        %v415 = vpack.c.b16 %v393, %v391
        %v416 = vpack.c.b16 %v394, %v392
        %v417 = vpack.c.b16 %v397, %v395
        %v418 = vpack.c.b16 %v398, %v396
        %v419 = vpack.c.b16 %v401, %v399
        %v420 = vpack.c.b16 %v402, %v400
        %v421 = vpack.c.b16 %v405, %v403
        %v422 = vpack.c.b16 %v406, %v404
        %439 = vmatprep.subr.bf16.mxu0 %v408
        %440 = vmatpush1.bf16.msra.mxu0 %v407
        %441 = vmatprep.subr.bf16.mxu0 %v410
        %442 = vmatpush1.bf16.msra.mxu0 %v409
        %443 = vmatprep.subr.bf16.mxu0 %v412
        %444 = vmatpush1.bf16.msra.mxu0 %v411
        %445 = vmatprep.subr.bf16.mxu0 %v414
        %446 = vmatpush1.bf16.msra.mxu0 %v413
        %447 = vmatprep.subr.bf16.mxu0 %v416
        %448 = vmatpush1.bf16.msra.mxu0 %v415
        %449 = vmatprep.subr.bf16.mxu0 %v418
        %450 = vmatpush1.bf16.msra.mxu0 %v417
        %451 = vmatprep.subr.bf16.mxu0 %v420
        %452 = vmatpush1.bf16.msra.mxu0 %v419
        %453 = vmatprep.subr.bf16.mxu0 %v422
        %454 = vmatpush1.bf16.msra.mxu0 %v421
        %455 = vmatprep.subr.bf16.mxu0 0
        %456 = vmatpush1.bf16.msra.mxu0 0
        %457 = vmatprep.subr.bf16.mxu0 0
        %458 = vmatpush1.bf16.msra.mxu0 0
        %459 = vmatprep.subr.bf16.mxu0 0
        %460 = vmatpush1.bf16.msra.mxu0 0
        %461 = vmatprep.subr.bf16.mxu0 0
        %462 = vmatpush1.bf16.msra.mxu0 0
        %463 = vmatprep.subr.bf16.mxu0 0
        %464 = vmatpush1.bf16.msra.mxu0 0
        %465 = vmatprep.subr.bf16.mxu0 0
        %466 = vmatpush1.bf16.msra.mxu0 0
        %467 = vmatprep.subr.bf16.mxu0 0
        %468 = vmatpush1.bf16.msra.mxu0 0
        %469 = vmatprep.subr.bf16.mxu0 0
        %470 = vmatpush1.bf16.msra.mxu0 0
        %471 = vmatprep.mubr.bf16.mxu0 0
        %472 = vmatmul.mubr.bf16.gmra.mrb[0].mxu0 %v188
        %v473 = vpop.f32.mrb[0].mxu0
        %v474 = vadd.f32 %v353, %v473
        %v475 = vpop.f32.mrb[0].mxu0
        %v476 = vadd.f32 %v355, %v475
        %v477 = vpop.f32.mrb[0].mxu0
        %v478 = vpop.f32.mrb[0].mxu0
        %479 = vdwg.mxu0
        %s480 = scalar_lea.vmem %s1, 256
        %v481 = vld [vmem:[%s480] sm:$0xff]
        %v482 = vld [vmem:[%s480 + $0x8] sm:$0xff]
        %v483 = vld [vmem:[%s480 + $0x10] sm:$0xff]
        %v484 = vld [vmem:[%s480 + $0x18] sm:$0xff]
        %v485 = vld [vmem:[%s480 + $0x20] sm:$0xff]
        %v486 = vld [vmem:[%s480 + $0x28] sm:$0xff]
        %v487 = vld [vmem:[%s480 + $0x30] sm:$0xff]
        %v488 = vld [vmem:[%s480 + $0x38] sm:$0xff]
        %v489 = vld [vmem:[%s480 + $0x40] sm:$0xff]
        %v490 = vld [vmem:[%s480 + $0x48] sm:$0xff]
        %v491 = vld [vmem:[%s480 + $0x50] sm:$0xff]
        %v492 = vld [vmem:[%s480 + $0x58] sm:$0xff]
        %v493 = vld [vmem:[%s480 + $0x60] sm:$0xff]
        %v494 = vld [vmem:[%s480 + $0x68] sm:$0xff]
        %v495 = vld [vmem:[%s480 + $0x70] sm:$0xff]
        %v496 = vld [vmem:[%s480 + $0x78] sm:$0xff]
        %v497 = vrot.slane %v229, 1
        %v515 = vunpack.c.l.b16 %v481
        %v516 = vunpack.c.h.b16 %v481
        %v517 = vunpack.c.l.b16 %v482
        %v518 = vunpack.c.h.b16 %v482
        %v519 = vunpack.c.l.b16 %v483
        %v520 = vunpack.c.h.b16 %v483
        %v521 = vunpack.c.l.b16 %v484
        %v522 = vunpack.c.h.b16 %v484
        %v523 = vunpack.c.l.b16 %v485
        %v524 = vunpack.c.h.b16 %v485
        %v525 = vunpack.c.l.b16 %v486
        %v526 = vunpack.c.h.b16 %v486
        %v527 = vunpack.c.l.b16 %v487
        %v528 = vunpack.c.h.b16 %v487
        %v529 = vunpack.c.l.b16 %v488
        %v530 = vunpack.c.h.b16 %v488
        %v531 = vunpack.c.l.b16 %v489
        %v532 = vunpack.c.h.b16 %v489
        %v533 = vunpack.c.l.b16 %v490
        %v534 = vunpack.c.h.b16 %v490
        %v535 = vunpack.c.l.b16 %v491
        %v536 = vunpack.c.h.b16 %v491
        %v537 = vunpack.c.l.b16 %v492
        %v538 = vunpack.c.h.b16 %v492
        %v539 = vunpack.c.l.b16 %v493
        %v540 = vunpack.c.h.b16 %v493
        %v541 = vunpack.c.l.b16 %v494
        %v542 = vunpack.c.h.b16 %v494
        %v543 = vunpack.c.l.b16 %v495
        %v544 = vunpack.c.h.b16 %v495
        %v545 = vunpack.c.l.b16 %v496
        %v546 = vunpack.c.h.b16 %v496
        %v547 = vpack.c.b16 %v517, %v515
        %v548 = vpack.c.b16 %v518, %v516
        %v549 = vpack.c.b16 %v521, %v519
        %v550 = vpack.c.b16 %v522, %v520
        %v551 = vpack.c.b16 %v525, %v523
        %v552 = vpack.c.b16 %v526, %v524
        %v553 = vpack.c.b16 %v529, %v527
        %v554 = vpack.c.b16 %v530, %v528
        %v555 = vpack.c.b16 %v533, %v531
        %v556 = vpack.c.b16 %v534, %v532
        %v557 = vpack.c.b16 %v537, %v535
        %v558 = vpack.c.b16 %v538, %v536
        %v559 = vpack.c.b16 %v541, %v539
        %v560 = vpack.c.b16 %v542, %v540
        %v561 = vpack.c.b16 %v545, %v543
        %v562 = vpack.c.b16 %v546, %v544
        %579 = vmatprep.subr.bf16.mxu0 %v548
        %580 = vmatpush1.bf16.msra.mxu0 %v547
        %581 = vmatprep.subr.bf16.mxu0 %v550
        %582 = vmatpush1.bf16.msra.mxu0 %v549
        %583 = vmatprep.subr.bf16.mxu0 %v552
        %584 = vmatpush1.bf16.msra.mxu0 %v551
        %585 = vmatprep.subr.bf16.mxu0 %v554
        %586 = vmatpush1.bf16.msra.mxu0 %v553
        %587 = vmatprep.subr.bf16.mxu0 %v556
        %588 = vmatpush1.bf16.msra.mxu0 %v555
        %589 = vmatprep.subr.bf16.mxu0 %v558
        %590 = vmatpush1.bf16.msra.mxu0 %v557
        %591 = vmatprep.subr.bf16.mxu0 %v560
        %592 = vmatpush1.bf16.msra.mxu0 %v559
        %593 = vmatprep.subr.bf16.mxu0 %v562
        %594 = vmatpush1.bf16.msra.mxu0 %v561
        %595 = vmatprep.subr.bf16.mxu0 0
        %596 = vmatpush1.bf16.msra.mxu0 0
        %597 = vmatprep.subr.bf16.mxu0 0
        %598 = vmatpush1.bf16.msra.mxu0 0
        %599 = vmatprep.subr.bf16.mxu0 0
        %600 = vmatpush1.bf16.msra.mxu0 0
        %601 = vmatprep.subr.bf16.mxu0 0
        %602 = vmatpush1.bf16.msra.mxu0 0
        %603 = vmatprep.subr.bf16.mxu0 0
        %604 = vmatpush1.bf16.msra.mxu0 0
        %605 = vmatprep.subr.bf16.mxu0 0
        %606 = vmatpush1.bf16.msra.mxu0 0
        %607 = vmatprep.subr.bf16.mxu0 0
        %608 = vmatpush1.bf16.msra.mxu0 0
        %609 = vmatprep.subr.bf16.mxu0 0
        %610 = vmatpush1.bf16.msra.mxu0 0
        %611 = vmatprep.mubr.bf16.mxu0 0
        %612 = vmatmul.mubr.bf16.gmra.mrb[0].mxu0 %v497
        %v613 = vpop.f32.mrb[0].mxu0
        %v614 = vadd.f32 0.0, %v613
        %v615 = vpop.f32.mrb[0].mxu0
        %v616 = vadd.f32 0.0, %v615
        %v617 = vpop.f32.mrb[0].mxu0
        %v618 = vpop.f32.mrb[0].mxu0
        %619 = vdwg.mxu0
        %v620 = vadd.f32 %v474, %v614
        %v621 = vadd.f32 %v476, %v616
        %s622 = sadd.s32 %s181, 1
        %s623 = smul.addr %s622, 2
        %s624 = scalar_lea.vmem %s169, %s623
        %v625 = vld [vmem:[%s624] sm:$0x3]
        %s626 = scalar_lea.vmem %s1, 384
        %v627 = vld [vmem:[%s626] sm:$0xff]
        %v628 = vld [vmem:[%s626 + $0x8] sm:$0xff]
        %v629 = vld [vmem:[%s626 + $0x10] sm:$0xff]
        %v630 = vld [vmem:[%s626 + $0x18] sm:$0xff]
        %v631 = vld [vmem:[%s626 + $0x20] sm:$0xff]
        %v632 = vld [vmem:[%s626 + $0x28] sm:$0xff]
        %v633 = vld [vmem:[%s626 + $0x30] sm:$0xff]
        %v634 = vld [vmem:[%s626 + $0x38] sm:$0xff]
        %v635 = vld [vmem:[%s626 + $0x40] sm:$0xff]
        %v636 = vld [vmem:[%s626 + $0x48] sm:$0xff]
        %v637 = vld [vmem:[%s626 + $0x50] sm:$0xff]
        %v638 = vld [vmem:[%s626 + $0x58] sm:$0xff]
        %v639 = vld [vmem:[%s626 + $0x60] sm:$0xff]
        %v640 = vld [vmem:[%s626 + $0x68] sm:$0xff]
        %v641 = vld [vmem:[%s626 + $0x70] sm:$0xff]
        %v642 = vld [vmem:[%s626 + $0x78] sm:$0xff]
        %v659 = vunpack.c.l.b16 %v627
        %v660 = vunpack.c.h.b16 %v627
        %v661 = vunpack.c.l.b16 %v628
        %v662 = vunpack.c.h.b16 %v628
        %v663 = vunpack.c.l.b16 %v629
        %v664 = vunpack.c.h.b16 %v629
        %v665 = vunpack.c.l.b16 %v630
        %v666 = vunpack.c.h.b16 %v630
        %v667 = vunpack.c.l.b16 %v631
        %v668 = vunpack.c.h.b16 %v631
        %v669 = vunpack.c.l.b16 %v632
        %v670 = vunpack.c.h.b16 %v632
        %v671 = vunpack.c.l.b16 %v633
        %v672 = vunpack.c.h.b16 %v633
        %v673 = vunpack.c.l.b16 %v634
        %v674 = vunpack.c.h.b16 %v634
        %v675 = vunpack.c.l.b16 %v635
        %v676 = vunpack.c.h.b16 %v635
        %v677 = vunpack.c.l.b16 %v636
        %v678 = vunpack.c.h.b16 %v636
        %v679 = vunpack.c.l.b16 %v637
        %v680 = vunpack.c.h.b16 %v637
        %v681 = vunpack.c.l.b16 %v638
        %v682 = vunpack.c.h.b16 %v638
        %v683 = vunpack.c.l.b16 %v639
        %v684 = vunpack.c.h.b16 %v639
        %v685 = vunpack.c.l.b16 %v640
        %v686 = vunpack.c.h.b16 %v640
        %v687 = vunpack.c.l.b16 %v641
        %v688 = vunpack.c.h.b16 %v641
        %v689 = vunpack.c.l.b16 %v642
        %v690 = vunpack.c.h.b16 %v642
        %v691 = vpack.c.b16 %v661, %v659
        %v692 = vpack.c.b16 %v662, %v660
        %v693 = vpack.c.b16 %v665, %v663
        %v694 = vpack.c.b16 %v666, %v664
        %v695 = vpack.c.b16 %v669, %v667
        %v696 = vpack.c.b16 %v670, %v668
        %v697 = vpack.c.b16 %v673, %v671
        %v698 = vpack.c.b16 %v674, %v672
        %v699 = vpack.c.b16 %v677, %v675
        %v700 = vpack.c.b16 %v678, %v676
        %v701 = vpack.c.b16 %v681, %v679
        %v702 = vpack.c.b16 %v682, %v680
        %v703 = vpack.c.b16 %v685, %v683
        %v704 = vpack.c.b16 %v686, %v684
        %v705 = vpack.c.b16 %v689, %v687
        %v706 = vpack.c.b16 %v690, %v688
        %723 = vmatprep.subr.bf16.mxu0 %v692
        %724 = vmatpush1.bf16.msra.mxu0 %v691
        %725 = vmatprep.subr.bf16.mxu0 %v694
        %726 = vmatpush1.bf16.msra.mxu0 %v693
        %727 = vmatprep.subr.bf16.mxu0 %v696
        %728 = vmatpush1.bf16.msra.mxu0 %v695
        %729 = vmatprep.subr.bf16.mxu0 %v698
        %730 = vmatpush1.bf16.msra.mxu0 %v697
        %731 = vmatprep.subr.bf16.mxu0 %v700
        %732 = vmatpush1.bf16.msra.mxu0 %v699
        %733 = vmatprep.subr.bf16.mxu0 %v702
        %734 = vmatpush1.bf16.msra.mxu0 %v701
        %735 = vmatprep.subr.bf16.mxu0 %v704
        %736 = vmatpush1.bf16.msra.mxu0 %v703
        %737 = vmatprep.subr.bf16.mxu0 %v706
        %738 = vmatpush1.bf16.msra.mxu0 %v705
        %739 = vmatprep.subr.bf16.mxu0 0
        %740 = vmatpush1.bf16.msra.mxu0 0
        %741 = vmatprep.subr.bf16.mxu0 0
        %742 = vmatpush1.bf16.msra.mxu0 0
        %743 = vmatprep.subr.bf16.mxu0 0
        %744 = vmatpush1.bf16.msra.mxu0 0
        %745 = vmatprep.subr.bf16.mxu0 0
        %746 = vmatpush1.bf16.msra.mxu0 0
        %747 = vmatprep.subr.bf16.mxu0 0
        %748 = vmatpush1.bf16.msra.mxu0 0
        %749 = vmatprep.subr.bf16.mxu0 0
        %750 = vmatpush1.bf16.msra.mxu0 0
        %751 = vmatprep.subr.bf16.mxu0 0
        %752 = vmatpush1.bf16.msra.mxu0 0
        %753 = vmatprep.subr.bf16.mxu0 0
        %754 = vmatpush1.bf16.msra.mxu0 0
        %755 = vmatprep.mubr.bf16.mxu0 0
        %756 = vmatmul.mubr.bf16.gmra.mrb[0].mxu0 %v625
        %v757 = vpop.f32.mrb[0].mxu0
        %v758 = vadd.f32 0.0, %v757
        %v759 = vpop.f32.mrb[0].mxu0
        %v760 = vadd.f32 0.0, %v759
        %v761 = vpop.f32.mrb[0].mxu0
        %v762 = vpop.f32.mrb[0].mxu0
        %763 = vdwg.mxu0
        %v764 = vadd.f32 %v620, %v758
        %v765 = vadd.f32 %v621, %v760
        %s766 = scalar_lea.vmem %s1, 512
        %v767 = vld [vmem:[%s766] sm:$0xff]
        %v768 = vld [vmem:[%s766 + $0x8] sm:$0xff]
        %v769 = vld [vmem:[%s766 + $0x10] sm:$0xff]
        %v770 = vld [vmem:[%s766 + $0x18] sm:$0xff]
        %v771 = vld [vmem:[%s766 + $0x20] sm:$0xff]
        %v772 = vld [vmem:[%s766 + $0x28] sm:$0xff]
        %v773 = vld [vmem:[%s766 + $0x30] sm:$0xff]
        %v774 = vld [vmem:[%s766 + $0x38] sm:$0xff]
        %v775 = vld [vmem:[%s766 + $0x40] sm:$0xff]
        %v776 = vld [vmem:[%s766 + $0x48] sm:$0xff]
        %v777 = vld [vmem:[%s766 + $0x50] sm:$0xff]
        %v778 = vld [vmem:[%s766 + $0x58] sm:$0xff]
        %v779 = vld [vmem:[%s766 + $0x60] sm:$0xff]
        %v780 = vld [vmem:[%s766 + $0x68] sm:$0xff]
        %v781 = vld [vmem:[%s766 + $0x70] sm:$0xff]
        %v782 = vld [vmem:[%s766 + $0x78] sm:$0xff]
        %v785 = vunpack.c.l.s4 1983009808
        %v786 = vunpack.c.0.s8 %v785
        %v787 = vlaneseq
        %v788 = vshrl.u32 %v787, 7
        %v789 = vsub.s32 %v786, %v788
        %v790 = vrot.slane %v625, %v789
        %v792 = vshrl.u32 %v790, 16
        %v794 = vshll.u32 %v790, 16
        %v796 = vrot.slane %v794, 1
        %v797 = vor.u32 %v792, %v796
        %v815 = vunpack.c.l.b16 %v767
        %v816 = vunpack.c.h.b16 %v767
        %v817 = vunpack.c.l.b16 %v768
        %v818 = vunpack.c.h.b16 %v768
        %v819 = vunpack.c.l.b16 %v769
        %v820 = vunpack.c.h.b16 %v769
        %v821 = vunpack.c.l.b16 %v770
        %v822 = vunpack.c.h.b16 %v770
        %v823 = vunpack.c.l.b16 %v771
        %v824 = vunpack.c.h.b16 %v771
        %v825 = vunpack.c.l.b16 %v772
        %v826 = vunpack.c.h.b16 %v772
        %v827 = vunpack.c.l.b16 %v773
        %v828 = vunpack.c.h.b16 %v773
        %v829 = vunpack.c.l.b16 %v774
        %v830 = vunpack.c.h.b16 %v774
        %v831 = vunpack.c.l.b16 %v775
        %v832 = vunpack.c.h.b16 %v775
        %v833 = vunpack.c.l.b16 %v776
        %v834 = vunpack.c.h.b16 %v776
        %v835 = vunpack.c.l.b16 %v777
        %v836 = vunpack.c.h.b16 %v777
        %v837 = vunpack.c.l.b16 %v778
        %v838 = vunpack.c.h.b16 %v778
        %v839 = vunpack.c.l.b16 %v779
        %v840 = vunpack.c.h.b16 %v779
        %v841 = vunpack.c.l.b16 %v780
        %v842 = vunpack.c.h.b16 %v780
        %v843 = vunpack.c.l.b16 %v781
        %v844 = vunpack.c.h.b16 %v781
        %v845 = vunpack.c.l.b16 %v782
        %v846 = vunpack.c.h.b16 %v782
        %v847 = vpack.c.b16 %v817, %v815
        %v848 = vpack.c.b16 %v818, %v816
        %v849 = vpack.c.b16 %v821, %v819
        %v850 = vpack.c.b16 %v822, %v820
        %v851 = vpack.c.b16 %v825, %v823
        %v852 = vpack.c.b16 %v826, %v824
        %v853 = vpack.c.b16 %v829, %v827
        %v854 = vpack.c.b16 %v830, %v828
        %v855 = vpack.c.b16 %v833, %v831
        %v856 = vpack.c.b16 %v834, %v832
        %v857 = vpack.c.b16 %v837, %v835
        %v858 = vpack.c.b16 %v838, %v836
        %v859 = vpack.c.b16 %v841, %v839
        %v860 = vpack.c.b16 %v842, %v840
        %v861 = vpack.c.b16 %v845, %v843
        %v862 = vpack.c.b16 %v846, %v844
        %879 = vmatprep.subr.bf16.mxu0 %v848
        %880 = vmatpush1.bf16.msra.mxu0 %v847
        %881 = vmatprep.subr.bf16.mxu0 %v850
        %882 = vmatpush1.bf16.msra.mxu0 %v849
        %883 = vmatprep.subr.bf16.mxu0 %v852
        %884 = vmatpush1.bf16.msra.mxu0 %v851
        %885 = vmatprep.subr.bf16.mxu0 %v854
        %886 = vmatpush1.bf16.msra.mxu0 %v853
        %887 = vmatprep.subr.bf16.mxu0 %v856
        %888 = vmatpush1.bf16.msra.mxu0 %v855
        %889 = vmatprep.subr.bf16.mxu0 %v858
        %890 = vmatpush1.bf16.msra.mxu0 %v857
        %891 = vmatprep.subr.bf16.mxu0 %v860
        %892 = vmatpush1.bf16.msra.mxu0 %v859
        %893 = vmatprep.subr.bf16.mxu0 %v862
        %894 = vmatpush1.bf16.msra.mxu0 %v861
        %895 = vmatprep.subr.bf16.mxu0 0
        %896 = vmatpush1.bf16.msra.mxu0 0
        %897 = vmatprep.subr.bf16.mxu0 0
        %898 = vmatpush1.bf16.msra.mxu0 0
        %899 = vmatprep.subr.bf16.mxu0 0
        %900 = vmatpush1.bf16.msra.mxu0 0
        %901 = vmatprep.subr.bf16.mxu0 0
        %902 = vmatpush1.bf16.msra.mxu0 0
        %903 = vmatprep.subr.bf16.mxu0 0
        %904 = vmatpush1.bf16.msra.mxu0 0
        %905 = vmatprep.subr.bf16.mxu0 0
        %906 = vmatpush1.bf16.msra.mxu0 0
        %907 = vmatprep.subr.bf16.mxu0 0
        %908 = vmatpush1.bf16.msra.mxu0 0
        %909 = vmatprep.subr.bf16.mxu0 0
        %910 = vmatpush1.bf16.msra.mxu0 0
        %911 = vmatprep.mubr.bf16.mxu0 0
        %912 = vmatmul.mubr.bf16.gmra.mrb[0].mxu0 %v797
        %v913 = vpop.f32.mrb[0].mxu0
        %v914 = vadd.f32 0.0, %v913
        %v915 = vpop.f32.mrb[0].mxu0
        %v916 = vadd.f32 0.0, %v915
        %v917 = vpop.f32.mrb[0].mxu0
        %v918 = vpop.f32.mrb[0].mxu0
        %919 = vdwg.mxu0
        %v920 = vadd.f32 %v764, %v914
        %v921 = vadd.f32 %v765, %v916
        %s922 = scalar_lea.vmem %s1, 640
        %v923 = vld [vmem:[%s922] sm:$0xff]
        %v924 = vld [vmem:[%s922 + $0x8] sm:$0xff]
        %v925 = vld [vmem:[%s922 + $0x10] sm:$0xff]
        %v926 = vld [vmem:[%s922 + $0x18] sm:$0xff]
        %v927 = vld [vmem:[%s922 + $0x20] sm:$0xff]
        %v928 = vld [vmem:[%s922 + $0x28] sm:$0xff]
        %v929 = vld [vmem:[%s922 + $0x30] sm:$0xff]
        %v930 = vld [vmem:[%s922 + $0x38] sm:$0xff]
        %v931 = vld [vmem:[%s922 + $0x40] sm:$0xff]
        %v932 = vld [vmem:[%s922 + $0x48] sm:$0xff]
        %v933 = vld [vmem:[%s922 + $0x50] sm:$0xff]
        %v934 = vld [vmem:[%s922 + $0x58] sm:$0xff]
        %v935 = vld [vmem:[%s922 + $0x60] sm:$0xff]
        %v936 = vld [vmem:[%s922 + $0x68] sm:$0xff]
        %v937 = vld [vmem:[%s922 + $0x70] sm:$0xff]
        %v938 = vld [vmem:[%s922 + $0x78] sm:$0xff]
        %v939 = vrot.slane %v790, 1
        %v957 = vunpack.c.l.b16 %v923
        %v958 = vunpack.c.h.b16 %v923
        %v959 = vunpack.c.l.b16 %v924
        %v960 = vunpack.c.h.b16 %v924
        %v961 = vunpack.c.l.b16 %v925
        %v962 = vunpack.c.h.b16 %v925
        %v963 = vunpack.c.l.b16 %v926
        %v964 = vunpack.c.h.b16 %v926
        %v965 = vunpack.c.l.b16 %v927
        %v966 = vunpack.c.h.b16 %v927
        %v967 = vunpack.c.l.b16 %v928
        %v968 = vunpack.c.h.b16 %v928
        %v969 = vunpack.c.l.b16 %v929
        %v970 = vunpack.c.h.b16 %v929
        %v971 = vunpack.c.l.b16 %v930
        %v972 = vunpack.c.h.b16 %v930
        %v973 = vunpack.c.l.b16 %v931
        %v974 = vunpack.c.h.b16 %v931
        %v975 = vunpack.c.l.b16 %v932
        %v976 = vunpack.c.h.b16 %v932
        %v977 = vunpack.c.l.b16 %v933
        %v978 = vunpack.c.h.b16 %v933
        %v979 = vunpack.c.l.b16 %v934
        %v980 = vunpack.c.h.b16 %v934
        %v981 = vunpack.c.l.b16 %v935
        %v982 = vunpack.c.h.b16 %v935
        %v983 = vunpack.c.l.b16 %v936
        %v984 = vunpack.c.h.b16 %v936
        %v985 = vunpack.c.l.b16 %v937
        %v986 = vunpack.c.h.b16 %v937
        %v987 = vunpack.c.l.b16 %v938
        %v988 = vunpack.c.h.b16 %v938
        %v989 = vpack.c.b16 %v959, %v957
        %v990 = vpack.c.b16 %v960, %v958
        %v991 = vpack.c.b16 %v963, %v961
        %v992 = vpack.c.b16 %v964, %v962
        %v993 = vpack.c.b16 %v967, %v965
        %v994 = vpack.c.b16 %v968, %v966
        %v995 = vpack.c.b16 %v971, %v969
        %v996 = vpack.c.b16 %v972, %v970
        %v997 = vpack.c.b16 %v975, %v973
        %v998 = vpack.c.b16 %v976, %v974
        %v999 = vpack.c.b16 %v979, %v977
        %v1000 = vpack.c.b16 %v980, %v978
        %v1001 = vpack.c.b16 %v983, %v981
        %v1002 = vpack.c.b16 %v984, %v982
        %v1003 = vpack.c.b16 %v987, %v985
        %v1004 = vpack.c.b16 %v988, %v986
        %1021 = vmatprep.subr.bf16.mxu0 %v990
        %1022 = vmatpush1.bf16.msra.mxu0 %v989
        %1023 = vmatprep.subr.bf16.mxu0 %v992
        %1024 = vmatpush1.bf16.msra.mxu0 %v991
        %1025 = vmatprep.subr.bf16.mxu0 %v994
        %1026 = vmatpush1.bf16.msra.mxu0 %v993
        %1027 = vmatprep.subr.bf16.mxu0 %v996
        %1028 = vmatpush1.bf16.msra.mxu0 %v995
        %1029 = vmatprep.subr.bf16.mxu0 %v998
        %1030 = vmatpush1.bf16.msra.mxu0 %v997
        %1031 = vmatprep.subr.bf16.mxu0 %v1000
        %1032 = vmatpush1.bf16.msra.mxu0 %v999
        %1033 = vmatprep.subr.bf16.mxu0 %v1002
        %1034 = vmatpush1.bf16.msra.mxu0 %v1001
        %1035 = vmatprep.subr.bf16.mxu0 %v1004
        %1036 = vmatpush1.bf16.msra.mxu0 %v1003
        %1037 = vmatprep.subr.bf16.mxu0 0
        %1038 = vmatpush1.bf16.msra.mxu0 0
        %1039 = vmatprep.subr.bf16.mxu0 0
        %1040 = vmatpush1.bf16.msra.mxu0 0
        %1041 = vmatprep.subr.bf16.mxu0 0
        %1042 = vmatpush1.bf16.msra.mxu0 0
        %1043 = vmatprep.subr.bf16.mxu0 0
        %1044 = vmatpush1.bf16.msra.mxu0 0
        %1045 = vmatprep.subr.bf16.mxu0 0
        %1046 = vmatpush1.bf16.msra.mxu0 0
        %1047 = vmatprep.subr.bf16.mxu0 0
        %1048 = vmatpush1.bf16.msra.mxu0 0
        %1049 = vmatprep.subr.bf16.mxu0 0
        %1050 = vmatpush1.bf16.msra.mxu0 0
        %1051 = vmatprep.subr.bf16.mxu0 0
        %1052 = vmatpush1.bf16.msra.mxu0 0
        %1053 = vmatprep.mubr.bf16.mxu0 0
        %1054 = vmatmul.mubr.bf16.gmra.mrb[0].mxu0 %v939
        %v1055 = vpop.f32.mrb[0].mxu0
        %v1056 = vadd.f32 0.0, %v1055
        %v1057 = vpop.f32.mrb[0].mxu0
        %v1058 = vadd.f32 0.0, %v1057
        %v1059 = vpop.f32.mrb[0].mxu0
        %v1060 = vpop.f32.mrb[0].mxu0
        %1061 = vdwg.mxu0
        %v1062 = vadd.f32 %v920, %v1056
        %v1063 = vadd.f32 %v921, %v1058
        %s1064 = sadd.s32 %s181, 2
        %s1065 = smul.addr %s1064, 2
        %s1066 = scalar_lea.vmem %s169, %s1065
        %v1067 = vld [vmem:[%s1066] sm:$0x3]
        %s1068 = scalar_lea.vmem %s1, 768
        %v1069 = vld [vmem:[%s1068] sm:$0xff]
        %v1070 = vld [vmem:[%s1068 + $0x8] sm:$0xff]
        %v1071 = vld [vmem:[%s1068 + $0x10] sm:$0xff]
        %v1072 = vld [vmem:[%s1068 + $0x18] sm:$0xff]
        %v1073 = vld [vmem:[%s1068 + $0x20] sm:$0xff]
        %v1074 = vld [vmem:[%s1068 + $0x28] sm:$0xff]
        %v1075 = vld [vmem:[%s1068 + $0x30] sm:$0xff]
        %v1076 = vld [vmem:[%s1068 + $0x38] sm:$0xff]
        %v1077 = vld [vmem:[%s1068 + $0x40] sm:$0xff]
        %v1078 = vld [vmem:[%s1068 + $0x48] sm:$0xff]
        %v1079 = vld [vmem:[%s1068 + $0x50] sm:$0xff]
        %v1080 = vld [vmem:[%s1068 + $0x58] sm:$0xff]
        %v1081 = vld [vmem:[%s1068 + $0x60] sm:$0xff]
        %v1082 = vld [vmem:[%s1068 + $0x68] sm:$0xff]
        %v1083 = vld [vmem:[%s1068 + $0x70] sm:$0xff]
        %v1084 = vld [vmem:[%s1068 + $0x78] sm:$0xff]
        %v1101 = vunpack.c.l.b16 %v1069
        %v1102 = vunpack.c.h.b16 %v1069
        %v1103 = vunpack.c.l.b16 %v1070
        %v1104 = vunpack.c.h.b16 %v1070
        %v1105 = vunpack.c.l.b16 %v1071
        %v1106 = vunpack.c.h.b16 %v1071
        %v1107 = vunpack.c.l.b16 %v1072
        %v1108 = vunpack.c.h.b16 %v1072
        %v1109 = vunpack.c.l.b16 %v1073
        %v1110 = vunpack.c.h.b16 %v1073
        %v1111 = vunpack.c.l.b16 %v1074
        %v1112 = vunpack.c.h.b16 %v1074
        %v1113 = vunpack.c.l.b16 %v1075
        %v1114 = vunpack.c.h.b16 %v1075
        %v1115 = vunpack.c.l.b16 %v1076
        %v1116 = vunpack.c.h.b16 %v1076
        %v1117 = vunpack.c.l.b16 %v1077
        %v1118 = vunpack.c.h.b16 %v1077
        %v1119 = vunpack.c.l.b16 %v1078
        %v1120 = vunpack.c.h.b16 %v1078
        %v1121 = vunpack.c.l.b16 %v1079
        %v1122 = vunpack.c.h.b16 %v1079
        %v1123 = vunpack.c.l.b16 %v1080
        %v1124 = vunpack.c.h.b16 %v1080
        %v1125 = vunpack.c.l.b16 %v1081
        %v1126 = vunpack.c.h.b16 %v1081
        %v1127 = vunpack.c.l.b16 %v1082
        %v1128 = vunpack.c.h.b16 %v1082
        %v1129 = vunpack.c.l.b16 %v1083
        %v1130 = vunpack.c.h.b16 %v1083
        %v1131 = vunpack.c.l.b16 %v1084
        %v1132 = vunpack.c.h.b16 %v1084
        %v1133 = vpack.c.b16 %v1103, %v1101
        %v1134 = vpack.c.b16 %v1104, %v1102
        %v1135 = vpack.c.b16 %v1107, %v1105
        %v1136 = vpack.c.b16 %v1108, %v1106
        %v1137 = vpack.c.b16 %v1111, %v1109
        %v1138 = vpack.c.b16 %v1112, %v1110
        %v1139 = vpack.c.b16 %v1115, %v1113
        %v1140 = vpack.c.b16 %v1116, %v1114
        %v1141 = vpack.c.b16 %v1119, %v1117
        %v1142 = vpack.c.b16 %v1120, %v1118
        %v1143 = vpack.c.b16 %v1123, %v1121
        %v1144 = vpack.c.b16 %v1124, %v1122
        %v1145 = vpack.c.b16 %v1127, %v1125
        %v1146 = vpack.c.b16 %v1128, %v1126
        %v1147 = vpack.c.b16 %v1131, %v1129
        %v1148 = vpack.c.b16 %v1132, %v1130
        %1165 = vmatprep.subr.bf16.mxu0 %v1134
        %1166 = vmatpush1.bf16.msra.mxu0 %v1133
        %1167 = vmatprep.subr.bf16.mxu0 %v1136
        %1168 = vmatpush1.bf16.msra.mxu0 %v1135
        %1169 = vmatprep.subr.bf16.mxu0 %v1138
        %1170 = vmatpush1.bf16.msra.mxu0 %v1137
        %1171 = vmatprep.subr.bf16.mxu0 %v1140
        %1172 = vmatpush1.bf16.msra.mxu0 %v1139
        %1173 = vmatprep.subr.bf16.mxu0 %v1142
        %1174 = vmatpush1.bf16.msra.mxu0 %v1141
        %1175 = vmatprep.subr.bf16.mxu0 %v1144
        %1176 = vmatpush1.bf16.msra.mxu0 %v1143
        %1177 = vmatprep.subr.bf16.mxu0 %v1146
        %1178 = vmatpush1.bf16.msra.mxu0 %v1145
        %1179 = vmatprep.subr.bf16.mxu0 %v1148
        %1180 = vmatpush1.bf16.msra.mxu0 %v1147
        %1181 = vmatprep.subr.bf16.mxu0 0
        %1182 = vmatpush1.bf16.msra.mxu0 0
        %1183 = vmatprep.subr.bf16.mxu0 0
        %1184 = vmatpush1.bf16.msra.mxu0 0
        %1185 = vmatprep.subr.bf16.mxu0 0
        %1186 = vmatpush1.bf16.msra.mxu0 0
        %1187 = vmatprep.subr.bf16.mxu0 0
        %1188 = vmatpush1.bf16.msra.mxu0 0
        %1189 = vmatprep.subr.bf16.mxu0 0
        %1190 = vmatpush1.bf16.msra.mxu0 0
        %1191 = vmatprep.subr.bf16.mxu0 0
        %1192 = vmatpush1.bf16.msra.mxu0 0
        %1193 = vmatprep.subr.bf16.mxu0 0
        %1194 = vmatpush1.bf16.msra.mxu0 0
        %1195 = vmatprep.subr.bf16.mxu0 0
        %1196 = vmatpush1.bf16.msra.mxu0 0
        %1197 = vmatprep.mubr.bf16.mxu0 0
        %1198 = vmatmul.mubr.bf16.gmra.mrb[0].mxu0 %v1067
        %v1199 = vpop.f32.mrb[0].mxu0
        %v1200 = vadd.f32 0.0, %v1199
        %v1201 = vpop.f32.mrb[0].mxu0
        %v1202 = vadd.f32 0.0, %v1201
        %v1203 = vpop.f32.mrb[0].mxu0
        %v1204 = vpop.f32.mrb[0].mxu0
        %1205 = vdwg.mxu0
        %v1206 = vadd.f32 %v1062, %v1200
        %v1207 = vadd.f32 %v1063, %v1202
        %s1208 = scalar_lea.vmem %s1, 896
        %v1209 = vld [vmem:[%s1208] sm:$0xff]
        %v1210 = vld [vmem:[%s1208 + $0x8] sm:$0xff]
        %v1211 = vld [vmem:[%s1208 + $0x10] sm:$0xff]
        %v1212 = vld [vmem:[%s1208 + $0x18] sm:$0xff]
        %v1213 = vld [vmem:[%s1208 + $0x20] sm:$0xff]
        %v1214 = vld [vmem:[%s1208 + $0x28] sm:$0xff]
        %v1215 = vld [vmem:[%s1208 + $0x30] sm:$0xff]
        %v1216 = vld [vmem:[%s1208 + $0x38] sm:$0xff]
        %v1217 = vld [vmem:[%s1208 + $0x40] sm:$0xff]
        %v1218 = vld [vmem:[%s1208 + $0x48] sm:$0xff]
        %v1219 = vld [vmem:[%s1208 + $0x50] sm:$0xff]
        %v1220 = vld [vmem:[%s1208 + $0x58] sm:$0xff]
        %v1221 = vld [vmem:[%s1208 + $0x60] sm:$0xff]
        %v1222 = vld [vmem:[%s1208 + $0x68] sm:$0xff]
        %v1223 = vld [vmem:[%s1208 + $0x70] sm:$0xff]
        %v1224 = vld [vmem:[%s1208 + $0x78] sm:$0xff]
        %v1227 = vunpack.c.l.s4 1983009808
        %v1228 = vunpack.c.0.s8 %v1227
        %v1229 = vlaneseq
        %v1230 = vshrl.u32 %v1229, 7
        %v1231 = vsub.s32 %v1228, %v1230
        %v1232 = vrot.slane %v1067, %v1231
        %v1234 = vshrl.u32 %v1232, 16
        %v1236 = vshll.u32 %v1232, 16
        %v1238 = vrot.slane %v1236, 1
        %v1239 = vor.u32 %v1234, %v1238
        %v1257 = vunpack.c.l.b16 %v1209
        %v1258 = vunpack.c.h.b16 %v1209
        %v1259 = vunpack.c.l.b16 %v1210
        %v1260 = vunpack.c.h.b16 %v1210
        %v1261 = vunpack.c.l.b16 %v1211
        %v1262 = vunpack.c.h.b16 %v1211
        %v1263 = vunpack.c.l.b16 %v1212
        %v1264 = vunpack.c.h.b16 %v1212
        %v1265 = vunpack.c.l.b16 %v1213
        %v1266 = vunpack.c.h.b16 %v1213
        %v1267 = vunpack.c.l.b16 %v1214
        %v1268 = vunpack.c.h.b16 %v1214
        %v1269 = vunpack.c.l.b16 %v1215
        %v1270 = vunpack.c.h.b16 %v1215
        %v1271 = vunpack.c.l.b16 %v1216
        %v1272 = vunpack.c.h.b16 %v1216
        %v1273 = vunpack.c.l.b16 %v1217
        %v1274 = vunpack.c.h.b16 %v1217
        %v1275 = vunpack.c.l.b16 %v1218
        %v1276 = vunpack.c.h.b16 %v1218
        %v1277 = vunpack.c.l.b16 %v1219
        %v1278 = vunpack.c.h.b16 %v1219
        %v1279 = vunpack.c.l.b16 %v1220
        %v1280 = vunpack.c.h.b16 %v1220
        %v1281 = vunpack.c.l.b16 %v1221
        %v1282 = vunpack.c.h.b16 %v1221
        %v1283 = vunpack.c.l.b16 %v1222
        %v1284 = vunpack.c.h.b16 %v1222
        %v1285 = vunpack.c.l.b16 %v1223
        %v1286 = vunpack.c.h.b16 %v1223
        %v1287 = vunpack.c.l.b16 %v1224
        %v1288 = vunpack.c.h.b16 %v1224
        %v1289 = vpack.c.b16 %v1259, %v1257
        %v1290 = vpack.c.b16 %v1260, %v1258
        %v1291 = vpack.c.b16 %v1263, %v1261
        %v1292 = vpack.c.b16 %v1264, %v1262
        %v1293 = vpack.c.b16 %v1267, %v1265
        %v1294 = vpack.c.b16 %v1268, %v1266
        %v1295 = vpack.c.b16 %v1271, %v1269
        %v1296 = vpack.c.b16 %v1272, %v1270
        %v1297 = vpack.c.b16 %v1275, %v1273
        %v1298 = vpack.c.b16 %v1276, %v1274
        %v1299 = vpack.c.b16 %v1279, %v1277
        %v1300 = vpack.c.b16 %v1280, %v1278
        %v1301 = vpack.c.b16 %v1283, %v1281
        %v1302 = vpack.c.b16 %v1284, %v1282
        %v1303 = vpack.c.b16 %v1287, %v1285
        %v1304 = vpack.c.b16 %v1288, %v1286
        %1321 = vmatprep.subr.bf16.mxu0 %v1290
        %1322 = vmatpush1.bf16.msra.mxu0 %v1289
        %1323 = vmatprep.subr.bf16.mxu0 %v1292
        %1324 = vmatpush1.bf16.msra.mxu0 %v1291
        %1325 = vmatprep.subr.bf16.mxu0 %v1294
        %1326 = vmatpush1.bf16.msra.mxu0 %v1293
        %1327 = vmatprep.subr.bf16.mxu0 %v1296
        %1328 = vmatpush1.bf16.msra.mxu0 %v1295
        %1329 = vmatprep.subr.bf16.mxu0 %v1298
        %1330 = vmatpush1.bf16.msra.mxu0 %v1297
        %1331 = vmatprep.subr.bf16.mxu0 %v1300
        %1332 = vmatpush1.bf16.msra.mxu0 %v1299
        %1333 = vmatprep.subr.bf16.mxu0 %v1302
        %1334 = vmatpush1.bf16.msra.mxu0 %v1301
        %1335 = vmatprep.subr.bf16.mxu0 %v1304
        %1336 = vmatpush1.bf16.msra.mxu0 %v1303
        %1337 = vmatprep.subr.bf16.mxu0 0
        %1338 = vmatpush1.bf16.msra.mxu0 0
        %1339 = vmatprep.subr.bf16.mxu0 0
        %1340 = vmatpush1.bf16.msra.mxu0 0
        %1341 = vmatprep.subr.bf16.mxu0 0
        %1342 = vmatpush1.bf16.msra.mxu0 0
        %1343 = vmatprep.subr.bf16.mxu0 0
        %1344 = vmatpush1.bf16.msra.mxu0 0
        %1345 = vmatprep.subr.bf16.mxu0 0
        %1346 = vmatpush1.bf16.msra.mxu0 0
        %1347 = vmatprep.subr.bf16.mxu0 0
        %1348 = vmatpush1.bf16.msra.mxu0 0
        %1349 = vmatprep.subr.bf16.mxu0 0
        %1350 = vmatpush1.bf16.msra.mxu0 0
        %1351 = vmatprep.subr.bf16.mxu0 0
        %1352 = vmatpush1.bf16.msra.mxu0 0
        %1353 = vmatprep.mubr.bf16.mxu0 0
        %1354 = vmatmul.mubr.bf16.gmra.mrb[0].mxu0 %v1239
        %v1355 = vpop.f32.mrb[0].mxu0
        %v1356 = vadd.f32 0.0, %v1355
        %v1357 = vpop.f32.mrb[0].mxu0
        %v1358 = vadd.f32 0.0, %v1357
        %v1359 = vpop.f32.mrb[0].mxu0
        %v1360 = vpop.f32.mrb[0].mxu0
        %1361 = vdwg.mxu0
        %v1362 = vadd.f32 %v1206, %v1356
        %v1363 = vadd.f32 %v1207, %v1358
        %s1364 = scalar_lea.vmem %s1, 1024
        %v1365 = vld [vmem:[%s1364] sm:$0xff]
        %v1366 = vld [vmem:[%s1364 + $0x8] sm:$0xff]
        %v1367 = vld [vmem:[%s1364 + $0x10] sm:$0xff]
        %v1368 = vld [vmem:[%s1364 + $0x18] sm:$0xff]
        %v1369 = vld [vmem:[%s1364 + $0x20] sm:$0xff]
        %v1370 = vld [vmem:[%s1364 + $0x28] sm:$0xff]
        %v1371 = vld [vmem:[%s1364 + $0x30] sm:$0xff]
        %v1372 = vld [vmem:[%s1364 + $0x38] sm:$0xff]
        %v1373 = vld [vmem:[%s1364 + $0x40] sm:$0xff]
        %v1374 = vld [vmem:[%s1364 + $0x48] sm:$0xff]
        %v1375 = vld [vmem:[%s1364 + $0x50] sm:$0xff]
        %v1376 = vld [vmem:[%s1364 + $0x58] sm:$0xff]
        %v1377 = vld [vmem:[%s1364 + $0x60] sm:$0xff]
        %v1378 = vld [vmem:[%s1364 + $0x68] sm:$0xff]
        %v1379 = vld [vmem:[%s1364 + $0x70] sm:$0xff]
        %v1380 = vld [vmem:[%s1364 + $0x78] sm:$0xff]
        %v1381 = vrot.slane %v1232, 1
        %v1399 = vunpack.c.l.b16 %v1365
        %v1400 = vunpack.c.h.b16 %v1365
        %v1401 = vunpack.c.l.b16 %v1366
        %v1402 = vunpack.c.h.b16 %v1366
        %v1403 = vunpack.c.l.b16 %v1367
        %v1404 = vunpack.c.h.b16 %v1367
        %v1405 = vunpack.c.l.b16 %v1368
        %v1406 = vunpack.c.h.b16 %v1368
        %v1407 = vunpack.c.l.b16 %v1369
        %v1408 = vunpack.c.h.b16 %v1369
        %v1409 = vunpack.c.l.b16 %v1370
        %v1410 = vunpack.c.h.b16 %v1370
        %v1411 = vunpack.c.l.b16 %v1371
        %v1412 = vunpack.c.h.b16 %v1371
        %v1413 = vunpack.c.l.b16 %v1372
        %v1414 = vunpack.c.h.b16 %v1372
        %v1415 = vunpack.c.l.b16 %v1373
        %v1416 = vunpack.c.h.b16 %v1373
        %v1417 = vunpack.c.l.b16 %v1374
        %v1418 = vunpack.c.h.b16 %v1374
        %v1419 = vunpack.c.l.b16 %v1375
        %v1420 = vunpack.c.h.b16 %v1375
        %v1421 = vunpack.c.l.b16 %v1376
        %v1422 = vunpack.c.h.b16 %v1376
        %v1423 = vunpack.c.l.b16 %v1377
        %v1424 = vunpack.c.h.b16 %v1377
        %v1425 = vunpack.c.l.b16 %v1378
        %v1426 = vunpack.c.h.b16 %v1378
        %v1427 = vunpack.c.l.b16 %v1379
        %v1428 = vunpack.c.h.b16 %v1379
        %v1429 = vunpack.c.l.b16 %v1380
        %v1430 = vunpack.c.h.b16 %v1380
        %v1431 = vpack.c.b16 %v1401, %v1399
        %v1432 = vpack.c.b16 %v1402, %v1400
        %v1433 = vpack.c.b16 %v1405, %v1403
        %v1434 = vpack.c.b16 %v1406, %v1404
        %v1435 = vpack.c.b16 %v1409, %v1407
        %v1436 = vpack.c.b16 %v1410, %v1408
        %v1437 = vpack.c.b16 %v1413, %v1411
        %v1438 = vpack.c.b16 %v1414, %v1412
        %v1439 = vpack.c.b16 %v1417, %v1415
        %v1440 = vpack.c.b16 %v1418, %v1416
        %v1441 = vpack.c.b16 %v1421, %v1419
        %v1442 = vpack.c.b16 %v1422, %v1420
        %v1443 = vpack.c.b16 %v1425, %v1423
        %v1444 = vpack.c.b16 %v1426, %v1424
        %v1445 = vpack.c.b16 %v1429, %v1427
        %v1446 = vpack.c.b16 %v1430, %v1428
        %1463 = vmatprep.subr.bf16.mxu0 %v1432
        %1464 = vmatpush1.bf16.msra.mxu0 %v1431
        %1465 = vmatprep.subr.bf16.mxu0 %v1434
        %1466 = vmatpush1.bf16.msra.mxu0 %v1433
        %1467 = vmatprep.subr.bf16.mxu0 %v1436
        %1468 = vmatpush1.bf16.msra.mxu0 %v1435
        %1469 = vmatprep.subr.bf16.mxu0 %v1438
        %1470 = vmatpush1.bf16.msra.mxu0 %v1437
        %1471 = vmatprep.subr.bf16.mxu0 %v1440
        %1472 = vmatpush1.bf16.msra.mxu0 %v1439
        %1473 = vmatprep.subr.bf16.mxu0 %v1442
        %1474 = vmatpush1.bf16.msra.mxu0 %v1441
        %1475 = vmatprep.subr.bf16.mxu0 %v1444
        %1476 = vmatpush1.bf16.msra.mxu0 %v1443
        %1477 = vmatprep.subr.bf16.mxu0 %v1446
        %1478 = vmatpush1.bf16.msra.mxu0 %v1445
        %1479 = vmatprep.subr.bf16.mxu0 0
        %1480 = vmatpush1.bf16.msra.mxu0 0
        %1481 = vmatprep.subr.bf16.mxu0 0
        %1482 = vmatpush1.bf16.msra.mxu0 0
        %1483 = vmatprep.subr.bf16.mxu0 0
        %1484 = vmatpush1.bf16.msra.mxu0 0
        %1485 = vmatprep.subr.bf16.mxu0 0
        %1486 = vmatpush1.bf16.msra.mxu0 0
        %1487 = vmatprep.subr.bf16.mxu0 0
        %1488 = vmatpush1.bf16.msra.mxu0 0
        %1489 = vmatprep.subr.bf16.mxu0 0
        %1490 = vmatpush1.bf16.msra.mxu0 0
        %1491 = vmatprep.subr.bf16.mxu0 0
        %1492 = vmatpush1.bf16.msra.mxu0 0
        %1493 = vmatprep.subr.bf16.mxu0 0
        %1494 = vmatpush1.bf16.msra.mxu0 0
        %1495 = vmatprep.mubr.bf16.mxu0 0
        %1496 = vmatmul.mubr.bf16.gmra.mrb[0].mxu0 %v1381
        %v1497 = vpop.f32.mrb[0].mxu0
        %v1498 = vadd.f32 0.0, %v1497
        %v1499 = vpop.f32.mrb[0].mxu0
        %v1500 = vadd.f32 0.0, %v1499
        %v1501 = vpop.f32.mrb[0].mxu0
        %v1502 = vpop.f32.mrb[0].mxu0
        %1503 = vdwg.mxu0
        %v1504 = vadd.f32 %v1362, %v1498
        %v1505 = vadd.f32 %v1363, %v1500
        %v1506 = vxor.u32 %v1505, 2147483648
        %v1507 = vmul.f32 %v1506, 1.442695
        %v1508 = vpow.pop %v1507
        %v1509 = vadd.f32 %v1508, 1.0
        %v1510 = vrcp.pop %v1509
        %v1511 = vmul.f32 1.0, %v1510
        %v1512 = vmax.f32 %v1504, 0.0
        %v1513 = vmul.f32 %v1511, %v1512
        %v1514 = vpack.c.bf16 %v1513, %v1513
        %s1515 = scalar_lea.vmem %s177, %s181
        %1516 = vst [vmem:[%s1515] sm:$0x1] %v1514
      $region33: #{_encoder_forward_nhwc.14} parent=27 // loop_footer
        %s185 = sadd.s32 1, %s181
      $region34: #{_encoder_forward_nhwc.14} parent=27 // loop_footer_branch
        %180 = sbr.rel target = $region30
      $region35: #{_encoder_forward_nhwc.14} parent=27 // loop_exit
        _
      %s1517 = smul.u32 2, %s18
      %p1518 = scmp.lt.s32.totalorder %s17, 1
      %s1519 = scalar_select %p1518, %s17, 1
      %p1520 = scmp.lt.s32.totalorder %s1517, 1
      %s1521 = scalar_select %p1520, %s1517, 1
      %s1522 = smul.addr %s1519, 2
      %s1523 = sadd.s32 %s1521, %s1522
      %s1524 = scalar_lea.vmem %s2, %s1523
      // Predicated region
      $region36: #{_encoder_forward_nhwc.14} parent=27 // pred_check
        %p1525 = pneg %p94
      $region37: #{_encoder_forward_nhwc.14} parent=27 // pred_check_branch
        %1527 = sbr.rel (%p1525) target = $region39
      $region38: #{_encoder_forward_nhwc.14} parent=27 // pred_region
        %s1528 = smul.u32 2, %s18
      $region39: #{_encoder_forward_nhwc.14} parent=27 // pred_fallthru
        _
    $region28: #{_encoder_forward_nhwc.14} parent=5 // pred_fallthru
      _
    %p1529 = scmp.le.s32.totalorder 2, %s8
    // Predicated region
    $region40: #{_encoder_forward_nhwc.14} parent=5 // pred_check
      %p1530 = pneg %p1529
    $region41: #{_encoder_forward_nhwc.14} parent=5 // pred_check_branch
      %1532 = sbr.rel (%p1530) target = $region43
    $region42: #{_encoder_forward_nhwc.14} parent=5 // pred_region
      %s1533 = ssub.s32 %s8, 2
      // Predicated region
      $region44: #{_encoder_forward_nhwc.14} parent=42 // pred_check
        %p1534 = pneg %p100
      $region45: #{_encoder_forward_nhwc.14} parent=42 // pred_check_branch
        %1536 = sbr.rel (%p1534) target = $region47
      $region46: #{_encoder_forward_nhwc.14} parent=42 // pred_region
        %s1537 = smul.u32 2, %s20
        %p1538 = scmp.lt.s32.totalorder %s19, 1
        %s1539 = scalar_select %p1538, %s19, 1
        %p1540 = scmp.lt.s32.totalorder %s1537, 1
        %s1541 = scalar_select %p1540, %s1537, 1
        %s1542 = smul.addr %s1539, 2
        %s1543 = sadd.s32 %s1541, %s1542
        %s1544 = scalar_lea.vmem %s2, %s1543
      $region47: #{_encoder_forward_nhwc.14} parent=42 // pred_fallthru
        _
    $region43: #{_encoder_forward_nhwc.14} parent=5 // pred_fallthru
      _
  $region6: #{_encoder_forward_nhwc.14} parent=0 // loop_footer
    %s12 = sadd.s32 1, %s8
  $region7: #{_encoder_forward_nhwc.14} parent=0 // loop_footer_branch
    %7 = sbr.rel target = $region3
  $region8: #{_encoder_forward_nhwc.14} parent=0 // loop_exit
    _

</llo_original>
